<compile_context>
chip_gen: v5e
topology: v5e:2x2
jax: 0.10.0
libtpu: 0.0.40
codegen_flags: <defaults>
</compile_context>

<pallas_src>
import jax
import jax.numpy as jnp
from jax import lax
from jax.experimental import pallas as pl
from jax.experimental.pallas import tpu as pltpu


# ------------------------------ fused kernel --------------------------------

def _resnet_block_kernel(x4_ref, a2_ref, w1a_ref, w1b_ref, w2_ref,
                         b1a_ref, bsum_ref, out_ref, y1cp_ref):
    """One batch element per grid step.

    x4_ref   : (4, H+2, Wc, C)    column-parity-4 split of zero-padded NHWC input
                                  x4[t, r, b, c] = xpad[r, 4*b + t, c]
    a2_ref   : (H2*W2, 16*C)      space-to-depth patches for the 4x4/s4 conv
    w1a_ref  : (9, C, OC)         conv1a weight, one (C, OC) matrix per tap
    w1b_ref  : (9, OC, OCP)       conv1b weight per tap, out-channels zero-padded
    w2_ref   : (16*C, OCP)        conv2 weight matrix, out-channels zero-padded
    b1a_ref  : (1, OC)
    bsum_ref : (1, OCP)           b1b + b2 (zero-padded)
    out_ref  : (H2*W2, OCP)       lane-dense result (sliced back to OC outside)
    y1cp_ref : (2, H1+2, W2+1, OC) VMEM scratch: column-parity split of the
                                  zero-padded conv1a output,
                                  y1cp[q, r, b, :] = y1pad[r, 2*b + q, :]
    """
    OC = w1a_ref.shape[-1]
    H1 = y1cp_ref.shape[1] - 2
    W2 = y1cp_ref.shape[2] - 1
    H2 = H1 // 2

    b1a = b1a_ref[...]            # (1, OC)
    bsum = bsum_ref[...]          # (1, OCP)  -- biases of conv1b and conv2 folded

    # Zero the staging scratch once: its untouched border supplies the zero
    # padding (p=1) that conv1b expects, so no separate pad step is needed.
    y1cp_ref[...] = jnp.zeros_like(y1cp_ref)

    # ---- conv1a: 3x3 / stride 2 / pad 1.  Each output row is computed split
    # by output-column parity q, so every tap read from the parity-4 input and
    # every scratch write is a contiguous slice (no strided VMEM access).
    for u in range(H1):
        for q in (0, 1):                       # output-column parity
            acc = jnp.zeros((W2, OC), jnp.float32)
            for i in range(3):
                for j in range(3):
                    t = 2 * q + j              # padded-input column offset mod 4
                    xs = x4_ref[t % 4, 2 * u + i, t // 4:t // 4 + W2, :]   # (W2, C)
                    acc = acc + jnp.dot(xs, w1a_ref[3 * i + j],
                                        preferred_element_type=jnp.float32)
            acc = acc + b1a
            if q == 0:     # even y1 columns -> odd y1pad columns (parity slot 1)
                y1cp_ref[1, u + 1, 0:W2, :] = acc
            else:          # odd y1 columns  -> even y1pad columns (parity slot 0)
                y1cp_ref[0, u + 1, 1:1 + W2, :] = acc

    # ---- conv2 (4x4 / s4): one MXU matmul over all output positions.
    acc2 = jnp.dot(a2_ref[...], w2_ref[...],
                   preferred_element_type=jnp.float32)        # (H2*W2, OCP)

    # ---- conv1b (3x3 / s2 / p1 on y1) + conv2 + biases, fused into one
    # lane-dense (128-wide) store per output row.
    for A in range(H2):
        acc = acc2[A * W2:(A + 1) * W2, :]
        for k in range(3):
            for l in range(3):
                ys = y1cp_ref[l % 2, 2 * A + k, l // 2:l // 2 + W2, :]     # (W2, OC)
                acc = acc + jnp.dot(ys, w1b_ref[3 * k + l],
                                    preferred_element_type=jnp.float32)
        out_ref[A * W2:(A + 1) * W2, :] = (acc + bsum).astype(out_ref.dtype)


# ------------------------------ wrapper (layout only) ------------------------

def _weight_taps(w_oihw, out_pad=None):
    """PyTorch [O, I, kH, kW] -> (kH*kW, I, O) tap-major matrices (pad O)."""
    O, I, kH, kW = w_oihw.shape
    taps = jnp.transpose(w_oihw, (2, 3, 1, 0)).reshape(kH * kW, I, O)
    if out_pad is not None and out_pad > O:
        taps = jnp.pad(taps, ((0, 0), (0, 0), (0, out_pad - O)))
    return taps


def _weight_matrix(w_oihw, out_pad=None):
    """PyTorch [O, I, kH, kW] -> (kH*kW*I, O) im2col weight matrix (pad O)."""
    O, I, kH, kW = w_oihw.shape
    m = jnp.transpose(w_oihw, (2, 3, 1, 0)).reshape(kH * kW * I, O)
    if out_pad is not None and out_pad > O:
        m = jnp.pad(m, ((0, 0), (0, out_pad - O)))
    return m


def resnet_block_forward(x_nchw, params):
    N, C, H, W = x_nchw.shape
    OC = params["w1a"].shape[0]
    assert H % 4 == 0 and W % 4 == 0, "branch shapes require H, W divisible by 4"
    H1, W1 = H // 2, W // 2              # after first 3x3/s2/p1
    H2, W2 = H1 // 2, W1 // 2            # after second 3x3/s2/p1  (== H//4, W//4)
    M2 = H2 * W2
    OCP = max(128, -(-OC // 128) * 128)  # lane-dense padded output channels

    x = jnp.transpose(x_nchw, (0, 2, 3, 1))                         # NHWC

    # Column-parity-4 split of the (pad=1) zero-padded input.  With it, every
    # 3x3/s2 tap of conv1a reads a contiguous column range in the kernel.
    Wp4 = -(-(W + 2) // 4) * 4
    Wc = Wp4 // 4
    xpe = jnp.pad(x, ((0, 0), (1, 1), (1, Wp4 - (W + 1)), (0, 0)))  # (N, H+2, Wp4, C)
    x4 = xpe.reshape(N, H + 2, Wc, 4, C).transpose(0, 3, 1, 2, 4)   # (N, 4, H+2, Wc, C)

    # conv2 (4x4 / stride 4) has non-overlapping windows: its "im2col" is a pure
    # space-to-depth permutation (no data expansion), done here as layout prep.
    a2 = (x.reshape(N, H2, 4, W2, 4, C)
            .transpose(0, 1, 3, 2, 4, 5)
            .reshape(N, M2, 16 * C))

    w1a = _weight_taps(params["w1a"])                  # (9, C, OC)
    w1b = _weight_taps(params["w1b"], out_pad=OCP)     # (9, OC, OCP)
    w2 = _weight_matrix(params["w2"], out_pad=OCP)     # (16*C, OCP)
    b1a = params["b1a"].reshape(1, OC)
    bsum = jnp.pad((params["b1b"] + params["b2"]).reshape(1, OC),
                   ((0, 0), (0, OCP - OC)))

    out = pl.pallas_call(
        _resnet_block_kernel,
        out_shape=jax.ShapeDtypeStruct((N, M2, OCP), x.dtype),
        grid_spec=pltpu.PrefetchScalarGridSpec(
            num_scalar_prefetch=0,
            grid=(N,),
            in_specs=[
                pl.BlockSpec((None, 4, H + 2, Wc, C), lambda n: (n, 0, 0, 0, 0)),
                pl.BlockSpec((None, M2, 16 * C), lambda n: (n, 0, 0)),
                pl.BlockSpec((9, C, OC), lambda n: (0, 0, 0)),
                pl.BlockSpec((9, OC, OCP), lambda n: (0, 0, 0)),
                pl.BlockSpec((16 * C, OCP), lambda n: (0, 0)),
                pl.BlockSpec((1, OC), lambda n: (0, 0)),
                pl.BlockSpec((1, OCP), lambda n: (0, 0)),
            ],
            out_specs=pl.BlockSpec((None, M2, OCP), lambda n: (n, 0, 0)),
            scratch_shapes=[pltpu.VMEM((2, H1 + 2, W2 + 1, OC), jnp.float32)],
        ),
        compiler_params=pltpu.CompilerParams(
            dimension_semantics=("parallel",)),
    )(x4, a2, w1a, w1b, w2, b1a, bsum)

    out = out[:, :, :OC].reshape(N, H2, W2, OC)
    return jnp.transpose(out, (0, 3, 1, 2))            # back to NCHW


# ------------------------------ reference (pure JAX) -------------------------

def _conv_ref(x_nchw, w, b, stride, pad):
    y = lax.conv_general_dilated(
        x_nchw, w, window_strides=(stride, stride),
        padding=((pad, pad), (pad, pad)),
        dimension_numbers=("NCHW", "OIHW", "NCHW"))
    return y + b.reshape(1, -1, 1, 1)


def resnet_block_ref(x, p):
    y1 = _conv_ref(_conv_ref(x, p["w1a"], p["b1a"], 2, 1), p["w1b"], p["b1b"], 2, 1)
    y2 = _conv_ref(x, p["w2"], p["b2"], 4, 0)
    return y1 + y2


# ------------------------------ main -----------------------------------------

if __name__ == "__main__":
    in_c, out_c = 4, 8
    N, H, W = 2, 16, 16

    key = jax.random.PRNGKey(0)
    k0, k1, k2, k3, k4, k5, k6 = jax.random.split(key, 7)

    params = {
        "w1a": 0.1 * jax.random.normal(k0, (out_c, in_c, 3, 3), jnp.float32),
        "b1a": 0.1 * jax.random.normal(k1, (out_c,), jnp.float32),
        "w1b": 0.1 * jax.random.normal(k2, (out_c, out_c, 3, 3), jnp.float32),
        "b1b": 0.1 * jax.random.normal(k3, (out_c,), jnp.float32),
        "w2": 0.1 * jax.random.normal(k4, (out_c, in_c, 4, 4), jnp.float32),
        "b2": 0.1 * jax.random.normal(k5, (out_c,), jnp.float32),
    }
    x = jax.random.normal(k6, (N, in_c, H, W), jnp.float32)

    out = jax.jit(resnet_block_forward)(x, params)
    out = jax.block_until_ready(out)

    ref = resnet_block_ref(x, params)
    assert out.shape == (N, out_c, H // 4, W // 4), out.shape
    assert jnp.allclose(out, ref, atol=1e-4, rtol=1e-4), "mismatch vs reference"

    print("KERNEL_OK")
</pallas_src>

<mosaic_0001>
module attributes {stable_mosaic.version = 11 : i64} {
  func.func @_resnet_block_kernel(%arg0: i32, %arg1: memref<1x4x18x5x4xf32, #tpu.memory_space<vmem>>, %arg2: memref<1x16x64xf32, #tpu.memory_space<vmem>>, %arg3: memref<9x4x8xf32, #tpu.memory_space<vmem>>, %arg4: memref<9x8x128xf32, #tpu.memory_space<vmem>>, %arg5: memref<64x128xf32, #tpu.memory_space<vmem>>, %arg6: memref<1x8xf32, #tpu.memory_space<vmem>>, %arg7: memref<1x128xf32, #tpu.memory_space<vmem>>, %arg8: memref<1x16x128xf32, #tpu.memory_space<vmem>>, %arg9: memref<2x10x5x8xf32, #tpu.memory_space<vmem>>) attributes {dimension_semantics = [#tpu.dimension_semantics<parallel>], iteration_bounds = array<i64: 2>, scalar_prefetch = 0 : i64, scratch_operands = 1 : i64, tpu.core_type = #tpu.core_type<tc>, window_params = [{transform_indices = @transform_0, window_bounds = array<i64: 1, 4, 18, 5, 4>}, {transform_indices = @transform_1, window_bounds = array<i64: 1, 16, 64>}, {pipeline_mode = #tpu.pipeline_mode<synchronous>, transform_indices = @transform_2, window_bounds = array<i64: 9, 4, 8>}, {pipeline_mode = #tpu.pipeline_mode<synchronous>, transform_indices = @transform_3, window_bounds = array<i64: 9, 8, 128>}, {pipeline_mode = #tpu.pipeline_mode<synchronous>, transform_indices = @transform_4, window_bounds = array<i64: 64, 128>}, {pipeline_mode = #tpu.pipeline_mode<synchronous>, transform_indices = @transform_5, window_bounds = array<i64: 1, 8>}, {pipeline_mode = #tpu.pipeline_mode<synchronous>, transform_indices = @transform_6, window_bounds = array<i64: 1, 128>}, {transform_indices = @transform_7, window_bounds = array<i64: 1, 16, 128>}]} {
    %c0 = arith.constant 0 : index
    %c0_0 = arith.constant 0 : index
    %0 = vector.load %arg6[%c0, %c0_0] : memref<1x8xf32, #tpu.memory_space<vmem>>, vector<1x8xf32>
    %c0_1 = arith.constant 0 : index
    %c0_2 = arith.constant 0 : index
    %1 = vector.load %arg7[%c0_1, %c0_2] : memref<1x128xf32, #tpu.memory_space<vmem>>, vector<1x128xf32>
    %cst = arith.constant 0.000000e+00 : f32
    %2 = vector.broadcast %cst : f32 to vector<2x10x5x8xf32>
    %c0_3 = arith.constant 0 : index
    %c0_4 = arith.constant 0 : index
    %c0_5 = arith.constant 0 : index
    %c0_6 = arith.constant 0 : index
    %3 = vector.load %arg9[%c0_3, %c0_4, %c0_5, %c0_6] : memref<2x10x5x8xf32, #tpu.memory_space<vmem>>, vector<2x10x5x8xf32>
    tpu.vector_store %arg9[%c0_3, %c0_4, %c0_5, %c0_6], %2 {strides = array<i32>} : memref<2x10x5x8xf32, #tpu.memory_space<vmem>>, vector<2x10x5x8xf32>,
    %cst_7 = arith.constant 0.000000e+00 : f32
    %4 = vector.broadcast %cst_7 : f32 to vector<4x8xf32>
    %c0_8 = arith.constant 0 : index
    %c0_9 = arith.constant 0 : index
    %c0_10 = arith.constant 0 : index
    %c0_11 = arith.constant 0 : index
    %c0_12 = arith.constant 0 : index
    %5 = vector.load %arg1[%c0_8, %c0_9, %c0_10, %c0_11, %c0_12] : memref<1x4x18x5x4xf32, #tpu.memory_space<vmem>>, vector<1x1x1x4x4xf32>
    %6 = vector.shape_cast %5 : vector<1x1x1x4x4xf32> to vector<4x4xf32>
    %c0_13 = arith.constant 0 : index
    %c0_14 = arith.constant 0 : index
    %c0_15 = arith.constant 0 : index
    %7 = vector.load %arg3[%c0_13, %c0_14, %c0_15] : memref<9x4x8xf32, #tpu.memory_space<vmem>>, vector<1x4x8xf32>
    %8 = vector.shape_cast %7 : vector<1x4x8xf32> to vector<4x8xf32>
    %cst_16 = arith.constant dense<0.000000e+00> : vector<4x8xf32>
    %9 = tpu.matmul %6, %8, %cst_16 {dimension_numbers = #tpu.dot_dimension_numbers<[1], [0], [0], [1], [0, 0, 1, 1], [], []>} : vector<4x4xf32>, vector<4x8xf32>, vector<4x8xf32> -> vector<4x8xf32>
    %10 = arith.addf %4, %9 : vector<4x8xf32>
    %c0_17 = arith.constant 0 : index
    %c1 = arith.constant 1 : index
    %c0_18 = arith.constant 0 : index
    %c0_19 = arith.constant 0 : index
    %c0_20 = arith.constant 0 : index
    %11 = vector.load %arg1[%c0_17, %c1, %c0_18, %c0_19, %c0_20] : memref<1x4x18x5x4xf32, #tpu.memory_space<vmem>>, vector<1x1x1x4x4xf32>
    %12 = vector.shape_cast %11 : vector<1x1x1x4x4xf32> to vector<4x4xf32>
    %c1_21 = arith.constant 1 : index
    %c0_22 = arith.constant 0 : index
    %c0_23 = arith.constant 0 : index
    %13 = vector.load %arg3[%c1_21, %c0_22, %c0_23] : memref<9x4x8xf32, #tpu.memory_space<vmem>>, vector<1x4x8xf32>
    %14 = vector.shape_cast %13 : vector<1x4x8xf32> to vector<4x8xf32>
    %cst_24 = arith.constant dense<0.000000e+00> : vector<4x8xf32>
    %15 = tpu.matmul %12, %14, %cst_24 {dimension_numbers = #tpu.dot_dimension_numbers<[1], [0], [0], [1], [0, 0, 1, 1], [], []>} : vector<4x4xf32>, vector<4x8xf32>, vector<4x8xf32> -> vector<4x8xf32>
    %16 = arith.addf %10, %15 : vector<4x8xf32>
    %c0_25 = arith.constant 0 : index
    %c2 = arith.constant 2 : index
    %c0_26 = arith.constant 0 : index
    %c0_27 = arith.constant 0 : index
    %c0_28 = arith.constant 0 : index
    %17 = vector.load %arg1[%c0_25, %c2, %c0_26, %c0_27, %c0_28] : memref<1x4x18x5x4xf32, #tpu.memory_space<vmem>>, vector<1x1x1x4x4xf32>
    %18 = vector.shape_cast %17 : vector<1x1x1x4x4xf32> to vector<4x4xf32>
    %c2_29 = arith.constant 2 : index
    %c0_30 = arith.constant 0 : index
    %c0_31 = arith.constant 0 : index
    %19 = vector.load %arg3[%c2_29, %c0_30, %c0_31] : memref<9x4x8xf32, #tpu.memory_space<vmem>>, vector<1x4x8xf32>
    %20 = vector.shape_cast %19 : vector<1x4x8xf32> to vector<4x8xf32>
    %cst_32 = arith.constant dense<0.000000e+00> : vector<4x8xf32>
    %21 = tpu.matmul %18, %20, %cst_32 {dimension_numbers = #tpu.dot_dimension_numbers<[1], [0], [0], [1], [0, 0, 1, 1], [], []>} : vector<4x4xf32>, vector<4x8xf32>, vector<4x8xf32> -> vector<4x8xf32>
    %22 = arith.addf %16, %21 : vector<4x8xf32>
    %c0_33 = arith.constant 0 : index
    %c0_34 = arith.constant 0 : index
    %c1_35 = arith.constant 1 : index
    %c0_36 = arith.constant 0 : index
    %c0_37 = arith.constant 0 : index
    %23 = vector.load %arg1[%c0_33, %c0_34, %c1_35, %c0_36, %c0_37] : memref<1x4x18x5x4xf32, #tpu.memory_space<vmem>>, vector<1x1x1x4x4xf32>
    %24 = vector.shape_cast %23 : vector<1x1x1x4x4xf32> to vector<4x4xf32>
    %c3 = arith.constant 3 : index
    %c0_38 = arith.constant 0 : index
    %c0_39 = arith.constant 0 : index
    %25 = vector.load %arg3[%c3, %c0_38, %c0_39] : memref<9x4x8xf32, #tpu.memory_space<vmem>>, vector<1x4x8xf32>
    %26 = vector.shape_cast %25 : vector<1x4x8xf32> to vector<4x8xf32>
    %cst_40 = arith.constant dense<0.000000e+00> : vector<4x8xf32>
    %27 = tpu.matmul %24, %26, %cst_40 {dimension_numbers = #tpu.dot_dimension_numbers<[1], [0], [0], [1], [0, 0, 1, 1], [], []>} : vector<4x4xf32>, vector<4x8xf32>, vector<4x8xf32> -> vector<4x8xf32>
    %28 = arith.addf %22, %27 : vector<4x8xf32>
    %c0_41 = arith.constant 0 : index
    %c1_42 = arith.constant 1 : index
    %c1_43 = arith.constant 1 : index
    %c0_44 = arith.constant 0 : index
    %c0_45 = arith.constant 0 : index
    %29 = vector.load %arg1[%c0_41, %c1_42, %c1_43, %c0_44, %c0_45] : memref<1x4x18x5x4xf32, #tpu.memory_space<vmem>>, vector<1x1x1x4x4xf32>
    %30 = vector.shape_cast %29 : vector<1x1x1x4x4xf32> to vector<4x4xf32>
    %c4 = arith.constant 4 : index
    %c0_46 = arith.constant 0 : index
    %c0_47 = arith.constant 0 : index
    %31 = vector.load %arg3[%c4, %c0_46, %c0_47] : memref<9x4x8xf32, #tpu.memory_space<vmem>>, vector<1x4x8xf32>
    %32 = vector.shape_cast %31 : vector<1x4x8xf32> to vector<4x8xf32>
    %cst_48 = arith.constant dense<0.000000e+00> : vector<4x8xf32>
    %33 = tpu.matmul %30, %32, %cst_48 {dimension_numbers = #tpu.dot_dimension_numbers<[1], [0], [0], [1], [0, 0, 1, 1], [], []>} : vector<4x4xf32>, vector<4x8xf32>, vector<4x8xf32> -> vector<4x8xf32>
    %34 = arith.addf %28, %33 : vector<4x8xf32>
    %c0_49 = arith.constant 0 : index
    %c2_50 = arith.constant 2 : index
    %c1_51 = arith.constant 1 : index
    %c0_52 = arith.constant 0 : index
    %c0_53 = arith.constant 0 : index
    %35 = vector.load %arg1[%c0_49, %c2_50, %c1_51, %c0_52, %c0_53] : memref<1x4x18x5x4xf32, #tpu.memory_space<vmem>>, vector<1x1x1x4x4xf32>
    %36 = vector.shape_cast %35 : vector<1x1x1x4x4xf32> to vector<4x4xf32>
    %c5 = arith.constant 5 : index
    %c0_54 = arith.constant 0 : index
    %c0_55 = arith.constant 0 : index
    %37 = vector.load %arg3[%c5, %c0_54, %c0_55] : memref<9x4x8xf32, #tpu.memory_space<vmem>>, vector<1x4x8xf32>
    %38 = vector.shape_cast %37 : vector<1x4x8xf32> to vector<4x8xf32>
    %cst_56 = arith.constant dense<0.000000e+00> : vector<4x8xf32>
    %39 = tpu.matmul %36, %38, %cst_56 {dimension_numbers = #tpu.dot_dimension_numbers<[1], [0], [0], [1], [0, 0, 1, 1], [], []>} : vector<4x4xf32>, vector<4x8xf32>, vector<4x8xf32> -> vector<4x8xf32>
    %40 = arith.addf %34, %39 : vector<4x8xf32>
    %c0_57 = arith.constant 0 : index
    %c0_58 = arith.constant 0 : index
    %c2_59 = arith.constant 2 : index
    %c0_60 = arith.constant 0 : index
    %c0_61 = arith.constant 0 : index
    %41 = vector.load %arg1[%c0_57, %c0_58, %c2_59, %c0_60, %c0_61] : memref<1x4x18x5x4xf32, #tpu.memory_space<vmem>>, vector<1x1x1x4x4xf32>
    %42 = vector.shape_cast %41 : vector<1x1x1x4x4xf32> to vector<4x4xf32>
    %c6 = arith.constant 6 : index
    %c0_62 = arith.constant 0 : index
    %c0_63 = arith.constant 0 : index
    %43 = vector.load %arg3[%c6, %c0_62, %c0_63] : memref<9x4x8xf32, #tpu.memory_space<vmem>>, vector<1x4x8xf32>
    %44 = vector.shape_cast %43 : vector<1x4x8xf32> to vector<4x8xf32>
    %cst_64 = arith.constant dense<0.000000e+00> : vector<4x8xf32>
    %45 = tpu.matmul %42, %44, %cst_64 {dimension_numbers = #tpu.dot_dimension_numbers<[1], [0], [0], [1], [0, 0, 1, 1], [], []>} : vector<4x4xf32>, vector<4x8xf32>, vector<4x8xf32> -> vector<4x8xf32>
    %46 = arith.addf %40, %45 : vector<4x8xf32>
    %c0_65 = arith.constant 0 : index
    %c1_66 = arith.constant 1 : index
    %c2_67 = arith.constant 2 : index
    %c0_68 = arith.constant 0 : index
    %c0_69 = arith.constant 0 : index
    %47 = vector.load %arg1[%c0_65, %c1_66, %c2_67, %c0_68, %c0_69] : memref<1x4x18x5x4xf32, #tpu.memory_space<vmem>>, vector<1x1x1x4x4xf32>
    %48 = vector.shape_cast %47 : vector<1x1x1x4x4xf32> to vector<4x4xf32>
    %c7 = arith.constant 7 : index
    %c0_70 = arith.constant 0 : index
    %c0_71 = arith.constant 0 : index
    %49 = vector.load %arg3[%c7, %c0_70, %c0_71] : memref<9x4x8xf32, #tpu.memory_space<vmem>>, vector<1x4x8xf32>
    %50 = vector.shape_cast %49 : vector<1x4x8xf32> to vector<4x8xf32>
    %cst_72 = arith.constant dense<0.000000e+00> : vector<4x8xf32>
    %51 = tpu.matmul %48, %50, %cst_72 {dimension_numbers = #tpu.dot_dimension_numbers<[1], [0], [0], [1], [0, 0, 1, 1], [], []>} : vector<4x4xf32>, vector<4x8xf32>, vector<4x8xf32> -> vector<4x8xf32>
    %52 = arith.addf %46, %51 : vector<4x8xf32>
    %c0_73 = arith.constant 0 : index
    %c2_74 = arith.constant 2 : index
    %c2_75 = arith.constant 2 : index
    %c0_76 = arith.constant 0 : index
    %c0_77 = arith.constant 0 : index
    %53 = vector.load %arg1[%c0_73, %c2_74, %c2_75, %c0_76, %c0_77] : memref<1x4x18x5x4xf32, #tpu.memory_space<vmem>>, vector<1x1x1x4x4xf32>
    %54 = vector.shape_cast %53 : vector<1x1x1x4x4xf32> to vector<4x4xf32>
    %c8 = arith.constant 8 : index
    %c0_78 = arith.constant 0 : index
    %c0_79 = arith.constant 0 : index
    %55 = vector.load %arg3[%c8, %c0_78, %c0_79] : memref<9x4x8xf32, #tpu.memory_space<vmem>>, vector<1x4x8xf32>
    %56 = vector.shape_cast %55 : vector<1x4x8xf32> to vector<4x8xf32>
    %cst_80 = arith.constant dense<0.000000e+00> : vector<4x8xf32>
    %57 = tpu.matmul %54, %56, %cst_80 {dimension_numbers = #tpu.dot_dimension_numbers<[1], [0], [0], [1], [0, 0, 1, 1], [], []>} : vector<4x4xf32>, vector<4x8xf32>, vector<4x8xf32> -> vector<4x8xf32>
    %58 = arith.addf %52, %57 : vector<4x8xf32>
    %59 = vector.broadcast %0 : vector<1x8xf32> to vector<4x8xf32>
    %60 = arith.addf %58, %59 : vector<4x8xf32>
    %c1_81 = arith.constant 1 : index
    %c1_82 = arith.constant 1 : index
    %c0_83 = arith.constant 0 : index
    %c0_84 = arith.constant 0 : index
    %61 = vector.load %arg9[%c1_81, %c1_82, %c0_83, %c0_84] : memref<2x10x5x8xf32, #tpu.memory_space<vmem>>, vector<1x1x4x8xf32>
    %62 = vector.shape_cast %61 : vector<1x1x4x8xf32> to vector<4x8xf32>
    %63 = vector.shape_cast %60 : vector<4x8xf32> to vector<1x1x4x8xf32>
    tpu.vector_store %arg9[%c1_81, %c1_82, %c0_83, %c0_84], %63 {strides = array<i32>} : memref<2x10x5x8xf32, #tpu.memory_space<vmem>>, vector<1x1x4x8xf32>,
    %cst_85 = arith.constant 0.000000e+00 : f32
    %64 = vector.broadcast %cst_85 : f32 to vector<4x8xf32>
    %c0_86 = arith.constant 0 : index
    %c2_87 = arith.constant 2 : index
    %c0_88 = arith.constant 0 : index
    %c0_89 = arith.constant 0 : index
    %c0_90 = arith.constant 0 : index
    %65 = vector.load %arg1[%c0_86, %c2_87, %c0_88, %c0_89, %c0_90] : memref<1x4x18x5x4xf32, #tpu.memory_space<vmem>>, vector<1x1x1x4x4xf32>
    %66 = vector.shape_cast %65 : vector<1x1x1x4x4xf32> to vector<4x4xf32>
    %c0_91 = arith.constant 0 : index
    %c0_92 = arith.constant 0 : index
    %c0_93 = arith.constant 0 : index
    %67 = vector.load %arg3[%c0_91, %c0_92, %c0_93] : memref<9x4x8xf32, #tpu.memory_space<vmem>>, vector<1x4x8xf32>
    %68 = vector.shape_cast %67 : vector<1x4x8xf32> to vector<4x8xf32>
    %cst_94 = arith.constant dense<0.000000e+00> : vector<4x8xf32>
    %69 = tpu.matmul %66, %68, %cst_94 {dimension_numbers = #tpu.dot_dimension_numbers<[1], [0], [0], [1], [0, 0, 1, 1], [], []>} : vector<4x4xf32>, vector<4x8xf32>, vector<4x8xf32> -> vector<4x8xf32>
    %70 = arith.addf %64, %69 : vector<4x8xf32>
    %c0_95 = arith.constant 0 : index
    %c3_96 = arith.constant 3 : index
    %c0_97 = arith.constant 0 : index
    %c0_98 = arith.constant 0 : index
    %c0_99 = arith.constant 0 : index
    %71 = vector.load %arg1[%c0_95, %c3_96, %c0_97, %c0_98, %c0_99] : memref<1x4x18x5x4xf32, #tpu.memory_space<vmem>>, vector<1x1x1x4x4xf32>
    %72 = vector.shape_cast %71 : vector<1x1x1x4x4xf32> to vector<4x4xf32>
    %c1_100 = arith.constant 1 : index
    %c0_101 = arith.constant 0 : index
    %c0_102 = arith.constant 0 : index
    %73 = vector.load %arg3[%c1_100, %c0_101, %c0_102] : memref<9x4x8xf32, #tpu.memory_space<vmem>>, vector<1x4x8xf32>
    %74 = vector.shape_cast %73 : vector<1x4x8xf32> to vector<4x8xf32>
    %cst_103 = arith.constant dense<0.000000e+00> : vector<4x8xf32>
    %75 = tpu.matmul %72, %74, %cst_103 {dimension_numbers = #tpu.dot_dimension_numbers<[1], [0], [0], [1], [0, 0, 1, 1], [], []>} : vector<4x4xf32>, vector<4x8xf32>, vector<4x8xf32> -> vector<4x8xf32>
    %76 = arith.addf %70, %75 : vector<4x8xf32>
    %c0_104 = arith.constant 0 : index
    %c0_105 = arith.constant 0 : index
    %c0_106 = arith.constant 0 : index
    %c1_107 = arith.constant 1 : index
    %c0_108 = arith.constant 0 : index
    %77 = vector.load %arg1[%c0_104, %c0_105, %c0_106, %c1_107, %c0_108] : memref<1x4x18x5x4xf32, #tpu.memory_space<vmem>>, vector<1x1x1x4x4xf32>
    %78 = vector.shape_cast %77 : vector<1x1x1x4x4xf32> to vector<4x4xf32>
    %c2_109 = arith.constant 2 : index
    %c0_110 = arith.constant 0 : index
    %c0_111 = arith.constant 0 : index
    %79 = vector.load %arg3[%c2_109, %c0_110, %c0_111] : memref<9x4x8xf32, #tpu.memory_space<vmem>>, vector<1x4x8xf32>
    %80 = vector.shape_cast %79 : vector<1x4x8xf32> to vector<4x8xf32>
    %cst_112 = arith.constant dense<0.000000e+00> : vector<4x8xf32>
    %81 = tpu.matmul %78, %80, %cst_112 {dimension_numbers = #tpu.dot_dimension_numbers<[1], [0], [0], [1], [0, 0, 1, 1], [], []>} : vector<4x4xf32>, vector<4x8xf32>, vector<4x8xf32> -> vector<4x8xf32>
    %82 = arith.addf %76, %81 : vector<4x8xf32>
    %c0_113 = arith.constant 0 : index
    %c2_114 = arith.constant 2 : index
    %c1_115 = arith.constant 1 : index
    %c0_116 = arith.constant 0 : index
    %c0_117 = arith.constant 0 : index
    %83 = vector.load %arg1[%c0_113, %c2_114, %c1_115, %c0_116, %c0_117] : memref<1x4x18x5x4xf32, #tpu.memory_space<vmem>>, vector<1x1x1x4x4xf32>
    %84 = vector.shape_cast %83 : vector<1x1x1x4x4xf32> to vector<4x4xf32>
    %c3_118 = arith.constant 3 : index
    %c0_119 = arith.constant 0 : index
    %c0_120 = arith.constant 0 : index
    %85 = vector.load %arg3[%c3_118, %c0_119, %c0_120] : memref<9x4x8xf32, #tpu.memory_space<vmem>>, vector<1x4x8xf32>
    %86 = vector.shape_cast %85 : vector<1x4x8xf32> to vector<4x8xf32>
    %cst_121 = arith.constant dense<0.000000e+00> : vector<4x8xf32>
    %87 = tpu.matmul %84, %86, %cst_121 {dimension_numbers = #tpu.dot_dimension_numbers<[1], [0], [0], [1], [0, 0, 1, 1], [], []>} : vector<4x4xf32>, vector<4x8xf32>, vector<4x8xf32> -> vector<4x8xf32>
    %88 = arith.addf %82, %87 : vector<4x8xf32>
    %c0_122 = arith.constant 0 : index
    %c3_123 = arith.constant 3 : index
    %c1_124 = arith.constant 1 : index
    %c0_125 = arith.constant 0 : index
    %c0_126 = arith.constant 0 : index
    %89 = vector.load %arg1[%c0_122, %c3_123, %c1_124, %c0_125, %c0_126] : memref<1x4x18x5x4xf32, #tpu.memory_space<vmem>>, vector<1x1x1x4x4xf32>
    %90 = vector.shape_cast %89 : vector<1x1x1x4x4xf32> to vector<4x4xf32>
    %c4_127 = arith.constant 4 : index
    %c0_128 = arith.constant 0 : index
    %c0_129 = arith.constant 0 : index
    %91 = vector.load %arg3[%c4_127, %c0_128, %c0_129] : memref<9x4x8xf32, #tpu.memory_space<vmem>>, vector<1x4x8xf32>
    %92 = vector.shape_cast %91 : vector<1x4x8xf32> to vector<4x8xf32>
    %cst_130 = arith.constant dense<0.000000e+00> : vector<4x8xf32>
    %93 = tpu.matmul %90, %92, %cst_130 {dimension_numbers = #tpu.dot_dimension_numbers<[1], [0], [0], [1], [0, 0, 1, 1], [], []>} : vector<4x4xf32>, vector<4x8xf32>, vector<4x8xf32> -> vector<4x8xf32>
    %94 = arith.addf %88, %93 : vector<4x8xf32>
    %c0_131 = arith.constant 0 : index
    %c0_132 = arith.constant 0 : index
    %c1_133 = arith.constant 1 : index
    %c1_134 = arith.constant 1 : index
    %c0_135 = arith.constant 0 : index
    %95 = vector.load %arg1[%c0_131, %c0_132, %c1_133, %c1_134, %c0_135] : memref<1x4x18x5x4xf32, #tpu.memory_space<vmem>>, vector<1x1x1x4x4xf32>
    %96 = vector.shape_cast %95 : vector<1x1x1x4x4xf32> to vector<4x4xf32>
    %c5_136 = arith.constant 5 : index
    %c0_137 = arith.constant 0 : index
    %c0_138 = arith.constant 0 : index
    %97 = vector.load %arg3[%c5_136, %c0_137, %c0_138] : memref<9x4x8xf32, #tpu.memory_space<vmem>>, vector<1x4x8xf32>
    %98 = vector.shape_cast %97 : vector<1x4x8xf32> to vector<4x8xf32>
    %cst_139 = arith.constant dense<0.000000e+00> : vector<4x8xf32>
    %99 = tpu.matmul %96, %98, %cst_139 {dimension_numbers = #tpu.dot_dimension_numbers<[1], [0], [0], [1], [0, 0, 1, 1], [], []>} : vector<4x4xf32>, vector<4x8xf32>, vector<4x8xf32> -> vector<4x8xf32>
    %100 = arith.addf %94, %99 : vector<4x8xf32>
    %c0_140 = arith.constant 0 : index
    %c2_141 = arith.constant 2 : index
    %c2_142 = arith.constant 2 : index
    %c0_143 = arith.constant 0 : index
    %c0_144 = arith.constant 0 : index
    %101 = vector.load %arg1[%c0_140, %c2_141, %c2_142, %c0_143, %c0_144] : memref<1x4x18x5x4xf32, #tpu.memory_space<vmem>>, vector<1x1x1x4x4xf32>
    %102 = vector.shape_cast %101 : vector<1x1x1x4x4xf32> to vector<4x4xf32>
    %c6_145 = arith.constant 6 : index
    %c0_146 = arith.constant 0 : index
    %c0_147 = arith.constant 0 : index
    %103 = vector.load %arg3[%c6_145, %c0_146, %c0_147] : memref<9x4x8xf32, #tpu.memory_space<vmem>>, vector<1x4x8xf32>
    %104 = vector.shape_cast %103 : vector<1x4x8xf32> to vector<4x8xf32>
    %cst_148 = arith.constant dense<0.000000e+00> : vector<4x8xf32>
    %105 = tpu.matmul %102, %104, %cst_148 {dimension_numbers = #tpu.dot_dimension_numbers<[1], [0], [0], [1], [0, 0, 1, 1], [], []>} : vector<4x4xf32>, vector<4x8xf32>, vector<4x8xf32> -> vector<4x8xf32>
    %106 = arith.addf %100, %105 : vector<4x8xf32>
    %c0_149 = arith.constant 0 : index
    %c3_150 = arith.constant 3 : index
    %c2_151 = arith.constant 2 : index
    %c0_152 = arith.constant 0 : index
    %c0_153 = arith.constant 0 : index
    %107 = vector.load %arg1[%c0_149, %c3_150, %c2_151, %c0_152, %c0_153] : memref<1x4x18x5x4xf32, #tpu.memory_space<vmem>>, vector<1x1x1x4x4xf32>
    %108 = vector.shape_cast %107 : vector<1x1x1x4x4xf32> to vector<4x4xf32>
    %c7_154 = arith.constant 7 : index
    %c0_155 = arith.constant 0 : index
    %c0_156 = arith.constant 0 : index
    %109 = vector.load %arg3[%c7_154, %c0_155, %c0_156] : memref<9x4x8xf32, #tpu.memory_space<vmem>>, vector<1x4x8xf32>
    %110 = vector.shape_cast %109 : vector<1x4x8xf32> to vector<4x8xf32>
    %cst_157 = arith.constant dense<0.000000e+00> : vector<4x8xf32>
    %111 = tpu.matmul %108, %110, %cst_157 {dimension_numbers = #tpu.dot_dimension_numbers<[1], [0], [0], [1], [0, 0, 1, 1], [], []>} : vector<4x4xf32>, vector<4x8xf32>, vector<4x8xf32> -> vector<4x8xf32>
    %112 = arith.addf %106, %111 : vector<4x8xf32>
    %c0_158 = arith.constant 0 : index
    %c0_159 = arith.constant 0 : index
    %c2_160 = arith.constant 2 : index
    %c1_161 = arith.constant 1 : index
    %c0_162 = arith.constant 0 : index
    %113 = vector.load %arg1[%c0_158, %c0_159, %c2_160, %c1_161, %c0_162] : memref<1x4x18x5x4xf32, #tpu.memory_space<vmem>>, vector<1x1x1x4x4xf32>
    %114 = vector.shape_cast %113 : vector<1x1x1x4x4xf32> to vector<4x4xf32>
    %c8_163 = arith.constant 8 : index
    %c0_164 = arith.constant 0 : index
    %c0_165 = arith.constant 0 : index
    %115 = vector.load %arg3[%c8_163, %c0_164, %c0_165] : memref<9x4x8xf32, #tpu.memory_space<vmem>>, vector<1x4x8xf32>
    %116 = vector.shape_cast %115 : vector<1x4x8xf32> to vector<4x8xf32>
    %cst_166 = arith.constant dense<0.000000e+00> : vector<4x8xf32>
    %117 = tpu.matmul %114, %116, %cst_166 {dimension_numbers = #tpu.dot_dimension_numbers<[1], [0], [0], [1], [0, 0, 1, 1], [], []>} : vector<4x4xf32>, vector<4x8xf32>, vector<4x8xf32> -> vector<4x8xf32>
    %118 = arith.addf %112, %117 : vector<4x8xf32>
    %119 = vector.broadcast %0 : vector<1x8xf32> to vector<4x8xf32>
    %120 = arith.addf %118, %119 : vector<4x8xf32>
    %c0_167 = arith.constant 0 : index
    %c1_168 = arith.constant 1 : index
    %c1_169 = arith.constant 1 : index
    %c0_170 = arith.constant 0 : index
    %121 = vector.load %arg9[%c0_167, %c1_168, %c1_169, %c0_170] : memref<2x10x5x8xf32, #tpu.memory_space<vmem>>, vector<1x1x4x8xf32>
    %122 = vector.shape_cast %121 : vector<1x1x4x8xf32> to vector<4x8xf32>
    %123 = vector.shape_cast %120 : vector<4x8xf32> to vector<1x1x4x8xf32>
    tpu.vector_store %arg9[%c0_167, %c1_168, %c1_169, %c0_170], %123 {strides = array<i32>} : memref<2x10x5x8xf32, #tpu.memory_space<vmem>>, vector<1x1x4x8xf32>,
    %cst_171 = arith.constant 0.000000e+00 : f32
    %124 = vector.broadcast %cst_171 : f32 to vector<4x8xf32>
    %c0_172 = arith.constant 0 : index
    %c0_173 = arith.constant 0 : index
    %c2_174 = arith.constant 2 : index
    %c0_175 = arith.constant 0 : index
    %c0_176 = arith.constant 0 : index
    %125 = vector.load %arg1[%c0_172, %c0_173, %c2_174, %c0_175, %c0_176] : memref<1x4x18x5x4xf32, #tpu.memory_space<vmem>>, vector<1x1x1x4x4xf32>
    %126 = vector.shape_cast %125 : vector<1x1x1x4x4xf32> to vector<4x4xf32>
    %c0_177 = arith.constant 0 : index
    %c0_178 = arith.constant 0 : index
    %c0_179 = arith.constant 0 : index
    %127 = vector.load %arg3[%c0_177, %c0_178, %c0_179] : memref<9x4x8xf32, #tpu.memory_space<vmem>>, vector<1x4x8xf32>
    %128 = vector.shape_cast %127 : vector<1x4x8xf32> to vector<4x8xf32>
    %cst_180 = arith.constant dense<0.000000e+00> : vector<4x8xf32>
    %129 = tpu.matmul %126, %128, %cst_180 {dimension_numbers = #tpu.dot_dimension_numbers<[1], [0], [0], [1], [0, 0, 1, 1], [], []>} : vector<4x4xf32>, vector<4x8xf32>, vector<4x8xf32> -> vector<4x8xf32>
    %130 = arith.addf %124, %129 : vector<4x8xf32>
    %c0_181 = arith.constant 0 : index
    %c1_182 = arith.constant 1 : index
    %c2_183 = arith.constant 2 : index
    %c0_184 = arith.constant 0 : index
    %c0_185 = arith.constant 0 : index
    %131 = vector.load %arg1[%c0_181, %c1_182, %c2_183, %c0_184, %c0_185] : memref<1x4x18x5x4xf32, #tpu.memory_space<vmem>>, vector<1x1x1x4x4xf32>
    %132 = vector.shape_cast %131 : vector<1x1x1x4x4xf32> to vector<4x4xf32>
    %c1_186 = arith.constant 1 : index
    %c0_187 = arith.constant 0 : index
    %c0_188 = arith.constant 0 : index
    %133 = vector.load %arg3[%c1_186, %c0_187, %c0_188] : memref<9x4x8xf32, #tpu.memory_space<vmem>>, vector<1x4x8xf32>
    %134 = vector.shape_cast %133 : vector<1x4x8xf32> to vector<4x8xf32>
    %cst_189 = arith.constant dense<0.000000e+00> : vector<4x8xf32>
    %135 = tpu.matmul %132, %134, %cst_189 {dimension_numbers = #tpu.dot_dimension_numbers<[1], [0], [0], [1], [0, 0, 1, 1], [], []>} : vector<4x4xf32>, vector<4x8xf32>, vector<4x8xf32> -> vector<4x8xf32>
    %136 = arith.addf %130, %135 : vector<4x8xf32>
    %c0_190 = arith.constant 0 : index
    %c2_191 = arith.constant 2 : index
    %c2_192 = arith.constant 2 : index
    %c0_193 = arith.constant 0 : index
    %c0_194 = arith.constant 0 : index
    %137 = vector.load %arg1[%c0_190, %c2_191, %c2_192, %c0_193, %c0_194] : memref<1x4x18x5x4xf32, #tpu.memory_space<vmem>>, vector<1x1x1x4x4xf32>
    %138 = vector.shape_cast %137 : vector<1x1x1x4x4xf32> to vector<4x4xf32>
    %c2_195 = arith.constant 2 : index
    %c0_196 = arith.constant 0 : index
    %c0_197 = arith.constant 0 : index
    %139 = vector.load %arg3[%c2_195, %c0_196, %c0_197] : memref<9x4x8xf32, #tpu.memory_space<vmem>>, vector<1x4x8xf32>
    %140 = vector.shape_cast %139 : vector<1x4x8xf32> to vector<4x8xf32>
    %cst_198 = arith.constant dense<0.000000e+00> : vector<4x8xf32>
    %141 = tpu.matmul %138, %140, %cst_198 {dimension_numbers = #tpu.dot_dimension_numbers<[1], [0], [0], [1], [0, 0, 1, 1], [], []>} : vector<4x4xf32>, vector<4x8xf32>, vector<4x8xf32> -> vector<4x8xf32>
    %142 = arith.addf %136, %141 : vector<4x8xf32>
    %c0_199 = arith.constant 0 : index
    %c0_200 = arith.constant 0 : index
    %c3_201 = arith.constant 3 : index
    %c0_202 = arith.constant 0 : index
    %c0_203 = arith.constant 0 : index
    %143 = vector.load %arg1[%c0_199, %c0_200, %c3_201, %c0_202, %c0_203] : memref<1x4x18x5x4xf32, #tpu.memory_space<vmem>>, vector<1x1x1x4x4xf32>
    %144 = vector.shape_cast %143 : vector<1x1x1x4x4xf32> to vector<4x4xf32>
    %c3_204 = arith.constant 3 : index
    %c0_205 = arith.constant 0 : index
    %c0_206 = arith.constant 0 : index
    %145 = vector.load %arg3[%c3_204, %c0_205, %c0_206] : memref<9x4x8xf32, #tpu.memory_space<vmem>>, vector<1x4x8xf32>
    %146 = vector.shape_cast %145 : vector<1x4x8xf32> to vector<4x8xf32>
    %cst_207 = arith.constant dense<0.000000e+00> : vector<4x8xf32>
    %147 = tpu.matmul %144, %146, %cst_207 {dimension_numbers = #tpu.dot_dimension_numbers<[1], [0], [0], [1], [0, 0, 1, 1], [], []>} : vector<4x4xf32>, vector<4x8xf32>, vector<4x8xf32> -> vector<4x8xf32>
    %148 = arith.addf %142, %147 : vector<4x8xf32>
    %c0_208 = arith.constant 0 : index
    %c1_209 = arith.constant 1 : index
    %c3_210 = arith.constant 3 : index
    %c0_211 = arith.constant 0 : index
    %c0_212 = arith.constant 0 : index
    %149 = vector.load %arg1[%c0_208, %c1_209, %c3_210, %c0_211, %c0_212] : memref<1x4x18x5x4xf32, #tpu.memory_space<vmem>>, vector<1x1x1x4x4xf32>
    %150 = vector.shape_cast %149 : vector<1x1x1x4x4xf32> to vector<4x4xf32>
    %c4_213 = arith.constant 4 : index
    %c0_214 = arith.constant 0 : index
    %c0_215 = arith.constant 0 : index
    %151 = vector.load %arg3[%c4_213, %c0_214, %c0_215] : memref<9x4x8xf32, #tpu.memory_space<vmem>>, vector<1x4x8xf32>
    %152 = vector.shape_cast %151 : vector<1x4x8xf32> to vector<4x8xf32>
    %cst_216 = arith.constant dense<0.000000e+00> : vector<4x8xf32>
    %153 = tpu.matmul %150, %152, %cst_216 {dimension_numbers = #tpu.dot_dimension_numbers<[1], [0], [0], [1], [0, 0, 1, 1], [], []>} : vector<4x4xf32>, vector<4x8xf32>, vector<4x8xf32> -> vector<4x8xf32>
    %154 = arith.addf %148, %153 : vector<4x8xf32>
    %c0_217 = arith.constant 0 : index
    %c2_218 = arith.constant 2 : index
    %c3_219 = arith.constant 3 : index
    %c0_220 = arith.constant 0 : index
    %c0_221 = arith.constant 0 : index
    %155 = vector.load %arg1[%c0_217, %c2_218, %c3_219, %c0_220, %c0_221] : memref<1x4x18x5x4xf32, #tpu.memory_space<vmem>>, vector<1x1x1x4x4xf32>
    %156 = vector.shape_cast %155 : vector<1x1x1x4x4xf32> to vector<4x4xf32>
    %c5_222 = arith.constant 5 : index
    %c0_223 = arith.constant 0 : index
    %c0_224 = arith.constant 0 : index
    %157 = vector.load %arg3[%c5_222, %c0_223, %c0_224] : memref<9x4x8xf32, #tpu.memory_space<vmem>>, vector<1x4x8xf32>
    %158 = vector.shape_cast %157 : vector<1x4x8xf32> to vector<4x8xf32>
    %cst_225 = arith.constant dense<0.000000e+00> : vector<4x8xf32>
    %159 = tpu.matmul %156, %158, %cst_225 {dimension_numbers = #tpu.dot_dimension_numbers<[1], [0], [0], [1], [0, 0, 1, 1], [], []>} : vector<4x4xf32>, vector<4x8xf32>, vector<4x8xf32> -> vector<4x8xf32>
    %160 = arith.addf %154, %159 : vector<4x8xf32>
    %c0_226 = arith.constant 0 : index
    %c0_227 = arith.constant 0 : index
    %c4_228 = arith.constant 4 : index
    %c0_229 = arith.constant 0 : index
    %c0_230 = arith.constant 0 : index
    %161 = vector.load %arg1[%c0_226, %c0_227, %c4_228, %c0_229, %c0_230] : memref<1x4x18x5x4xf32, #tpu.memory_space<vmem>>, vector<1x1x1x4x4xf32>
    %162 = vector.shape_cast %161 : vector<1x1x1x4x4xf32> to vector<4x4xf32>
    %c6_231 = arith.constant 6 : index
    %c0_232 = arith.constant 0 : index
    %c0_233 = arith.constant 0 : index
    %163 = vector.load %arg3[%c6_231, %c0_232, %c0_233] : memref<9x4x8xf32, #tpu.memory_space<vmem>>, vector<1x4x8xf32>
    %164 = vector.shape_cast %163 : vector<1x4x8xf32> to vector<4x8xf32>
    %cst_234 = arith.constant dense<0.000000e+00> : vector<4x8xf32>
    %165 = tpu.matmul %162, %164, %cst_234 {dimension_numbers = #tpu.dot_dimension_numbers<[1], [0], [0], [1], [0, 0, 1, 1], [], []>} : vector<4x4xf32>, vector<4x8xf32>, vector<4x8xf32> -> vector<4x8xf32>
    %166 = arith.addf %160, %165 : vector<4x8xf32>
    %c0_235 = arith.constant 0 : index
    %c1_236 = arith.constant 1 : index
    %c4_237 = arith.constant 4 : index
    %c0_238 = arith.constant 0 : index
    %c0_239 = arith.constant 0 : index
    %167 = vector.load %arg1[%c0_235, %c1_236, %c4_237, %c0_238, %c0_239] : memref<1x4x18x5x4xf32, #tpu.memory_space<vmem>>, vector<1x1x1x4x4xf32>
    %168 = vector.shape_cast %167 : vector<1x1x1x4x4xf32> to vector<4x4xf32>
    %c7_240 = arith.constant 7 : index
    %c0_241 = arith.constant 0 : index
    %c0_242 = arith.constant 0 : index
    %169 = vector.load %arg3[%c7_240, %c0_241, %c0_242] : memref<9x4x8xf32, #tpu.memory_space<vmem>>, vector<1x4x8xf32>
    %170 = vector.shape_cast %169 : vector<1x4x8xf32> to vector<4x8xf32>
    %cst_243 = arith.constant dense<0.000000e+00> : vector<4x8xf32>
    %171 = tpu.matmul %168, %170, %cst_243 {dimension_numbers = #tpu.dot_dimension_numbers<[1], [0], [0], [1], [0, 0, 1, 1], [], []>} : vector<4x4xf32>, vector<4x8xf32>, vector<4x8xf32> -> vector<4x8xf32>
    %172 = arith.addf %166, %171 : vector<4x8xf32>
    %c0_244 = arith.constant 0 : index
    %c2_245 = arith.constant 2 : index
    %c4_246 = arith.constant 4 : index
    %c0_247 = arith.constant 0 : index
    %c0_248 = arith.constant 0 : index
    %173 = vector.load %arg1[%c0_244, %c2_245, %c4_246, %c0_247, %c0_248] : memref<1x4x18x5x4xf32, #tpu.memory_space<vmem>>, vector<1x1x1x4x4xf32>
    %174 = vector.shape_cast %173 : vector<1x1x1x4x4xf32> to vector<4x4xf32>
    %c8_249 = arith.constant 8 : index
    %c0_250 = arith.constant 0 : index
    %c0_251 = arith.constant 0 : index
    %175 = vector.load %arg3[%c8_249, %c0_250, %c0_251] : memref<9x4x8xf32, #tpu.memory_space<vmem>>, vector<1x4x8xf32>
    %176 = vector.shape_cast %175 : vector<1x4x8xf32> to vector<4x8xf32>
    %cst_252 = arith.constant dense<0.000000e+00> : vector<4x8xf32>
    %177 = tpu.matmul %174, %176, %cst_252 {dimension_numbers = #tpu.dot_dimension_numbers<[1], [0], [0], [1], [0, 0, 1, 1], [], []>} : vector<4x4xf32>, vector<4x8xf32>, vector<4x8xf32> -> vector<4x8xf32>
    %178 = arith.addf %172, %177 : vector<4x8xf32>
    %179 = vector.broadcast %0 : vector<1x8xf32> to vector<4x8xf32>
    %180 = arith.addf %178, %179 : vector<4x8xf32>
    %c1_253 = arith.constant 1 : index
    %c2_254 = arith.constant 2 : index
    %c0_255 = arith.constant 0 : index
    %c0_256 = arith.constant 0 : index
    %181 = vector.load %arg9[%c1_253, %c2_254, %c0_255, %c0_256] : memref<2x10x5x8xf32, #tpu.memory_space<vmem>>, vector<1x1x4x8xf32>
    %182 = vector.shape_cast %181 : vector<1x1x4x8xf32> to vector<4x8xf32>
    %183 = vector.shape_cast %180 : vector<4x8xf32> to vector<1x1x4x8xf32>
    tpu.vector_store %arg9[%c1_253, %c2_254, %c0_255, %c0_256], %183 {strides = array<i32>} : memref<2x10x5x8xf32, #tpu.memory_space<vmem>>, vector<1x1x4x8xf32>,
    %cst_257 = arith.constant 0.000000e+00 : f32
    %184 = vector.broadcast %cst_257 : f32 to vector<4x8xf32>
    %c0_258 = arith.constant 0 : index
    %c2_259 = arith.constant 2 : index
    %c2_260 = arith.constant 2 : index
    %c0_261 = arith.constant 0 : index
    %c0_262 = arith.constant 0 : index
    %185 = vector.load %arg1[%c0_258, %c2_259, %c2_260, %c0_261, %c0_262] : memref<1x4x18x5x4xf32, #tpu.memory_space<vmem>>, vector<1x1x1x4x4xf32>
    %186 = vector.shape_cast %185 : vector<1x1x1x4x4xf32> to vector<4x4xf32>
    %c0_263 = arith.constant 0 : index
    %c0_264 = arith.constant 0 : index
    %c0_265 = arith.constant 0 : index
    %187 = vector.load %arg3[%c0_263, %c0_264, %c0_265] : memref<9x4x8xf32, #tpu.memory_space<vmem>>, vector<1x4x8xf32>
    %188 = vector.shape_cast %187 : vector<1x4x8xf32> to vector<4x8xf32>
    %cst_266 = arith.constant dense<0.000000e+00> : vector<4x8xf32>
    %189 = tpu.matmul %186, %188, %cst_266 {dimension_numbers = #tpu.dot_dimension_numbers<[1], [0], [0], [1], [0, 0, 1, 1], [], []>} : vector<4x4xf32>, vector<4x8xf32>, vector<4x8xf32> -> vector<4x8xf32>
    %190 = arith.addf %184, %189 : vector<4x8xf32>
    %c0_267 = arith.constant 0 : index
    %c3_268 = arith.constant 3 : index
    %c2_269 = arith.constant 2 : index
    %c0_270 = arith.constant 0 : index
    %c0_271 = arith.constant 0 : index
    %191 = vector.load %arg1[%c0_267, %c3_268, %c2_269, %c0_270, %c0_271] : memref<1x4x18x5x4xf32, #tpu.memory_space<vmem>>, vector<1x1x1x4x4xf32>
    %192 = vector.shape_cast %191 : vector<1x1x1x4x4xf32> to vector<4x4xf32>
    %c1_272 = arith.constant 1 : index
    %c0_273 = arith.constant 0 : index
    %c0_274 = arith.constant 0 : index
    %193 = vector.load %arg3[%c1_272, %c0_273, %c0_274] : memref<9x4x8xf32, #tpu.memory_space<vmem>>, vector<1x4x8xf32>
    %194 = vector.shape_cast %193 : vector<1x4x8xf32> to vector<4x8xf32>
    %cst_275 = arith.constant dense<0.000000e+00> : vector<4x8xf32>
    %195 = tpu.matmul %192, %194, %cst_275 {dimension_numbers = #tpu.dot_dimension_numbers<[1], [0], [0], [1], [0, 0, 1, 1], [], []>} : vector<4x4xf32>, vector<4x8xf32>, vector<4x8xf32> -> vector<4x8xf32>
    %196 = arith.addf %190, %195 : vector<4x8xf32>
    %c0_276 = arith.constant 0 : index
    %c0_277 = arith.constant 0 : index
    %c2_278 = arith.constant 2 : index
    %c1_279 = arith.constant 1 : index
    %c0_280 = arith.constant 0 : index
    %197 = vector.load %arg1[%c0_276, %c0_277, %c2_278, %c1_279, %c0_280] : memref<1x4x18x5x4xf32, #tpu.memory_space<vmem>>, vector<1x1x1x4x4xf32>
    %198 = vector.shape_cast %197 : vector<1x1x1x4x4xf32> to vector<4x4xf32>
    %c2_281 = arith.constant 2 : index
    %c0_282 = arith.constant 0 : index
    %c0_283 = arith.constant 0 : index
    %199 = vector.load %arg3[%c2_281, %c0_282, %c0_283] : memref<9x4x8xf32, #tpu.memory_space<vmem>>, vector<1x4x8xf32>
    %200 = vector.shape_cast %199 : vector<1x4x8xf32> to vector<4x8xf32>
    %cst_284 = arith.constant dense<0.000000e+00> : vector<4x8xf32>
    %201 = tpu.matmul %198, %200, %cst_284 {dimension_numbers = #tpu.dot_dimension_numbers<[1], [0], [0], [1], [0, 0, 1, 1], [], []>} : vector<4x4xf32>, vector<4x8xf32>, vector<4x8xf32> -> vector<4x8xf32>
    %202 = arith.addf %196, %201 : vector<4x8xf32>
    %c0_285 = arith.constant 0 : index
    %c2_286 = arith.constant 2 : index
    %c3_287 = arith.constant 3 : index
    %c0_288 = arith.constant 0 : index
    %c0_289 = arith.constant 0 : index
    %203 = vector.load %arg1[%c0_285, %c2_286, %c3_287, %c0_288, %c0_289] : memref<1x4x18x5x4xf32, #tpu.memory_space<vmem>>, vector<1x1x1x4x4xf32>
    %204 = vector.shape_cast %203 : vector<1x1x1x4x4xf32> to vector<4x4xf32>
    %c3_290 = arith.constant 3 : index
    %c0_291 = arith.constant 0 : index
    %c0_292 = arith.constant 0 : index
    %205 = vector.load %arg3[%c3_290, %c0_291, %c0_292] : memref<9x4x8xf32, #tpu.memory_space<vmem>>, vector<1x4x8xf32>
    %206 = vector.shape_cast %205 : vector<1x4x8xf32> to vector<4x8xf32>
    %cst_293 = arith.constant dense<0.000000e+00> : vector<4x8xf32>
    %207 = tpu.matmul %204, %206, %cst_293 {dimension_numbers = #tpu.dot_dimension_numbers<[1], [0], [0], [1], [0, 0, 1, 1], [], []>} : vector<4x4xf32>, vector<4x8xf32>, vector<4x8xf32> -> vector<4x8xf32>
    %208 = arith.addf %202, %207 : vector<4x8xf32>
    %c0_294 = arith.constant 0 : index
    %c3_295 = arith.constant 3 : index
    %c3_296 = arith.constant 3 : index
    %c0_297 = arith.constant 0 : index
    %c0_298 = arith.constant 0 : index
    %209 = vector.load %arg1[%c0_294, %c3_295, %c3_296, %c0_297, %c0_298] : memref<1x4x18x5x4xf32, #tpu.memory_space<vmem>>, vector<1x1x1x4x4xf32>
    %210 = vector.shape_cast %209 : vector<1x1x1x4x4xf32> to vector<4x4xf32>
    %c4_299 = arith.constant 4 : index
    %c0_300 = arith.constant 0 : index
    %c0_301 = arith.constant 0 : index
    %211 = vector.load %arg3[%c4_299, %c0_300, %c0_301] : memref<9x4x8xf32, #tpu.memory_space<vmem>>, vector<1x4x8xf32>
    %212 = vector.shape_cast %211 : vector<1x4x8xf32> to vector<4x8xf32>
    %cst_302 = arith.constant dense<0.000000e+00> : vector<4x8xf32>
    %213 = tpu.matmul %210, %212, %cst_302 {dimension_numbers = #tpu.dot_dimension_numbers<[1], [0], [0], [1], [0, 0, 1, 1], [], []>} : vector<4x4xf32>, vector<4x8xf32>, vector<4x8xf32> -> vector<4x8xf32>
    %214 = arith.addf %208, %213 : vector<4x8xf32>
    %c0_303 = arith.constant 0 : index
    %c0_304 = arith.constant 0 : index
    %c3_305 = arith.constant 3 : index
    %c1_306 = arith.constant 1 : index
    %c0_307 = arith.constant 0 : index
    %215 = vector.load %arg1[%c0_303, %c0_304, %c3_305, %c1_306, %c0_307] : memref<1x4x18x5x4xf32, #tpu.memory_space<vmem>>, vector<1x1x1x4x4xf32>
    %216 = vector.shape_cast %215 : vector<1x1x1x4x4xf32> to vector<4x4xf32>
    %c5_308 = arith.constant 5 : index
    %c0_309 = arith.constant 0 : index
    %c0_310 = arith.constant 0 : index
    %217 = vector.load %arg3[%c5_308, %c0_309, %c0_310] : memref<9x4x8xf32, #tpu.memory_space<vmem>>, vector<1x4x8xf32>
    %218 = vector.shape_cast %217 : vector<1x4x8xf32> to vector<4x8xf32>
    %cst_311 = arith.constant dense<0.000000e+00> : vector<4x8xf32>
    %219 = tpu.matmul %216, %218, %cst_311 {dimension_numbers = #tpu.dot_dimension_numbers<[1], [0], [0], [1], [0, 0, 1, 1], [], []>} : vector<4x4xf32>, vector<4x8xf32>, vector<4x8xf32> -> vector<4x8xf32>
    %220 = arith.addf %214, %219 : vector<4x8xf32>
    %c0_312 = arith.constant 0 : index
    %c2_313 = arith.constant 2 : index
    %c4_314 = arith.constant 4 : index
    %c0_315 = arith.constant 0 : index
    %c0_316 = arith.constant 0 : index
    %221 = vector.load %arg1[%c0_312, %c2_313, %c4_314, %c0_315, %c0_316] : memref<1x4x18x5x4xf32, #tpu.memory_space<vmem>>, vector<1x1x1x4x4xf32>
    %222 = vector.shape_cast %221 : vector<1x1x1x4x4xf32> to vector<4x4xf32>
    %c6_317 = arith.constant 6 : index
    %c0_318 = arith.constant 0 : index
    %c0_319 = arith.constant 0 : index
    %223 = vector.load %arg3[%c6_317, %c0_318, %c0_319] : memref<9x4x8xf32, #tpu.memory_space<vmem>>, vector<1x4x8xf32>
    %224 = vector.shape_cast %223 : vector<1x4x8xf32> to vector<4x8xf32>
    %cst_320 = arith.constant dense<0.000000e+00> : vector<4x8xf32>
    %225 = tpu.matmul %222, %224, %cst_320 {dimension_numbers = #tpu.dot_dimension_numbers<[1], [0], [0], [1], [0, 0, 1, 1], [], []>} : vector<4x4xf32>, vector<4x8xf32>, vector<4x8xf32> -> vector<4x8xf32>
    %226 = arith.addf %220, %225 : vector<4x8xf32>
    %c0_321 = arith.constant 0 : index
    %c3_322 = arith.constant 3 : index
    %c4_323 = arith.constant 4 : index
    %c0_324 = arith.constant 0 : index
    %c0_325 = arith.constant 0 : index
    %227 = vector.load %arg1[%c0_321, %c3_322, %c4_323, %c0_324, %c0_325] : memref<1x4x18x5x4xf32, #tpu.memory_space<vmem>>, vector<1x1x1x4x4xf32>
    %228 = vector.shape_cast %227 : vector<1x1x1x4x4xf32> to vector<4x4xf32>
    %c7_326 = arith.constant 7 : index
    %c0_327 = arith.constant 0 : index
    %c0_328 = arith.constant 0 : index
    %229 = vector.load %arg3[%c7_326, %c0_327, %c0_328] : memref<9x4x8xf32, #tpu.memory_space<vmem>>, vector<1x4x8xf32>
    %230 = vector.shape_cast %229 : vector<1x4x8xf32> to vector<4x8xf32>
    %cst_329 = arith.constant dense<0.000000e+00> : vector<4x8xf32>
    %231 = tpu.matmul %228, %230, %cst_329 {dimension_numbers = #tpu.dot_dimension_numbers<[1], [0], [0], [1], [0, 0, 1, 1], [], []>} : vector<4x4xf32>, vector<4x8xf32>, vector<4x8xf32> -> vector<4x8xf32>
    %232 = arith.addf %226, %231 : vector<4x8xf32>
    %c0_330 = arith.constant 0 : index
    %c0_331 = arith.constant 0 : index
    %c4_332 = arith.constant 4 : index
    %c1_333 = arith.constant 1 : index
    %c0_334 = arith.constant 0 : index
    %233 = vector.load %arg1[%c0_330, %c0_331, %c4_332, %c1_333, %c0_334] : memref<1x4x18x5x4xf32, #tpu.memory_space<vmem>>, vector<1x1x1x4x4xf32>
    %234 = vector.shape_cast %233 : vector<1x1x1x4x4xf32> to vector<4x4xf32>
    %c8_335 = arith.constant 8 : index
    %c0_336 = arith.constant 0 : index
    %c0_337 = arith.constant 0 : index
    %235 = vector.load %arg3[%c8_335, %c0_336, %c0_337] : memref<9x4x8xf32, #tpu.memory_space<vmem>>, vector<1x4x8xf32>
    %236 = vector.shape_cast %235 : vector<1x4x8xf32> to vector<4x8xf32>
    %cst_338 = arith.constant dense<0.000000e+00> : vector<4x8xf32>
    %237 = tpu.matmul %234, %236, %cst_338 {dimension_numbers = #tpu.dot_dimension_numbers<[1], [0], [0], [1], [0, 0, 1, 1], [], []>} : vector<4x4xf32>, vector<4x8xf32>, vector<4x8xf32> -> vector<4x8xf32>
    %238 = arith.addf %232, %237 : vector<4x8xf32>
    %239 = vector.broadcast %0 : vector<1x8xf32> to vector<4x8xf32>
    %240 = arith.addf %238, %239 : vector<4x8xf32>
    %c0_339 = arith.constant 0 : index
    %c2_340 = arith.constant 2 : index
    %c1_341 = arith.constant 1 : index
    %c0_342 = arith.constant 0 : index
    %241 = vector.load %arg9[%c0_339, %c2_340, %c1_341, %c0_342] : memref<2x10x5x8xf32, #tpu.memory_space<vmem>>, vector<1x1x4x8xf32>
    %242 = vector.shape_cast %241 : vector<1x1x4x8xf32> to vector<4x8xf32>
    %243 = vector.shape_cast %240 : vector<4x8xf32> to vector<1x1x4x8xf32>
    tpu.vector_store %arg9[%c0_339, %c2_340, %c1_341, %c0_342], %243 {strides = array<i32>} : memref<2x10x5x8xf32, #tpu.memory_space<vmem>>, vector<1x1x4x8xf32>,
    %cst_343 = arith.constant 0.000000e+00 : f32
    %244 = vector.broadcast %cst_343 : f32 to vector<4x8xf32>
    %c0_344 = arith.constant 0 : index
    %c0_345 = arith.constant 0 : index
    %c4_346 = arith.constant 4 : index
    %c0_347 = arith.constant 0 : index
    %c0_348 = arith.constant 0 : index
    %245 = vector.load %arg1[%c0_344, %c0_345, %c4_346, %c0_347, %c0_348] : memref<1x4x18x5x4xf32, #tpu.memory_space<vmem>>, vector<1x1x1x4x4xf32>
    %246 = vector.shape_cast %245 : vector<1x1x1x4x4xf32> to vector<4x4xf32>
    %c0_349 = arith.constant 0 : index
    %c0_350 = arith.constant 0 : index
    %c0_351 = arith.constant 0 : index
    %247 = vector.load %arg3[%c0_349, %c0_350, %c0_351] : memref<9x4x8xf32, #tpu.memory_space<vmem>>, vector<1x4x8xf32>
    %248 = vector.shape_cast %247 : vector<1x4x8xf32> to vector<4x8xf32>
    %cst_352 = arith.constant dense<0.000000e+00> : vector<4x8xf32>
    %249 = tpu.matmul %246, %248, %cst_352 {dimension_numbers = #tpu.dot_dimension_numbers<[1], [0], [0], [1], [0, 0, 1, 1], [], []>} : vector<4x4xf32>, vector<4x8xf32>, vector<4x8xf32> -> vector<4x8xf32>
    %250 = arith.addf %244, %249 : vector<4x8xf32>
    %c0_353 = arith.constant 0 : index
    %c1_354 = arith.constant 1 : index
    %c4_355 = arith.constant 4 : index
    %c0_356 = arith.constant 0 : index
    %c0_357 = arith.constant 0 : index
    %251 = vector.load %arg1[%c0_353, %c1_354, %c4_355, %c0_356, %c0_357] : memref<1x4x18x5x4xf32, #tpu.memory_space<vmem>>, vector<1x1x1x4x4xf32>
    %252 = vector.shape_cast %251 : vector<1x1x1x4x4xf32> to vector<4x4xf32>
    %c1_358 = arith.constant 1 : index
    %c0_359 = arith.constant 0 : index
    %c0_360 = arith.constant 0 : index
    %253 = vector.load %arg3[%c1_358, %c0_359, %c0_360] : memref<9x4x8xf32, #tpu.memory_space<vmem>>, vector<1x4x8xf32>
    %254 = vector.shape_cast %253 : vector<1x4x8xf32> to vector<4x8xf32>
    %cst_361 = arith.constant dense<0.000000e+00> : vector<4x8xf32>
    %255 = tpu.matmul %252, %254, %cst_361 {dimension_numbers = #tpu.dot_dimension_numbers<[1], [0], [0], [1], [0, 0, 1, 1], [], []>} : vector<4x4xf32>, vector<4x8xf32>, vector<4x8xf32> -> vector<4x8xf32>
    %256 = arith.addf %250, %255 : vector<4x8xf32>
    %c0_362 = arith.constant 0 : index
    %c2_363 = arith.constant 2 : index
    %c4_364 = arith.constant 4 : index
    %c0_365 = arith.constant 0 : index
    %c0_366 = arith.constant 0 : index
    %257 = vector.load %arg1[%c0_362, %c2_363, %c4_364, %c0_365, %c0_366] : memref<1x4x18x5x4xf32, #tpu.memory_space<vmem>>, vector<1x1x1x4x4xf32>
    %258 = vector.shape_cast %257 : vector<1x1x1x4x4xf32> to vector<4x4xf32>
    %c2_367 = arith.constant 2 : index
    %c0_368 = arith.constant 0 : index
    %c0_369 = arith.constant 0 : index
    %259 = vector.load %arg3[%c2_367, %c0_368, %c0_369] : memref<9x4x8xf32, #tpu.memory_space<vmem>>, vector<1x4x8xf32>
    %260 = vector.shape_cast %259 : vector<1x4x8xf32> to vector<4x8xf32>
    %cst_370 = arith.constant dense<0.000000e+00> : vector<4x8xf32>
    %261 = tpu.matmul %258, %260, %cst_370 {dimension_numbers = #tpu.dot_dimension_numbers<[1], [0], [0], [1], [0, 0, 1, 1], [], []>} : vector<4x4xf32>, vector<4x8xf32>, vector<4x8xf32> -> vector<4x8xf32>
    %262 = arith.addf %256, %261 : vector<4x8xf32>
    %c0_371 = arith.constant 0 : index
    %c0_372 = arith.constant 0 : index
    %c5_373 = arith.constant 5 : index
    %c0_374 = arith.constant 0 : index
    %c0_375 = arith.constant 0 : index
    %263 = vector.load %arg1[%c0_371, %c0_372, %c5_373, %c0_374, %c0_375] : memref<1x4x18x5x4xf32, #tpu.memory_space<vmem>>, vector<1x1x1x4x4xf32>
    %264 = vector.shape_cast %263 : vector<1x1x1x4x4xf32> to vector<4x4xf32>
    %c3_376 = arith.constant 3 : index
    %c0_377 = arith.constant 0 : index
    %c0_378 = arith.constant 0 : index
    %265 = vector.load %arg3[%c3_376, %c0_377, %c0_378] : memref<9x4x8xf32, #tpu.memory_space<vmem>>, vector<1x4x8xf32>
    %266 = vector.shape_cast %265 : vector<1x4x8xf32> to vector<4x8xf32>
    %cst_379 = arith.constant dense<0.000000e+00> : vector<4x8xf32>
    %267 = tpu.matmul %264, %266, %cst_379 {dimension_numbers = #tpu.dot_dimension_numbers<[1], [0], [0], [1], [0, 0, 1, 1], [], []>} : vector<4x4xf32>, vector<4x8xf32>, vector<4x8xf32> -> vector<4x8xf32>
    %268 = arith.addf %262, %267 : vector<4x8xf32>
    %c0_380 = arith.constant 0 : index
    %c1_381 = arith.constant 1 : index
    %c5_382 = arith.constant 5 : index
    %c0_383 = arith.constant 0 : index
    %c0_384 = arith.constant 0 : index
    %269 = vector.load %arg1[%c0_380, %c1_381, %c5_382, %c0_383, %c0_384] : memref<1x4x18x5x4xf32, #tpu.memory_space<vmem>>, vector<1x1x1x4x4xf32>
    %270 = vector.shape_cast %269 : vector<1x1x1x4x4xf32> to vector<4x4xf32>
    %c4_385 = arith.constant 4 : index
    %c0_386 = arith.constant 0 : index
    %c0_387 = arith.constant 0 : index
    %271 = vector.load %arg3[%c4_385, %c0_386, %c0_387] : memref<9x4x8xf32, #tpu.memory_space<vmem>>, vector<1x4x8xf32>
    %272 = vector.shape_cast %271 : vector<1x4x8xf32> to vector<4x8xf32>
    %cst_388 = arith.constant dense<0.000000e+00> : vector<4x8xf32>
    %273 = tpu.matmul %270, %272, %cst_388 {dimension_numbers = #tpu.dot_dimension_numbers<[1], [0], [0], [1], [0, 0, 1, 1], [], []>} : vector<4x4xf32>, vector<4x8xf32>, vector<4x8xf32> -> vector<4x8xf32>
    %274 = arith.addf %268, %273 : vector<4x8xf32>
    %c0_389 = arith.constant 0 : index
    %c2_390 = arith.constant 2 : index
    %c5_391 = arith.constant 5 : index
    %c0_392 = arith.constant 0 : index
    %c0_393 = arith.constant 0 : index
    %275 = vector.load %arg1[%c0_389, %c2_390, %c5_391, %c0_392, %c0_393] : memref<1x4x18x5x4xf32, #tpu.memory_space<vmem>>, vector<1x1x1x4x4xf32>
    %276 = vector.shape_cast %275 : vector<1x1x1x4x4xf32> to vector<4x4xf32>
    %c5_394 = arith.constant 5 : index
    %c0_395 = arith.constant 0 : index
    %c0_396 = arith.constant 0 : index
    %277 = vector.load %arg3[%c5_394, %c0_395, %c0_396] : memref<9x4x8xf32, #tpu.memory_space<vmem>>, vector<1x4x8xf32>
    %278 = vector.shape_cast %277 : vector<1x4x8xf32> to vector<4x8xf32>
    %cst_397 = arith.constant dense<0.000000e+00> : vector<4x8xf32>
    %279 = tpu.matmul %276, %278, %cst_397 {dimension_numbers = #tpu.dot_dimension_numbers<[1], [0], [0], [1], [0, 0, 1, 1], [], []>} : vector<4x4xf32>, vector<4x8xf32>, vector<4x8xf32> -> vector<4x8xf32>
    %280 = arith.addf %274, %279 : vector<4x8xf32>
    %c0_398 = arith.constant 0 : index
    %c0_399 = arith.constant 0 : index
    %c6_400 = arith.constant 6 : index
    %c0_401 = arith.constant 0 : index
    %c0_402 = arith.constant 0 : index
    %281 = vector.load %arg1[%c0_398, %c0_399, %c6_400, %c0_401, %c0_402] : memref<1x4x18x5x4xf32, #tpu.memory_space<vmem>>, vector<1x1x1x4x4xf32>
    %282 = vector.shape_cast %281 : vector<1x1x1x4x4xf32> to vector<4x4xf32>
    %c6_403 = arith.constant 6 : index
    %c0_404 = arith.constant 0 : index
    %c0_405 = arith.constant 0 : index
    %283 = vector.load %arg3[%c6_403, %c0_404, %c0_405] : memref<9x4x8xf32, #tpu.memory_space<vmem>>, vector<1x4x8xf32>
    %284 = vector.shape_cast %283 : vector<1x4x8xf32> to vector<4x8xf32>
    %cst_406 = arith.constant dense<0.000000e+00> : vector<4x8xf32>
    %285 = tpu.matmul %282, %284, %cst_406 {dimension_numbers = #tpu.dot_dimension_numbers<[1], [0], [0], [1], [0, 0, 1, 1], [], []>} : vector<4x4xf32>, vector<4x8xf32>, vector<4x8xf32> -> vector<4x8xf32>
    %286 = arith.addf %280, %285 : vector<4x8xf32>
    %c0_407 = arith.constant 0 : index
    %c1_408 = arith.constant 1 : index
    %c6_409 = arith.constant 6 : index
    %c0_410 = arith.constant 0 : index
    %c0_411 = arith.constant 0 : index
    %287 = vector.load %arg1[%c0_407, %c1_408, %c6_409, %c0_410, %c0_411] : memref<1x4x18x5x4xf32, #tpu.memory_space<vmem>>, vector<1x1x1x4x4xf32>
    %288 = vector.shape_cast %287 : vector<1x1x1x4x4xf32> to vector<4x4xf32>
    %c7_412 = arith.constant 7 : index
    %c0_413 = arith.constant 0 : index
    %c0_414 = arith.constant 0 : index
    %289 = vector.load %arg3[%c7_412, %c0_413, %c0_414] : memref<9x4x8xf32, #tpu.memory_space<vmem>>, vector<1x4x8xf32>
    %290 = vector.shape_cast %289 : vector<1x4x8xf32> to vector<4x8xf32>
    %cst_415 = arith.constant dense<0.000000e+00> : vector<4x8xf32>
    %291 = tpu.matmul %288, %290, %cst_415 {dimension_numbers = #tpu.dot_dimension_numbers<[1], [0], [0], [1], [0, 0, 1, 1], [], []>} : vector<4x4xf32>, vector<4x8xf32>, vector<4x8xf32> -> vector<4x8xf32>
    %292 = arith.addf %286, %291 : vector<4x8xf32>
    %c0_416 = arith.constant 0 : index
    %c2_417 = arith.constant 2 : index
    %c6_418 = arith.constant 6 : index
    %c0_419 = arith.constant 0 : index
    %c0_420 = arith.constant 0 : index
    %293 = vector.load %arg1[%c0_416, %c2_417, %c6_418, %c0_419, %c0_420] : memref<1x4x18x5x4xf32, #tpu.memory_space<vmem>>, vector<1x1x1x4x4xf32>
    %294 = vector.shape_cast %293 : vector<1x1x1x4x4xf32> to vector<4x4xf32>
    %c8_421 = arith.constant 8 : index
    %c0_422 = arith.constant 0 : index
    %c0_423 = arith.constant 0 : index
    %295 = vector.load %arg3[%c8_421, %c0_422, %c0_423] : memref<9x4x8xf32, #tpu.memory_space<vmem>>, vector<1x4x8xf32>
    %296 = vector.shape_cast %295 : vector<1x4x8xf32> to vector<4x8xf32>
    %cst_424 = arith.constant dense<0.000000e+00> : vector<4x8xf32>
    %297 = tpu.matmul %294, %296, %cst_424 {dimension_numbers = #tpu.dot_dimension_numbers<[1], [0], [0], [1], [0, 0, 1, 1], [], []>} : vector<4x4xf32>, vector<4x8xf32>, vector<4x8xf32> -> vector<4x8xf32>
    %298 = arith.addf %292, %297 : vector<4x8xf32>
    %299 = vector.broadcast %0 : vector<1x8xf32> to vector<4x8xf32>
    %300 = arith.addf %298, %299 : vector<4x8xf32>
    %c1_425 = arith.constant 1 : index
    %c3_426 = arith.constant 3 : index
    %c0_427 = arith.constant 0 : index
    %c0_428 = arith.constant 0 : index
    %301 = vector.load %arg9[%c1_425, %c3_426, %c0_427, %c0_428] : memref<2x10x5x8xf32, #tpu.memory_space<vmem>>, vector<1x1x4x8xf32>
    %302 = vector.shape_cast %301 : vector<1x1x4x8xf32> to vector<4x8xf32>
    %303 = vector.shape_cast %300 : vector<4x8xf32> to vector<1x1x4x8xf32>
    tpu.vector_store %arg9[%c1_425, %c3_426, %c0_427, %c0_428], %303 {strides = array<i32>} : memref<2x10x5x8xf32, #tpu.memory_space<vmem>>, vector<1x1x4x8xf32>,
    %cst_429 = arith.constant 0.000000e+00 : f32
    %304 = vector.broadcast %cst_429 : f32 to vector<4x8xf32>
    %c0_430 = arith.constant 0 : index
    %c2_431 = arith.constant 2 : index
    %c4_432 = arith.constant 4 : index
    %c0_433 = arith.constant 0 : index
    %c0_434 = arith.constant 0 : index
    %305 = vector.load %arg1[%c0_430, %c2_431, %c4_432, %c0_433, %c0_434] : memref<1x4x18x5x4xf32, #tpu.memory_space<vmem>>, vector<1x1x1x4x4xf32>
    %306 = vector.shape_cast %305 : vector<1x1x1x4x4xf32> to vector<4x4xf32>
    %c0_435 = arith.constant 0 : index
    %c0_436 = arith.constant 0 : index
    %c0_437 = arith.constant 0 : index
    %307 = vector.load %arg3[%c0_435, %c0_436, %c0_437] : memref<9x4x8xf32, #tpu.memory_space<vmem>>, vector<1x4x8xf32>
    %308 = vector.shape_cast %307 : vector<1x4x8xf32> to vector<4x8xf32>
    %cst_438 = arith.constant dense<0.000000e+00> : vector<4x8xf32>
    %309 = tpu.matmul %306, %308, %cst_438 {dimension_numbers = #tpu.dot_dimension_numbers<[1], [0], [0], [1], [0, 0, 1, 1], [], []>} : vector<4x4xf32>, vector<4x8xf32>, vector<4x8xf32> -> vector<4x8xf32>
    %310 = arith.addf %304, %309 : vector<4x8xf32>
    %c0_439 = arith.constant 0 : index
    %c3_440 = arith.constant 3 : index
    %c4_441 = arith.constant 4 : index
    %c0_442 = arith.constant 0 : index
    %c0_443 = arith.constant 0 : index
    %311 = vector.load %arg1[%c0_439, %c3_440, %c4_441, %c0_442, %c0_443] : memref<1x4x18x5x4xf32, #tpu.memory_space<vmem>>, vector<1x1x1x4x4xf32>
    %312 = vector.shape_cast %311 : vector<1x1x1x4x4xf32> to vector<4x4xf32>
    %c1_444 = arith.constant 1 : index
    %c0_445 = arith.constant 0 : index
    %c0_446 = arith.constant 0 : index
    %313 = vector.load %arg3[%c1_444, %c0_445, %c0_446] : memref<9x4x8xf32, #tpu.memory_space<vmem>>, vector<1x4x8xf32>
    %314 = vector.shape_cast %313 : vector<1x4x8xf32> to vector<4x8xf32>
    %cst_447 = arith.constant dense<0.000000e+00> : vector<4x8xf32>
    %315 = tpu.matmul %312, %314, %cst_447 {dimension_numbers = #tpu.dot_dimension_numbers<[1], [0], [0], [1], [0, 0, 1, 1], [], []>} : vector<4x4xf32>, vector<4x8xf32>, vector<4x8xf32> -> vector<4x8xf32>
    %316 = arith.addf %310, %315 : vector<4x8xf32>
    %c0_448 = arith.constant 0 : index
    %c0_449 = arith.constant 0 : index
    %c4_450 = arith.constant 4 : index
    %c1_451 = arith.constant 1 : index
    %c0_452 = arith.constant 0 : index
    %317 = vector.load %arg1[%c0_448, %c0_449, %c4_450, %c1_451, %c0_452] : memref<1x4x18x5x4xf32, #tpu.memory_space<vmem>>, vector<1x1x1x4x4xf32>
    %318 = vector.shape_cast %317 : vector<1x1x1x4x4xf32> to vector<4x4xf32>
    %c2_453 = arith.constant 2 : index
    %c0_454 = arith.constant 0 : index
    %c0_455 = arith.constant 0 : index
    %319 = vector.load %arg3[%c2_453, %c0_454, %c0_455] : memref<9x4x8xf32, #tpu.memory_space<vmem>>, vector<1x4x8xf32>
    %320 = vector.shape_cast %319 : vector<1x4x8xf32> to vector<4x8xf32>
    %cst_456 = arith.constant dense<0.000000e+00> : vector<4x8xf32>
    %321 = tpu.matmul %318, %320, %cst_456 {dimension_numbers = #tpu.dot_dimension_numbers<[1], [0], [0], [1], [0, 0, 1, 1], [], []>} : vector<4x4xf32>, vector<4x8xf32>, vector<4x8xf32> -> vector<4x8xf32>
    %322 = arith.addf %316, %321 : vector<4x8xf32>
    %c0_457 = arith.constant 0 : index
    %c2_458 = arith.constant 2 : index
    %c5_459 = arith.constant 5 : index
    %c0_460 = arith.constant 0 : index
    %c0_461 = arith.constant 0 : index
    %323 = vector.load %arg1[%c0_457, %c2_458, %c5_459, %c0_460, %c0_461] : memref<1x4x18x5x4xf32, #tpu.memory_space<vmem>>, vector<1x1x1x4x4xf32>
    %324 = vector.shape_cast %323 : vector<1x1x1x4x4xf32> to vector<4x4xf32>
    %c3_462 = arith.constant 3 : index
    %c0_463 = arith.constant 0 : index
    %c0_464 = arith.constant 0 : index
    %325 = vector.load %arg3[%c3_462, %c0_463, %c0_464] : memref<9x4x8xf32, #tpu.memory_space<vmem>>, vector<1x4x8xf32>
    %326 = vector.shape_cast %325 : vector<1x4x8xf32> to vector<4x8xf32>
    %cst_465 = arith.constant dense<0.000000e+00> : vector<4x8xf32>
    %327 = tpu.matmul %324, %326, %cst_465 {dimension_numbers = #tpu.dot_dimension_numbers<[1], [0], [0], [1], [0, 0, 1, 1], [], []>} : vector<4x4xf32>, vector<4x8xf32>, vector<4x8xf32> -> vector<4x8xf32>
    %328 = arith.addf %322, %327 : vector<4x8xf32>
    %c0_466 = arith.constant 0 : index
    %c3_467 = arith.constant 3 : index
    %c5_468 = arith.constant 5 : index
    %c0_469 = arith.constant 0 : index
    %c0_470 = arith.constant 0 : index
    %329 = vector.load %arg1[%c0_466, %c3_467, %c5_468, %c0_469, %c0_470] : memref<1x4x18x5x4xf32, #tpu.memory_space<vmem>>, vector<1x1x1x4x4xf32>
    %330 = vector.shape_cast %329 : vector<1x1x1x4x4xf32> to vector<4x4xf32>
    %c4_471 = arith.constant 4 : index
    %c0_472 = arith.constant 0 : index
    %c0_473 = arith.constant 0 : index
    %331 = vector.load %arg3[%c4_471, %c0_472, %c0_473] : memref<9x4x8xf32, #tpu.memory_space<vmem>>, vector<1x4x8xf32>
    %332 = vector.shape_cast %331 : vector<1x4x8xf32> to vector<4x8xf32>
    %cst_474 = arith.constant dense<0.000000e+00> : vector<4x8xf32>
    %333 = tpu.matmul %330, %332, %cst_474 {dimension_numbers = #tpu.dot_dimension_numbers<[1], [0], [0], [1], [0, 0, 1, 1], [], []>} : vector<4x4xf32>, vector<4x8xf32>, vector<4x8xf32> -> vector<4x8xf32>
    %334 = arith.addf %328, %333 : vector<4x8xf32>
    %c0_475 = arith.constant 0 : index
    %c0_476 = arith.constant 0 : index
    %c5_477 = arith.constant 5 : index
    %c1_478 = arith.constant 1 : index
    %c0_479 = arith.constant 0 : index
    %335 = vector.load %arg1[%c0_475, %c0_476, %c5_477, %c1_478, %c0_479] : memref<1x4x18x5x4xf32, #tpu.memory_space<vmem>>, vector<1x1x1x4x4xf32>
    %336 = vector.shape_cast %335 : vector<1x1x1x4x4xf32> to vector<4x4xf32>
    %c5_480 = arith.constant 5 : index
    %c0_481 = arith.constant 0 : index
    %c0_482 = arith.constant 0 : index
    %337 = vector.load %arg3[%c5_480, %c0_481, %c0_482] : memref<9x4x8xf32, #tpu.memory_space<vmem>>, vector<1x4x8xf32>
    %338 = vector.shape_cast %337 : vector<1x4x8xf32> to vector<4x8xf32>
    %cst_483 = arith.constant dense<0.000000e+00> : vector<4x8xf32>
    %339 = tpu.matmul %336, %338, %cst_483 {dimension_numbers = #tpu.dot_dimension_numbers<[1], [0], [0], [1], [0, 0, 1, 1], [], []>} : vector<4x4xf32>, vector<4x8xf32>, vector<4x8xf32> -> vector<4x8xf32>
    %340 = arith.addf %334, %339 : vector<4x8xf32>
    %c0_484 = arith.constant 0 : index
    %c2_485 = arith.constant 2 : index
    %c6_486 = arith.constant 6 : index
    %c0_487 = arith.constant 0 : index
    %c0_488 = arith.constant 0 : index
    %341 = vector.load %arg1[%c0_484, %c2_485, %c6_486, %c0_487, %c0_488] : memref<1x4x18x5x4xf32, #tpu.memory_space<vmem>>, vector<1x1x1x4x4xf32>
    %342 = vector.shape_cast %341 : vector<1x1x1x4x4xf32> to vector<4x4xf32>
    %c6_489 = arith.constant 6 : index
    %c0_490 = arith.constant 0 : index
    %c0_491 = arith.constant 0 : index
    %343 = vector.load %arg3[%c6_489, %c0_490, %c0_491] : memref<9x4x8xf32, #tpu.memory_space<vmem>>, vector<1x4x8xf32>
    %344 = vector.shape_cast %343 : vector<1x4x8xf32> to vector<4x8xf32>
    %cst_492 = arith.constant dense<0.000000e+00> : vector<4x8xf32>
    %345 = tpu.matmul %342, %344, %cst_492 {dimension_numbers = #tpu.dot_dimension_numbers<[1], [0], [0], [1], [0, 0, 1, 1], [], []>} : vector<4x4xf32>, vector<4x8xf32>, vector<4x8xf32> -> vector<4x8xf32>
    %346 = arith.addf %340, %345 : vector<4x8xf32>
    %c0_493 = arith.constant 0 : index
    %c3_494 = arith.constant 3 : index
    %c6_495 = arith.constant 6 : index
    %c0_496 = arith.constant 0 : index
    %c0_497 = arith.constant 0 : index
    %347 = vector.load %arg1[%c0_493, %c3_494, %c6_495, %c0_496, %c0_497] : memref<1x4x18x5x4xf32, #tpu.memory_space<vmem>>, vector<1x1x1x4x4xf32>
    %348 = vector.shape_cast %347 : vector<1x1x1x4x4xf32> to vector<4x4xf32>
    %c7_498 = arith.constant 7 : index
    %c0_499 = arith.constant 0 : index
    %c0_500 = arith.constant 0 : index
    %349 = vector.load %arg3[%c7_498, %c0_499, %c0_500] : memref<9x4x8xf32, #tpu.memory_space<vmem>>, vector<1x4x8xf32>
    %350 = vector.shape_cast %349 : vector<1x4x8xf32> to vector<4x8xf32>
    %cst_501 = arith.constant dense<0.000000e+00> : vector<4x8xf32>
    %351 = tpu.matmul %348, %350, %cst_501 {dimension_numbers = #tpu.dot_dimension_numbers<[1], [0], [0], [1], [0, 0, 1, 1], [], []>} : vector<4x4xf32>, vector<4x8xf32>, vector<4x8xf32> -> vector<4x8xf32>
    %352 = arith.addf %346, %351 : vector<4x8xf32>
    %c0_502 = arith.constant 0 : index
    %c0_503 = arith.constant 0 : index
    %c6_504 = arith.constant 6 : index
    %c1_505 = arith.constant 1 : index
    %c0_506 = arith.constant 0 : index
    %353 = vector.load %arg1[%c0_502, %c0_503, %c6_504, %c1_505, %c0_506] : memref<1x4x18x5x4xf32, #tpu.memory_space<vmem>>, vector<1x1x1x4x4xf32>
    %354 = vector.shape_cast %353 : vector<1x1x1x4x4xf32> to vector<4x4xf32>
    %c8_507 = arith.constant 8 : index
    %c0_508 = arith.constant 0 : index
    %c0_509 = arith.constant 0 : index
    %355 = vector.load %arg3[%c8_507, %c0_508, %c0_509] : memref<9x4x8xf32, #tpu.memory_space<vmem>>, vector<1x4x8xf32>
    %356 = vector.shape_cast %355 : vector<1x4x8xf32> to vector<4x8xf32>
    %cst_510 = arith.constant dense<0.000000e+00> : vector<4x8xf32>
    %357 = tpu.matmul %354, %356, %cst_510 {dimension_numbers = #tpu.dot_dimension_numbers<[1], [0], [0], [1], [0, 0, 1, 1], [], []>} : vector<4x4xf32>, vector<4x8xf32>, vector<4x8xf32> -> vector<4x8xf32>
    %358 = arith.addf %352, %357 : vector<4x8xf32>
    %359 = vector.broadcast %0 : vector<1x8xf32> to vector<4x8xf32>
    %360 = arith.addf %358, %359 : vector<4x8xf32>
    %c0_511 = arith.constant 0 : index
    %c3_512 = arith.constant 3 : index
    %c1_513 = arith.constant 1 : index
    %c0_514 = arith.constant 0 : index
    %361 = vector.load %arg9[%c0_511, %c3_512, %c1_513, %c0_514] : memref<2x10x5x8xf32, #tpu.memory_space<vmem>>, vector<1x1x4x8xf32>
    %362 = vector.shape_cast %361 : vector<1x1x4x8xf32> to vector<4x8xf32>
    %363 = vector.shape_cast %360 : vector<4x8xf32> to vector<1x1x4x8xf32>
    tpu.vector_store %arg9[%c0_511, %c3_512, %c1_513, %c0_514], %363 {strides = array<i32>} : memref<2x10x5x8xf32, #tpu.memory_space<vmem>>, vector<1x1x4x8xf32>,
    %cst_515 = arith.constant 0.000000e+00 : f32
    %364 = vector.broadcast %cst_515 : f32 to vector<4x8xf32>
    %c0_516 = arith.constant 0 : index
    %c0_517 = arith.constant 0 : index
    %c6_518 = arith.constant 6 : index
    %c0_519 = arith.constant 0 : index
    %c0_520 = arith.constant 0 : index
    %365 = vector.load %arg1[%c0_516, %c0_517, %c6_518, %c0_519, %c0_520] : memref<1x4x18x5x4xf32, #tpu.memory_space<vmem>>, vector<1x1x1x4x4xf32>
    %366 = vector.shape_cast %365 : vector<1x1x1x4x4xf32> to vector<4x4xf32>
    %c0_521 = arith.constant 0 : index
    %c0_522 = arith.constant 0 : index
    %c0_523 = arith.constant 0 : index
    %367 = vector.load %arg3[%c0_521, %c0_522, %c0_523] : memref<9x4x8xf32, #tpu.memory_space<vmem>>, vector<1x4x8xf32>
    %368 = vector.shape_cast %367 : vector<1x4x8xf32> to vector<4x8xf32>
    %cst_524 = arith.constant dense<0.000000e+00> : vector<4x8xf32>
    %369 = tpu.matmul %366, %368, %cst_524 {dimension_numbers = #tpu.dot_dimension_numbers<[1], [0], [0], [1], [0, 0, 1, 1], [], []>} : vector<4x4xf32>, vector<4x8xf32>, vector<4x8xf32> -> vector<4x8xf32>
    %370 = arith.addf %364, %369 : vector<4x8xf32>
    %c0_525 = arith.constant 0 : index
    %c1_526 = arith.constant 1 : index
    %c6_527 = arith.constant 6 : index
    %c0_528 = arith.constant 0 : index
    %c0_529 = arith.constant 0 : index
    %371 = vector.load %arg1[%c0_525, %c1_526, %c6_527, %c0_528, %c0_529] : memref<1x4x18x5x4xf32, #tpu.memory_space<vmem>>, vector<1x1x1x4x4xf32>
    %372 = vector.shape_cast %371 : vector<1x1x1x4x4xf32> to vector<4x4xf32>
    %c1_530 = arith.constant 1 : index
    %c0_531 = arith.constant 0 : index
    %c0_532 = arith.constant 0 : index
    %373 = vector.load %arg3[%c1_530, %c0_531, %c0_532] : memref<9x4x8xf32, #tpu.memory_space<vmem>>, vector<1x4x8xf32>
    %374 = vector.shape_cast %373 : vector<1x4x8xf32> to vector<4x8xf32>
    %cst_533 = arith.constant dense<0.000000e+00> : vector<4x8xf32>
    %375 = tpu.matmul %372, %374, %cst_533 {dimension_numbers = #tpu.dot_dimension_numbers<[1], [0], [0], [1], [0, 0, 1, 1], [], []>} : vector<4x4xf32>, vector<4x8xf32>, vector<4x8xf32> -> vector<4x8xf32>
    %376 = arith.addf %370, %375 : vector<4x8xf32>
    %c0_534 = arith.constant 0 : index
    %c2_535 = arith.constant 2 : index
    %c6_536 = arith.constant 6 : index
    %c0_537 = arith.constant 0 : index
    %c0_538 = arith.constant 0 : index
    %377 = vector.load %arg1[%c0_534, %c2_535, %c6_536, %c0_537, %c0_538] : memref<1x4x18x5x4xf32, #tpu.memory_space<vmem>>, vector<1x1x1x4x4xf32>
    %378 = vector.shape_cast %377 : vector<1x1x1x4x4xf32> to vector<4x4xf32>
    %c2_539 = arith.constant 2 : index
    %c0_540 = arith.constant 0 : index
    %c0_541 = arith.constant 0 : index
    %379 = vector.load %arg3[%c2_539, %c0_540, %c0_541] : memref<9x4x8xf32, #tpu.memory_space<vmem>>, vector<1x4x8xf32>
    %380 = vector.shape_cast %379 : vector<1x4x8xf32> to vector<4x8xf32>
    %cst_542 = arith.constant dense<0.000000e+00> : vector<4x8xf32>
    %381 = tpu.matmul %378, %380, %cst_542 {dimension_numbers = #tpu.dot_dimension_numbers<[1], [0], [0], [1], [0, 0, 1, 1], [], []>} : vector<4x4xf32>, vector<4x8xf32>, vector<4x8xf32> -> vector<4x8xf32>
    %382 = arith.addf %376, %381 : vector<4x8xf32>
    %c0_543 = arith.constant 0 : index
    %c0_544 = arith.constant 0 : index
    %c7_545 = arith.constant 7 : index
    %c0_546 = arith.constant 0 : index
    %c0_547 = arith.constant 0 : index
    %383 = vector.load %arg1[%c0_543, %c0_544, %c7_545, %c0_546, %c0_547] : memref<1x4x18x5x4xf32, #tpu.memory_space<vmem>>, vector<1x1x1x4x4xf32>
    %384 = vector.shape_cast %383 : vector<1x1x1x4x4xf32> to vector<4x4xf32>
    %c3_548 = arith.constant 3 : index
    %c0_549 = arith.constant 0 : index
    %c0_550 = arith.constant 0 : index
    %385 = vector.load %arg3[%c3_548, %c0_549, %c0_550] : memref<9x4x8xf32, #tpu.memory_space<vmem>>, vector<1x4x8xf32>
    %386 = vector.shape_cast %385 : vector<1x4x8xf32> to vector<4x8xf32>
    %cst_551 = arith.constant dense<0.000000e+00> : vector<4x8xf32>
    %387 = tpu.matmul %384, %386, %cst_551 {dimension_numbers = #tpu.dot_dimension_numbers<[1], [0], [0], [1], [0, 0, 1, 1], [], []>} : vector<4x4xf32>, vector<4x8xf32>, vector<4x8xf32> -> vector<4x8xf32>
    %388 = arith.addf %382, %387 : vector<4x8xf32>
    %c0_552 = arith.constant 0 : index
    %c1_553 = arith.constant 1 : index
    %c7_554 = arith.constant 7 : index
    %c0_555 = arith.constant 0 : index
    %c0_556 = arith.constant 0 : index
    %389 = vector.load %arg1[%c0_552, %c1_553, %c7_554, %c0_555, %c0_556] : memref<1x4x18x5x4xf32, #tpu.memory_space<vmem>>, vector<1x1x1x4x4xf32>
    %390 = vector.shape_cast %389 : vector<1x1x1x4x4xf32> to vector<4x4xf32>
    %c4_557 = arith.constant 4 : index
    %c0_558 = arith.constant 0 : index
    %c0_559 = arith.constant 0 : index
    %391 = vector.load %arg3[%c4_557, %c0_558, %c0_559] : memref<9x4x8xf32, #tpu.memory_space<vmem>>, vector<1x4x8xf32>
    %392 = vector.shape_cast %391 : vector<1x4x8xf32> to vector<4x8xf32>
    %cst_560 = arith.constant dense<0.000000e+00> : vector<4x8xf32>
    %393 = tpu.matmul %390, %392, %cst_560 {dimension_numbers = #tpu.dot_dimension_numbers<[1], [0], [0], [1], [0, 0, 1, 1], [], []>} : vector<4x4xf32>, vector<4x8xf32>, vector<4x8xf32> -> vector<4x8xf32>
    %394 = arith.addf %388, %393 : vector<4x8xf32>
    %c0_561 = arith.constant 0 : index
    %c2_562 = arith.constant 2 : index
    %c7_563 = arith.constant 7 : index
    %c0_564 = arith.constant 0 : index
    %c0_565 = arith.constant 0 : index
    %395 = vector.load %arg1[%c0_561, %c2_562, %c7_563, %c0_564, %c0_565] : memref<1x4x18x5x4xf32, #tpu.memory_space<vmem>>, vector<1x1x1x4x4xf32>
    %396 = vector.shape_cast %395 : vector<1x1x1x4x4xf32> to vector<4x4xf32>
    %c5_566 = arith.constant 5 : index
    %c0_567 = arith.constant 0 : index
    %c0_568 = arith.constant 0 : index
    %397 = vector.load %arg3[%c5_566, %c0_567, %c0_568] : memref<9x4x8xf32, #tpu.memory_space<vmem>>, vector<1x4x8xf32>
    %398 = vector.shape_cast %397 : vector<1x4x8xf32> to vector<4x8xf32>
    %cst_569 = arith.constant dense<0.000000e+00> : vector<4x8xf32>
    %399 = tpu.matmul %396, %398, %cst_569 {dimension_numbers = #tpu.dot_dimension_numbers<[1], [0], [0], [1], [0, 0, 1, 1], [], []>} : vector<4x4xf32>, vector<4x8xf32>, vector<4x8xf32> -> vector<4x8xf32>
    %400 = arith.addf %394, %399 : vector<4x8xf32>
    %c0_570 = arith.constant 0 : index
    %c0_571 = arith.constant 0 : index
    %c8_572 = arith.constant 8 : index
    %c0_573 = arith.constant 0 : index
    %c0_574 = arith.constant 0 : index
    %401 = vector.load %arg1[%c0_570, %c0_571, %c8_572, %c0_573, %c0_574] : memref<1x4x18x5x4xf32, #tpu.memory_space<vmem>>, vector<1x1x1x4x4xf32>
    %402 = vector.shape_cast %401 : vector<1x1x1x4x4xf32> to vector<4x4xf32>
    %c6_575 = arith.constant 6 : index
    %c0_576 = arith.constant 0 : index
    %c0_577 = arith.constant 0 : index
    %403 = vector.load %arg3[%c6_575, %c0_576, %c0_577] : memref<9x4x8xf32, #tpu.memory_space<vmem>>, vector<1x4x8xf32>
    %404 = vector.shape_cast %403 : vector<1x4x8xf32> to vector<4x8xf32>
    %cst_578 = arith.constant dense<0.000000e+00> : vector<4x8xf32>
    %405 = tpu.matmul %402, %404, %cst_578 {dimension_numbers = #tpu.dot_dimension_numbers<[1], [0], [0], [1], [0, 0, 1, 1], [], []>} : vector<4x4xf32>, vector<4x8xf32>, vector<4x8xf32> -> vector<4x8xf32>
    %406 = arith.addf %400, %405 : vector<4x8xf32>
    %c0_579 = arith.constant 0 : index
    %c1_580 = arith.constant 1 : index
    %c8_581 = arith.constant 8 : index
    %c0_582 = arith.constant 0 : index
    %c0_583 = arith.constant 0 : index
    %407 = vector.load %arg1[%c0_579, %c1_580, %c8_581, %c0_582, %c0_583] : memref<1x4x18x5x4xf32, #tpu.memory_space<vmem>>, vector<1x1x1x4x4xf32>
    %408 = vector.shape_cast %407 : vector<1x1x1x4x4xf32> to vector<4x4xf32>
    %c7_584 = arith.constant 7 : index
    %c0_585 = arith.constant 0 : index
    %c0_586 = arith.constant 0 : index
    %409 = vector.load %arg3[%c7_584, %c0_585, %c0_586] : memref<9x4x8xf32, #tpu.memory_space<vmem>>, vector<1x4x8xf32>
    %410 = vector.shape_cast %409 : vector<1x4x8xf32> to vector<4x8xf32>
    %cst_587 = arith.constant dense<0.000000e+00> : vector<4x8xf32>
    %411 = tpu.matmul %408, %410, %cst_587 {dimension_numbers = #tpu.dot_dimension_numbers<[1], [0], [0], [1], [0, 0, 1, 1], [], []>} : vector<4x4xf32>, vector<4x8xf32>, vector<4x8xf32> -> vector<4x8xf32>
    %412 = arith.addf %406, %411 : vector<4x8xf32>
    %c0_588 = arith.constant 0 : index
    %c2_589 = arith.constant 2 : index
    %c8_590 = arith.constant 8 : index
    %c0_591 = arith.constant 0 : index
    %c0_592 = arith.constant 0 : index
    %413 = vector.load %arg1[%c0_588, %c2_589, %c8_590, %c0_591, %c0_592] : memref<1x4x18x5x4xf32, #tpu.memory_space<vmem>>, vector<1x1x1x4x4xf32>
    %414 = vector.shape_cast %413 : vector<1x1x1x4x4xf32> to vector<4x4xf32>
    %c8_593 = arith.constant 8 : index
    %c0_594 = arith.constant 0 : index
    %c0_595 = arith.constant 0 : index
    %415 = vector.load %arg3[%c8_593, %c0_594, %c0_595] : memref<9x4x8xf32, #tpu.memory_space<vmem>>, vector<1x4x8xf32>
    %416 = vector.shape_cast %415 : vector<1x4x8xf32> to vector<4x8xf32>
    %cst_596 = arith.constant dense<0.000000e+00> : vector<4x8xf32>
    %417 = tpu.matmul %414, %416, %cst_596 {dimension_numbers = #tpu.dot_dimension_numbers<[1], [0], [0], [1], [0, 0, 1, 1], [], []>} : vector<4x4xf32>, vector<4x8xf32>, vector<4x8xf32> -> vector<4x8xf32>
    %418 = arith.addf %412, %417 : vector<4x8xf32>
    %419 = vector.broadcast %0 : vector<1x8xf32> to vector<4x8xf32>
    %420 = arith.addf %418, %419 : vector<4x8xf32>
    %c1_597 = arith.constant 1 : index
    %c4_598 = arith.constant 4 : index
    %c0_599 = arith.constant 0 : index
    %c0_600 = arith.constant 0 : index
    %421 = vector.load %arg9[%c1_597, %c4_598, %c0_599, %c0_600] : memref<2x10x5x8xf32, #tpu.memory_space<vmem>>, vector<1x1x4x8xf32>
    %422 = vector.shape_cast %421 : vector<1x1x4x8xf32> to vector<4x8xf32>
    %423 = vector.shape_cast %420 : vector<4x8xf32> to vector<1x1x4x8xf32>
    tpu.vector_store %arg9[%c1_597, %c4_598, %c0_599, %c0_600], %423 {strides = array<i32>} : memref<2x10x5x8xf32, #tpu.memory_space<vmem>>, vector<1x1x4x8xf32>,
    %cst_601 = arith.constant 0.000000e+00 : f32
    %424 = vector.broadcast %cst_601 : f32 to vector<4x8xf32>
    %c0_602 = arith.constant 0 : index
    %c2_603 = arith.constant 2 : index
    %c6_604 = arith.constant 6 : index
    %c0_605 = arith.constant 0 : index
    %c0_606 = arith.constant 0 : index
    %425 = vector.load %arg1[%c0_602, %c2_603, %c6_604, %c0_605, %c0_606] : memref<1x4x18x5x4xf32, #tpu.memory_space<vmem>>, vector<1x1x1x4x4xf32>
    %426 = vector.shape_cast %425 : vector<1x1x1x4x4xf32> to vector<4x4xf32>
    %c0_607 = arith.constant 0 : index
    %c0_608 = arith.constant 0 : index
    %c0_609 = arith.constant 0 : index
    %427 = vector.load %arg3[%c0_607, %c0_608, %c0_609] : memref<9x4x8xf32, #tpu.memory_space<vmem>>, vector<1x4x8xf32>
    %428 = vector.shape_cast %427 : vector<1x4x8xf32> to vector<4x8xf32>
    %cst_610 = arith.constant dense<0.000000e+00> : vector<4x8xf32>
    %429 = tpu.matmul %426, %428, %cst_610 {dimension_numbers = #tpu.dot_dimension_numbers<[1], [0], [0], [1], [0, 0, 1, 1], [], []>} : vector<4x4xf32>, vector<4x8xf32>, vector<4x8xf32> -> vector<4x8xf32>
    %430 = arith.addf %424, %429 : vector<4x8xf32>
    %c0_611 = arith.constant 0 : index
    %c3_612 = arith.constant 3 : index
    %c6_613 = arith.constant 6 : index
    %c0_614 = arith.constant 0 : index
    %c0_615 = arith.constant 0 : index
    %431 = vector.load %arg1[%c0_611, %c3_612, %c6_613, %c0_614, %c0_615] : memref<1x4x18x5x4xf32, #tpu.memory_space<vmem>>, vector<1x1x1x4x4xf32>
    %432 = vector.shape_cast %431 : vector<1x1x1x4x4xf32> to vector<4x4xf32>
    %c1_616 = arith.constant 1 : index
    %c0_617 = arith.constant 0 : index
    %c0_618 = arith.constant 0 : index
    %433 = vector.load %arg3[%c1_616, %c0_617, %c0_618] : memref<9x4x8xf32, #tpu.memory_space<vmem>>, vector<1x4x8xf32>
    %434 = vector.shape_cast %433 : vector<1x4x8xf32> to vector<4x8xf32>
    %cst_619 = arith.constant dense<0.000000e+00> : vector<4x8xf32>
    %435 = tpu.matmul %432, %434, %cst_619 {dimension_numbers = #tpu.dot_dimension_numbers<[1], [0], [0], [1], [0, 0, 1, 1], [], []>} : vector<4x4xf32>, vector<4x8xf32>, vector<4x8xf32> -> vector<4x8xf32>
    %436 = arith.addf %430, %435 : vector<4x8xf32>
    %c0_620 = arith.constant 0 : index
    %c0_621 = arith.constant 0 : index
    %c6_622 = arith.constant 6 : index
    %c1_623 = arith.constant 1 : index
    %c0_624 = arith.constant 0 : index
    %437 = vector.load %arg1[%c0_620, %c0_621, %c6_622, %c1_623, %c0_624] : memref<1x4x18x5x4xf32, #tpu.memory_space<vmem>>, vector<1x1x1x4x4xf32>
    %438 = vector.shape_cast %437 : vector<1x1x1x4x4xf32> to vector<4x4xf32>
    %c2_625 = arith.constant 2 : index
    %c0_626 = arith.constant 0 : index
    %c0_627 = arith.constant 0 : index
    %439 = vector.load %arg3[%c2_625, %c0_626, %c0_627] : memref<9x4x8xf32, #tpu.memory_space<vmem>>, vector<1x4x8xf32>
    %440 = vector.shape_cast %439 : vector<1x4x8xf32> to vector<4x8xf32>
    %cst_628 = arith.constant dense<0.000000e+00> : vector<4x8xf32>
    %441 = tpu.matmul %438, %440, %cst_628 {dimension_numbers = #tpu.dot_dimension_numbers<[1], [0], [0], [1], [0, 0, 1, 1], [], []>} : vector<4x4xf32>, vector<4x8xf32>, vector<4x8xf32> -> vector<4x8xf32>
    %442 = arith.addf %436, %441 : vector<4x8xf32>
    %c0_629 = arith.constant 0 : index
    %c2_630 = arith.constant 2 : index
    %c7_631 = arith.constant 7 : index
    %c0_632 = arith.constant 0 : index
    %c0_633 = arith.constant 0 : index
    %443 = vector.load %arg1[%c0_629, %c2_630, %c7_631, %c0_632, %c0_633] : memref<1x4x18x5x4xf32, #tpu.memory_space<vmem>>, vector<1x1x1x4x4xf32>
    %444 = vector.shape_cast %443 : vector<1x1x1x4x4xf32> to vector<4x4xf32>
    %c3_634 = arith.constant 3 : index
    %c0_635 = arith.constant 0 : index
    %c0_636 = arith.constant 0 : index
    %445 = vector.load %arg3[%c3_634, %c0_635, %c0_636] : memref<9x4x8xf32, #tpu.memory_space<vmem>>, vector<1x4x8xf32>
    %446 = vector.shape_cast %445 : vector<1x4x8xf32> to vector<4x8xf32>
    %cst_637 = arith.constant dense<0.000000e+00> : vector<4x8xf32>
    %447 = tpu.matmul %444, %446, %cst_637 {dimension_numbers = #tpu.dot_dimension_numbers<[1], [0], [0], [1], [0, 0, 1, 1], [], []>} : vector<4x4xf32>, vector<4x8xf32>, vector<4x8xf32> -> vector<4x8xf32>
    %448 = arith.addf %442, %447 : vector<4x8xf32>
    %c0_638 = arith.constant 0 : index
    %c3_639 = arith.constant 3 : index
    %c7_640 = arith.constant 7 : index
    %c0_641 = arith.constant 0 : index
    %c0_642 = arith.constant 0 : index
    %449 = vector.load %arg1[%c0_638, %c3_639, %c7_640, %c0_641, %c0_642] : memref<1x4x18x5x4xf32, #tpu.memory_space<vmem>>, vector<1x1x1x4x4xf32>
    %450 = vector.shape_cast %449 : vector<1x1x1x4x4xf32> to vector<4x4xf32>
    %c4_643 = arith.constant 4 : index
    %c0_644 = arith.constant 0 : index
    %c0_645 = arith.constant 0 : index
    %451 = vector.load %arg3[%c4_643, %c0_644, %c0_645] : memref<9x4x8xf32, #tpu.memory_space<vmem>>, vector<1x4x8xf32>
    %452 = vector.shape_cast %451 : vector<1x4x8xf32> to vector<4x8xf32>
    %cst_646 = arith.constant dense<0.000000e+00> : vector<4x8xf32>
    %453 = tpu.matmul %450, %452, %cst_646 {dimension_numbers = #tpu.dot_dimension_numbers<[1], [0], [0], [1], [0, 0, 1, 1], [], []>} : vector<4x4xf32>, vector<4x8xf32>, vector<4x8xf32> -> vector<4x8xf32>
    %454 = arith.addf %448, %453 : vector<4x8xf32>
    %c0_647 = arith.constant 0 : index
    %c0_648 = arith.constant 0 : index
    %c7_649 = arith.constant 7 : index
    %c1_650 = arith.constant 1 : index
    %c0_651 = arith.constant 0 : index
    %455 = vector.load %arg1[%c0_647, %c0_648, %c7_649, %c1_650, %c0_651] : memref<1x4x18x5x4xf32, #tpu.memory_space<vmem>>, vector<1x1x1x4x4xf32>
    %456 = vector.shape_cast %455 : vector<1x1x1x4x4xf32> to vector<4x4xf32>
    %c5_652 = arith.constant 5 : index
    %c0_653 = arith.constant 0 : index
    %c0_654 = arith.constant 0 : index
    %457 = vector.load %arg3[%c5_652, %c0_653, %c0_654] : memref<9x4x8xf32, #tpu.memory_space<vmem>>, vector<1x4x8xf32>
    %458 = vector.shape_cast %457 : vector<1x4x8xf32> to vector<4x8xf32>
    %cst_655 = arith.constant dense<0.000000e+00> : vector<4x8xf32>
    %459 = tpu.matmul %456, %458, %cst_655 {dimension_numbers = #tpu.dot_dimension_numbers<[1], [0], [0], [1], [0, 0, 1, 1], [], []>} : vector<4x4xf32>, vector<4x8xf32>, vector<4x8xf32> -> vector<4x8xf32>
    %460 = arith.addf %454, %459 : vector<4x8xf32>
    %c0_656 = arith.constant 0 : index
    %c2_657 = arith.constant 2 : index
    %c8_658 = arith.constant 8 : index
    %c0_659 = arith.constant 0 : index
    %c0_660 = arith.constant 0 : index
    %461 = vector.load %arg1[%c0_656, %c2_657, %c8_658, %c0_659, %c0_660] : memref<1x4x18x5x4xf32, #tpu.memory_space<vmem>>, vector<1x1x1x4x4xf32>
    %462 = vector.shape_cast %461 : vector<1x1x1x4x4xf32> to vector<4x4xf32>
    %c6_661 = arith.constant 6 : index
    %c0_662 = arith.constant 0 : index
    %c0_663 = arith.constant 0 : index
    %463 = vector.load %arg3[%c6_661, %c0_662, %c0_663] : memref<9x4x8xf32, #tpu.memory_space<vmem>>, vector<1x4x8xf32>
    %464 = vector.shape_cast %463 : vector<1x4x8xf32> to vector<4x8xf32>
    %cst_664 = arith.constant dense<0.000000e+00> : vector<4x8xf32>
    %465 = tpu.matmul %462, %464, %cst_664 {dimension_numbers = #tpu.dot_dimension_numbers<[1], [0], [0], [1], [0, 0, 1, 1], [], []>} : vector<4x4xf32>, vector<4x8xf32>, vector<4x8xf32> -> vector<4x8xf32>
    %466 = arith.addf %460, %465 : vector<4x8xf32>
    %c0_665 = arith.constant 0 : index
    %c3_666 = arith.constant 3 : index
    %c8_667 = arith.constant 8 : index
    %c0_668 = arith.constant 0 : index
    %c0_669 = arith.constant 0 : index
    %467 = vector.load %arg1[%c0_665, %c3_666, %c8_667, %c0_668, %c0_669] : memref<1x4x18x5x4xf32, #tpu.memory_space<vmem>>, vector<1x1x1x4x4xf32>
    %468 = vector.shape_cast %467 : vector<1x1x1x4x4xf32> to vector<4x4xf32>
    %c7_670 = arith.constant 7 : index
    %c0_671 = arith.constant 0 : index
    %c0_672 = arith.constant 0 : index
    %469 = vector.load %arg3[%c7_670, %c0_671, %c0_672] : memref<9x4x8xf32, #tpu.memory_space<vmem>>, vector<1x4x8xf32>
    %470 = vector.shape_cast %469 : vector<1x4x8xf32> to vector<4x8xf32>
    %cst_673 = arith.constant dense<0.000000e+00> : vector<4x8xf32>
    %471 = tpu.matmul %468, %470, %cst_673 {dimension_numbers = #tpu.dot_dimension_numbers<[1], [0], [0], [1], [0, 0, 1, 1], [], []>} : vector<4x4xf32>, vector<4x8xf32>, vector<4x8xf32> -> vector<4x8xf32>
    %472 = arith.addf %466, %471 : vector<4x8xf32>
    %c0_674 = arith.constant 0 : index
    %c0_675 = arith.constant 0 : index
    %c8_676 = arith.constant 8 : index
    %c1_677 = arith.constant 1 : index
    %c0_678 = arith.constant 0 : index
    %473 = vector.load %arg1[%c0_674, %c0_675, %c8_676, %c1_677, %c0_678] : memref<1x4x18x5x4xf32, #tpu.memory_space<vmem>>, vector<1x1x1x4x4xf32>
    %474 = vector.shape_cast %473 : vector<1x1x1x4x4xf32> to vector<4x4xf32>
    %c8_679 = arith.constant 8 : index
    %c0_680 = arith.constant 0 : index
    %c0_681 = arith.constant 0 : index
    %475 = vector.load %arg3[%c8_679, %c0_680, %c0_681] : memref<9x4x8xf32, #tpu.memory_space<vmem>>, vector<1x4x8xf32>
    %476 = vector.shape_cast %475 : vector<1x4x8xf32> to vector<4x8xf32>
    %cst_682 = arith.constant dense<0.000000e+00> : vector<4x8xf32>
    %477 = tpu.matmul %474, %476, %cst_682 {dimension_numbers = #tpu.dot_dimension_numbers<[1], [0], [0], [1], [0, 0, 1, 1], [], []>} : vector<4x4xf32>, vector<4x8xf32>, vector<4x8xf32> -> vector<4x8xf32>
    %478 = arith.addf %472, %477 : vector<4x8xf32>
    %479 = vector.broadcast %0 : vector<1x8xf32> to vector<4x8xf32>
    %480 = arith.addf %478, %479 : vector<4x8xf32>
    %c0_683 = arith.constant 0 : index
    %c4_684 = arith.constant 4 : index
    %c1_685 = arith.constant 1 : index
    %c0_686 = arith.constant 0 : index
    %481 = vector.load %arg9[%c0_683, %c4_684, %c1_685, %c0_686] : memref<2x10x5x8xf32, #tpu.memory_space<vmem>>, vector<1x1x4x8xf32>
    %482 = vector.shape_cast %481 : vector<1x1x4x8xf32> to vector<4x8xf32>
    %483 = vector.shape_cast %480 : vector<4x8xf32> to vector<1x1x4x8xf32>
    tpu.vector_store %arg9[%c0_683, %c4_684, %c1_685, %c0_686], %483 {strides = array<i32>} : memref<2x10x5x8xf32, #tpu.memory_space<vmem>>, vector<1x1x4x8xf32>,
    %cst_687 = arith.constant 0.000000e+00 : f32
    %484 = vector.broadcast %cst_687 : f32 to vector<4x8xf32>
    %c0_688 = arith.constant 0 : index
    %c0_689 = arith.constant 0 : index
    %c8_690 = arith.constant 8 : index
    %c0_691 = arith.constant 0 : index
    %c0_692 = arith.constant 0 : index
    %485 = vector.load %arg1[%c0_688, %c0_689, %c8_690, %c0_691, %c0_692] : memref<1x4x18x5x4xf32, #tpu.memory_space<vmem>>, vector<1x1x1x4x4xf32>
    %486 = vector.shape_cast %485 : vector<1x1x1x4x4xf32> to vector<4x4xf32>
    %c0_693 = arith.constant 0 : index
    %c0_694 = arith.constant 0 : index
    %c0_695 = arith.constant 0 : index
    %487 = vector.load %arg3[%c0_693, %c0_694, %c0_695] : memref<9x4x8xf32, #tpu.memory_space<vmem>>, vector<1x4x8xf32>
    %488 = vector.shape_cast %487 : vector<1x4x8xf32> to vector<4x8xf32>
    %cst_696 = arith.constant dense<0.000000e+00> : vector<4x8xf32>
    %489 = tpu.matmul %486, %488, %cst_696 {dimension_numbers = #tpu.dot_dimension_numbers<[1], [0], [0], [1], [0, 0, 1, 1], [], []>} : vector<4x4xf32>, vector<4x8xf32>, vector<4x8xf32> -> vector<4x8xf32>
    %490 = arith.addf %484, %489 : vector<4x8xf32>
    %c0_697 = arith.constant 0 : index
    %c1_698 = arith.constant 1 : index
    %c8_699 = arith.constant 8 : index
    %c0_700 = arith.constant 0 : index
    %c0_701 = arith.constant 0 : index
    %491 = vector.load %arg1[%c0_697, %c1_698, %c8_699, %c0_700, %c0_701] : memref<1x4x18x5x4xf32, #tpu.memory_space<vmem>>, vector<1x1x1x4x4xf32>
    %492 = vector.shape_cast %491 : vector<1x1x1x4x4xf32> to vector<4x4xf32>
    %c1_702 = arith.constant 1 : index
    %c0_703 = arith.constant 0 : index
    %c0_704 = arith.constant 0 : index
    %493 = vector.load %arg3[%c1_702, %c0_703, %c0_704] : memref<9x4x8xf32, #tpu.memory_space<vmem>>, vector<1x4x8xf32>
    %494 = vector.shape_cast %493 : vector<1x4x8xf32> to vector<4x8xf32>
    %cst_705 = arith.constant dense<0.000000e+00> : vector<4x8xf32>
    %495 = tpu.matmul %492, %494, %cst_705 {dimension_numbers = #tpu.dot_dimension_numbers<[1], [0], [0], [1], [0, 0, 1, 1], [], []>} : vector<4x4xf32>, vector<4x8xf32>, vector<4x8xf32> -> vector<4x8xf32>
    %496 = arith.addf %490, %495 : vector<4x8xf32>
    %c0_706 = arith.constant 0 : index
    %c2_707 = arith.constant 2 : index
    %c8_708 = arith.constant 8 : index
    %c0_709 = arith.constant 0 : index
    %c0_710 = arith.constant 0 : index
    %497 = vector.load %arg1[%c0_706, %c2_707, %c8_708, %c0_709, %c0_710] : memref<1x4x18x5x4xf32, #tpu.memory_space<vmem>>, vector<1x1x1x4x4xf32>
    %498 = vector.shape_cast %497 : vector<1x1x1x4x4xf32> to vector<4x4xf32>
    %c2_711 = arith.constant 2 : index
    %c0_712 = arith.constant 0 : index
    %c0_713 = arith.constant 0 : index
    %499 = vector.load %arg3[%c2_711, %c0_712, %c0_713] : memref<9x4x8xf32, #tpu.memory_space<vmem>>, vector<1x4x8xf32>
    %500 = vector.shape_cast %499 : vector<1x4x8xf32> to vector<4x8xf32>
    %cst_714 = arith.constant dense<0.000000e+00> : vector<4x8xf32>
    %501 = tpu.matmul %498, %500, %cst_714 {dimension_numbers = #tpu.dot_dimension_numbers<[1], [0], [0], [1], [0, 0, 1, 1], [], []>} : vector<4x4xf32>, vector<4x8xf32>, vector<4x8xf32> -> vector<4x8xf32>
    %502 = arith.addf %496, %501 : vector<4x8xf32>
    %c0_715 = arith.constant 0 : index
    %c0_716 = arith.constant 0 : index
    %c9 = arith.constant 9 : index
    %c0_717 = arith.constant 0 : index
    %c0_718 = arith.constant 0 : index
    %503 = vector.load %arg1[%c0_715, %c0_716, %c9, %c0_717, %c0_718] : memref<1x4x18x5x4xf32, #tpu.memory_space<vmem>>, vector<1x1x1x4x4xf32>
    %504 = vector.shape_cast %503 : vector<1x1x1x4x4xf32> to vector<4x4xf32>
    %c3_719 = arith.constant 3 : index
    %c0_720 = arith.constant 0 : index
    %c0_721 = arith.constant 0 : index
    %505 = vector.load %arg3[%c3_719, %c0_720, %c0_721] : memref<9x4x8xf32, #tpu.memory_space<vmem>>, vector<1x4x8xf32>
    %506 = vector.shape_cast %505 : vector<1x4x8xf32> to vector<4x8xf32>
    %cst_722 = arith.constant dense<0.000000e+00> : vector<4x8xf32>
    %507 = tpu.matmul %504, %506, %cst_722 {dimension_numbers = #tpu.dot_dimension_numbers<[1], [0], [0], [1], [0, 0, 1, 1], [], []>} : vector<4x4xf32>, vector<4x8xf32>, vector<4x8xf32> -> vector<4x8xf32>
    %508 = arith.addf %502, %507 : vector<4x8xf32>
    %c0_723 = arith.constant 0 : index
    %c1_724 = arith.constant 1 : index
    %c9_725 = arith.constant 9 : index
    %c0_726 = arith.constant 0 : index
    %c0_727 = arith.constant 0 : index
    %509 = vector.load %arg1[%c0_723, %c1_724, %c9_725, %c0_726, %c0_727] : memref<1x4x18x5x4xf32, #tpu.memory_space<vmem>>, vector<1x1x1x4x4xf32>
    %510 = vector.shape_cast %509 : vector<1x1x1x4x4xf32> to vector<4x4xf32>
    %c4_728 = arith.constant 4 : index
    %c0_729 = arith.constant 0 : index
    %c0_730 = arith.constant 0 : index
    %511 = vector.load %arg3[%c4_728, %c0_729, %c0_730] : memref<9x4x8xf32, #tpu.memory_space<vmem>>, vector<1x4x8xf32>
    %512 = vector.shape_cast %511 : vector<1x4x8xf32> to vector<4x8xf32>
    %cst_731 = arith.constant dense<0.000000e+00> : vector<4x8xf32>
    %513 = tpu.matmul %510, %512, %cst_731 {dimension_numbers = #tpu.dot_dimension_numbers<[1], [0], [0], [1], [0, 0, 1, 1], [], []>} : vector<4x4xf32>, vector<4x8xf32>, vector<4x8xf32> -> vector<4x8xf32>
    %514 = arith.addf %508, %513 : vector<4x8xf32>
    %c0_732 = arith.constant 0 : index
    %c2_733 = arith.constant 2 : index
    %c9_734 = arith.constant 9 : index
    %c0_735 = arith.constant 0 : index
    %c0_736 = arith.constant 0 : index
    %515 = vector.load %arg1[%c0_732, %c2_733, %c9_734, %c0_735, %c0_736] : memref<1x4x18x5x4xf32, #tpu.memory_space<vmem>>, vector<1x1x1x4x4xf32>
    %516 = vector.shape_cast %515 : vector<1x1x1x4x4xf32> to vector<4x4xf32>
    %c5_737 = arith.constant 5 : index
    %c0_738 = arith.constant 0 : index
    %c0_739 = arith.constant 0 : index
    %517 = vector.load %arg3[%c5_737, %c0_738, %c0_739] : memref<9x4x8xf32, #tpu.memory_space<vmem>>, vector<1x4x8xf32>
    %518 = vector.shape_cast %517 : vector<1x4x8xf32> to vector<4x8xf32>
    %cst_740 = arith.constant dense<0.000000e+00> : vector<4x8xf32>
    %519 = tpu.matmul %516, %518, %cst_740 {dimension_numbers = #tpu.dot_dimension_numbers<[1], [0], [0], [1], [0, 0, 1, 1], [], []>} : vector<4x4xf32>, vector<4x8xf32>, vector<4x8xf32> -> vector<4x8xf32>
    %520 = arith.addf %514, %519 : vector<4x8xf32>
    %c0_741 = arith.constant 0 : index
    %c0_742 = arith.constant 0 : index
    %c10 = arith.constant 10 : index
    %c0_743 = arith.constant 0 : index
    %c0_744 = arith.constant 0 : index
    %521 = vector.load %arg1[%c0_741, %c0_742, %c10, %c0_743, %c0_744] : memref<1x4x18x5x4xf32, #tpu.memory_space<vmem>>, vector<1x1x1x4x4xf32>
    %522 = vector.shape_cast %521 : vector<1x1x1x4x4xf32> to vector<4x4xf32>
    %c6_745 = arith.constant 6 : index
    %c0_746 = arith.constant 0 : index
    %c0_747 = arith.constant 0 : index
    %523 = vector.load %arg3[%c6_745, %c0_746, %c0_747] : memref<9x4x8xf32, #tpu.memory_space<vmem>>, vector<1x4x8xf32>
    %524 = vector.shape_cast %523 : vector<1x4x8xf32> to vector<4x8xf32>
    %cst_748 = arith.constant dense<0.000000e+00> : vector<4x8xf32>
    %525 = tpu.matmul %522, %524, %cst_748 {dimension_numbers = #tpu.dot_dimension_numbers<[1], [0], [0], [1], [0, 0, 1, 1], [], []>} : vector<4x4xf32>, vector<4x8xf32>, vector<4x8xf32> -> vector<4x8xf32>
    %526 = arith.addf %520, %525 : vector<4x8xf32>
    %c0_749 = arith.constant 0 : index
    %c1_750 = arith.constant 1 : index
    %c10_751 = arith.constant 10 : index
    %c0_752 = arith.constant 0 : index
    %c0_753 = arith.constant 0 : index
    %527 = vector.load %arg1[%c0_749, %c1_750, %c10_751, %c0_752, %c0_753] : memref<1x4x18x5x4xf32, #tpu.memory_space<vmem>>, vector<1x1x1x4x4xf32>
    %528 = vector.shape_cast %527 : vector<1x1x1x4x4xf32> to vector<4x4xf32>
    %c7_754 = arith.constant 7 : index
    %c0_755 = arith.constant 0 : index
    %c0_756 = arith.constant 0 : index
    %529 = vector.load %arg3[%c7_754, %c0_755, %c0_756] : memref<9x4x8xf32, #tpu.memory_space<vmem>>, vector<1x4x8xf32>
    %530 = vector.shape_cast %529 : vector<1x4x8xf32> to vector<4x8xf32>
    %cst_757 = arith.constant dense<0.000000e+00> : vector<4x8xf32>
    %531 = tpu.matmul %528, %530, %cst_757 {dimension_numbers = #tpu.dot_dimension_numbers<[1], [0], [0], [1], [0, 0, 1, 1], [], []>} : vector<4x4xf32>, vector<4x8xf32>, vector<4x8xf32> -> vector<4x8xf32>
    %532 = arith.addf %526, %531 : vector<4x8xf32>
    %c0_758 = arith.constant 0 : index
    %c2_759 = arith.constant 2 : index
    %c10_760 = arith.constant 10 : index
    %c0_761 = arith.constant 0 : index
    %c0_762 = arith.constant 0 : index
    %533 = vector.load %arg1[%c0_758, %c2_759, %c10_760, %c0_761, %c0_762] : memref<1x4x18x5x4xf32, #tpu.memory_space<vmem>>, vector<1x1x1x4x4xf32>
    %534 = vector.shape_cast %533 : vector<1x1x1x4x4xf32> to vector<4x4xf32>
    %c8_763 = arith.constant 8 : index
    %c0_764 = arith.constant 0 : index
    %c0_765 = arith.constant 0 : index
    %535 = vector.load %arg3[%c8_763, %c0_764, %c0_765] : memref<9x4x8xf32, #tpu.memory_space<vmem>>, vector<1x4x8xf32>
    %536 = vector.shape_cast %535 : vector<1x4x8xf32> to vector<4x8xf32>
    %cst_766 = arith.constant dense<0.000000e+00> : vector<4x8xf32>
    %537 = tpu.matmul %534, %536, %cst_766 {dimension_numbers = #tpu.dot_dimension_numbers<[1], [0], [0], [1], [0, 0, 1, 1], [], []>} : vector<4x4xf32>, vector<4x8xf32>, vector<4x8xf32> -> vector<4x8xf32>
    %538 = arith.addf %532, %537 : vector<4x8xf32>
    %539 = vector.broadcast %0 : vector<1x8xf32> to vector<4x8xf32>
    %540 = arith.addf %538, %539 : vector<4x8xf32>
    %c1_767 = arith.constant 1 : index
    %c5_768 = arith.constant 5 : index
    %c0_769 = arith.constant 0 : index
    %c0_770 = arith.constant 0 : index
    %541 = vector.load %arg9[%c1_767, %c5_768, %c0_769, %c0_770] : memref<2x10x5x8xf32, #tpu.memory_space<vmem>>, vector<1x1x4x8xf32>
    %542 = vector.shape_cast %541 : vector<1x1x4x8xf32> to vector<4x8xf32>
    %543 = vector.shape_cast %540 : vector<4x8xf32> to vector<1x1x4x8xf32>
    tpu.vector_store %arg9[%c1_767, %c5_768, %c0_769, %c0_770], %543 {strides = array<i32>} : memref<2x10x5x8xf32, #tpu.memory_space<vmem>>, vector<1x1x4x8xf32>,
    %cst_771 = arith.constant 0.000000e+00 : f32
    %544 = vector.broadcast %cst_771 : f32 to vector<4x8xf32>
    %c0_772 = arith.constant 0 : index
    %c2_773 = arith.constant 2 : index
    %c8_774 = arith.constant 8 : index
    %c0_775 = arith.constant 0 : index
    %c0_776 = arith.constant 0 : index
    %545 = vector.load %arg1[%c0_772, %c2_773, %c8_774, %c0_775, %c0_776] : memref<1x4x18x5x4xf32, #tpu.memory_space<vmem>>, vector<1x1x1x4x4xf32>
    %546 = vector.shape_cast %545 : vector<1x1x1x4x4xf32> to vector<4x4xf32>
    %c0_777 = arith.constant 0 : index
    %c0_778 = arith.constant 0 : index
    %c0_779 = arith.constant 0 : index
    %547 = vector.load %arg3[%c0_777, %c0_778, %c0_779] : memref<9x4x8xf32, #tpu.memory_space<vmem>>, vector<1x4x8xf32>
    %548 = vector.shape_cast %547 : vector<1x4x8xf32> to vector<4x8xf32>
    %cst_780 = arith.constant dense<0.000000e+00> : vector<4x8xf32>
    %549 = tpu.matmul %546, %548, %cst_780 {dimension_numbers = #tpu.dot_dimension_numbers<[1], [0], [0], [1], [0, 0, 1, 1], [], []>} : vector<4x4xf32>, vector<4x8xf32>, vector<4x8xf32> -> vector<4x8xf32>
    %550 = arith.addf %544, %549 : vector<4x8xf32>
    %c0_781 = arith.constant 0 : index
    %c3_782 = arith.constant 3 : index
    %c8_783 = arith.constant 8 : index
    %c0_784 = arith.constant 0 : index
    %c0_785 = arith.constant 0 : index
    %551 = vector.load %arg1[%c0_781, %c3_782, %c8_783, %c0_784, %c0_785] : memref<1x4x18x5x4xf32, #tpu.memory_space<vmem>>, vector<1x1x1x4x4xf32>
    %552 = vector.shape_cast %551 : vector<1x1x1x4x4xf32> to vector<4x4xf32>
    %c1_786 = arith.constant 1 : index
    %c0_787 = arith.constant 0 : index
    %c0_788 = arith.constant 0 : index
    %553 = vector.load %arg3[%c1_786, %c0_787, %c0_788] : memref<9x4x8xf32, #tpu.memory_space<vmem>>, vector<1x4x8xf32>
    %554 = vector.shape_cast %553 : vector<1x4x8xf32> to vector<4x8xf32>
    %cst_789 = arith.constant dense<0.000000e+00> : vector<4x8xf32>
    %555 = tpu.matmul %552, %554, %cst_789 {dimension_numbers = #tpu.dot_dimension_numbers<[1], [0], [0], [1], [0, 0, 1, 1], [], []>} : vector<4x4xf32>, vector<4x8xf32>, vector<4x8xf32> -> vector<4x8xf32>
    %556 = arith.addf %550, %555 : vector<4x8xf32>
    %c0_790 = arith.constant 0 : index
    %c0_791 = arith.constant 0 : index
    %c8_792 = arith.constant 8 : index
    %c1_793 = arith.constant 1 : index
    %c0_794 = arith.constant 0 : index
    %557 = vector.load %arg1[%c0_790, %c0_791, %c8_792, %c1_793, %c0_794] : memref<1x4x18x5x4xf32, #tpu.memory_space<vmem>>, vector<1x1x1x4x4xf32>
    %558 = vector.shape_cast %557 : vector<1x1x1x4x4xf32> to vector<4x4xf32>
    %c2_795 = arith.constant 2 : index
    %c0_796 = arith.constant 0 : index
    %c0_797 = arith.constant 0 : index
    %559 = vector.load %arg3[%c2_795, %c0_796, %c0_797] : memref<9x4x8xf32, #tpu.memory_space<vmem>>, vector<1x4x8xf32>
    %560 = vector.shape_cast %559 : vector<1x4x8xf32> to vector<4x8xf32>
    %cst_798 = arith.constant dense<0.000000e+00> : vector<4x8xf32>
    %561 = tpu.matmul %558, %560, %cst_798 {dimension_numbers = #tpu.dot_dimension_numbers<[1], [0], [0], [1], [0, 0, 1, 1], [], []>} : vector<4x4xf32>, vector<4x8xf32>, vector<4x8xf32> -> vector<4x8xf32>
    %562 = arith.addf %556, %561 : vector<4x8xf32>
    %c0_799 = arith.constant 0 : index
    %c2_800 = arith.constant 2 : index
    %c9_801 = arith.constant 9 : index
    %c0_802 = arith.constant 0 : index
    %c0_803 = arith.constant 0 : index
    %563 = vector.load %arg1[%c0_799, %c2_800, %c9_801, %c0_802, %c0_803] : memref<1x4x18x5x4xf32, #tpu.memory_space<vmem>>, vector<1x1x1x4x4xf32>
    %564 = vector.shape_cast %563 : vector<1x1x1x4x4xf32> to vector<4x4xf32>
    %c3_804 = arith.constant 3 : index
    %c0_805 = arith.constant 0 : index
    %c0_806 = arith.constant 0 : index
    %565 = vector.load %arg3[%c3_804, %c0_805, %c0_806] : memref<9x4x8xf32, #tpu.memory_space<vmem>>, vector<1x4x8xf32>
    %566 = vector.shape_cast %565 : vector<1x4x8xf32> to vector<4x8xf32>
    %cst_807 = arith.constant dense<0.000000e+00> : vector<4x8xf32>
    %567 = tpu.matmul %564, %566, %cst_807 {dimension_numbers = #tpu.dot_dimension_numbers<[1], [0], [0], [1], [0, 0, 1, 1], [], []>} : vector<4x4xf32>, vector<4x8xf32>, vector<4x8xf32> -> vector<4x8xf32>
    %568 = arith.addf %562, %567 : vector<4x8xf32>
    %c0_808 = arith.constant 0 : index
    %c3_809 = arith.constant 3 : index
    %c9_810 = arith.constant 9 : index
    %c0_811 = arith.constant 0 : index
    %c0_812 = arith.constant 0 : index
    %569 = vector.load %arg1[%c0_808, %c3_809, %c9_810, %c0_811, %c0_812] : memref<1x4x18x5x4xf32, #tpu.memory_space<vmem>>, vector<1x1x1x4x4xf32>
    %570 = vector.shape_cast %569 : vector<1x1x1x4x4xf32> to vector<4x4xf32>
    %c4_813 = arith.constant 4 : index
    %c0_814 = arith.constant 0 : index
    %c0_815 = arith.constant 0 : index
    %571 = vector.load %arg3[%c4_813, %c0_814, %c0_815] : memref<9x4x8xf32, #tpu.memory_space<vmem>>, vector<1x4x8xf32>
    %572 = vector.shape_cast %571 : vector<1x4x8xf32> to vector<4x8xf32>
    %cst_816 = arith.constant dense<0.000000e+00> : vector<4x8xf32>
    %573 = tpu.matmul %570, %572, %cst_816 {dimension_numbers = #tpu.dot_dimension_numbers<[1], [0], [0], [1], [0, 0, 1, 1], [], []>} : vector<4x4xf32>, vector<4x8xf32>, vector<4x8xf32> -> vector<4x8xf32>
    %574 = arith.addf %568, %573 : vector<4x8xf32>
    %c0_817 = arith.constant 0 : index
    %c0_818 = arith.constant 0 : index
    %c9_819 = arith.constant 9 : index
    %c1_820 = arith.constant 1 : index
    %c0_821 = arith.constant 0 : index
    %575 = vector.load %arg1[%c0_817, %c0_818, %c9_819, %c1_820, %c0_821] : memref<1x4x18x5x4xf32, #tpu.memory_space<vmem>>, vector<1x1x1x4x4xf32>
    %576 = vector.shape_cast %575 : vector<1x1x1x4x4xf32> to vector<4x4xf32>
    %c5_822 = arith.constant 5 : index
    %c0_823 = arith.constant 0 : index
    %c0_824 = arith.constant 0 : index
    %577 = vector.load %arg3[%c5_822, %c0_823, %c0_824] : memref<9x4x8xf32, #tpu.memory_space<vmem>>, vector<1x4x8xf32>
    %578 = vector.shape_cast %577 : vector<1x4x8xf32> to vector<4x8xf32>
    %cst_825 = arith.constant dense<0.000000e+00> : vector<4x8xf32>
    %579 = tpu.matmul %576, %578, %cst_825 {dimension_numbers = #tpu.dot_dimension_numbers<[1], [0], [0], [1], [0, 0, 1, 1], [], []>} : vector<4x4xf32>, vector<4x8xf32>, vector<4x8xf32> -> vector<4x8xf32>
    %580 = arith.addf %574, %579 : vector<4x8xf32>
    %c0_826 = arith.constant 0 : index
    %c2_827 = arith.constant 2 : index
    %c10_828 = arith.constant 10 : index
    %c0_829 = arith.constant 0 : index
    %c0_830 = arith.constant 0 : index
    %581 = vector.load %arg1[%c0_826, %c2_827, %c10_828, %c0_829, %c0_830] : memref<1x4x18x5x4xf32, #tpu.memory_space<vmem>>, vector<1x1x1x4x4xf32>
    %582 = vector.shape_cast %581 : vector<1x1x1x4x4xf32> to vector<4x4xf32>
    %c6_831 = arith.constant 6 : index
    %c0_832 = arith.constant 0 : index
    %c0_833 = arith.constant 0 : index
    %583 = vector.load %arg3[%c6_831, %c0_832, %c0_833] : memref<9x4x8xf32, #tpu.memory_space<vmem>>, vector<1x4x8xf32>
    %584 = vector.shape_cast %583 : vector<1x4x8xf32> to vector<4x8xf32>
    %cst_834 = arith.constant dense<0.000000e+00> : vector<4x8xf32>
    %585 = tpu.matmul %582, %584, %cst_834 {dimension_numbers = #tpu.dot_dimension_numbers<[1], [0], [0], [1], [0, 0, 1, 1], [], []>} : vector<4x4xf32>, vector<4x8xf32>, vector<4x8xf32> -> vector<4x8xf32>
    %586 = arith.addf %580, %585 : vector<4x8xf32>
    %c0_835 = arith.constant 0 : index
    %c3_836 = arith.constant 3 : index
    %c10_837 = arith.constant 10 : index
    %c0_838 = arith.constant 0 : index
    %c0_839 = arith.constant 0 : index
    %587 = vector.load %arg1[%c0_835, %c3_836, %c10_837, %c0_838, %c0_839] : memref<1x4x18x5x4xf32, #tpu.memory_space<vmem>>, vector<1x1x1x4x4xf32>
    %588 = vector.shape_cast %587 : vector<1x1x1x4x4xf32> to vector<4x4xf32>
    %c7_840 = arith.constant 7 : index
    %c0_841 = arith.constant 0 : index
    %c0_842 = arith.constant 0 : index
    %589 = vector.load %arg3[%c7_840, %c0_841, %c0_842] : memref<9x4x8xf32, #tpu.memory_space<vmem>>, vector<1x4x8xf32>
    %590 = vector.shape_cast %589 : vector<1x4x8xf32> to vector<4x8xf32>
    %cst_843 = arith.constant dense<0.000000e+00> : vector<4x8xf32>
    %591 = tpu.matmul %588, %590, %cst_843 {dimension_numbers = #tpu.dot_dimension_numbers<[1], [0], [0], [1], [0, 0, 1, 1], [], []>} : vector<4x4xf32>, vector<4x8xf32>, vector<4x8xf32> -> vector<4x8xf32>
    %592 = arith.addf %586, %591 : vector<4x8xf32>
    %c0_844 = arith.constant 0 : index
    %c0_845 = arith.constant 0 : index
    %c10_846 = arith.constant 10 : index
    %c1_847 = arith.constant 1 : index
    %c0_848 = arith.constant 0 : index
    %593 = vector.load %arg1[%c0_844, %c0_845, %c10_846, %c1_847, %c0_848] : memref<1x4x18x5x4xf32, #tpu.memory_space<vmem>>, vector<1x1x1x4x4xf32>
    %594 = vector.shape_cast %593 : vector<1x1x1x4x4xf32> to vector<4x4xf32>
    %c8_849 = arith.constant 8 : index
    %c0_850 = arith.constant 0 : index
    %c0_851 = arith.constant 0 : index
    %595 = vector.load %arg3[%c8_849, %c0_850, %c0_851] : memref<9x4x8xf32, #tpu.memory_space<vmem>>, vector<1x4x8xf32>
    %596 = vector.shape_cast %595 : vector<1x4x8xf32> to vector<4x8xf32>
    %cst_852 = arith.constant dense<0.000000e+00> : vector<4x8xf32>
    %597 = tpu.matmul %594, %596, %cst_852 {dimension_numbers = #tpu.dot_dimension_numbers<[1], [0], [0], [1], [0, 0, 1, 1], [], []>} : vector<4x4xf32>, vector<4x8xf32>, vector<4x8xf32> -> vector<4x8xf32>
    %598 = arith.addf %592, %597 : vector<4x8xf32>
    %599 = vector.broadcast %0 : vector<1x8xf32> to vector<4x8xf32>
    %600 = arith.addf %598, %599 : vector<4x8xf32>
    %c0_853 = arith.constant 0 : index
    %c5_854 = arith.constant 5 : index
    %c1_855 = arith.constant 1 : index
    %c0_856 = arith.constant 0 : index
    %601 = vector.load %arg9[%c0_853, %c5_854, %c1_855, %c0_856] : memref<2x10x5x8xf32, #tpu.memory_space<vmem>>, vector<1x1x4x8xf32>
    %602 = vector.shape_cast %601 : vector<1x1x4x8xf32> to vector<4x8xf32>
    %603 = vector.shape_cast %600 : vector<4x8xf32> to vector<1x1x4x8xf32>
    tpu.vector_store %arg9[%c0_853, %c5_854, %c1_855, %c0_856], %603 {strides = array<i32>} : memref<2x10x5x8xf32, #tpu.memory_space<vmem>>, vector<1x1x4x8xf32>,
    %cst_857 = arith.constant 0.000000e+00 : f32
    %604 = vector.broadcast %cst_857 : f32 to vector<4x8xf32>
    %c0_858 = arith.constant 0 : index
    %c0_859 = arith.constant 0 : index
    %c10_860 = arith.constant 10 : index
    %c0_861 = arith.constant 0 : index
    %c0_862 = arith.constant 0 : index
    %605 = vector.load %arg1[%c0_858, %c0_859, %c10_860, %c0_861, %c0_862] : memref<1x4x18x5x4xf32, #tpu.memory_space<vmem>>, vector<1x1x1x4x4xf32>
    %606 = vector.shape_cast %605 : vector<1x1x1x4x4xf32> to vector<4x4xf32>
    %c0_863 = arith.constant 0 : index
    %c0_864 = arith.constant 0 : index
    %c0_865 = arith.constant 0 : index
    %607 = vector.load %arg3[%c0_863, %c0_864, %c0_865] : memref<9x4x8xf32, #tpu.memory_space<vmem>>, vector<1x4x8xf32>
    %608 = vector.shape_cast %607 : vector<1x4x8xf32> to vector<4x8xf32>
    %cst_866 = arith.constant dense<0.000000e+00> : vector<4x8xf32>
    %609 = tpu.matmul %606, %608, %cst_866 {dimension_numbers = #tpu.dot_dimension_numbers<[1], [0], [0], [1], [0, 0, 1, 1], [], []>} : vector<4x4xf32>, vector<4x8xf32>, vector<4x8xf32> -> vector<4x8xf32>
    %610 = arith.addf %604, %609 : vector<4x8xf32>
    %c0_867 = arith.constant 0 : index
    %c1_868 = arith.constant 1 : index
    %c10_869 = arith.constant 10 : index
    %c0_870 = arith.constant 0 : index
    %c0_871 = arith.constant 0 : index
    %611 = vector.load %arg1[%c0_867, %c1_868, %c10_869, %c0_870, %c0_871] : memref<1x4x18x5x4xf32, #tpu.memory_space<vmem>>, vector<1x1x1x4x4xf32>
    %612 = vector.shape_cast %611 : vector<1x1x1x4x4xf32> to vector<4x4xf32>
    %c1_872 = arith.constant 1 : index
    %c0_873 = arith.constant 0 : index
    %c0_874 = arith.constant 0 : index
    %613 = vector.load %arg3[%c1_872, %c0_873, %c0_874] : memref<9x4x8xf32, #tpu.memory_space<vmem>>, vector<1x4x8xf32>
    %614 = vector.shape_cast %613 : vector<1x4x8xf32> to vector<4x8xf32>
    %cst_875 = arith.constant dense<0.000000e+00> : vector<4x8xf32>
    %615 = tpu.matmul %612, %614, %cst_875 {dimension_numbers = #tpu.dot_dimension_numbers<[1], [0], [0], [1], [0, 0, 1, 1], [], []>} : vector<4x4xf32>, vector<4x8xf32>, vector<4x8xf32> -> vector<4x8xf32>
    %616 = arith.addf %610, %615 : vector<4x8xf32>
    %c0_876 = arith.constant 0 : index
    %c2_877 = arith.constant 2 : index
    %c10_878 = arith.constant 10 : index
    %c0_879 = arith.constant 0 : index
    %c0_880 = arith.constant 0 : index
    %617 = vector.load %arg1[%c0_876, %c2_877, %c10_878, %c0_879, %c0_880] : memref<1x4x18x5x4xf32, #tpu.memory_space<vmem>>, vector<1x1x1x4x4xf32>
    %618 = vector.shape_cast %617 : vector<1x1x1x4x4xf32> to vector<4x4xf32>
    %c2_881 = arith.constant 2 : index
    %c0_882 = arith.constant 0 : index
    %c0_883 = arith.constant 0 : index
    %619 = vector.load %arg3[%c2_881, %c0_882, %c0_883] : memref<9x4x8xf32, #tpu.memory_space<vmem>>, vector<1x4x8xf32>
    %620 = vector.shape_cast %619 : vector<1x4x8xf32> to vector<4x8xf32>
    %cst_884 = arith.constant dense<0.000000e+00> : vector<4x8xf32>
    %621 = tpu.matmul %618, %620, %cst_884 {dimension_numbers = #tpu.dot_dimension_numbers<[1], [0], [0], [1], [0, 0, 1, 1], [], []>} : vector<4x4xf32>, vector<4x8xf32>, vector<4x8xf32> -> vector<4x8xf32>
    %622 = arith.addf %616, %621 : vector<4x8xf32>
    %c0_885 = arith.constant 0 : index
    %c0_886 = arith.constant 0 : index
    %c11 = arith.constant 11 : index
    %c0_887 = arith.constant 0 : index
    %c0_888 = arith.constant 0 : index
    %623 = vector.load %arg1[%c0_885, %c0_886, %c11, %c0_887, %c0_888] : memref<1x4x18x5x4xf32, #tpu.memory_space<vmem>>, vector<1x1x1x4x4xf32>
    %624 = vector.shape_cast %623 : vector<1x1x1x4x4xf32> to vector<4x4xf32>
    %c3_889 = arith.constant 3 : index
    %c0_890 = arith.constant 0 : index
    %c0_891 = arith.constant 0 : index
    %625 = vector.load %arg3[%c3_889, %c0_890, %c0_891] : memref<9x4x8xf32, #tpu.memory_space<vmem>>, vector<1x4x8xf32>
    %626 = vector.shape_cast %625 : vector<1x4x8xf32> to vector<4x8xf32>
    %cst_892 = arith.constant dense<0.000000e+00> : vector<4x8xf32>
    %627 = tpu.matmul %624, %626, %cst_892 {dimension_numbers = #tpu.dot_dimension_numbers<[1], [0], [0], [1], [0, 0, 1, 1], [], []>} : vector<4x4xf32>, vector<4x8xf32>, vector<4x8xf32> -> vector<4x8xf32>
    %628 = arith.addf %622, %627 : vector<4x8xf32>
    %c0_893 = arith.constant 0 : index
    %c1_894 = arith.constant 1 : index
    %c11_895 = arith.constant 11 : index
    %c0_896 = arith.constant 0 : index
    %c0_897 = arith.constant 0 : index
    %629 = vector.load %arg1[%c0_893, %c1_894, %c11_895, %c0_896, %c0_897] : memref<1x4x18x5x4xf32, #tpu.memory_space<vmem>>, vector<1x1x1x4x4xf32>
    %630 = vector.shape_cast %629 : vector<1x1x1x4x4xf32> to vector<4x4xf32>
    %c4_898 = arith.constant 4 : index
    %c0_899 = arith.constant 0 : index
    %c0_900 = arith.constant 0 : index
    %631 = vector.load %arg3[%c4_898, %c0_899, %c0_900] : memref<9x4x8xf32, #tpu.memory_space<vmem>>, vector<1x4x8xf32>
    %632 = vector.shape_cast %631 : vector<1x4x8xf32> to vector<4x8xf32>
    %cst_901 = arith.constant dense<0.000000e+00> : vector<4x8xf32>
    %633 = tpu.matmul %630, %632, %cst_901 {dimension_numbers = #tpu.dot_dimension_numbers<[1], [0], [0], [1], [0, 0, 1, 1], [], []>} : vector<4x4xf32>, vector<4x8xf32>, vector<4x8xf32> -> vector<4x8xf32>
    %634 = arith.addf %628, %633 : vector<4x8xf32>
    %c0_902 = arith.constant 0 : index
    %c2_903 = arith.constant 2 : index
    %c11_904 = arith.constant 11 : index
    %c0_905 = arith.constant 0 : index
    %c0_906 = arith.constant 0 : index
    %635 = vector.load %arg1[%c0_902, %c2_903, %c11_904, %c0_905, %c0_906] : memref<1x4x18x5x4xf32, #tpu.memory_space<vmem>>, vector<1x1x1x4x4xf32>
    %636 = vector.shape_cast %635 : vector<1x1x1x4x4xf32> to vector<4x4xf32>
    %c5_907 = arith.constant 5 : index
    %c0_908 = arith.constant 0 : index
    %c0_909 = arith.constant 0 : index
    %637 = vector.load %arg3[%c5_907, %c0_908, %c0_909] : memref<9x4x8xf32, #tpu.memory_space<vmem>>, vector<1x4x8xf32>
    %638 = vector.shape_cast %637 : vector<1x4x8xf32> to vector<4x8xf32>
    %cst_910 = arith.constant dense<0.000000e+00> : vector<4x8xf32>
    %639 = tpu.matmul %636, %638, %cst_910 {dimension_numbers = #tpu.dot_dimension_numbers<[1], [0], [0], [1], [0, 0, 1, 1], [], []>} : vector<4x4xf32>, vector<4x8xf32>, vector<4x8xf32> -> vector<4x8xf32>
    %640 = arith.addf %634, %639 : vector<4x8xf32>
    %c0_911 = arith.constant 0 : index
    %c0_912 = arith.constant 0 : index
    %c12 = arith.constant 12 : index
    %c0_913 = arith.constant 0 : index
    %c0_914 = arith.constant 0 : index
    %641 = vector.load %arg1[%c0_911, %c0_912, %c12, %c0_913, %c0_914] : memref<1x4x18x5x4xf32, #tpu.memory_space<vmem>>, vector<1x1x1x4x4xf32>
    %642 = vector.shape_cast %641 : vector<1x1x1x4x4xf32> to vector<4x4xf32>
    %c6_915 = arith.constant 6 : index
    %c0_916 = arith.constant 0 : index
    %c0_917 = arith.constant 0 : index
    %643 = vector.load %arg3[%c6_915, %c0_916, %c0_917] : memref<9x4x8xf32, #tpu.memory_space<vmem>>, vector<1x4x8xf32>
    %644 = vector.shape_cast %643 : vector<1x4x8xf32> to vector<4x8xf32>
    %cst_918 = arith.constant dense<0.000000e+00> : vector<4x8xf32>
    %645 = tpu.matmul %642, %644, %cst_918 {dimension_numbers = #tpu.dot_dimension_numbers<[1], [0], [0], [1], [0, 0, 1, 1], [], []>} : vector<4x4xf32>, vector<4x8xf32>, vector<4x8xf32> -> vector<4x8xf32>
    %646 = arith.addf %640, %645 : vector<4x8xf32>
    %c0_919 = arith.constant 0 : index
    %c1_920 = arith.constant 1 : index
    %c12_921 = arith.constant 12 : index
    %c0_922 = arith.constant 0 : index
    %c0_923 = arith.constant 0 : index
    %647 = vector.load %arg1[%c0_919, %c1_920, %c12_921, %c0_922, %c0_923] : memref<1x4x18x5x4xf32, #tpu.memory_space<vmem>>, vector<1x1x1x4x4xf32>
    %648 = vector.shape_cast %647 : vector<1x1x1x4x4xf32> to vector<4x4xf32>
    %c7_924 = arith.constant 7 : index
    %c0_925 = arith.constant 0 : index
    %c0_926 = arith.constant 0 : index
    %649 = vector.load %arg3[%c7_924, %c0_925, %c0_926] : memref<9x4x8xf32, #tpu.memory_space<vmem>>, vector<1x4x8xf32>
    %650 = vector.shape_cast %649 : vector<1x4x8xf32> to vector<4x8xf32>
    %cst_927 = arith.constant dense<0.000000e+00> : vector<4x8xf32>
    %651 = tpu.matmul %648, %650, %cst_927 {dimension_numbers = #tpu.dot_dimension_numbers<[1], [0], [0], [1], [0, 0, 1, 1], [], []>} : vector<4x4xf32>, vector<4x8xf32>, vector<4x8xf32> -> vector<4x8xf32>
    %652 = arith.addf %646, %651 : vector<4x8xf32>
    %c0_928 = arith.constant 0 : index
    %c2_929 = arith.constant 2 : index
    %c12_930 = arith.constant 12 : index
    %c0_931 = arith.constant 0 : index
    %c0_932 = arith.constant 0 : index
    %653 = vector.load %arg1[%c0_928, %c2_929, %c12_930, %c0_931, %c0_932] : memref<1x4x18x5x4xf32, #tpu.memory_space<vmem>>, vector<1x1x1x4x4xf32>
    %654 = vector.shape_cast %653 : vector<1x1x1x4x4xf32> to vector<4x4xf32>
    %c8_933 = arith.constant 8 : index
    %c0_934 = arith.constant 0 : index
    %c0_935 = arith.constant 0 : index
    %655 = vector.load %arg3[%c8_933, %c0_934, %c0_935] : memref<9x4x8xf32, #tpu.memory_space<vmem>>, vector<1x4x8xf32>
    %656 = vector.shape_cast %655 : vector<1x4x8xf32> to vector<4x8xf32>
    %cst_936 = arith.constant dense<0.000000e+00> : vector<4x8xf32>
    %657 = tpu.matmul %654, %656, %cst_936 {dimension_numbers = #tpu.dot_dimension_numbers<[1], [0], [0], [1], [0, 0, 1, 1], [], []>} : vector<4x4xf32>, vector<4x8xf32>, vector<4x8xf32> -> vector<4x8xf32>
    %658 = arith.addf %652, %657 : vector<4x8xf32>
    %659 = vector.broadcast %0 : vector<1x8xf32> to vector<4x8xf32>
    %660 = arith.addf %658, %659 : vector<4x8xf32>
    %c1_937 = arith.constant 1 : index
    %c6_938 = arith.constant 6 : index
    %c0_939 = arith.constant 0 : index
    %c0_940 = arith.constant 0 : index
    %661 = vector.load %arg9[%c1_937, %c6_938, %c0_939, %c0_940] : memref<2x10x5x8xf32, #tpu.memory_space<vmem>>, vector<1x1x4x8xf32>
    %662 = vector.shape_cast %661 : vector<1x1x4x8xf32> to vector<4x8xf32>
    %663 = vector.shape_cast %660 : vector<4x8xf32> to vector<1x1x4x8xf32>
    tpu.vector_store %arg9[%c1_937, %c6_938, %c0_939, %c0_940], %663 {strides = array<i32>} : memref<2x10x5x8xf32, #tpu.memory_space<vmem>>, vector<1x1x4x8xf32>,
    %cst_941 = arith.constant 0.000000e+00 : f32
    %664 = vector.broadcast %cst_941 : f32 to vector<4x8xf32>
    %c0_942 = arith.constant 0 : index
    %c2_943 = arith.constant 2 : index
    %c10_944 = arith.constant 10 : index
    %c0_945 = arith.constant 0 : index
    %c0_946 = arith.constant 0 : index
    %665 = vector.load %arg1[%c0_942, %c2_943, %c10_944, %c0_945, %c0_946] : memref<1x4x18x5x4xf32, #tpu.memory_space<vmem>>, vector<1x1x1x4x4xf32>
    %666 = vector.shape_cast %665 : vector<1x1x1x4x4xf32> to vector<4x4xf32>
    %c0_947 = arith.constant 0 : index
    %c0_948 = arith.constant 0 : index
    %c0_949 = arith.constant 0 : index
    %667 = vector.load %arg3[%c0_947, %c0_948, %c0_949] : memref<9x4x8xf32, #tpu.memory_space<vmem>>, vector<1x4x8xf32>
    %668 = vector.shape_cast %667 : vector<1x4x8xf32> to vector<4x8xf32>
    %cst_950 = arith.constant dense<0.000000e+00> : vector<4x8xf32>
    %669 = tpu.matmul %666, %668, %cst_950 {dimension_numbers = #tpu.dot_dimension_numbers<[1], [0], [0], [1], [0, 0, 1, 1], [], []>} : vector<4x4xf32>, vector<4x8xf32>, vector<4x8xf32> -> vector<4x8xf32>
    %670 = arith.addf %664, %669 : vector<4x8xf32>
    %c0_951 = arith.constant 0 : index
    %c3_952 = arith.constant 3 : index
    %c10_953 = arith.constant 10 : index
    %c0_954 = arith.constant 0 : index
    %c0_955 = arith.constant 0 : index
    %671 = vector.load %arg1[%c0_951, %c3_952, %c10_953, %c0_954, %c0_955] : memref<1x4x18x5x4xf32, #tpu.memory_space<vmem>>, vector<1x1x1x4x4xf32>
    %672 = vector.shape_cast %671 : vector<1x1x1x4x4xf32> to vector<4x4xf32>
    %c1_956 = arith.constant 1 : index
    %c0_957 = arith.constant 0 : index
    %c0_958 = arith.constant 0 : index
    %673 = vector.load %arg3[%c1_956, %c0_957, %c0_958] : memref<9x4x8xf32, #tpu.memory_space<vmem>>, vector<1x4x8xf32>
    %674 = vector.shape_cast %673 : vector<1x4x8xf32> to vector<4x8xf32>
    %cst_959 = arith.constant dense<0.000000e+00> : vector<4x8xf32>
    %675 = tpu.matmul %672, %674, %cst_959 {dimension_numbers = #tpu.dot_dimension_numbers<[1], [0], [0], [1], [0, 0, 1, 1], [], []>} : vector<4x4xf32>, vector<4x8xf32>, vector<4x8xf32> -> vector<4x8xf32>
    %676 = arith.addf %670, %675 : vector<4x8xf32>
    %c0_960 = arith.constant 0 : index
    %c0_961 = arith.constant 0 : index
    %c10_962 = arith.constant 10 : index
    %c1_963 = arith.constant 1 : index
    %c0_964 = arith.constant 0 : index
    %677 = vector.load %arg1[%c0_960, %c0_961, %c10_962, %c1_963, %c0_964] : memref<1x4x18x5x4xf32, #tpu.memory_space<vmem>>, vector<1x1x1x4x4xf32>
    %678 = vector.shape_cast %677 : vector<1x1x1x4x4xf32> to vector<4x4xf32>
    %c2_965 = arith.constant 2 : index
    %c0_966 = arith.constant 0 : index
    %c0_967 = arith.constant 0 : index
    %679 = vector.load %arg3[%c2_965, %c0_966, %c0_967] : memref<9x4x8xf32, #tpu.memory_space<vmem>>, vector<1x4x8xf32>
    %680 = vector.shape_cast %679 : vector<1x4x8xf32> to vector<4x8xf32>
    %cst_968 = arith.constant dense<0.000000e+00> : vector<4x8xf32>
    %681 = tpu.matmul %678, %680, %cst_968 {dimension_numbers = #tpu.dot_dimension_numbers<[1], [0], [0], [1], [0, 0, 1, 1], [], []>} : vector<4x4xf32>, vector<4x8xf32>, vector<4x8xf32> -> vector<4x8xf32>
    %682 = arith.addf %676, %681 : vector<4x8xf32>
    %c0_969 = arith.constant 0 : index
    %c2_970 = arith.constant 2 : index
    %c11_971 = arith.constant 11 : index
    %c0_972 = arith.constant 0 : index
    %c0_973 = arith.constant 0 : index
    %683 = vector.load %arg1[%c0_969, %c2_970, %c11_971, %c0_972, %c0_973] : memref<1x4x18x5x4xf32, #tpu.memory_space<vmem>>, vector<1x1x1x4x4xf32>
    %684 = vector.shape_cast %683 : vector<1x1x1x4x4xf32> to vector<4x4xf32>
    %c3_974 = arith.constant 3 : index
    %c0_975 = arith.constant 0 : index
    %c0_976 = arith.constant 0 : index
    %685 = vector.load %arg3[%c3_974, %c0_975, %c0_976] : memref<9x4x8xf32, #tpu.memory_space<vmem>>, vector<1x4x8xf32>
    %686 = vector.shape_cast %685 : vector<1x4x8xf32> to vector<4x8xf32>
    %cst_977 = arith.constant dense<0.000000e+00> : vector<4x8xf32>
    %687 = tpu.matmul %684, %686, %cst_977 {dimension_numbers = #tpu.dot_dimension_numbers<[1], [0], [0], [1], [0, 0, 1, 1], [], []>} : vector<4x4xf32>, vector<4x8xf32>, vector<4x8xf32> -> vector<4x8xf32>
    %688 = arith.addf %682, %687 : vector<4x8xf32>
    %c0_978 = arith.constant 0 : index
    %c3_979 = arith.constant 3 : index
    %c11_980 = arith.constant 11 : index
    %c0_981 = arith.constant 0 : index
    %c0_982 = arith.constant 0 : index
    %689 = vector.load %arg1[%c0_978, %c3_979, %c11_980, %c0_981, %c0_982] : memref<1x4x18x5x4xf32, #tpu.memory_space<vmem>>, vector<1x1x1x4x4xf32>
    %690 = vector.shape_cast %689 : vector<1x1x1x4x4xf32> to vector<4x4xf32>
    %c4_983 = arith.constant 4 : index
    %c0_984 = arith.constant 0 : index
    %c0_985 = arith.constant 0 : index
    %691 = vector.load %arg3[%c4_983, %c0_984, %c0_985] : memref<9x4x8xf32, #tpu.memory_space<vmem>>, vector<1x4x8xf32>
    %692 = vector.shape_cast %691 : vector<1x4x8xf32> to vector<4x8xf32>
    %cst_986 = arith.constant dense<0.000000e+00> : vector<4x8xf32>
    %693 = tpu.matmul %690, %692, %cst_986 {dimension_numbers = #tpu.dot_dimension_numbers<[1], [0], [0], [1], [0, 0, 1, 1], [], []>} : vector<4x4xf32>, vector<4x8xf32>, vector<4x8xf32> -> vector<4x8xf32>
    %694 = arith.addf %688, %693 : vector<4x8xf32>
    %c0_987 = arith.constant 0 : index
    %c0_988 = arith.constant 0 : index
    %c11_989 = arith.constant 11 : index
    %c1_990 = arith.constant 1 : index
    %c0_991 = arith.constant 0 : index
    %695 = vector.load %arg1[%c0_987, %c0_988, %c11_989, %c1_990, %c0_991] : memref<1x4x18x5x4xf32, #tpu.memory_space<vmem>>, vector<1x1x1x4x4xf32>
    %696 = vector.shape_cast %695 : vector<1x1x1x4x4xf32> to vector<4x4xf32>
    %c5_992 = arith.constant 5 : index
    %c0_993 = arith.constant 0 : index
    %c0_994 = arith.constant 0 : index
    %697 = vector.load %arg3[%c5_992, %c0_993, %c0_994] : memref<9x4x8xf32, #tpu.memory_space<vmem>>, vector<1x4x8xf32>
    %698 = vector.shape_cast %697 : vector<1x4x8xf32> to vector<4x8xf32>
    %cst_995 = arith.constant dense<0.000000e+00> : vector<4x8xf32>
    %699 = tpu.matmul %696, %698, %cst_995 {dimension_numbers = #tpu.dot_dimension_numbers<[1], [0], [0], [1], [0, 0, 1, 1], [], []>} : vector<4x4xf32>, vector<4x8xf32>, vector<4x8xf32> -> vector<4x8xf32>
    %700 = arith.addf %694, %699 : vector<4x8xf32>
    %c0_996 = arith.constant 0 : index
    %c2_997 = arith.constant 2 : index
    %c12_998 = arith.constant 12 : index
    %c0_999 = arith.constant 0 : index
    %c0_1000 = arith.constant 0 : index
    %701 = vector.load %arg1[%c0_996, %c2_997, %c12_998, %c0_999, %c0_1000] : memref<1x4x18x5x4xf32, #tpu.memory_space<vmem>>, vector<1x1x1x4x4xf32>
    %702 = vector.shape_cast %701 : vector<1x1x1x4x4xf32> to vector<4x4xf32>
    %c6_1001 = arith.constant 6 : index
    %c0_1002 = arith.constant 0 : index
    %c0_1003 = arith.constant 0 : index
    %703 = vector.load %arg3[%c6_1001, %c0_1002, %c0_1003] : memref<9x4x8xf32, #tpu.memory_space<vmem>>, vector<1x4x8xf32>
    %704 = vector.shape_cast %703 : vector<1x4x8xf32> to vector<4x8xf32>
    %cst_1004 = arith.constant dense<0.000000e+00> : vector<4x8xf32>
    %705 = tpu.matmul %702, %704, %cst_1004 {dimension_numbers = #tpu.dot_dimension_numbers<[1], [0], [0], [1], [0, 0, 1, 1], [], []>} : vector<4x4xf32>, vector<4x8xf32>, vector<4x8xf32> -> vector<4x8xf32>
    %706 = arith.addf %700, %705 : vector<4x8xf32>
    %c0_1005 = arith.constant 0 : index
    %c3_1006 = arith.constant 3 : index
    %c12_1007 = arith.constant 12 : index
    %c0_1008 = arith.constant 0 : index
    %c0_1009 = arith.constant 0 : index
    %707 = vector.load %arg1[%c0_1005, %c3_1006, %c12_1007, %c0_1008, %c0_1009] : memref<1x4x18x5x4xf32, #tpu.memory_space<vmem>>, vector<1x1x1x4x4xf32>
    %708 = vector.shape_cast %707 : vector<1x1x1x4x4xf32> to vector<4x4xf32>
    %c7_1010 = arith.constant 7 : index
    %c0_1011 = arith.constant 0 : index
    %c0_1012 = arith.constant 0 : index
    %709 = vector.load %arg3[%c7_1010, %c0_1011, %c0_1012] : memref<9x4x8xf32, #tpu.memory_space<vmem>>, vector<1x4x8xf32>
    %710 = vector.shape_cast %709 : vector<1x4x8xf32> to vector<4x8xf32>
    %cst_1013 = arith.constant dense<0.000000e+00> : vector<4x8xf32>
    %711 = tpu.matmul %708, %710, %cst_1013 {dimension_numbers = #tpu.dot_dimension_numbers<[1], [0], [0], [1], [0, 0, 1, 1], [], []>} : vector<4x4xf32>, vector<4x8xf32>, vector<4x8xf32> -> vector<4x8xf32>
    %712 = arith.addf %706, %711 : vector<4x8xf32>
    %c0_1014 = arith.constant 0 : index
    %c0_1015 = arith.constant 0 : index
    %c12_1016 = arith.constant 12 : index
    %c1_1017 = arith.constant 1 : index
    %c0_1018 = arith.constant 0 : index
    %713 = vector.load %arg1[%c0_1014, %c0_1015, %c12_1016, %c1_1017, %c0_1018] : memref<1x4x18x5x4xf32, #tpu.memory_space<vmem>>, vector<1x1x1x4x4xf32>
    %714 = vector.shape_cast %713 : vector<1x1x1x4x4xf32> to vector<4x4xf32>
    %c8_1019 = arith.constant 8 : index
    %c0_1020 = arith.constant 0 : index
    %c0_1021 = arith.constant 0 : index
    %715 = vector.load %arg3[%c8_1019, %c0_1020, %c0_1021] : memref<9x4x8xf32, #tpu.memory_space<vmem>>, vector<1x4x8xf32>
    %716 = vector.shape_cast %715 : vector<1x4x8xf32> to vector<4x8xf32>
    %cst_1022 = arith.constant dense<0.000000e+00> : vector<4x8xf32>
    %717 = tpu.matmul %714, %716, %cst_1022 {dimension_numbers = #tpu.dot_dimension_numbers<[1], [0], [0], [1], [0, 0, 1, 1], [], []>} : vector<4x4xf32>, vector<4x8xf32>, vector<4x8xf32> -> vector<4x8xf32>
    %718 = arith.addf %712, %717 : vector<4x8xf32>
    %719 = vector.broadcast %0 : vector<1x8xf32> to vector<4x8xf32>
    %720 = arith.addf %718, %719 : vector<4x8xf32>
    %c0_1023 = arith.constant 0 : index
    %c6_1024 = arith.constant 6 : index
    %c1_1025 = arith.constant 1 : index
    %c0_1026 = arith.constant 0 : index
    %721 = vector.load %arg9[%c0_1023, %c6_1024, %c1_1025, %c0_1026] : memref<2x10x5x8xf32, #tpu.memory_space<vmem>>, vector<1x1x4x8xf32>
    %722 = vector.shape_cast %721 : vector<1x1x4x8xf32> to vector<4x8xf32>
    %723 = vector.shape_cast %720 : vector<4x8xf32> to vector<1x1x4x8xf32>
    tpu.vector_store %arg9[%c0_1023, %c6_1024, %c1_1025, %c0_1026], %723 {strides = array<i32>} : memref<2x10x5x8xf32, #tpu.memory_space<vmem>>, vector<1x1x4x8xf32>,
    %cst_1027 = arith.constant 0.000000e+00 : f32
    %724 = vector.broadcast %cst_1027 : f32 to vector<4x8xf32>
    %c0_1028 = arith.constant 0 : index
    %c0_1029 = arith.constant 0 : index
    %c12_1030 = arith.constant 12 : index
    %c0_1031 = arith.constant 0 : index
    %c0_1032 = arith.constant 0 : index
    %725 = vector.load %arg1[%c0_1028, %c0_1029, %c12_1030, %c0_1031, %c0_1032] : memref<1x4x18x5x4xf32, #tpu.memory_space<vmem>>, vector<1x1x1x4x4xf32>
    %726 = vector.shape_cast %725 : vector<1x1x1x4x4xf32> to vector<4x4xf32>
    %c0_1033 = arith.constant 0 : index
    %c0_1034 = arith.constant 0 : index
    %c0_1035 = arith.constant 0 : index
    %727 = vector.load %arg3[%c0_1033, %c0_1034, %c0_1035] : memref<9x4x8xf32, #tpu.memory_space<vmem>>, vector<1x4x8xf32>
    %728 = vector.shape_cast %727 : vector<1x4x8xf32> to vector<4x8xf32>
    %cst_1036 = arith.constant dense<0.000000e+00> : vector<4x8xf32>
    %729 = tpu.matmul %726, %728, %cst_1036 {dimension_numbers = #tpu.dot_dimension_numbers<[1], [0], [0], [1], [0, 0, 1, 1], [], []>} : vector<4x4xf32>, vector<4x8xf32>, vector<4x8xf32> -> vector<4x8xf32>
    %730 = arith.addf %724, %729 : vector<4x8xf32>
    %c0_1037 = arith.constant 0 : index
    %c1_1038 = arith.constant 1 : index
    %c12_1039 = arith.constant 12 : index
    %c0_1040 = arith.constant 0 : index
    %c0_1041 = arith.constant 0 : index
    %731 = vector.load %arg1[%c0_1037, %c1_1038, %c12_1039, %c0_1040, %c0_1041] : memref<1x4x18x5x4xf32, #tpu.memory_space<vmem>>, vector<1x1x1x4x4xf32>
    %732 = vector.shape_cast %731 : vector<1x1x1x4x4xf32> to vector<4x4xf32>
    %c1_1042 = arith.constant 1 : index
    %c0_1043 = arith.constant 0 : index
    %c0_1044 = arith.constant 0 : index
    %733 = vector.load %arg3[%c1_1042, %c0_1043, %c0_1044] : memref<9x4x8xf32, #tpu.memory_space<vmem>>, vector<1x4x8xf32>
    %734 = vector.shape_cast %733 : vector<1x4x8xf32> to vector<4x8xf32>
    %cst_1045 = arith.constant dense<0.000000e+00> : vector<4x8xf32>
    %735 = tpu.matmul %732, %734, %cst_1045 {dimension_numbers = #tpu.dot_dimension_numbers<[1], [0], [0], [1], [0, 0, 1, 1], [], []>} : vector<4x4xf32>, vector<4x8xf32>, vector<4x8xf32> -> vector<4x8xf32>
    %736 = arith.addf %730, %735 : vector<4x8xf32>
    %c0_1046 = arith.constant 0 : index
    %c2_1047 = arith.constant 2 : index
    %c12_1048 = arith.constant 12 : index
    %c0_1049 = arith.constant 0 : index
    %c0_1050 = arith.constant 0 : index
    %737 = vector.load %arg1[%c0_1046, %c2_1047, %c12_1048, %c0_1049, %c0_1050] : memref<1x4x18x5x4xf32, #tpu.memory_space<vmem>>, vector<1x1x1x4x4xf32>
    %738 = vector.shape_cast %737 : vector<1x1x1x4x4xf32> to vector<4x4xf32>
    %c2_1051 = arith.constant 2 : index
    %c0_1052 = arith.constant 0 : index
    %c0_1053 = arith.constant 0 : index
    %739 = vector.load %arg3[%c2_1051, %c0_1052, %c0_1053] : memref<9x4x8xf32, #tpu.memory_space<vmem>>, vector<1x4x8xf32>
    %740 = vector.shape_cast %739 : vector<1x4x8xf32> to vector<4x8xf32>
    %cst_1054 = arith.constant dense<0.000000e+00> : vector<4x8xf32>
    %741 = tpu.matmul %738, %740, %cst_1054 {dimension_numbers = #tpu.dot_dimension_numbers<[1], [0], [0], [1], [0, 0, 1, 1], [], []>} : vector<4x4xf32>, vector<4x8xf32>, vector<4x8xf32> -> vector<4x8xf32>
    %742 = arith.addf %736, %741 : vector<4x8xf32>
    %c0_1055 = arith.constant 0 : index
    %c0_1056 = arith.constant 0 : index
    %c13 = arith.constant 13 : index
    %c0_1057 = arith.constant 0 : index
    %c0_1058 = arith.constant 0 : index
    %743 = vector.load %arg1[%c0_1055, %c0_1056, %c13, %c0_1057, %c0_1058] : memref<1x4x18x5x4xf32, #tpu.memory_space<vmem>>, vector<1x1x1x4x4xf32>
    %744 = vector.shape_cast %743 : vector<1x1x1x4x4xf32> to vector<4x4xf32>
    %c3_1059 = arith.constant 3 : index
    %c0_1060 = arith.constant 0 : index
    %c0_1061 = arith.constant 0 : index
    %745 = vector.load %arg3[%c3_1059, %c0_1060, %c0_1061] : memref<9x4x8xf32, #tpu.memory_space<vmem>>, vector<1x4x8xf32>
    %746 = vector.shape_cast %745 : vector<1x4x8xf32> to vector<4x8xf32>
    %cst_1062 = arith.constant dense<0.000000e+00> : vector<4x8xf32>
    %747 = tpu.matmul %744, %746, %cst_1062 {dimension_numbers = #tpu.dot_dimension_numbers<[1], [0], [0], [1], [0, 0, 1, 1], [], []>} : vector<4x4xf32>, vector<4x8xf32>, vector<4x8xf32> -> vector<4x8xf32>
    %748 = arith.addf %742, %747 : vector<4x8xf32>
    %c0_1063 = arith.constant 0 : index
    %c1_1064 = arith.constant 1 : index
    %c13_1065 = arith.constant 13 : index
    %c0_1066 = arith.constant 0 : index
    %c0_1067 = arith.constant 0 : index
    %749 = vector.load %arg1[%c0_1063, %c1_1064, %c13_1065, %c0_1066, %c0_1067] : memref<1x4x18x5x4xf32, #tpu.memory_space<vmem>>, vector<1x1x1x4x4xf32>
    %750 = vector.shape_cast %749 : vector<1x1x1x4x4xf32> to vector<4x4xf32>
    %c4_1068 = arith.constant 4 : index
    %c0_1069 = arith.constant 0 : index
    %c0_1070 = arith.constant 0 : index
    %751 = vector.load %arg3[%c4_1068, %c0_1069, %c0_1070] : memref<9x4x8xf32, #tpu.memory_space<vmem>>, vector<1x4x8xf32>
    %752 = vector.shape_cast %751 : vector<1x4x8xf32> to vector<4x8xf32>
    %cst_1071 = arith.constant dense<0.000000e+00> : vector<4x8xf32>
    %753 = tpu.matmul %750, %752, %cst_1071 {dimension_numbers = #tpu.dot_dimension_numbers<[1], [0], [0], [1], [0, 0, 1, 1], [], []>} : vector<4x4xf32>, vector<4x8xf32>, vector<4x8xf32> -> vector<4x8xf32>
    %754 = arith.addf %748, %753 : vector<4x8xf32>
    %c0_1072 = arith.constant 0 : index
    %c2_1073 = arith.constant 2 : index
    %c13_1074 = arith.constant 13 : index
    %c0_1075 = arith.constant 0 : index
    %c0_1076 = arith.constant 0 : index
    %755 = vector.load %arg1[%c0_1072, %c2_1073, %c13_1074, %c0_1075, %c0_1076] : memref<1x4x18x5x4xf32, #tpu.memory_space<vmem>>, vector<1x1x1x4x4xf32>
    %756 = vector.shape_cast %755 : vector<1x1x1x4x4xf32> to vector<4x4xf32>
    %c5_1077 = arith.constant 5 : index
    %c0_1078 = arith.constant 0 : index
    %c0_1079 = arith.constant 0 : index
    %757 = vector.load %arg3[%c5_1077, %c0_1078, %c0_1079] : memref<9x4x8xf32, #tpu.memory_space<vmem>>, vector<1x4x8xf32>
    %758 = vector.shape_cast %757 : vector<1x4x8xf32> to vector<4x8xf32>
    %cst_1080 = arith.constant dense<0.000000e+00> : vector<4x8xf32>
    %759 = tpu.matmul %756, %758, %cst_1080 {dimension_numbers = #tpu.dot_dimension_numbers<[1], [0], [0], [1], [0, 0, 1, 1], [], []>} : vector<4x4xf32>, vector<4x8xf32>, vector<4x8xf32> -> vector<4x8xf32>
    %760 = arith.addf %754, %759 : vector<4x8xf32>
    %c0_1081 = arith.constant 0 : index
    %c0_1082 = arith.constant 0 : index
    %c14 = arith.constant 14 : index
    %c0_1083 = arith.constant 0 : index
    %c0_1084 = arith.constant 0 : index
    %761 = vector.load %arg1[%c0_1081, %c0_1082, %c14, %c0_1083, %c0_1084] : memref<1x4x18x5x4xf32, #tpu.memory_space<vmem>>, vector<1x1x1x4x4xf32>
    %762 = vector.shape_cast %761 : vector<1x1x1x4x4xf32> to vector<4x4xf32>
    %c6_1085 = arith.constant 6 : index
    %c0_1086 = arith.constant 0 : index
    %c0_1087 = arith.constant 0 : index
    %763 = vector.load %arg3[%c6_1085, %c0_1086, %c0_1087] : memref<9x4x8xf32, #tpu.memory_space<vmem>>, vector<1x4x8xf32>
    %764 = vector.shape_cast %763 : vector<1x4x8xf32> to vector<4x8xf32>
    %cst_1088 = arith.constant dense<0.000000e+00> : vector<4x8xf32>
    %765 = tpu.matmul %762, %764, %cst_1088 {dimension_numbers = #tpu.dot_dimension_numbers<[1], [0], [0], [1], [0, 0, 1, 1], [], []>} : vector<4x4xf32>, vector<4x8xf32>, vector<4x8xf32> -> vector<4x8xf32>
    %766 = arith.addf %760, %765 : vector<4x8xf32>
    %c0_1089 = arith.constant 0 : index
    %c1_1090 = arith.constant 1 : index
    %c14_1091 = arith.constant 14 : index
    %c0_1092 = arith.constant 0 : index
    %c0_1093 = arith.constant 0 : index
    %767 = vector.load %arg1[%c0_1089, %c1_1090, %c14_1091, %c0_1092, %c0_1093] : memref<1x4x18x5x4xf32, #tpu.memory_space<vmem>>, vector<1x1x1x4x4xf32>
    %768 = vector.shape_cast %767 : vector<1x1x1x4x4xf32> to vector<4x4xf32>
    %c7_1094 = arith.constant 7 : index
    %c0_1095 = arith.constant 0 : index
    %c0_1096 = arith.constant 0 : index
    %769 = vector.load %arg3[%c7_1094, %c0_1095, %c0_1096] : memref<9x4x8xf32, #tpu.memory_space<vmem>>, vector<1x4x8xf32>
    %770 = vector.shape_cast %769 : vector<1x4x8xf32> to vector<4x8xf32>
    %cst_1097 = arith.constant dense<0.000000e+00> : vector<4x8xf32>
    %771 = tpu.matmul %768, %770, %cst_1097 {dimension_numbers = #tpu.dot_dimension_numbers<[1], [0], [0], [1], [0, 0, 1, 1], [], []>} : vector<4x4xf32>, vector<4x8xf32>, vector<4x8xf32> -> vector<4x8xf32>
    %772 = arith.addf %766, %771 : vector<4x8xf32>
    %c0_1098 = arith.constant 0 : index
    %c2_1099 = arith.constant 2 : index
    %c14_1100 = arith.constant 14 : index
    %c0_1101 = arith.constant 0 : index
    %c0_1102 = arith.constant 0 : index
    %773 = vector.load %arg1[%c0_1098, %c2_1099, %c14_1100, %c0_1101, %c0_1102] : memref<1x4x18x5x4xf32, #tpu.memory_space<vmem>>, vector<1x1x1x4x4xf32>
    %774 = vector.shape_cast %773 : vector<1x1x1x4x4xf32> to vector<4x4xf32>
    %c8_1103 = arith.constant 8 : index
    %c0_1104 = arith.constant 0 : index
    %c0_1105 = arith.constant 0 : index
    %775 = vector.load %arg3[%c8_1103, %c0_1104, %c0_1105] : memref<9x4x8xf32, #tpu.memory_space<vmem>>, vector<1x4x8xf32>
    %776 = vector.shape_cast %775 : vector<1x4x8xf32> to vector<4x8xf32>
    %cst_1106 = arith.constant dense<0.000000e+00> : vector<4x8xf32>
    %777 = tpu.matmul %774, %776, %cst_1106 {dimension_numbers = #tpu.dot_dimension_numbers<[1], [0], [0], [1], [0, 0, 1, 1], [], []>} : vector<4x4xf32>, vector<4x8xf32>, vector<4x8xf32> -> vector<4x8xf32>
    %778 = arith.addf %772, %777 : vector<4x8xf32>
    %779 = vector.broadcast %0 : vector<1x8xf32> to vector<4x8xf32>
    %780 = arith.addf %778, %779 : vector<4x8xf32>
    %c1_1107 = arith.constant 1 : index
    %c7_1108 = arith.constant 7 : index
    %c0_1109 = arith.constant 0 : index
    %c0_1110 = arith.constant 0 : index
    %781 = vector.load %arg9[%c1_1107, %c7_1108, %c0_1109, %c0_1110] : memref<2x10x5x8xf32, #tpu.memory_space<vmem>>, vector<1x1x4x8xf32>
    %782 = vector.shape_cast %781 : vector<1x1x4x8xf32> to vector<4x8xf32>
    %783 = vector.shape_cast %780 : vector<4x8xf32> to vector<1x1x4x8xf32>
    tpu.vector_store %arg9[%c1_1107, %c7_1108, %c0_1109, %c0_1110], %783 {strides = array<i32>} : memref<2x10x5x8xf32, #tpu.memory_space<vmem>>, vector<1x1x4x8xf32>,
    %cst_1111 = arith.constant 0.000000e+00 : f32
    %784 = vector.broadcast %cst_1111 : f32 to vector<4x8xf32>
    %c0_1112 = arith.constant 0 : index
    %c2_1113 = arith.constant 2 : index
    %c12_1114 = arith.constant 12 : index
    %c0_1115 = arith.constant 0 : index
    %c0_1116 = arith.constant 0 : index
    %785 = vector.load %arg1[%c0_1112, %c2_1113, %c12_1114, %c0_1115, %c0_1116] : memref<1x4x18x5x4xf32, #tpu.memory_space<vmem>>, vector<1x1x1x4x4xf32>
    %786 = vector.shape_cast %785 : vector<1x1x1x4x4xf32> to vector<4x4xf32>
    %c0_1117 = arith.constant 0 : index
    %c0_1118 = arith.constant 0 : index
    %c0_1119 = arith.constant 0 : index
    %787 = vector.load %arg3[%c0_1117, %c0_1118, %c0_1119] : memref<9x4x8xf32, #tpu.memory_space<vmem>>, vector<1x4x8xf32>
    %788 = vector.shape_cast %787 : vector<1x4x8xf32> to vector<4x8xf32>
    %cst_1120 = arith.constant dense<0.000000e+00> : vector<4x8xf32>
    %789 = tpu.matmul %786, %788, %cst_1120 {dimension_numbers = #tpu.dot_dimension_numbers<[1], [0], [0], [1], [0, 0, 1, 1], [], []>} : vector<4x4xf32>, vector<4x8xf32>, vector<4x8xf32> -> vector<4x8xf32>
    %790 = arith.addf %784, %789 : vector<4x8xf32>
    %c0_1121 = arith.constant 0 : index
    %c3_1122 = arith.constant 3 : index
    %c12_1123 = arith.constant 12 : index
    %c0_1124 = arith.constant 0 : index
    %c0_1125 = arith.constant 0 : index
    %791 = vector.load %arg1[%c0_1121, %c3_1122, %c12_1123, %c0_1124, %c0_1125] : memref<1x4x18x5x4xf32, #tpu.memory_space<vmem>>, vector<1x1x1x4x4xf32>
    %792 = vector.shape_cast %791 : vector<1x1x1x4x4xf32> to vector<4x4xf32>
    %c1_1126 = arith.constant 1 : index
    %c0_1127 = arith.constant 0 : index
    %c0_1128 = arith.constant 0 : index
    %793 = vector.load %arg3[%c1_1126, %c0_1127, %c0_1128] : memref<9x4x8xf32, #tpu.memory_space<vmem>>, vector<1x4x8xf32>
    %794 = vector.shape_cast %793 : vector<1x4x8xf32> to vector<4x8xf32>
    %cst_1129 = arith.constant dense<0.000000e+00> : vector<4x8xf32>
    %795 = tpu.matmul %792, %794, %cst_1129 {dimension_numbers = #tpu.dot_dimension_numbers<[1], [0], [0], [1], [0, 0, 1, 1], [], []>} : vector<4x4xf32>, vector<4x8xf32>, vector<4x8xf32> -> vector<4x8xf32>
    %796 = arith.addf %790, %795 : vector<4x8xf32>
    %c0_1130 = arith.constant 0 : index
    %c0_1131 = arith.constant 0 : index
    %c12_1132 = arith.constant 12 : index
    %c1_1133 = arith.constant 1 : index
    %c0_1134 = arith.constant 0 : index
    %797 = vector.load %arg1[%c0_1130, %c0_1131, %c12_1132, %c1_1133, %c0_1134] : memref<1x4x18x5x4xf32, #tpu.memory_space<vmem>>, vector<1x1x1x4x4xf32>
    %798 = vector.shape_cast %797 : vector<1x1x1x4x4xf32> to vector<4x4xf32>
    %c2_1135 = arith.constant 2 : index
    %c0_1136 = arith.constant 0 : index
    %c0_1137 = arith.constant 0 : index
    %799 = vector.load %arg3[%c2_1135, %c0_1136, %c0_1137] : memref<9x4x8xf32, #tpu.memory_space<vmem>>, vector<1x4x8xf32>
    %800 = vector.shape_cast %799 : vector<1x4x8xf32> to vector<4x8xf32>
    %cst_1138 = arith.constant dense<0.000000e+00> : vector<4x8xf32>
    %801 = tpu.matmul %798, %800, %cst_1138 {dimension_numbers = #tpu.dot_dimension_numbers<[1], [0], [0], [1], [0, 0, 1, 1], [], []>} : vector<4x4xf32>, vector<4x8xf32>, vector<4x8xf32> -> vector<4x8xf32>
    %802 = arith.addf %796, %801 : vector<4x8xf32>
    %c0_1139 = arith.constant 0 : index
    %c2_1140 = arith.constant 2 : index
    %c13_1141 = arith.constant 13 : index
    %c0_1142 = arith.constant 0 : index
    %c0_1143 = arith.constant 0 : index
    %803 = vector.load %arg1[%c0_1139, %c2_1140, %c13_1141, %c0_1142, %c0_1143] : memref<1x4x18x5x4xf32, #tpu.memory_space<vmem>>, vector<1x1x1x4x4xf32>
    %804 = vector.shape_cast %803 : vector<1x1x1x4x4xf32> to vector<4x4xf32>
    %c3_1144 = arith.constant 3 : index
    %c0_1145 = arith.constant 0 : index
    %c0_1146 = arith.constant 0 : index
    %805 = vector.load %arg3[%c3_1144, %c0_1145, %c0_1146] : memref<9x4x8xf32, #tpu.memory_space<vmem>>, vector<1x4x8xf32>
    %806 = vector.shape_cast %805 : vector<1x4x8xf32> to vector<4x8xf32>
    %cst_1147 = arith.constant dense<0.000000e+00> : vector<4x8xf32>
    %807 = tpu.matmul %804, %806, %cst_1147 {dimension_numbers = #tpu.dot_dimension_numbers<[1], [0], [0], [1], [0, 0, 1, 1], [], []>} : vector<4x4xf32>, vector<4x8xf32>, vector<4x8xf32> -> vector<4x8xf32>
    %808 = arith.addf %802, %807 : vector<4x8xf32>
    %c0_1148 = arith.constant 0 : index
    %c3_1149 = arith.constant 3 : index
    %c13_1150 = arith.constant 13 : index
    %c0_1151 = arith.constant 0 : index
    %c0_1152 = arith.constant 0 : index
    %809 = vector.load %arg1[%c0_1148, %c3_1149, %c13_1150, %c0_1151, %c0_1152] : memref<1x4x18x5x4xf32, #tpu.memory_space<vmem>>, vector<1x1x1x4x4xf32>
    %810 = vector.shape_cast %809 : vector<1x1x1x4x4xf32> to vector<4x4xf32>
    %c4_1153 = arith.constant 4 : index
    %c0_1154 = arith.constant 0 : index
    %c0_1155 = arith.constant 0 : index
    %811 = vector.load %arg3[%c4_1153, %c0_1154, %c0_1155] : memref<9x4x8xf32, #tpu.memory_space<vmem>>, vector<1x4x8xf32>
    %812 = vector.shape_cast %811 : vector<1x4x8xf32> to vector<4x8xf32>
    %cst_1156 = arith.constant dense<0.000000e+00> : vector<4x8xf32>
    %813 = tpu.matmul %810, %812, %cst_1156 {dimension_numbers = #tpu.dot_dimension_numbers<[1], [0], [0], [1], [0, 0, 1, 1], [], []>} : vector<4x4xf32>, vector<4x8xf32>, vector<4x8xf32> -> vector<4x8xf32>
    %814 = arith.addf %808, %813 : vector<4x8xf32>
    %c0_1157 = arith.constant 0 : index
    %c0_1158 = arith.constant 0 : index
    %c13_1159 = arith.constant 13 : index
    %c1_1160 = arith.constant 1 : index
    %c0_1161 = arith.constant 0 : index
    %815 = vector.load %arg1[%c0_1157, %c0_1158, %c13_1159, %c1_1160, %c0_1161] : memref<1x4x18x5x4xf32, #tpu.memory_space<vmem>>, vector<1x1x1x4x4xf32>
    %816 = vector.shape_cast %815 : vector<1x1x1x4x4xf32> to vector<4x4xf32>
    %c5_1162 = arith.constant 5 : index
    %c0_1163 = arith.constant 0 : index
    %c0_1164 = arith.constant 0 : index
    %817 = vector.load %arg3[%c5_1162, %c0_1163, %c0_1164] : memref<9x4x8xf32, #tpu.memory_space<vmem>>, vector<1x4x8xf32>
    %818 = vector.shape_cast %817 : vector<1x4x8xf32> to vector<4x8xf32>
    %cst_1165 = arith.constant dense<0.000000e+00> : vector<4x8xf32>
    %819 = tpu.matmul %816, %818, %cst_1165 {dimension_numbers = #tpu.dot_dimension_numbers<[1], [0], [0], [1], [0, 0, 1, 1], [], []>} : vector<4x4xf32>, vector<4x8xf32>, vector<4x8xf32> -> vector<4x8xf32>
    %820 = arith.addf %814, %819 : vector<4x8xf32>
    %c0_1166 = arith.constant 0 : index
    %c2_1167 = arith.constant 2 : index
    %c14_1168 = arith.constant 14 : index
    %c0_1169 = arith.constant 0 : index
    %c0_1170 = arith.constant 0 : index
    %821 = vector.load %arg1[%c0_1166, %c2_1167, %c14_1168, %c0_1169, %c0_1170] : memref<1x4x18x5x4xf32, #tpu.memory_space<vmem>>, vector<1x1x1x4x4xf32>
    %822 = vector.shape_cast %821 : vector<1x1x1x4x4xf32> to vector<4x4xf32>
    %c6_1171 = arith.constant 6 : index
    %c0_1172 = arith.constant 0 : index
    %c0_1173 = arith.constant 0 : index
    %823 = vector.load %arg3[%c6_1171, %c0_1172, %c0_1173] : memref<9x4x8xf32, #tpu.memory_space<vmem>>, vector<1x4x8xf32>
    %824 = vector.shape_cast %823 : vector<1x4x8xf32> to vector<4x8xf32>
    %cst_1174 = arith.constant dense<0.000000e+00> : vector<4x8xf32>
    %825 = tpu.matmul %822, %824, %cst_1174 {dimension_numbers = #tpu.dot_dimension_numbers<[1], [0], [0], [1], [0, 0, 1, 1], [], []>} : vector<4x4xf32>, vector<4x8xf32>, vector<4x8xf32> -> vector<4x8xf32>
    %826 = arith.addf %820, %825 : vector<4x8xf32>
    %c0_1175 = arith.constant 0 : index
    %c3_1176 = arith.constant 3 : index
    %c14_1177 = arith.constant 14 : index
    %c0_1178 = arith.constant 0 : index
    %c0_1179 = arith.constant 0 : index
    %827 = vector.load %arg1[%c0_1175, %c3_1176, %c14_1177, %c0_1178, %c0_1179] : memref<1x4x18x5x4xf32, #tpu.memory_space<vmem>>, vector<1x1x1x4x4xf32>
    %828 = vector.shape_cast %827 : vector<1x1x1x4x4xf32> to vector<4x4xf32>
    %c7_1180 = arith.constant 7 : index
    %c0_1181 = arith.constant 0 : index
    %c0_1182 = arith.constant 0 : index
    %829 = vector.load %arg3[%c7_1180, %c0_1181, %c0_1182] : memref<9x4x8xf32, #tpu.memory_space<vmem>>, vector<1x4x8xf32>
    %830 = vector.shape_cast %829 : vector<1x4x8xf32> to vector<4x8xf32>
    %cst_1183 = arith.constant dense<0.000000e+00> : vector<4x8xf32>
    %831 = tpu.matmul %828, %830, %cst_1183 {dimension_numbers = #tpu.dot_dimension_numbers<[1], [0], [0], [1], [0, 0, 1, 1], [], []>} : vector<4x4xf32>, vector<4x8xf32>, vector<4x8xf32> -> vector<4x8xf32>
    %832 = arith.addf %826, %831 : vector<4x8xf32>
    %c0_1184 = arith.constant 0 : index
    %c0_1185 = arith.constant 0 : index
    %c14_1186 = arith.constant 14 : index
    %c1_1187 = arith.constant 1 : index
    %c0_1188 = arith.constant 0 : index
    %833 = vector.load %arg1[%c0_1184, %c0_1185, %c14_1186, %c1_1187, %c0_1188] : memref<1x4x18x5x4xf32, #tpu.memory_space<vmem>>, vector<1x1x1x4x4xf32>
    %834 = vector.shape_cast %833 : vector<1x1x1x4x4xf32> to vector<4x4xf32>
    %c8_1189 = arith.constant 8 : index
    %c0_1190 = arith.constant 0 : index
    %c0_1191 = arith.constant 0 : index
    %835 = vector.load %arg3[%c8_1189, %c0_1190, %c0_1191] : memref<9x4x8xf32, #tpu.memory_space<vmem>>, vector<1x4x8xf32>
    %836 = vector.shape_cast %835 : vector<1x4x8xf32> to vector<4x8xf32>
    %cst_1192 = arith.constant dense<0.000000e+00> : vector<4x8xf32>
    %837 = tpu.matmul %834, %836, %cst_1192 {dimension_numbers = #tpu.dot_dimension_numbers<[1], [0], [0], [1], [0, 0, 1, 1], [], []>} : vector<4x4xf32>, vector<4x8xf32>, vector<4x8xf32> -> vector<4x8xf32>
    %838 = arith.addf %832, %837 : vector<4x8xf32>
    %839 = vector.broadcast %0 : vector<1x8xf32> to vector<4x8xf32>
    %840 = arith.addf %838, %839 : vector<4x8xf32>
    %c0_1193 = arith.constant 0 : index
    %c7_1194 = arith.constant 7 : index
    %c1_1195 = arith.constant 1 : index
    %c0_1196 = arith.constant 0 : index
    %841 = vector.load %arg9[%c0_1193, %c7_1194, %c1_1195, %c0_1196] : memref<2x10x5x8xf32, #tpu.memory_space<vmem>>, vector<1x1x4x8xf32>
    %842 = vector.shape_cast %841 : vector<1x1x4x8xf32> to vector<4x8xf32>
    %843 = vector.shape_cast %840 : vector<4x8xf32> to vector<1x1x4x8xf32>
    tpu.vector_store %arg9[%c0_1193, %c7_1194, %c1_1195, %c0_1196], %843 {strides = array<i32>} : memref<2x10x5x8xf32, #tpu.memory_space<vmem>>, vector<1x1x4x8xf32>,
    %cst_1197 = arith.constant 0.000000e+00 : f32
    %844 = vector.broadcast %cst_1197 : f32 to vector<4x8xf32>
    %c0_1198 = arith.constant 0 : index
    %c0_1199 = arith.constant 0 : index
    %c14_1200 = arith.constant 14 : index
    %c0_1201 = arith.constant 0 : index
    %c0_1202 = arith.constant 0 : index
    %845 = vector.load %arg1[%c0_1198, %c0_1199, %c14_1200, %c0_1201, %c0_1202] : memref<1x4x18x5x4xf32, #tpu.memory_space<vmem>>, vector<1x1x1x4x4xf32>
    %846 = vector.shape_cast %845 : vector<1x1x1x4x4xf32> to vector<4x4xf32>
    %c0_1203 = arith.constant 0 : index
    %c0_1204 = arith.constant 0 : index
    %c0_1205 = arith.constant 0 : index
    %847 = vector.load %arg3[%c0_1203, %c0_1204, %c0_1205] : memref<9x4x8xf32, #tpu.memory_space<vmem>>, vector<1x4x8xf32>
    %848 = vector.shape_cast %847 : vector<1x4x8xf32> to vector<4x8xf32>
    %cst_1206 = arith.constant dense<0.000000e+00> : vector<4x8xf32>
    %849 = tpu.matmul %846, %848, %cst_1206 {dimension_numbers = #tpu.dot_dimension_numbers<[1], [0], [0], [1], [0, 0, 1, 1], [], []>} : vector<4x4xf32>, vector<4x8xf32>, vector<4x8xf32> -> vector<4x8xf32>
    %850 = arith.addf %844, %849 : vector<4x8xf32>
    %c0_1207 = arith.constant 0 : index
    %c1_1208 = arith.constant 1 : index
    %c14_1209 = arith.constant 14 : index
    %c0_1210 = arith.constant 0 : index
    %c0_1211 = arith.constant 0 : index
    %851 = vector.load %arg1[%c0_1207, %c1_1208, %c14_1209, %c0_1210, %c0_1211] : memref<1x4x18x5x4xf32, #tpu.memory_space<vmem>>, vector<1x1x1x4x4xf32>
    %852 = vector.shape_cast %851 : vector<1x1x1x4x4xf32> to vector<4x4xf32>
    %c1_1212 = arith.constant 1 : index
    %c0_1213 = arith.constant 0 : index
    %c0_1214 = arith.constant 0 : index
    %853 = vector.load %arg3[%c1_1212, %c0_1213, %c0_1214] : memref<9x4x8xf32, #tpu.memory_space<vmem>>, vector<1x4x8xf32>
    %854 = vector.shape_cast %853 : vector<1x4x8xf32> to vector<4x8xf32>
    %cst_1215 = arith.constant dense<0.000000e+00> : vector<4x8xf32>
    %855 = tpu.matmul %852, %854, %cst_1215 {dimension_numbers = #tpu.dot_dimension_numbers<[1], [0], [0], [1], [0, 0, 1, 1], [], []>} : vector<4x4xf32>, vector<4x8xf32>, vector<4x8xf32> -> vector<4x8xf32>
    %856 = arith.addf %850, %855 : vector<4x8xf32>
    %c0_1216 = arith.constant 0 : index
    %c2_1217 = arith.constant 2 : index
    %c14_1218 = arith.constant 14 : index
    %c0_1219 = arith.constant 0 : index
    %c0_1220 = arith.constant 0 : index
    %857 = vector.load %arg1[%c0_1216, %c2_1217, %c14_1218, %c0_1219, %c0_1220] : memref<1x4x18x5x4xf32, #tpu.memory_space<vmem>>, vector<1x1x1x4x4xf32>
    %858 = vector.shape_cast %857 : vector<1x1x1x4x4xf32> to vector<4x4xf32>
    %c2_1221 = arith.constant 2 : index
    %c0_1222 = arith.constant 0 : index
    %c0_1223 = arith.constant 0 : index
    %859 = vector.load %arg3[%c2_1221, %c0_1222, %c0_1223] : memref<9x4x8xf32, #tpu.memory_space<vmem>>, vector<1x4x8xf32>
    %860 = vector.shape_cast %859 : vector<1x4x8xf32> to vector<4x8xf32>
    %cst_1224 = arith.constant dense<0.000000e+00> : vector<4x8xf32>
    %861 = tpu.matmul %858, %860, %cst_1224 {dimension_numbers = #tpu.dot_dimension_numbers<[1], [0], [0], [1], [0, 0, 1, 1], [], []>} : vector<4x4xf32>, vector<4x8xf32>, vector<4x8xf32> -> vector<4x8xf32>
    %862 = arith.addf %856, %861 : vector<4x8xf32>
    %c0_1225 = arith.constant 0 : index
    %c0_1226 = arith.constant 0 : index
    %c15 = arith.constant 15 : index
    %c0_1227 = arith.constant 0 : index
    %c0_1228 = arith.constant 0 : index
    %863 = vector.load %arg1[%c0_1225, %c0_1226, %c15, %c0_1227, %c0_1228] : memref<1x4x18x5x4xf32, #tpu.memory_space<vmem>>, vector<1x1x1x4x4xf32>
    %864 = vector.shape_cast %863 : vector<1x1x1x4x4xf32> to vector<4x4xf32>
    %c3_1229 = arith.constant 3 : index
    %c0_1230 = arith.constant 0 : index
    %c0_1231 = arith.constant 0 : index
    %865 = vector.load %arg3[%c3_1229, %c0_1230, %c0_1231] : memref<9x4x8xf32, #tpu.memory_space<vmem>>, vector<1x4x8xf32>
    %866 = vector.shape_cast %865 : vector<1x4x8xf32> to vector<4x8xf32>
    %cst_1232 = arith.constant dense<0.000000e+00> : vector<4x8xf32>
    %867 = tpu.matmul %864, %866, %cst_1232 {dimension_numbers = #tpu.dot_dimension_numbers<[1], [0], [0], [1], [0, 0, 1, 1], [], []>} : vector<4x4xf32>, vector<4x8xf32>, vector<4x8xf32> -> vector<4x8xf32>
    %868 = arith.addf %862, %867 : vector<4x8xf32>
    %c0_1233 = arith.constant 0 : index
    %c1_1234 = arith.constant 1 : index
    %c15_1235 = arith.constant 15 : index
    %c0_1236 = arith.constant 0 : index
    %c0_1237 = arith.constant 0 : index
    %869 = vector.load %arg1[%c0_1233, %c1_1234, %c15_1235, %c0_1236, %c0_1237] : memref<1x4x18x5x4xf32, #tpu.memory_space<vmem>>, vector<1x1x1x4x4xf32>
    %870 = vector.shape_cast %869 : vector<1x1x1x4x4xf32> to vector<4x4xf32>
    %c4_1238 = arith.constant 4 : index
    %c0_1239 = arith.constant 0 : index
    %c0_1240 = arith.constant 0 : index
    %871 = vector.load %arg3[%c4_1238, %c0_1239, %c0_1240] : memref<9x4x8xf32, #tpu.memory_space<vmem>>, vector<1x4x8xf32>
    %872 = vector.shape_cast %871 : vector<1x4x8xf32> to vector<4x8xf32>
    %cst_1241 = arith.constant dense<0.000000e+00> : vector<4x8xf32>
    %873 = tpu.matmul %870, %872, %cst_1241 {dimension_numbers = #tpu.dot_dimension_numbers<[1], [0], [0], [1], [0, 0, 1, 1], [], []>} : vector<4x4xf32>, vector<4x8xf32>, vector<4x8xf32> -> vector<4x8xf32>
    %874 = arith.addf %868, %873 : vector<4x8xf32>
    %c0_1242 = arith.constant 0 : index
    %c2_1243 = arith.constant 2 : index
    %c15_1244 = arith.constant 15 : index
    %c0_1245 = arith.constant 0 : index
    %c0_1246 = arith.constant 0 : index
    %875 = vector.load %arg1[%c0_1242, %c2_1243, %c15_1244, %c0_1245, %c0_1246] : memref<1x4x18x5x4xf32, #tpu.memory_space<vmem>>, vector<1x1x1x4x4xf32>
    %876 = vector.shape_cast %875 : vector<1x1x1x4x4xf32> to vector<4x4xf32>
    %c5_1247 = arith.constant 5 : index
    %c0_1248 = arith.constant 0 : index
    %c0_1249 = arith.constant 0 : index
    %877 = vector.load %arg3[%c5_1247, %c0_1248, %c0_1249] : memref<9x4x8xf32, #tpu.memory_space<vmem>>, vector<1x4x8xf32>
    %878 = vector.shape_cast %877 : vector<1x4x8xf32> to vector<4x8xf32>
    %cst_1250 = arith.constant dense<0.000000e+00> : vector<4x8xf32>
    %879 = tpu.matmul %876, %878, %cst_1250 {dimension_numbers = #tpu.dot_dimension_numbers<[1], [0], [0], [1], [0, 0, 1, 1], [], []>} : vector<4x4xf32>, vector<4x8xf32>, vector<4x8xf32> -> vector<4x8xf32>
    %880 = arith.addf %874, %879 : vector<4x8xf32>
    %c0_1251 = arith.constant 0 : index
    %c0_1252 = arith.constant 0 : index
    %c16 = arith.constant 16 : index
    %c0_1253 = arith.constant 0 : index
    %c0_1254 = arith.constant 0 : index
    %881 = vector.load %arg1[%c0_1251, %c0_1252, %c16, %c0_1253, %c0_1254] : memref<1x4x18x5x4xf32, #tpu.memory_space<vmem>>, vector<1x1x1x4x4xf32>
    %882 = vector.shape_cast %881 : vector<1x1x1x4x4xf32> to vector<4x4xf32>
    %c6_1255 = arith.constant 6 : index
    %c0_1256 = arith.constant 0 : index
    %c0_1257 = arith.constant 0 : index
    %883 = vector.load %arg3[%c6_1255, %c0_1256, %c0_1257] : memref<9x4x8xf32, #tpu.memory_space<vmem>>, vector<1x4x8xf32>
    %884 = vector.shape_cast %883 : vector<1x4x8xf32> to vector<4x8xf32>
    %cst_1258 = arith.constant dense<0.000000e+00> : vector<4x8xf32>
    %885 = tpu.matmul %882, %884, %cst_1258 {dimension_numbers = #tpu.dot_dimension_numbers<[1], [0], [0], [1], [0, 0, 1, 1], [], []>} : vector<4x4xf32>, vector<4x8xf32>, vector<4x8xf32> -> vector<4x8xf32>
    %886 = arith.addf %880, %885 : vector<4x8xf32>
    %c0_1259 = arith.constant 0 : index
    %c1_1260 = arith.constant 1 : index
    %c16_1261 = arith.constant 16 : index
    %c0_1262 = arith.constant 0 : index
    %c0_1263 = arith.constant 0 : index
    %887 = vector.load %arg1[%c0_1259, %c1_1260, %c16_1261, %c0_1262, %c0_1263] : memref<1x4x18x5x4xf32, #tpu.memory_space<vmem>>, vector<1x1x1x4x4xf32>
    %888 = vector.shape_cast %887 : vector<1x1x1x4x4xf32> to vector<4x4xf32>
    %c7_1264 = arith.constant 7 : index
    %c0_1265 = arith.constant 0 : index
    %c0_1266 = arith.constant 0 : index
    %889 = vector.load %arg3[%c7_1264, %c0_1265, %c0_1266] : memref<9x4x8xf32, #tpu.memory_space<vmem>>, vector<1x4x8xf32>
    %890 = vector.shape_cast %889 : vector<1x4x8xf32> to vector<4x8xf32>
    %cst_1267 = arith.constant dense<0.000000e+00> : vector<4x8xf32>
    %891 = tpu.matmul %888, %890, %cst_1267 {dimension_numbers = #tpu.dot_dimension_numbers<[1], [0], [0], [1], [0, 0, 1, 1], [], []>} : vector<4x4xf32>, vector<4x8xf32>, vector<4x8xf32> -> vector<4x8xf32>
    %892 = arith.addf %886, %891 : vector<4x8xf32>
    %c0_1268 = arith.constant 0 : index
    %c2_1269 = arith.constant 2 : index
    %c16_1270 = arith.constant 16 : index
    %c0_1271 = arith.constant 0 : index
    %c0_1272 = arith.constant 0 : index
    %893 = vector.load %arg1[%c0_1268, %c2_1269, %c16_1270, %c0_1271, %c0_1272] : memref<1x4x18x5x4xf32, #tpu.memory_space<vmem>>, vector<1x1x1x4x4xf32>
    %894 = vector.shape_cast %893 : vector<1x1x1x4x4xf32> to vector<4x4xf32>
    %c8_1273 = arith.constant 8 : index
    %c0_1274 = arith.constant 0 : index
    %c0_1275 = arith.constant 0 : index
    %895 = vector.load %arg3[%c8_1273, %c0_1274, %c0_1275] : memref<9x4x8xf32, #tpu.memory_space<vmem>>, vector<1x4x8xf32>
    %896 = vector.shape_cast %895 : vector<1x4x8xf32> to vector<4x8xf32>
    %cst_1276 = arith.constant dense<0.000000e+00> : vector<4x8xf32>
    %897 = tpu.matmul %894, %896, %cst_1276 {dimension_numbers = #tpu.dot_dimension_numbers<[1], [0], [0], [1], [0, 0, 1, 1], [], []>} : vector<4x4xf32>, vector<4x8xf32>, vector<4x8xf32> -> vector<4x8xf32>
    %898 = arith.addf %892, %897 : vector<4x8xf32>
    %899 = vector.broadcast %0 : vector<1x8xf32> to vector<4x8xf32>
    %900 = arith.addf %898, %899 : vector<4x8xf32>
    %c1_1277 = arith.constant 1 : index
    %c8_1278 = arith.constant 8 : index
    %c0_1279 = arith.constant 0 : index
    %c0_1280 = arith.constant 0 : index
    %901 = vector.load %arg9[%c1_1277, %c8_1278, %c0_1279, %c0_1280] : memref<2x10x5x8xf32, #tpu.memory_space<vmem>>, vector<1x1x4x8xf32>
    %902 = vector.shape_cast %901 : vector<1x1x4x8xf32> to vector<4x8xf32>
    %903 = vector.shape_cast %900 : vector<4x8xf32> to vector<1x1x4x8xf32>
    tpu.vector_store %arg9[%c1_1277, %c8_1278, %c0_1279, %c0_1280], %903 {strides = array<i32>} : memref<2x10x5x8xf32, #tpu.memory_space<vmem>>, vector<1x1x4x8xf32>,
    %cst_1281 = arith.constant 0.000000e+00 : f32
    %904 = vector.broadcast %cst_1281 : f32 to vector<4x8xf32>
    %c0_1282 = arith.constant 0 : index
    %c2_1283 = arith.constant 2 : index
    %c14_1284 = arith.constant 14 : index
    %c0_1285 = arith.constant 0 : index
    %c0_1286 = arith.constant 0 : index
    %905 = vector.load %arg1[%c0_1282, %c2_1283, %c14_1284, %c0_1285, %c0_1286] : memref<1x4x18x5x4xf32, #tpu.memory_space<vmem>>, vector<1x1x1x4x4xf32>
    %906 = vector.shape_cast %905 : vector<1x1x1x4x4xf32> to vector<4x4xf32>
    %c0_1287 = arith.constant 0 : index
    %c0_1288 = arith.constant 0 : index
    %c0_1289 = arith.constant 0 : index
    %907 = vector.load %arg3[%c0_1287, %c0_1288, %c0_1289] : memref<9x4x8xf32, #tpu.memory_space<vmem>>, vector<1x4x8xf32>
    %908 = vector.shape_cast %907 : vector<1x4x8xf32> to vector<4x8xf32>
    %cst_1290 = arith.constant dense<0.000000e+00> : vector<4x8xf32>
    %909 = tpu.matmul %906, %908, %cst_1290 {dimension_numbers = #tpu.dot_dimension_numbers<[1], [0], [0], [1], [0, 0, 1, 1], [], []>} : vector<4x4xf32>, vector<4x8xf32>, vector<4x8xf32> -> vector<4x8xf32>
    %910 = arith.addf %904, %909 : vector<4x8xf32>
    %c0_1291 = arith.constant 0 : index
    %c3_1292 = arith.constant 3 : index
    %c14_1293 = arith.constant 14 : index
    %c0_1294 = arith.constant 0 : index
    %c0_1295 = arith.constant 0 : index
    %911 = vector.load %arg1[%c0_1291, %c3_1292, %c14_1293, %c0_1294, %c0_1295] : memref<1x4x18x5x4xf32, #tpu.memory_space<vmem>>, vector<1x1x1x4x4xf32>
    %912 = vector.shape_cast %911 : vector<1x1x1x4x4xf32> to vector<4x4xf32>
    %c1_1296 = arith.constant 1 : index
    %c0_1297 = arith.constant 0 : index
    %c0_1298 = arith.constant 0 : index
    %913 = vector.load %arg3[%c1_1296, %c0_1297, %c0_1298] : memref<9x4x8xf32, #tpu.memory_space<vmem>>, vector<1x4x8xf32>
    %914 = vector.shape_cast %913 : vector<1x4x8xf32> to vector<4x8xf32>
    %cst_1299 = arith.constant dense<0.000000e+00> : vector<4x8xf32>
    %915 = tpu.matmul %912, %914, %cst_1299 {dimension_numbers = #tpu.dot_dimension_numbers<[1], [0], [0], [1], [0, 0, 1, 1], [], []>} : vector<4x4xf32>, vector<4x8xf32>, vector<4x8xf32> -> vector<4x8xf32>
    %916 = arith.addf %910, %915 : vector<4x8xf32>
    %c0_1300 = arith.constant 0 : index
    %c0_1301 = arith.constant 0 : index
    %c14_1302 = arith.constant 14 : index
    %c1_1303 = arith.constant 1 : index
    %c0_1304 = arith.constant 0 : index
    %917 = vector.load %arg1[%c0_1300, %c0_1301, %c14_1302, %c1_1303, %c0_1304] : memref<1x4x18x5x4xf32, #tpu.memory_space<vmem>>, vector<1x1x1x4x4xf32>
    %918 = vector.shape_cast %917 : vector<1x1x1x4x4xf32> to vector<4x4xf32>
    %c2_1305 = arith.constant 2 : index
    %c0_1306 = arith.constant 0 : index
    %c0_1307 = arith.constant 0 : index
    %919 = vector.load %arg3[%c2_1305, %c0_1306, %c0_1307] : memref<9x4x8xf32, #tpu.memory_space<vmem>>, vector<1x4x8xf32>
    %920 = vector.shape_cast %919 : vector<1x4x8xf32> to vector<4x8xf32>
    %cst_1308 = arith.constant dense<0.000000e+00> : vector<4x8xf32>
    %921 = tpu.matmul %918, %920, %cst_1308 {dimension_numbers = #tpu.dot_dimension_numbers<[1], [0], [0], [1], [0, 0, 1, 1], [], []>} : vector<4x4xf32>, vector<4x8xf32>, vector<4x8xf32> -> vector<4x8xf32>
    %922 = arith.addf %916, %921 : vector<4x8xf32>
    %c0_1309 = arith.constant 0 : index
    %c2_1310 = arith.constant 2 : index
    %c15_1311 = arith.constant 15 : index
    %c0_1312 = arith.constant 0 : index
    %c0_1313 = arith.constant 0 : index
    %923 = vector.load %arg1[%c0_1309, %c2_1310, %c15_1311, %c0_1312, %c0_1313] : memref<1x4x18x5x4xf32, #tpu.memory_space<vmem>>, vector<1x1x1x4x4xf32>
    %924 = vector.shape_cast %923 : vector<1x1x1x4x4xf32> to vector<4x4xf32>
    %c3_1314 = arith.constant 3 : index
    %c0_1315 = arith.constant 0 : index
    %c0_1316 = arith.constant 0 : index
    %925 = vector.load %arg3[%c3_1314, %c0_1315, %c0_1316] : memref<9x4x8xf32, #tpu.memory_space<vmem>>, vector<1x4x8xf32>
    %926 = vector.shape_cast %925 : vector<1x4x8xf32> to vector<4x8xf32>
    %cst_1317 = arith.constant dense<0.000000e+00> : vector<4x8xf32>
    %927 = tpu.matmul %924, %926, %cst_1317 {dimension_numbers = #tpu.dot_dimension_numbers<[1], [0], [0], [1], [0, 0, 1, 1], [], []>} : vector<4x4xf32>, vector<4x8xf32>, vector<4x8xf32> -> vector<4x8xf32>
    %928 = arith.addf %922, %927 : vector<4x8xf32>
    %c0_1318 = arith.constant 0 : index
    %c3_1319 = arith.constant 3 : index
    %c15_1320 = arith.constant 15 : index
    %c0_1321 = arith.constant 0 : index
    %c0_1322 = arith.constant 0 : index
    %929 = vector.load %arg1[%c0_1318, %c3_1319, %c15_1320, %c0_1321, %c0_1322] : memref<1x4x18x5x4xf32, #tpu.memory_space<vmem>>, vector<1x1x1x4x4xf32>
    %930 = vector.shape_cast %929 : vector<1x1x1x4x4xf32> to vector<4x4xf32>
    %c4_1323 = arith.constant 4 : index
    %c0_1324 = arith.constant 0 : index
    %c0_1325 = arith.constant 0 : index
    %931 = vector.load %arg3[%c4_1323, %c0_1324, %c0_1325] : memref<9x4x8xf32, #tpu.memory_space<vmem>>, vector<1x4x8xf32>
    %932 = vector.shape_cast %931 : vector<1x4x8xf32> to vector<4x8xf32>
    %cst_1326 = arith.constant dense<0.000000e+00> : vector<4x8xf32>
    %933 = tpu.matmul %930, %932, %cst_1326 {dimension_numbers = #tpu.dot_dimension_numbers<[1], [0], [0], [1], [0, 0, 1, 1], [], []>} : vector<4x4xf32>, vector<4x8xf32>, vector<4x8xf32> -> vector<4x8xf32>
    %934 = arith.addf %928, %933 : vector<4x8xf32>
    %c0_1327 = arith.constant 0 : index
    %c0_1328 = arith.constant 0 : index
    %c15_1329 = arith.constant 15 : index
    %c1_1330 = arith.constant 1 : index
    %c0_1331 = arith.constant 0 : index
    %935 = vector.load %arg1[%c0_1327, %c0_1328, %c15_1329, %c1_1330, %c0_1331] : memref<1x4x18x5x4xf32, #tpu.memory_space<vmem>>, vector<1x1x1x4x4xf32>
    %936 = vector.shape_cast %935 : vector<1x1x1x4x4xf32> to vector<4x4xf32>
    %c5_1332 = arith.constant 5 : index
    %c0_1333 = arith.constant 0 : index
    %c0_1334 = arith.constant 0 : index
    %937 = vector.load %arg3[%c5_1332, %c0_1333, %c0_1334] : memref<9x4x8xf32, #tpu.memory_space<vmem>>, vector<1x4x8xf32>
    %938 = vector.shape_cast %937 : vector<1x4x8xf32> to vector<4x8xf32>
    %cst_1335 = arith.constant dense<0.000000e+00> : vector<4x8xf32>
    %939 = tpu.matmul %936, %938, %cst_1335 {dimension_numbers = #tpu.dot_dimension_numbers<[1], [0], [0], [1], [0, 0, 1, 1], [], []>} : vector<4x4xf32>, vector<4x8xf32>, vector<4x8xf32> -> vector<4x8xf32>
    %940 = arith.addf %934, %939 : vector<4x8xf32>
    %c0_1336 = arith.constant 0 : index
    %c2_1337 = arith.constant 2 : index
    %c16_1338 = arith.constant 16 : index
    %c0_1339 = arith.constant 0 : index
    %c0_1340 = arith.constant 0 : index
    %941 = vector.load %arg1[%c0_1336, %c2_1337, %c16_1338, %c0_1339, %c0_1340] : memref<1x4x18x5x4xf32, #tpu.memory_space<vmem>>, vector<1x1x1x4x4xf32>
    %942 = vector.shape_cast %941 : vector<1x1x1x4x4xf32> to vector<4x4xf32>
    %c6_1341 = arith.constant 6 : index
    %c0_1342 = arith.constant 0 : index
    %c0_1343 = arith.constant 0 : index
    %943 = vector.load %arg3[%c6_1341, %c0_1342, %c0_1343] : memref<9x4x8xf32, #tpu.memory_space<vmem>>, vector<1x4x8xf32>
    %944 = vector.shape_cast %943 : vector<1x4x8xf32> to vector<4x8xf32>
    %cst_1344 = arith.constant dense<0.000000e+00> : vector<4x8xf32>
    %945 = tpu.matmul %942, %944, %cst_1344 {dimension_numbers = #tpu.dot_dimension_numbers<[1], [0], [0], [1], [0, 0, 1, 1], [], []>} : vector<4x4xf32>, vector<4x8xf32>, vector<4x8xf32> -> vector<4x8xf32>
    %946 = arith.addf %940, %945 : vector<4x8xf32>
    %c0_1345 = arith.constant 0 : index
    %c3_1346 = arith.constant 3 : index
    %c16_1347 = arith.constant 16 : index
    %c0_1348 = arith.constant 0 : index
    %c0_1349 = arith.constant 0 : index
    %947 = vector.load %arg1[%c0_1345, %c3_1346, %c16_1347, %c0_1348, %c0_1349] : memref<1x4x18x5x4xf32, #tpu.memory_space<vmem>>, vector<1x1x1x4x4xf32>
    %948 = vector.shape_cast %947 : vector<1x1x1x4x4xf32> to vector<4x4xf32>
    %c7_1350 = arith.constant 7 : index
    %c0_1351 = arith.constant 0 : index
    %c0_1352 = arith.constant 0 : index
    %949 = vector.load %arg3[%c7_1350, %c0_1351, %c0_1352] : memref<9x4x8xf32, #tpu.memory_space<vmem>>, vector<1x4x8xf32>
    %950 = vector.shape_cast %949 : vector<1x4x8xf32> to vector<4x8xf32>
    %cst_1353 = arith.constant dense<0.000000e+00> : vector<4x8xf32>
    %951 = tpu.matmul %948, %950, %cst_1353 {dimension_numbers = #tpu.dot_dimension_numbers<[1], [0], [0], [1], [0, 0, 1, 1], [], []>} : vector<4x4xf32>, vector<4x8xf32>, vector<4x8xf32> -> vector<4x8xf32>
    %952 = arith.addf %946, %951 : vector<4x8xf32>
    %c0_1354 = arith.constant 0 : index
    %c0_1355 = arith.constant 0 : index
    %c16_1356 = arith.constant 16 : index
    %c1_1357 = arith.constant 1 : index
    %c0_1358 = arith.constant 0 : index
    %953 = vector.load %arg1[%c0_1354, %c0_1355, %c16_1356, %c1_1357, %c0_1358] : memref<1x4x18x5x4xf32, #tpu.memory_space<vmem>>, vector<1x1x1x4x4xf32>
    %954 = vector.shape_cast %953 : vector<1x1x1x4x4xf32> to vector<4x4xf32>
    %c8_1359 = arith.constant 8 : index
    %c0_1360 = arith.constant 0 : index
    %c0_1361 = arith.constant 0 : index
    %955 = vector.load %arg3[%c8_1359, %c0_1360, %c0_1361] : memref<9x4x8xf32, #tpu.memory_space<vmem>>, vector<1x4x8xf32>
    %956 = vector.shape_cast %955 : vector<1x4x8xf32> to vector<4x8xf32>
    %cst_1362 = arith.constant dense<0.000000e+00> : vector<4x8xf32>
    %957 = tpu.matmul %954, %956, %cst_1362 {dimension_numbers = #tpu.dot_dimension_numbers<[1], [0], [0], [1], [0, 0, 1, 1], [], []>} : vector<4x4xf32>, vector<4x8xf32>, vector<4x8xf32> -> vector<4x8xf32>
    %958 = arith.addf %952, %957 : vector<4x8xf32>
    %959 = vector.broadcast %0 : vector<1x8xf32> to vector<4x8xf32>
    %960 = arith.addf %958, %959 : vector<4x8xf32>
    %c0_1363 = arith.constant 0 : index
    %c8_1364 = arith.constant 8 : index
    %c1_1365 = arith.constant 1 : index
    %c0_1366 = arith.constant 0 : index
    %961 = vector.load %arg9[%c0_1363, %c8_1364, %c1_1365, %c0_1366] : memref<2x10x5x8xf32, #tpu.memory_space<vmem>>, vector<1x1x4x8xf32>
    %962 = vector.shape_cast %961 : vector<1x1x4x8xf32> to vector<4x8xf32>
    %963 = vector.shape_cast %960 : vector<4x8xf32> to vector<1x1x4x8xf32>
    tpu.vector_store %arg9[%c0_1363, %c8_1364, %c1_1365, %c0_1366], %963 {strides = array<i32>} : memref<2x10x5x8xf32, #tpu.memory_space<vmem>>, vector<1x1x4x8xf32>,
    %c0_1367 = arith.constant 0 : index
    %c0_1368 = arith.constant 0 : index
    %c0_1369 = arith.constant 0 : index
    %964 = vector.load %arg2[%c0_1367, %c0_1368, %c0_1369] : memref<1x16x64xf32, #tpu.memory_space<vmem>>, vector<1x16x64xf32>
    %965 = vector.shape_cast %964 : vector<1x16x64xf32> to vector<16x64xf32>
    %c0_1370 = arith.constant 0 : index
    %c0_1371 = arith.constant 0 : index
    %966 = vector.load %arg5[%c0_1370, %c0_1371] : memref<64x128xf32, #tpu.memory_space<vmem>>, vector<64x128xf32>
    %cst_1372 = arith.constant dense<0.000000e+00> : vector<16x128xf32>
    %967 = tpu.matmul %965, %966, %cst_1372 {dimension_numbers = #tpu.dot_dimension_numbers<[1], [0], [0], [1], [0, 0, 1, 1], [], []>} : vector<16x64xf32>, vector<64x128xf32>, vector<16x128xf32> -> vector<16x128xf32>
    %968 = vector.extract_strided_slice %967 {offsets = [0, 0], sizes = [4, 128], strides = [1, 1]} : vector<16x128xf32> to vector<4x128xf32>
    %c0_1373 = arith.constant 0 : index
    %c0_1374 = arith.constant 0 : index
    %c0_1375 = arith.constant 0 : index
    %c0_1376 = arith.constant 0 : index
    %969 = vector.load %arg9[%c0_1373, %c0_1374, %c0_1375, %c0_1376] : memref<2x10x5x8xf32, #tpu.memory_space<vmem>>, vector<1x1x4x8xf32>
    %970 = vector.shape_cast %969 : vector<1x1x4x8xf32> to vector<4x8xf32>
    %c0_1377 = arith.constant 0 : index
    %c0_1378 = arith.constant 0 : index
    %c0_1379 = arith.constant 0 : index
    %971 = vector.load %arg4[%c0_1377, %c0_1378, %c0_1379] : memref<9x8x128xf32, #tpu.memory_space<vmem>>, vector<1x8x128xf32>
    %972 = vector.shape_cast %971 : vector<1x8x128xf32> to vector<8x128xf32>
    %cst_1380 = arith.constant dense<0.000000e+00> : vector<4x128xf32>
    %973 = tpu.matmul %970, %972, %cst_1380 {dimension_numbers = #tpu.dot_dimension_numbers<[1], [0], [0], [1], [0, 0, 1, 1], [], []>} : vector<4x8xf32>, vector<8x128xf32>, vector<4x128xf32> -> vector<4x128xf32>
    %974 = arith.addf %968, %973 : vector<4x128xf32>
    %c1_1381 = arith.constant 1 : index
    %c0_1382 = arith.constant 0 : index
    %c0_1383 = arith.constant 0 : index
    %c0_1384 = arith.constant 0 : index
    %975 = vector.load %arg9[%c1_1381, %c0_1382, %c0_1383, %c0_1384] : memref<2x10x5x8xf32, #tpu.memory_space<vmem>>, vector<1x1x4x8xf32>
    %976 = vector.shape_cast %975 : vector<1x1x4x8xf32> to vector<4x8xf32>
    %c1_1385 = arith.constant 1 : index
    %c0_1386 = arith.constant 0 : index
    %c0_1387 = arith.constant 0 : index
    %977 = vector.load %arg4[%c1_1385, %c0_1386, %c0_1387] : memref<9x8x128xf32, #tpu.memory_space<vmem>>, vector<1x8x128xf32>
    %978 = vector.shape_cast %977 : vector<1x8x128xf32> to vector<8x128xf32>
    %cst_1388 = arith.constant dense<0.000000e+00> : vector<4x128xf32>
    %979 = tpu.matmul %976, %978, %cst_1388 {dimension_numbers = #tpu.dot_dimension_numbers<[1], [0], [0], [1], [0, 0, 1, 1], [], []>} : vector<4x8xf32>, vector<8x128xf32>, vector<4x128xf32> -> vector<4x128xf32>
    %980 = arith.addf %974, %979 : vector<4x128xf32>
    %c0_1389 = arith.constant 0 : index
    %c0_1390 = arith.constant 0 : index
    %c1_1391 = arith.constant 1 : index
    %c0_1392 = arith.constant 0 : index
    %981 = vector.load %arg9[%c0_1389, %c0_1390, %c1_1391, %c0_1392] : memref<2x10x5x8xf32, #tpu.memory_space<vmem>>, vector<1x1x4x8xf32>
    %982 = vector.shape_cast %981 : vector<1x1x4x8xf32> to vector<4x8xf32>
    %c2_1393 = arith.constant 2 : index
    %c0_1394 = arith.constant 0 : index
    %c0_1395 = arith.constant 0 : index
    %983 = vector.load %arg4[%c2_1393, %c0_1394, %c0_1395] : memref<9x8x128xf32, #tpu.memory_space<vmem>>, vector<1x8x128xf32>
    %984 = vector.shape_cast %983 : vector<1x8x128xf32> to vector<8x128xf32>
    %cst_1396 = arith.constant dense<0.000000e+00> : vector<4x128xf32>
    %985 = tpu.matmul %982, %984, %cst_1396 {dimension_numbers = #tpu.dot_dimension_numbers<[1], [0], [0], [1], [0, 0, 1, 1], [], []>} : vector<4x8xf32>, vector<8x128xf32>, vector<4x128xf32> -> vector<4x128xf32>
    %986 = arith.addf %980, %985 : vector<4x128xf32>
    %c0_1397 = arith.constant 0 : index
    %c1_1398 = arith.constant 1 : index
    %c0_1399 = arith.constant 0 : index
    %c0_1400 = arith.constant 0 : index
    %987 = vector.load %arg9[%c0_1397, %c1_1398, %c0_1399, %c0_1400] : memref<2x10x5x8xf32, #tpu.memory_space<vmem>>, vector<1x1x4x8xf32>
    %988 = vector.shape_cast %987 : vector<1x1x4x8xf32> to vector<4x8xf32>
    %c3_1401 = arith.constant 3 : index
    %c0_1402 = arith.constant 0 : index
    %c0_1403 = arith.constant 0 : index
    %989 = vector.load %arg4[%c3_1401, %c0_1402, %c0_1403] : memref<9x8x128xf32, #tpu.memory_space<vmem>>, vector<1x8x128xf32>
    %990 = vector.shape_cast %989 : vector<1x8x128xf32> to vector<8x128xf32>
    %cst_1404 = arith.constant dense<0.000000e+00> : vector<4x128xf32>
    %991 = tpu.matmul %988, %990, %cst_1404 {dimension_numbers = #tpu.dot_dimension_numbers<[1], [0], [0], [1], [0, 0, 1, 1], [], []>} : vector<4x8xf32>, vector<8x128xf32>, vector<4x128xf32> -> vector<4x128xf32>
    %992 = arith.addf %986, %991 : vector<4x128xf32>
    %c1_1405 = arith.constant 1 : index
    %c1_1406 = arith.constant 1 : index
    %c0_1407 = arith.constant 0 : index
    %c0_1408 = arith.constant 0 : index
    %993 = vector.load %arg9[%c1_1405, %c1_1406, %c0_1407, %c0_1408] : memref<2x10x5x8xf32, #tpu.memory_space<vmem>>, vector<1x1x4x8xf32>
    %994 = vector.shape_cast %993 : vector<1x1x4x8xf32> to vector<4x8xf32>
    %c4_1409 = arith.constant 4 : index
    %c0_1410 = arith.constant 0 : index
    %c0_1411 = arith.constant 0 : index
    %995 = vector.load %arg4[%c4_1409, %c0_1410, %c0_1411] : memref<9x8x128xf32, #tpu.memory_space<vmem>>, vector<1x8x128xf32>
    %996 = vector.shape_cast %995 : vector<1x8x128xf32> to vector<8x128xf32>
    %cst_1412 = arith.constant dense<0.000000e+00> : vector<4x128xf32>
    %997 = tpu.matmul %994, %996, %cst_1412 {dimension_numbers = #tpu.dot_dimension_numbers<[1], [0], [0], [1], [0, 0, 1, 1], [], []>} : vector<4x8xf32>, vector<8x128xf32>, vector<4x128xf32> -> vector<4x128xf32>
    %998 = arith.addf %992, %997 : vector<4x128xf32>
    %c0_1413 = arith.constant 0 : index
    %c1_1414 = arith.constant 1 : index
    %c1_1415 = arith.constant 1 : index
    %c0_1416 = arith.constant 0 : index
    %999 = vector.load %arg9[%c0_1413, %c1_1414, %c1_1415, %c0_1416] : memref<2x10x5x8xf32, #tpu.memory_space<vmem>>, vector<1x1x4x8xf32>
    %1000 = vector.shape_cast %999 : vector<1x1x4x8xf32> to vector<4x8xf32>
    %c5_1417 = arith.constant 5 : index
    %c0_1418 = arith.constant 0 : index
    %c0_1419 = arith.constant 0 : index
    %1001 = vector.load %arg4[%c5_1417, %c0_1418, %c0_1419] : memref<9x8x128xf32, #tpu.memory_space<vmem>>, vector<1x8x128xf32>
    %1002 = vector.shape_cast %1001 : vector<1x8x128xf32> to vector<8x128xf32>
    %cst_1420 = arith.constant dense<0.000000e+00> : vector<4x128xf32>
    %1003 = tpu.matmul %1000, %1002, %cst_1420 {dimension_numbers = #tpu.dot_dimension_numbers<[1], [0], [0], [1], [0, 0, 1, 1], [], []>} : vector<4x8xf32>, vector<8x128xf32>, vector<4x128xf32> -> vector<4x128xf32>
    %1004 = arith.addf %998, %1003 : vector<4x128xf32>
    %c0_1421 = arith.constant 0 : index
    %c2_1422 = arith.constant 2 : index
    %c0_1423 = arith.constant 0 : index
    %c0_1424 = arith.constant 0 : index
    %1005 = vector.load %arg9[%c0_1421, %c2_1422, %c0_1423, %c0_1424] : memref<2x10x5x8xf32, #tpu.memory_space<vmem>>, vector<1x1x4x8xf32>
    %1006 = vector.shape_cast %1005 : vector<1x1x4x8xf32> to vector<4x8xf32>
    %c6_1425 = arith.constant 6 : index
    %c0_1426 = arith.constant 0 : index
    %c0_1427 = arith.constant 0 : index
    %1007 = vector.load %arg4[%c6_1425, %c0_1426, %c0_1427] : memref<9x8x128xf32, #tpu.memory_space<vmem>>, vector<1x8x128xf32>
    %1008 = vector.shape_cast %1007 : vector<1x8x128xf32> to vector<8x128xf32>
    %cst_1428 = arith.constant dense<0.000000e+00> : vector<4x128xf32>
    %1009 = tpu.matmul %1006, %1008, %cst_1428 {dimension_numbers = #tpu.dot_dimension_numbers<[1], [0], [0], [1], [0, 0, 1, 1], [], []>} : vector<4x8xf32>, vector<8x128xf32>, vector<4x128xf32> -> vector<4x128xf32>
    %1010 = arith.addf %1004, %1009 : vector<4x128xf32>
    %c1_1429 = arith.constant 1 : index
    %c2_1430 = arith.constant 2 : index
    %c0_1431 = arith.constant 0 : index
    %c0_1432 = arith.constant 0 : index
    %1011 = vector.load %arg9[%c1_1429, %c2_1430, %c0_1431, %c0_1432] : memref<2x10x5x8xf32, #tpu.memory_space<vmem>>, vector<1x1x4x8xf32>
    %1012 = vector.shape_cast %1011 : vector<1x1x4x8xf32> to vector<4x8xf32>
    %c7_1433 = arith.constant 7 : index
    %c0_1434 = arith.constant 0 : index
    %c0_1435 = arith.constant 0 : index
    %1013 = vector.load %arg4[%c7_1433, %c0_1434, %c0_1435] : memref<9x8x128xf32, #tpu.memory_space<vmem>>, vector<1x8x128xf32>
    %1014 = vector.shape_cast %1013 : vector<1x8x128xf32> to vector<8x128xf32>
    %cst_1436 = arith.constant dense<0.000000e+00> : vector<4x128xf32>
    %1015 = tpu.matmul %1012, %1014, %cst_1436 {dimension_numbers = #tpu.dot_dimension_numbers<[1], [0], [0], [1], [0, 0, 1, 1], [], []>} : vector<4x8xf32>, vector<8x128xf32>, vector<4x128xf32> -> vector<4x128xf32>
    %1016 = arith.addf %1010, %1015 : vector<4x128xf32>
    %c0_1437 = arith.constant 0 : index
    %c2_1438 = arith.constant 2 : index
    %c1_1439 = arith.constant 1 : index
    %c0_1440 = arith.constant 0 : index
    %1017 = vector.load %arg9[%c0_1437, %c2_1438, %c1_1439, %c0_1440] : memref<2x10x5x8xf32, #tpu.memory_space<vmem>>, vector<1x1x4x8xf32>
    %1018 = vector.shape_cast %1017 : vector<1x1x4x8xf32> to vector<4x8xf32>
    %c8_1441 = arith.constant 8 : index
    %c0_1442 = arith.constant 0 : index
    %c0_1443 = arith.constant 0 : index
    %1019 = vector.load %arg4[%c8_1441, %c0_1442, %c0_1443] : memref<9x8x128xf32, #tpu.memory_space<vmem>>, vector<1x8x128xf32>
    %1020 = vector.shape_cast %1019 : vector<1x8x128xf32> to vector<8x128xf32>
    %cst_1444 = arith.constant dense<0.000000e+00> : vector<4x128xf32>
    %1021 = tpu.matmul %1018, %1020, %cst_1444 {dimension_numbers = #tpu.dot_dimension_numbers<[1], [0], [0], [1], [0, 0, 1, 1], [], []>} : vector<4x8xf32>, vector<8x128xf32>, vector<4x128xf32> -> vector<4x128xf32>
    %1022 = arith.addf %1016, %1021 : vector<4x128xf32>
    %1023 = vector.broadcast %1 : vector<1x128xf32> to vector<4x128xf32>
    %1024 = arith.addf %1022, %1023 : vector<4x128xf32>
    %c0_1445 = arith.constant 0 : index
    %c0_1446 = arith.constant 0 : index
    %c0_1447 = arith.constant 0 : index
    %1025 = vector.load %arg8[%c0_1445, %c0_1446, %c0_1447] : memref<1x16x128xf32, #tpu.memory_space<vmem>>, vector<1x4x128xf32>
    %1026 = vector.shape_cast %1025 : vector<1x4x128xf32> to vector<4x128xf32>
    %1027 = vector.shape_cast %1024 : vector<4x128xf32> to vector<1x4x128xf32>
    tpu.vector_store %arg8[%c0_1445, %c0_1446, %c0_1447], %1027 {strides = array<i32>} : memref<1x16x128xf32, #tpu.memory_space<vmem>>, vector<1x4x128xf32>,
    %1028 = vector.extract_strided_slice %967 {offsets = [4, 0], sizes = [4, 128], strides = [1, 1]} : vector<16x128xf32> to vector<4x128xf32>
    %c0_1448 = arith.constant 0 : index
    %c2_1449 = arith.constant 2 : index
    %c0_1450 = arith.constant 0 : index
    %c0_1451 = arith.constant 0 : index
    %1029 = vector.load %arg9[%c0_1448, %c2_1449, %c0_1450, %c0_1451] : memref<2x10x5x8xf32, #tpu.memory_space<vmem>>, vector<1x1x4x8xf32>
    %1030 = vector.shape_cast %1029 : vector<1x1x4x8xf32> to vector<4x8xf32>
    %c0_1452 = arith.constant 0 : index
    %c0_1453 = arith.constant 0 : index
    %c0_1454 = arith.constant 0 : index
    %1031 = vector.load %arg4[%c0_1452, %c0_1453, %c0_1454] : memref<9x8x128xf32, #tpu.memory_space<vmem>>, vector<1x8x128xf32>
    %1032 = vector.shape_cast %1031 : vector<1x8x128xf32> to vector<8x128xf32>
    %cst_1455 = arith.constant dense<0.000000e+00> : vector<4x128xf32>
    %1033 = tpu.matmul %1030, %1032, %cst_1455 {dimension_numbers = #tpu.dot_dimension_numbers<[1], [0], [0], [1], [0, 0, 1, 1], [], []>} : vector<4x8xf32>, vector<8x128xf32>, vector<4x128xf32> -> vector<4x128xf32>
    %1034 = arith.addf %1028, %1033 : vector<4x128xf32>
    %c1_1456 = arith.constant 1 : index
    %c2_1457 = arith.constant 2 : index
    %c0_1458 = arith.constant 0 : index
    %c0_1459 = arith.constant 0 : index
    %1035 = vector.load %arg9[%c1_1456, %c2_1457, %c0_1458, %c0_1459] : memref<2x10x5x8xf32, #tpu.memory_space<vmem>>, vector<1x1x4x8xf32>
    %1036 = vector.shape_cast %1035 : vector<1x1x4x8xf32> to vector<4x8xf32>
    %c1_1460 = arith.constant 1 : index
    %c0_1461 = arith.constant 0 : index
    %c0_1462 = arith.constant 0 : index
    %1037 = vector.load %arg4[%c1_1460, %c0_1461, %c0_1462] : memref<9x8x128xf32, #tpu.memory_space<vmem>>, vector<1x8x128xf32>
    %1038 = vector.shape_cast %1037 : vector<1x8x128xf32> to vector<8x128xf32>
    %cst_1463 = arith.constant dense<0.000000e+00> : vector<4x128xf32>
    %1039 = tpu.matmul %1036, %1038, %cst_1463 {dimension_numbers = #tpu.dot_dimension_numbers<[1], [0], [0], [1], [0, 0, 1, 1], [], []>} : vector<4x8xf32>, vector<8x128xf32>, vector<4x128xf32> -> vector<4x128xf32>
    %1040 = arith.addf %1034, %1039 : vector<4x128xf32>
    %c0_1464 = arith.constant 0 : index
    %c2_1465 = arith.constant 2 : index
    %c1_1466 = arith.constant 1 : index
    %c0_1467 = arith.constant 0 : index
    %1041 = vector.load %arg9[%c0_1464, %c2_1465, %c1_1466, %c0_1467] : memref<2x10x5x8xf32, #tpu.memory_space<vmem>>, vector<1x1x4x8xf32>
    %1042 = vector.shape_cast %1041 : vector<1x1x4x8xf32> to vector<4x8xf32>
    %c2_1468 = arith.constant 2 : index
    %c0_1469 = arith.constant 0 : index
    %c0_1470 = arith.constant 0 : index
    %1043 = vector.load %arg4[%c2_1468, %c0_1469, %c0_1470] : memref<9x8x128xf32, #tpu.memory_space<vmem>>, vector<1x8x128xf32>
    %1044 = vector.shape_cast %1043 : vector<1x8x128xf32> to vector<8x128xf32>
    %cst_1471 = arith.constant dense<0.000000e+00> : vector<4x128xf32>
    %1045 = tpu.matmul %1042, %1044, %cst_1471 {dimension_numbers = #tpu.dot_dimension_numbers<[1], [0], [0], [1], [0, 0, 1, 1], [], []>} : vector<4x8xf32>, vector<8x128xf32>, vector<4x128xf32> -> vector<4x128xf32>
    %1046 = arith.addf %1040, %1045 : vector<4x128xf32>
    %c0_1472 = arith.constant 0 : index
    %c3_1473 = arith.constant 3 : index
    %c0_1474 = arith.constant 0 : index
    %c0_1475 = arith.constant 0 : index
    %1047 = vector.load %arg9[%c0_1472, %c3_1473, %c0_1474, %c0_1475] : memref<2x10x5x8xf32, #tpu.memory_space<vmem>>, vector<1x1x4x8xf32>
    %1048 = vector.shape_cast %1047 : vector<1x1x4x8xf32> to vector<4x8xf32>
    %c3_1476 = arith.constant 3 : index
    %c0_1477 = arith.constant 0 : index
    %c0_1478 = arith.constant 0 : index
    %1049 = vector.load %arg4[%c3_1476, %c0_1477, %c0_1478] : memref<9x8x128xf32, #tpu.memory_space<vmem>>, vector<1x8x128xf32>
    %1050 = vector.shape_cast %1049 : vector<1x8x128xf32> to vector<8x128xf32>
    %cst_1479 = arith.constant dense<0.000000e+00> : vector<4x128xf32>
    %1051 = tpu.matmul %1048, %1050, %cst_1479 {dimension_numbers = #tpu.dot_dimension_numbers<[1], [0], [0], [1], [0, 0, 1, 1], [], []>} : vector<4x8xf32>, vector<8x128xf32>, vector<4x128xf32> -> vector<4x128xf32>
    %1052 = arith.addf %1046, %1051 : vector<4x128xf32>
    %c1_1480 = arith.constant 1 : index
    %c3_1481 = arith.constant 3 : index
    %c0_1482 = arith.constant 0 : index
    %c0_1483 = arith.constant 0 : index
    %1053 = vector.load %arg9[%c1_1480, %c3_1481, %c0_1482, %c0_1483] : memref<2x10x5x8xf32, #tpu.memory_space<vmem>>, vector<1x1x4x8xf32>
    %1054 = vector.shape_cast %1053 : vector<1x1x4x8xf32> to vector<4x8xf32>
    %c4_1484 = arith.constant 4 : index
    %c0_1485 = arith.constant 0 : index
    %c0_1486 = arith.constant 0 : index
    %1055 = vector.load %arg4[%c4_1484, %c0_1485, %c0_1486] : memref<9x8x128xf32, #tpu.memory_space<vmem>>, vector<1x8x128xf32>
    %1056 = vector.shape_cast %1055 : vector<1x8x128xf32> to vector<8x128xf32>
    %cst_1487 = arith.constant dense<0.000000e+00> : vector<4x128xf32>
    %1057 = tpu.matmul %1054, %1056, %cst_1487 {dimension_numbers = #tpu.dot_dimension_numbers<[1], [0], [0], [1], [0, 0, 1, 1], [], []>} : vector<4x8xf32>, vector<8x128xf32>, vector<4x128xf32> -> vector<4x128xf32>
    %1058 = arith.addf %1052, %1057 : vector<4x128xf32>
    %c0_1488 = arith.constant 0 : index
    %c3_1489 = arith.constant 3 : index
    %c1_1490 = arith.constant 1 : index
    %c0_1491 = arith.constant 0 : index
    %1059 = vector.load %arg9[%c0_1488, %c3_1489, %c1_1490, %c0_1491] : memref<2x10x5x8xf32, #tpu.memory_space<vmem>>, vector<1x1x4x8xf32>
    %1060 = vector.shape_cast %1059 : vector<1x1x4x8xf32> to vector<4x8xf32>
    %c5_1492 = arith.constant 5 : index
    %c0_1493 = arith.constant 0 : index
    %c0_1494 = arith.constant 0 : index
    %1061 = vector.load %arg4[%c5_1492, %c0_1493, %c0_1494] : memref<9x8x128xf32, #tpu.memory_space<vmem>>, vector<1x8x128xf32>
    %1062 = vector.shape_cast %1061 : vector<1x8x128xf32> to vector<8x128xf32>
    %cst_1495 = arith.constant dense<0.000000e+00> : vector<4x128xf32>
    %1063 = tpu.matmul %1060, %1062, %cst_1495 {dimension_numbers = #tpu.dot_dimension_numbers<[1], [0], [0], [1], [0, 0, 1, 1], [], []>} : vector<4x8xf32>, vector<8x128xf32>, vector<4x128xf32> -> vector<4x128xf32>
    %1064 = arith.addf %1058, %1063 : vector<4x128xf32>
    %c0_1496 = arith.constant 0 : index
    %c4_1497 = arith.constant 4 : index
    %c0_1498 = arith.constant 0 : index
    %c0_1499 = arith.constant 0 : index
    %1065 = vector.load %arg9[%c0_1496, %c4_1497, %c0_1498, %c0_1499] : memref<2x10x5x8xf32, #tpu.memory_space<vmem>>, vector<1x1x4x8xf32>
    %1066 = vector.shape_cast %1065 : vector<1x1x4x8xf32> to vector<4x8xf32>
    %c6_1500 = arith.constant 6 : index
    %c0_1501 = arith.constant 0 : index
    %c0_1502 = arith.constant 0 : index
    %1067 = vector.load %arg4[%c6_1500, %c0_1501, %c0_1502] : memref<9x8x128xf32, #tpu.memory_space<vmem>>, vector<1x8x128xf32>
    %1068 = vector.shape_cast %1067 : vector<1x8x128xf32> to vector<8x128xf32>
    %cst_1503 = arith.constant dense<0.000000e+00> : vector<4x128xf32>
    %1069 = tpu.matmul %1066, %1068, %cst_1503 {dimension_numbers = #tpu.dot_dimension_numbers<[1], [0], [0], [1], [0, 0, 1, 1], [], []>} : vector<4x8xf32>, vector<8x128xf32>, vector<4x128xf32> -> vector<4x128xf32>
    %1070 = arith.addf %1064, %1069 : vector<4x128xf32>
    %c1_1504 = arith.constant 1 : index
    %c4_1505 = arith.constant 4 : index
    %c0_1506 = arith.constant 0 : index
    %c0_1507 = arith.constant 0 : index
    %1071 = vector.load %arg9[%c1_1504, %c4_1505, %c0_1506, %c0_1507] : memref<2x10x5x8xf32, #tpu.memory_space<vmem>>, vector<1x1x4x8xf32>
    %1072 = vector.shape_cast %1071 : vector<1x1x4x8xf32> to vector<4x8xf32>
    %c7_1508 = arith.constant 7 : index
    %c0_1509 = arith.constant 0 : index
    %c0_1510 = arith.constant 0 : index
    %1073 = vector.load %arg4[%c7_1508, %c0_1509, %c0_1510] : memref<9x8x128xf32, #tpu.memory_space<vmem>>, vector<1x8x128xf32>
    %1074 = vector.shape_cast %1073 : vector<1x8x128xf32> to vector<8x128xf32>
    %cst_1511 = arith.constant dense<0.000000e+00> : vector<4x128xf32>
    %1075 = tpu.matmul %1072, %1074, %cst_1511 {dimension_numbers = #tpu.dot_dimension_numbers<[1], [0], [0], [1], [0, 0, 1, 1], [], []>} : vector<4x8xf32>, vector<8x128xf32>, vector<4x128xf32> -> vector<4x128xf32>
    %1076 = arith.addf %1070, %1075 : vector<4x128xf32>
    %c0_1512 = arith.constant 0 : index
    %c4_1513 = arith.constant 4 : index
    %c1_1514 = arith.constant 1 : index
    %c0_1515 = arith.constant 0 : index
    %1077 = vector.load %arg9[%c0_1512, %c4_1513, %c1_1514, %c0_1515] : memref<2x10x5x8xf32, #tpu.memory_space<vmem>>, vector<1x1x4x8xf32>
    %1078 = vector.shape_cast %1077 : vector<1x1x4x8xf32> to vector<4x8xf32>
    %c8_1516 = arith.constant 8 : index
    %c0_1517 = arith.constant 0 : index
    %c0_1518 = arith.constant 0 : index
    %1079 = vector.load %arg4[%c8_1516, %c0_1517, %c0_1518] : memref<9x8x128xf32, #tpu.memory_space<vmem>>, vector<1x8x128xf32>
    %1080 = vector.shape_cast %1079 : vector<1x8x128xf32> to vector<8x128xf32>
    %cst_1519 = arith.constant dense<0.000000e+00> : vector<4x128xf32>
    %1081 = tpu.matmul %1078, %1080, %cst_1519 {dimension_numbers = #tpu.dot_dimension_numbers<[1], [0], [0], [1], [0, 0, 1, 1], [], []>} : vector<4x8xf32>, vector<8x128xf32>, vector<4x128xf32> -> vector<4x128xf32>
    %1082 = arith.addf %1076, %1081 : vector<4x128xf32>
    %1083 = vector.broadcast %1 : vector<1x128xf32> to vector<4x128xf32>
    %1084 = arith.addf %1082, %1083 : vector<4x128xf32>
    %c0_1520 = arith.constant 0 : index
    %c4_1521 = arith.constant 4 : index
    %c0_1522 = arith.constant 0 : index
    %1085 = vector.load %arg8[%c0_1520, %c4_1521, %c0_1522] : memref<1x16x128xf32, #tpu.memory_space<vmem>>, vector<1x4x128xf32>
    %1086 = vector.shape_cast %1085 : vector<1x4x128xf32> to vector<4x128xf32>
    %1087 = vector.shape_cast %1084 : vector<4x128xf32> to vector<1x4x128xf32>
    tpu.vector_store %arg8[%c0_1520, %c4_1521, %c0_1522], %1087 {strides = array<i32>} : memref<1x16x128xf32, #tpu.memory_space<vmem>>, vector<1x4x128xf32>,
    %1088 = vector.extract_strided_slice %967 {offsets = [8, 0], sizes = [4, 128], strides = [1, 1]} : vector<16x128xf32> to vector<4x128xf32>
    %c0_1523 = arith.constant 0 : index
    %c4_1524 = arith.constant 4 : index
    %c0_1525 = arith.constant 0 : index
    %c0_1526 = arith.constant 0 : index
    %1089 = vector.load %arg9[%c0_1523, %c4_1524, %c0_1525, %c0_1526] : memref<2x10x5x8xf32, #tpu.memory_space<vmem>>, vector<1x1x4x8xf32>
    %1090 = vector.shape_cast %1089 : vector<1x1x4x8xf32> to vector<4x8xf32>
    %c0_1527 = arith.constant 0 : index
    %c0_1528 = arith.constant 0 : index
    %c0_1529 = arith.constant 0 : index
    %1091 = vector.load %arg4[%c0_1527, %c0_1528, %c0_1529] : memref<9x8x128xf32, #tpu.memory_space<vmem>>, vector<1x8x128xf32>
    %1092 = vector.shape_cast %1091 : vector<1x8x128xf32> to vector<8x128xf32>
    %cst_1530 = arith.constant dense<0.000000e+00> : vector<4x128xf32>
    %1093 = tpu.matmul %1090, %1092, %cst_1530 {dimension_numbers = #tpu.dot_dimension_numbers<[1], [0], [0], [1], [0, 0, 1, 1], [], []>} : vector<4x8xf32>, vector<8x128xf32>, vector<4x128xf32> -> vector<4x128xf32>
    %1094 = arith.addf %1088, %1093 : vector<4x128xf32>
    %c1_1531 = arith.constant 1 : index
    %c4_1532 = arith.constant 4 : index
    %c0_1533 = arith.constant 0 : index
    %c0_1534 = arith.constant 0 : index
    %1095 = vector.load %arg9[%c1_1531, %c4_1532, %c0_1533, %c0_1534] : memref<2x10x5x8xf32, #tpu.memory_space<vmem>>, vector<1x1x4x8xf32>
    %1096 = vector.shape_cast %1095 : vector<1x1x4x8xf32> to vector<4x8xf32>
    %c1_1535 = arith.constant 1 : index
    %c0_1536 = arith.constant 0 : index
    %c0_1537 = arith.constant 0 : index
    %1097 = vector.load %arg4[%c1_1535, %c0_1536, %c0_1537] : memref<9x8x128xf32, #tpu.memory_space<vmem>>, vector<1x8x128xf32>
    %1098 = vector.shape_cast %1097 : vector<1x8x128xf32> to vector<8x128xf32>
    %cst_1538 = arith.constant dense<0.000000e+00> : vector<4x128xf32>
    %1099 = tpu.matmul %1096, %1098, %cst_1538 {dimension_numbers = #tpu.dot_dimension_numbers<[1], [0], [0], [1], [0, 0, 1, 1], [], []>} : vector<4x8xf32>, vector<8x128xf32>, vector<4x128xf32> -> vector<4x128xf32>
    %1100 = arith.addf %1094, %1099 : vector<4x128xf32>
    %c0_1539 = arith.constant 0 : index
    %c4_1540 = arith.constant 4 : index
    %c1_1541 = arith.constant 1 : index
    %c0_1542 = arith.constant 0 : index
    %1101 = vector.load %arg9[%c0_1539, %c4_1540, %c1_1541, %c0_1542] : memref<2x10x5x8xf32, #tpu.memory_space<vmem>>, vector<1x1x4x8xf32>
    %1102 = vector.shape_cast %1101 : vector<1x1x4x8xf32> to vector<4x8xf32>
    %c2_1543 = arith.constant 2 : index
    %c0_1544 = arith.constant 0 : index
    %c0_1545 = arith.constant 0 : index
    %1103 = vector.load %arg4[%c2_1543, %c0_1544, %c0_1545] : memref<9x8x128xf32, #tpu.memory_space<vmem>>, vector<1x8x128xf32>
    %1104 = vector.shape_cast %1103 : vector<1x8x128xf32> to vector<8x128xf32>
    %cst_1546 = arith.constant dense<0.000000e+00> : vector<4x128xf32>
    %1105 = tpu.matmul %1102, %1104, %cst_1546 {dimension_numbers = #tpu.dot_dimension_numbers<[1], [0], [0], [1], [0, 0, 1, 1], [], []>} : vector<4x8xf32>, vector<8x128xf32>, vector<4x128xf32> -> vector<4x128xf32>
    %1106 = arith.addf %1100, %1105 : vector<4x128xf32>
    %c0_1547 = arith.constant 0 : index
    %c5_1548 = arith.constant 5 : index
    %c0_1549 = arith.constant 0 : index
    %c0_1550 = arith.constant 0 : index
    %1107 = vector.load %arg9[%c0_1547, %c5_1548, %c0_1549, %c0_1550] : memref<2x10x5x8xf32, #tpu.memory_space<vmem>>, vector<1x1x4x8xf32>
    %1108 = vector.shape_cast %1107 : vector<1x1x4x8xf32> to vector<4x8xf32>
    %c3_1551 = arith.constant 3 : index
    %c0_1552 = arith.constant 0 : index
    %c0_1553 = arith.constant 0 : index
    %1109 = vector.load %arg4[%c3_1551, %c0_1552, %c0_1553] : memref<9x8x128xf32, #tpu.memory_space<vmem>>, vector<1x8x128xf32>
    %1110 = vector.shape_cast %1109 : vector<1x8x128xf32> to vector<8x128xf32>
    %cst_1554 = arith.constant dense<0.000000e+00> : vector<4x128xf32>
    %1111 = tpu.matmul %1108, %1110, %cst_1554 {dimension_numbers = #tpu.dot_dimension_numbers<[1], [0], [0], [1], [0, 0, 1, 1], [], []>} : vector<4x8xf32>, vector<8x128xf32>, vector<4x128xf32> -> vector<4x128xf32>
    %1112 = arith.addf %1106, %1111 : vector<4x128xf32>
    %c1_1555 = arith.constant 1 : index
    %c5_1556 = arith.constant 5 : index
    %c0_1557 = arith.constant 0 : index
    %c0_1558 = arith.constant 0 : index
    %1113 = vector.load %arg9[%c1_1555, %c5_1556, %c0_1557, %c0_1558] : memref<2x10x5x8xf32, #tpu.memory_space<vmem>>, vector<1x1x4x8xf32>
    %1114 = vector.shape_cast %1113 : vector<1x1x4x8xf32> to vector<4x8xf32>
    %c4_1559 = arith.constant 4 : index
    %c0_1560 = arith.constant 0 : index
    %c0_1561 = arith.constant 0 : index
    %1115 = vector.load %arg4[%c4_1559, %c0_1560, %c0_1561] : memref<9x8x128xf32, #tpu.memory_space<vmem>>, vector<1x8x128xf32>
    %1116 = vector.shape_cast %1115 : vector<1x8x128xf32> to vector<8x128xf32>
    %cst_1562 = arith.constant dense<0.000000e+00> : vector<4x128xf32>
    %1117 = tpu.matmul %1114, %1116, %cst_1562 {dimension_numbers = #tpu.dot_dimension_numbers<[1], [0], [0], [1], [0, 0, 1, 1], [], []>} : vector<4x8xf32>, vector<8x128xf32>, vector<4x128xf32> -> vector<4x128xf32>
    %1118 = arith.addf %1112, %1117 : vector<4x128xf32>
    %c0_1563 = arith.constant 0 : index
    %c5_1564 = arith.constant 5 : index
    %c1_1565 = arith.constant 1 : index
    %c0_1566 = arith.constant 0 : index
    %1119 = vector.load %arg9[%c0_1563, %c5_1564, %c1_1565, %c0_1566] : memref<2x10x5x8xf32, #tpu.memory_space<vmem>>, vector<1x1x4x8xf32>
    %1120 = vector.shape_cast %1119 : vector<1x1x4x8xf32> to vector<4x8xf32>
    %c5_1567 = arith.constant 5 : index
    %c0_1568 = arith.constant 0 : index
    %c0_1569 = arith.constant 0 : index
    %1121 = vector.load %arg4[%c5_1567, %c0_1568, %c0_1569] : memref<9x8x128xf32, #tpu.memory_space<vmem>>, vector<1x8x128xf32>
    %1122 = vector.shape_cast %1121 : vector<1x8x128xf32> to vector<8x128xf32>
    %cst_1570 = arith.constant dense<0.000000e+00> : vector<4x128xf32>
    %1123 = tpu.matmul %1120, %1122, %cst_1570 {dimension_numbers = #tpu.dot_dimension_numbers<[1], [0], [0], [1], [0, 0, 1, 1], [], []>} : vector<4x8xf32>, vector<8x128xf32>, vector<4x128xf32> -> vector<4x128xf32>
    %1124 = arith.addf %1118, %1123 : vector<4x128xf32>
    %c0_1571 = arith.constant 0 : index
    %c6_1572 = arith.constant 6 : index
    %c0_1573 = arith.constant 0 : index
    %c0_1574 = arith.constant 0 : index
    %1125 = vector.load %arg9[%c0_1571, %c6_1572, %c0_1573, %c0_1574] : memref<2x10x5x8xf32, #tpu.memory_space<vmem>>, vector<1x1x4x8xf32>
    %1126 = vector.shape_cast %1125 : vector<1x1x4x8xf32> to vector<4x8xf32>
    %c6_1575 = arith.constant 6 : index
    %c0_1576 = arith.constant 0 : index
    %c0_1577 = arith.constant 0 : index
    %1127 = vector.load %arg4[%c6_1575, %c0_1576, %c0_1577] : memref<9x8x128xf32, #tpu.memory_space<vmem>>, vector<1x8x128xf32>
    %1128 = vector.shape_cast %1127 : vector<1x8x128xf32> to vector<8x128xf32>
    %cst_1578 = arith.constant dense<0.000000e+00> : vector<4x128xf32>
    %1129 = tpu.matmul %1126, %1128, %cst_1578 {dimension_numbers = #tpu.dot_dimension_numbers<[1], [0], [0], [1], [0, 0, 1, 1], [], []>} : vector<4x8xf32>, vector<8x128xf32>, vector<4x128xf32> -> vector<4x128xf32>
    %1130 = arith.addf %1124, %1129 : vector<4x128xf32>
    %c1_1579 = arith.constant 1 : index
    %c6_1580 = arith.constant 6 : index
    %c0_1581 = arith.constant 0 : index
    %c0_1582 = arith.constant 0 : index
    %1131 = vector.load %arg9[%c1_1579, %c6_1580, %c0_1581, %c0_1582] : memref<2x10x5x8xf32, #tpu.memory_space<vmem>>, vector<1x1x4x8xf32>
    %1132 = vector.shape_cast %1131 : vector<1x1x4x8xf32> to vector<4x8xf32>
    %c7_1583 = arith.constant 7 : index
    %c0_1584 = arith.constant 0 : index
    %c0_1585 = arith.constant 0 : index
    %1133 = vector.load %arg4[%c7_1583, %c0_1584, %c0_1585] : memref<9x8x128xf32, #tpu.memory_space<vmem>>, vector<1x8x128xf32>
    %1134 = vector.shape_cast %1133 : vector<1x8x128xf32> to vector<8x128xf32>
    %cst_1586 = arith.constant dense<0.000000e+00> : vector<4x128xf32>
    %1135 = tpu.matmul %1132, %1134, %cst_1586 {dimension_numbers = #tpu.dot_dimension_numbers<[1], [0], [0], [1], [0, 0, 1, 1], [], []>} : vector<4x8xf32>, vector<8x128xf32>, vector<4x128xf32> -> vector<4x128xf32>
    %1136 = arith.addf %1130, %1135 : vector<4x128xf32>
    %c0_1587 = arith.constant 0 : index
    %c6_1588 = arith.constant 6 : index
    %c1_1589 = arith.constant 1 : index
    %c0_1590 = arith.constant 0 : index
    %1137 = vector.load %arg9[%c0_1587, %c6_1588, %c1_1589, %c0_1590] : memref<2x10x5x8xf32, #tpu.memory_space<vmem>>, vector<1x1x4x8xf32>
    %1138 = vector.shape_cast %1137 : vector<1x1x4x8xf32> to vector<4x8xf32>
    %c8_1591 = arith.constant 8 : index
    %c0_1592 = arith.constant 0 : index
    %c0_1593 = arith.constant 0 : index
    %1139 = vector.load %arg4[%c8_1591, %c0_1592, %c0_1593] : memref<9x8x128xf32, #tpu.memory_space<vmem>>, vector<1x8x128xf32>
    %1140 = vector.shape_cast %1139 : vector<1x8x128xf32> to vector<8x128xf32>
    %cst_1594 = arith.constant dense<0.000000e+00> : vector<4x128xf32>
    %1141 = tpu.matmul %1138, %1140, %cst_1594 {dimension_numbers = #tpu.dot_dimension_numbers<[1], [0], [0], [1], [0, 0, 1, 1], [], []>} : vector<4x8xf32>, vector<8x128xf32>, vector<4x128xf32> -> vector<4x128xf32>
    %1142 = arith.addf %1136, %1141 : vector<4x128xf32>
    %1143 = vector.broadcast %1 : vector<1x128xf32> to vector<4x128xf32>
    %1144 = arith.addf %1142, %1143 : vector<4x128xf32>
    %c0_1595 = arith.constant 0 : index
    %c8_1596 = arith.constant 8 : index
    %c0_1597 = arith.constant 0 : index
    %1145 = vector.load %arg8[%c0_1595, %c8_1596, %c0_1597] : memref<1x16x128xf32, #tpu.memory_space<vmem>>, vector<1x4x128xf32>
    %1146 = vector.shape_cast %1145 : vector<1x4x128xf32> to vector<4x128xf32>
    %1147 = vector.shape_cast %1144 : vector<4x128xf32> to vector<1x4x128xf32>
    tpu.vector_store %arg8[%c0_1595, %c8_1596, %c0_1597], %1147 {strides = array<i32>} : memref<1x16x128xf32, #tpu.memory_space<vmem>>, vector<1x4x128xf32>,
    %1148 = vector.extract_strided_slice %967 {offsets = [12, 0], sizes = [4, 128], strides = [1, 1]} : vector<16x128xf32> to vector<4x128xf32>
    %c0_1598 = arith.constant 0 : index
    %c6_1599 = arith.constant 6 : index
    %c0_1600 = arith.constant 0 : index
    %c0_1601 = arith.constant 0 : index
    %1149 = vector.load %arg9[%c0_1598, %c6_1599, %c0_1600, %c0_1601] : memref<2x10x5x8xf32, #tpu.memory_space<vmem>>, vector<1x1x4x8xf32>
    %1150 = vector.shape_cast %1149 : vector<1x1x4x8xf32> to vector<4x8xf32>
    %c0_1602 = arith.constant 0 : index
    %c0_1603 = arith.constant 0 : index
    %c0_1604 = arith.constant 0 : index
    %1151 = vector.load %arg4[%c0_1602, %c0_1603, %c0_1604] : memref<9x8x128xf32, #tpu.memory_space<vmem>>, vector<1x8x128xf32>
    %1152 = vector.shape_cast %1151 : vector<1x8x128xf32> to vector<8x128xf32>
    %cst_1605 = arith.constant dense<0.000000e+00> : vector<4x128xf32>
    %1153 = tpu.matmul %1150, %1152, %cst_1605 {dimension_numbers = #tpu.dot_dimension_numbers<[1], [0], [0], [1], [0, 0, 1, 1], [], []>} : vector<4x8xf32>, vector<8x128xf32>, vector<4x128xf32> -> vector<4x128xf32>
    %1154 = arith.addf %1148, %1153 : vector<4x128xf32>
    %c1_1606 = arith.constant 1 : index
    %c6_1607 = arith.constant 6 : index
    %c0_1608 = arith.constant 0 : index
    %c0_1609 = arith.constant 0 : index
    %1155 = vector.load %arg9[%c1_1606, %c6_1607, %c0_1608, %c0_1609] : memref<2x10x5x8xf32, #tpu.memory_space<vmem>>, vector<1x1x4x8xf32>
    %1156 = vector.shape_cast %1155 : vector<1x1x4x8xf32> to vector<4x8xf32>
    %c1_1610 = arith.constant 1 : index
    %c0_1611 = arith.constant 0 : index
    %c0_1612 = arith.constant 0 : index
    %1157 = vector.load %arg4[%c1_1610, %c0_1611, %c0_1612] : memref<9x8x128xf32, #tpu.memory_space<vmem>>, vector<1x8x128xf32>
    %1158 = vector.shape_cast %1157 : vector<1x8x128xf32> to vector<8x128xf32>
    %cst_1613 = arith.constant dense<0.000000e+00> : vector<4x128xf32>
    %1159 = tpu.matmul %1156, %1158, %cst_1613 {dimension_numbers = #tpu.dot_dimension_numbers<[1], [0], [0], [1], [0, 0, 1, 1], [], []>} : vector<4x8xf32>, vector<8x128xf32>, vector<4x128xf32> -> vector<4x128xf32>
    %1160 = arith.addf %1154, %1159 : vector<4x128xf32>
    %c0_1614 = arith.constant 0 : index
    %c6_1615 = arith.constant 6 : index
    %c1_1616 = arith.constant 1 : index
    %c0_1617 = arith.constant 0 : index
    %1161 = vector.load %arg9[%c0_1614, %c6_1615, %c1_1616, %c0_1617] : memref<2x10x5x8xf32, #tpu.memory_space<vmem>>, vector<1x1x4x8xf32>
    %1162 = vector.shape_cast %1161 : vector<1x1x4x8xf32> to vector<4x8xf32>
    %c2_1618 = arith.constant 2 : index
    %c0_1619 = arith.constant 0 : index
    %c0_1620 = arith.constant 0 : index
    %1163 = vector.load %arg4[%c2_1618, %c0_1619, %c0_1620] : memref<9x8x128xf32, #tpu.memory_space<vmem>>, vector<1x8x128xf32>
    %1164 = vector.shape_cast %1163 : vector<1x8x128xf32> to vector<8x128xf32>
    %cst_1621 = arith.constant dense<0.000000e+00> : vector<4x128xf32>
    %1165 = tpu.matmul %1162, %1164, %cst_1621 {dimension_numbers = #tpu.dot_dimension_numbers<[1], [0], [0], [1], [0, 0, 1, 1], [], []>} : vector<4x8xf32>, vector<8x128xf32>, vector<4x128xf32> -> vector<4x128xf32>
    %1166 = arith.addf %1160, %1165 : vector<4x128xf32>
    %c0_1622 = arith.constant 0 : index
    %c7_1623 = arith.constant 7 : index
    %c0_1624 = arith.constant 0 : index
    %c0_1625 = arith.constant 0 : index
    %1167 = vector.load %arg9[%c0_1622, %c7_1623, %c0_1624, %c0_1625] : memref<2x10x5x8xf32, #tpu.memory_space<vmem>>, vector<1x1x4x8xf32>
    %1168 = vector.shape_cast %1167 : vector<1x1x4x8xf32> to vector<4x8xf32>
    %c3_1626 = arith.constant 3 : index
    %c0_1627 = arith.constant 0 : index
    %c0_1628 = arith.constant 0 : index
    %1169 = vector.load %arg4[%c3_1626, %c0_1627, %c0_1628] : memref<9x8x128xf32, #tpu.memory_space<vmem>>, vector<1x8x128xf32>
    %1170 = vector.shape_cast %1169 : vector<1x8x128xf32> to vector<8x128xf32>
    %cst_1629 = arith.constant dense<0.000000e+00> : vector<4x128xf32>
    %1171 = tpu.matmul %1168, %1170, %cst_1629 {dimension_numbers = #tpu.dot_dimension_numbers<[1], [0], [0], [1], [0, 0, 1, 1], [], []>} : vector<4x8xf32>, vector<8x128xf32>, vector<4x128xf32> -> vector<4x128xf32>
    %1172 = arith.addf %1166, %1171 : vector<4x128xf32>
    %c1_1630 = arith.constant 1 : index
    %c7_1631 = arith.constant 7 : index
    %c0_1632 = arith.constant 0 : index
    %c0_1633 = arith.constant 0 : index
    %1173 = vector.load %arg9[%c1_1630, %c7_1631, %c0_1632, %c0_1633] : memref<2x10x5x8xf32, #tpu.memory_space<vmem>>, vector<1x1x4x8xf32>
    %1174 = vector.shape_cast %1173 : vector<1x1x4x8xf32> to vector<4x8xf32>
    %c4_1634 = arith.constant 4 : index
    %c0_1635 = arith.constant 0 : index
    %c0_1636 = arith.constant 0 : index
    %1175 = vector.load %arg4[%c4_1634, %c0_1635, %c0_1636] : memref<9x8x128xf32, #tpu.memory_space<vmem>>, vector<1x8x128xf32>
    %1176 = vector.shape_cast %1175 : vector<1x8x128xf32> to vector<8x128xf32>
    %cst_1637 = arith.constant dense<0.000000e+00> : vector<4x128xf32>
    %1177 = tpu.matmul %1174, %1176, %cst_1637 {dimension_numbers = #tpu.dot_dimension_numbers<[1], [0], [0], [1], [0, 0, 1, 1], [], []>} : vector<4x8xf32>, vector<8x128xf32>, vector<4x128xf32> -> vector<4x128xf32>
    %1178 = arith.addf %1172, %1177 : vector<4x128xf32>
    %c0_1638 = arith.constant 0 : index
    %c7_1639 = arith.constant 7 : index
    %c1_1640 = arith.constant 1 : index
    %c0_1641 = arith.constant 0 : index
    %1179 = vector.load %arg9[%c0_1638, %c7_1639, %c1_1640, %c0_1641] : memref<2x10x5x8xf32, #tpu.memory_space<vmem>>, vector<1x1x4x8xf32>
    %1180 = vector.shape_cast %1179 : vector<1x1x4x8xf32> to vector<4x8xf32>
    %c5_1642 = arith.constant 5 : index
    %c0_1643 = arith.constant 0 : index
    %c0_1644 = arith.constant 0 : index
    %1181 = vector.load %arg4[%c5_1642, %c0_1643, %c0_1644] : memref<9x8x128xf32, #tpu.memory_space<vmem>>, vector<1x8x128xf32>
    %1182 = vector.shape_cast %1181 : vector<1x8x128xf32> to vector<8x128xf32>
    %cst_1645 = arith.constant dense<0.000000e+00> : vector<4x128xf32>
    %1183 = tpu.matmul %1180, %1182, %cst_1645 {dimension_numbers = #tpu.dot_dimension_numbers<[1], [0], [0], [1], [0, 0, 1, 1], [], []>} : vector<4x8xf32>, vector<8x128xf32>, vector<4x128xf32> -> vector<4x128xf32>
    %1184 = arith.addf %1178, %1183 : vector<4x128xf32>
    %c0_1646 = arith.constant 0 : index
    %c8_1647 = arith.constant 8 : index
    %c0_1648 = arith.constant 0 : index
    %c0_1649 = arith.constant 0 : index
    %1185 = vector.load %arg9[%c0_1646, %c8_1647, %c0_1648, %c0_1649] : memref<2x10x5x8xf32, #tpu.memory_space<vmem>>, vector<1x1x4x8xf32>
    %1186 = vector.shape_cast %1185 : vector<1x1x4x8xf32> to vector<4x8xf32>
    %c6_1650 = arith.constant 6 : index
    %c0_1651 = arith.constant 0 : index
    %c0_1652 = arith.constant 0 : index
    %1187 = vector.load %arg4[%c6_1650, %c0_1651, %c0_1652] : memref<9x8x128xf32, #tpu.memory_space<vmem>>, vector<1x8x128xf32>
    %1188 = vector.shape_cast %1187 : vector<1x8x128xf32> to vector<8x128xf32>
    %cst_1653 = arith.constant dense<0.000000e+00> : vector<4x128xf32>
    %1189 = tpu.matmul %1186, %1188, %cst_1653 {dimension_numbers = #tpu.dot_dimension_numbers<[1], [0], [0], [1], [0, 0, 1, 1], [], []>} : vector<4x8xf32>, vector<8x128xf32>, vector<4x128xf32> -> vector<4x128xf32>
    %1190 = arith.addf %1184, %1189 : vector<4x128xf32>
    %c1_1654 = arith.constant 1 : index
    %c8_1655 = arith.constant 8 : index
    %c0_1656 = arith.constant 0 : index
    %c0_1657 = arith.constant 0 : index
    %1191 = vector.load %arg9[%c1_1654, %c8_1655, %c0_1656, %c0_1657] : memref<2x10x5x8xf32, #tpu.memory_space<vmem>>, vector<1x1x4x8xf32>
    %1192 = vector.shape_cast %1191 : vector<1x1x4x8xf32> to vector<4x8xf32>
    %c7_1658 = arith.constant 7 : index
    %c0_1659 = arith.constant 0 : index
    %c0_1660 = arith.constant 0 : index
    %1193 = vector.load %arg4[%c7_1658, %c0_1659, %c0_1660] : memref<9x8x128xf32, #tpu.memory_space<vmem>>, vector<1x8x128xf32>
    %1194 = vector.shape_cast %1193 : vector<1x8x128xf32> to vector<8x128xf32>
    %cst_1661 = arith.constant dense<0.000000e+00> : vector<4x128xf32>
    %1195 = tpu.matmul %1192, %1194, %cst_1661 {dimension_numbers = #tpu.dot_dimension_numbers<[1], [0], [0], [1], [0, 0, 1, 1], [], []>} : vector<4x8xf32>, vector<8x128xf32>, vector<4x128xf32> -> vector<4x128xf32>
    %1196 = arith.addf %1190, %1195 : vector<4x128xf32>
    %c0_1662 = arith.constant 0 : index
    %c8_1663 = arith.constant 8 : index
    %c1_1664 = arith.constant 1 : index
    %c0_1665 = arith.constant 0 : index
    %1197 = vector.load %arg9[%c0_1662, %c8_1663, %c1_1664, %c0_1665] : memref<2x10x5x8xf32, #tpu.memory_space<vmem>>, vector<1x1x4x8xf32>
    %1198 = vector.shape_cast %1197 : vector<1x1x4x8xf32> to vector<4x8xf32>
    %c8_1666 = arith.constant 8 : index
    %c0_1667 = arith.constant 0 : index
    %c0_1668 = arith.constant 0 : index
    %1199 = vector.load %arg4[%c8_1666, %c0_1667, %c0_1668] : memref<9x8x128xf32, #tpu.memory_space<vmem>>, vector<1x8x128xf32>
    %1200 = vector.shape_cast %1199 : vector<1x8x128xf32> to vector<8x128xf32>
    %cst_1669 = arith.constant dense<0.000000e+00> : vector<4x128xf32>
    %1201 = tpu.matmul %1198, %1200, %cst_1669 {dimension_numbers = #tpu.dot_dimension_numbers<[1], [0], [0], [1], [0, 0, 1, 1], [], []>} : vector<4x8xf32>, vector<8x128xf32>, vector<4x128xf32> -> vector<4x128xf32>
    %1202 = arith.addf %1196, %1201 : vector<4x128xf32>
    %1203 = vector.broadcast %1 : vector<1x128xf32> to vector<4x128xf32>
    %1204 = arith.addf %1202, %1203 : vector<4x128xf32>
    %c0_1670 = arith.constant 0 : index
    %c12_1671 = arith.constant 12 : index
    %c0_1672 = arith.constant 0 : index
    %1205 = vector.load %arg8[%c0_1670, %c12_1671, %c0_1672] : memref<1x16x128xf32, #tpu.memory_space<vmem>>, vector<1x4x128xf32>
    %1206 = vector.shape_cast %1205 : vector<1x4x128xf32> to vector<4x128xf32>
    %1207 = vector.shape_cast %1204 : vector<4x128xf32> to vector<1x4x128xf32>
    tpu.vector_store %arg8[%c0_1670, %c12_1671, %c0_1672], %1207 {strides = array<i32>} : memref<1x16x128xf32, #tpu.memory_space<vmem>>, vector<1x4x128xf32>,
    return
  }
  func.func @transform_0(%arg0: i32) -> (i32, i32, i32, i32, i32) {
    %c0_i32 = arith.constant 0 : i32
    %c0_i32_0 = arith.constant 0 : i32
    %c0_i32_1 = arith.constant 0 : i32
    %c0_i32_2 = arith.constant 0 : i32
    %c0_i32_3 = arith.constant 0 : i32
    return %arg0, %c0_i32, %c0_i32_0, %c0_i32_1, %c0_i32_2 : i32, i32, i32, i32, i32
  }
  func.func @transform_1(%arg0: i32) -> (i32, i32, i32) {
    %c0_i32 = arith.constant 0 : i32
    %c0_i32_0 = arith.constant 0 : i32
    %c0_i32_1 = arith.constant 0 : i32
    return %arg0, %c0_i32, %c0_i32_0 : i32, i32, i32
  }
  func.func @transform_2(%arg0: i32) -> (i32, i32, i32) {
    %c0_i32 = arith.constant 0 : i32
    %c0_i32_0 = arith.constant 0 : i32
    %c0_i32_1 = arith.constant 0 : i32
    %c0_i32_2 = arith.constant 0 : i32
    return %c0_i32, %c0_i32_0, %c0_i32_1 : i32, i32, i32
  }
  func.func @transform_3(%arg0: i32) -> (i32, i32, i32) {
    %c0_i32 = arith.constant 0 : i32
    %c0_i32_0 = arith.constant 0 : i32
    %c0_i32_1 = arith.constant 0 : i32
    %c0_i32_2 = arith.constant 0 : i32
    return %c0_i32, %c0_i32_0, %c0_i32_1 : i32, i32, i32
  }
  func.func @transform_4(%arg0: i32) -> (i32, i32) {
    %c0_i32 = arith.constant 0 : i32
    %c0_i32_0 = arith.constant 0 : i32
    %c0_i32_1 = arith.constant 0 : i32
    return %c0_i32, %c0_i32_0 : i32, i32
  }
  func.func @transform_5(%arg0: i32) -> (i32, i32) {
    %c0_i32 = arith.constant 0 : i32
    %c0_i32_0 = arith.constant 0 : i32
    %c0_i32_1 = arith.constant 0 : i32
    return %c0_i32, %c0_i32_0 : i32, i32
  }
  func.func @transform_6(%arg0: i32) -> (i32, i32) {
    %c0_i32 = arith.constant 0 : i32
    %c0_i32_0 = arith.constant 0 : i32
    %c0_i32_1 = arith.constant 0 : i32
    return %c0_i32, %c0_i32_0 : i32, i32
  }
  func.func @transform_7(%arg0: i32) -> (i32, i32, i32) {
    %c0_i32 = arith.constant 0 : i32
    %c0_i32_0 = arith.constant 0 : i32
    %c0_i32_1 = arith.constant 0 : i32
    return %arg0, %c0_i32, %c0_i32_0 : i32, i32, i32
  }
}

</mosaic_0001>

<llo_original>
// kernel: resnet_block_forward.1
$region0: #{resnet_block_forward.1}
  #allocation0 [shape = 'u32[]', space=smem, size = 0x4, offset = 0x4, fixed_abs, tag = 'smem constant byte address 0x4 - core index']
  #allocation1 [shape = 'u32[72,128]{1,0:T(1,128)}', space=vmem, size = 0x9000, scoped, tag = 'internal scratch']
  #allocation2 [shape = 'f32[2,10,5,8]{3,2,1,0:T(8,128)}', space=vmem, size = 0x14000, scoped, tag = 'scratch operand']
  %s0 = inlined_call_operand.vmem [shape: f32[2,4,18,5,4], index: 0, kind: input, shape index: {}]
  %s1 = inlined_call_operand.vmem [shape: f32[2,16,64], index: 1, kind: input, shape index: {}]
  %s2 = inlined_call_operand.vmem [shape: f32[9,4,8], index: 2, kind: input, shape index: {}]
  %s3 = inlined_call_operand.vmem [shape: f32[9,8,128], index: 3, kind: input, shape index: {}]
  %s4 = inlined_call_operand.vmem [shape: f32[64,128], index: 4, kind: input, shape index: {}]
  %s5 = inlined_call_operand.vmem [shape: f32[1,8], index: 5, kind: input, shape index: {}]
  %s6 = inlined_call_operand.vmem [shape: f32[1,128], index: 6, kind: input, shape index: {}]
  %s7 = inlined_call_operand.hbm [shape: f32[2,16,128], index: 7, kind: output, shape index: {}]
  %s8 = sld [smem:[#allocation0]]
  $region61: #{resnet_block_forward.1} parent=0
    _
  %s10 = ssub.s32 1, %s8
  %s11 = scalar_select 0, %s10, %s8
  $region1: #{resnet_block_forward.1} parent=0
    #allocation3 [shape = 'u8[16384]{0}', space=vmem, size = 0x4000, scoped, tag = 'output window, operand 0']
    #allocation4 [shape = 's32[2]{0}', space=sflag, size = 0x8, scoped, tag = 'scoped memory for resnet_block_forward.1']
    %12 = vsyncpa [#allocation4], 0
    %s13 = scalar_lea.sflag [#allocation4], 1
    %14 = vsyncpa %s13, 0
    loop: start=0, step=1, limit=4
    $region2: #{resnet_block_forward.1} parent=1 // loop_pre_header
      _
    $region3: #{resnet_block_forward.1} parent=1 // loop_header
      %s16 = sphi 0, %s20
      %p17 = scmp.ge.s32.totalorder %s16, 4
      %s26 = sphi 0, %s28
      %s29 = sphi 0, %s26
      %s30 = sphi 0, %s29
      %s46 = sphi 0, %s30
      %s52 = sphi 0, %s54
      %s55 = sphi 0, %s52
      %s56 = sphi 0, %s55
      %s72 = sphi 0, %s56
      %s76 = sphi 0, %s76
      %s78 = sphi 0, %s76
      %s79 = sphi 0, %s78
      %s93 = sphi 0, %s79
      %s97 = sphi 0, %s97
      %s99 = sphi 0, %s97
      %s100 = sphi 0, %s99
      %s114 = sphi 0, %s100
      %s118 = sphi 0, %s118
      %s120 = sphi 0, %s118
      %s121 = sphi 0, %s120
      %s135 = sphi 0, %s121
      %s139 = sphi 0, %s139
      %s141 = sphi 0, %s139
      %s142 = sphi 0, %s141
      %s156 = sphi 0, %s142
      %s160 = sphi 0, %s160
      %s162 = sphi 0, %s160
      %s163 = sphi 0, %s162
      %s177 = sphi 0, %s163
      %s183 = sphi 0, %s185
      %s186 = sphi 0, %s183
      %s187 = sphi 0, %s186
      %s203 = sphi 0, %s187
    $region4: #{resnet_block_forward.1} parent=1 // loop_header_branch
      %19 = sbr.rel (%p17) target = $region8
    $region5: #{resnet_block_forward.1} parent=1 // loop_body
      %s21 = ssub.s32 %s16, 1
      %s22 = ssub.s32 %s16, 2
      %s23 = sadd.s32 %s16, 1
      %s24 = ssub.s32 %s16, %s23
      %p25 = scmp.eq.s32.totalorder %s24, 0
      %s27 = sadd.s32 %s26, 1
      %s28 = scalar_select %p25, %s26, %s27
      %p31 = pneg %p25
      %p32 = scmp.eq.s32.totalorder %s16, 1
      %p33 = por %p31, %p32
      %p34 = scmp.ne.s32.totalorder %s26, %s29
      %p35 = scmp.eq.s32.totalorder %s16, 0
      %p36 = por %p34, %p35
      %p37 = scmp.ne.s32.totalorder %s26, %s29
      %p38 = scmp.eq.s32.totalorder %s21, 1
      %p39 = por %p37, %p38
      %p40 = scmp.ne.s32.totalorder %s29, %s30
      %p41 = scmp.eq.s32.totalorder %s21, 0
      %p42 = por %p40, %p41
      %p43 = scmp.ne.s32.totalorder %s29, %s30
      %p44 = scmp.eq.s32.totalorder %s22, 1
      %p45 = por %p43, %p44
      %p47 = scmp.ne.s32.totalorder %s30, %s46
      %p48 = scmp.eq.s32.totalorder %s22, 0
      %p49 = por %p47, %p48
      %s50 = ssub.s32 %s16, %s23
      %p51 = scmp.eq.s32.totalorder %s50, 0
      %s53 = sadd.s32 %s52, 1
      %s54 = scalar_select %p51, %s52, %s53
      %p57 = pneg %p51
      %p58 = scmp.eq.s32.totalorder %s16, 1
      %p59 = por %p57, %p58
      %p60 = scmp.ne.s32.totalorder %s52, %s55
      %p61 = scmp.eq.s32.totalorder %s16, 0
      %p62 = por %p60, %p61
      %p63 = scmp.ne.s32.totalorder %s52, %s55
      %p64 = scmp.eq.s32.totalorder %s21, 1
      %p65 = por %p63, %p64
      %p66 = scmp.ne.s32.totalorder %s55, %s56
      %p67 = scmp.eq.s32.totalorder %s21, 0
      %p68 = por %p66, %p67
      %p69 = scmp.ne.s32.totalorder %s55, %s56
      %p70 = scmp.eq.s32.totalorder %s22, 1
      %p71 = por %p69, %p70
      %p73 = scmp.ne.s32.totalorder %s56, %s72
      %p74 = scmp.eq.s32.totalorder %s22, 0
      %p75 = por %p73, %p74
      %s77 = sadd.s32 %s76, 1
      %p80 = scmp.eq.s32.totalorder %s16, 1
      %p81 = scmp.ne.s32.totalorder %s76, %s78
      %p82 = scmp.eq.s32.totalorder %s16, 0
      %p83 = por %p81, %p82
      %p84 = scmp.ne.s32.totalorder %s76, %s78
      %p85 = scmp.eq.s32.totalorder %s21, 1
      %p86 = por %p84, %p85
      %p87 = scmp.ne.s32.totalorder %s78, %s79
      %p88 = scmp.eq.s32.totalorder %s21, 0
      %p89 = por %p87, %p88
      %p90 = scmp.ne.s32.totalorder %s78, %s79
      %p91 = scmp.eq.s32.totalorder %s22, 1
      %p92 = por %p90, %p91
      %p94 = scmp.ne.s32.totalorder %s79, %s93
      %p95 = scmp.eq.s32.totalorder %s22, 0
      %p96 = por %p94, %p95
      %s98 = sadd.s32 %s97, 1
      %p101 = scmp.eq.s32.totalorder %s16, 1
      %p102 = scmp.ne.s32.totalorder %s97, %s99
      %p103 = scmp.eq.s32.totalorder %s16, 0
      %p104 = por %p102, %p103
      %p105 = scmp.ne.s32.totalorder %s97, %s99
      %p106 = scmp.eq.s32.totalorder %s21, 1
      %p107 = por %p105, %p106
      %p108 = scmp.ne.s32.totalorder %s99, %s100
      %p109 = scmp.eq.s32.totalorder %s21, 0
      %p110 = por %p108, %p109
      %p111 = scmp.ne.s32.totalorder %s99, %s100
      %p112 = scmp.eq.s32.totalorder %s22, 1
      %p113 = por %p111, %p112
      %p115 = scmp.ne.s32.totalorder %s100, %s114
      %p116 = scmp.eq.s32.totalorder %s22, 0
      %p117 = por %p115, %p116
      %s119 = sadd.s32 %s118, 1
      %p122 = scmp.eq.s32.totalorder %s16, 1
      %p123 = scmp.ne.s32.totalorder %s118, %s120
      %p124 = scmp.eq.s32.totalorder %s16, 0
      %p125 = por %p123, %p124
      %p126 = scmp.ne.s32.totalorder %s118, %s120
      %p127 = scmp.eq.s32.totalorder %s21, 1
      %p128 = por %p126, %p127
      %p129 = scmp.ne.s32.totalorder %s120, %s121
      %p130 = scmp.eq.s32.totalorder %s21, 0
      %p131 = por %p129, %p130
      %p132 = scmp.ne.s32.totalorder %s120, %s121
      %p133 = scmp.eq.s32.totalorder %s22, 1
      %p134 = por %p132, %p133
      %p136 = scmp.ne.s32.totalorder %s121, %s135
      %p137 = scmp.eq.s32.totalorder %s22, 0
      %p138 = por %p136, %p137
      %s140 = sadd.s32 %s139, 1
      %p143 = scmp.eq.s32.totalorder %s16, 1
      %p144 = scmp.ne.s32.totalorder %s139, %s141
      %p145 = scmp.eq.s32.totalorder %s16, 0
      %p146 = por %p144, %p145
      %p147 = scmp.ne.s32.totalorder %s139, %s141
      %p148 = scmp.eq.s32.totalorder %s21, 1
      %p149 = por %p147, %p148
      %p150 = scmp.ne.s32.totalorder %s141, %s142
      %p151 = scmp.eq.s32.totalorder %s21, 0
      %p152 = por %p150, %p151
      %p153 = scmp.ne.s32.totalorder %s141, %s142
      %p154 = scmp.eq.s32.totalorder %s22, 1
      %p155 = por %p153, %p154
      %p157 = scmp.ne.s32.totalorder %s142, %s156
      %p158 = scmp.eq.s32.totalorder %s22, 0
      %p159 = por %p157, %p158
      %s161 = sadd.s32 %s160, 1
      %p164 = scmp.eq.s32.totalorder %s16, 1
      %p165 = scmp.ne.s32.totalorder %s160, %s162
      %p166 = scmp.eq.s32.totalorder %s16, 0
      %p167 = por %p165, %p166
      %p168 = scmp.ne.s32.totalorder %s160, %s162
      %p169 = scmp.eq.s32.totalorder %s21, 1
      %p170 = por %p168, %p169
      %p171 = scmp.ne.s32.totalorder %s162, %s163
      %p172 = scmp.eq.s32.totalorder %s21, 0
      %p173 = por %p171, %p172
      %p174 = scmp.ne.s32.totalorder %s162, %s163
      %p175 = scmp.eq.s32.totalorder %s22, 1
      %p176 = por %p174, %p175
      %p178 = scmp.ne.s32.totalorder %s163, %s177
      %p179 = scmp.eq.s32.totalorder %s22, 0
      %p180 = por %p178, %p179
      %s181 = ssub.s32 %s16, %s23
      %p182 = scmp.eq.s32.totalorder %s181, 0
      %s184 = sadd.s32 %s183, 1
      %s185 = scalar_select %p182, %s183, %s184
      %p188 = pneg %p182
      %p189 = scmp.eq.s32.totalorder %s16, 1
      %p190 = por %p188, %p189
      %p191 = scmp.ne.s32.totalorder %s183, %s186
      %p192 = scmp.eq.s32.totalorder %s16, 0
      %p193 = por %p191, %p192
      %p194 = scmp.ne.s32.totalorder %s183, %s186
      %p195 = scmp.eq.s32.totalorder %s21, 1
      %p196 = por %p194, %p195
      %p197 = scmp.ne.s32.totalorder %s186, %s187
      %p198 = scmp.eq.s32.totalorder %s21, 0
      %p199 = por %p197, %p198
      %p200 = scmp.ne.s32.totalorder %s186, %s187
      %p201 = scmp.eq.s32.totalorder %s22, 1
      %p202 = por %p200, %p201
      %p204 = scmp.ne.s32.totalorder %s187, %s203
      %p205 = scmp.eq.s32.totalorder %s22, 0
      %p206 = por %p204, %p205
      %p207 = scmp.le.s32.totalorder 1, %s16
      %p208 = scmp.lt.s32.totalorder %s16, 3
      %p209 = pnand %p207, %p208
      %p210 = pneg %p209
      // Predicated region
      $region9: #{resnet_block_forward.1} parent=5 // pred_check
        _
      $region10: #{resnet_block_forward.1} parent=5 // pred_check_branch
        %212 = sbr.rel (%p209) target = $region12
      $region11: #{resnet_block_forward.1} parent=5 // pred_region
        %s213 = ssub.s32 %s16, 1
        // Predicated region
        $region13: #{resnet_block_forward.1} parent=11 // pred_check
          %p214 = pneg %p89
        $region14: #{resnet_block_forward.1} parent=11 // pred_check_branch
          %216 = sbr.rel (%p214) target = $region16
        $region15: #{resnet_block_forward.1} parent=11 // pred_region
          _
        $region16: #{resnet_block_forward.1} parent=11 // pred_fallthru
          _
        // Predicated region
        $region17: #{resnet_block_forward.1} parent=11 // pred_check
          %p217 = pneg %p110
        $region18: #{resnet_block_forward.1} parent=11 // pred_check_branch
          %219 = sbr.rel (%p217) target = $region20
        $region19: #{resnet_block_forward.1} parent=11 // pred_region
          _
        $region20: #{resnet_block_forward.1} parent=11 // pred_fallthru
          _
        // Predicated region
        $region21: #{resnet_block_forward.1} parent=11 // pred_check
          %p220 = pneg %p131
        $region22: #{resnet_block_forward.1} parent=11 // pred_check_branch
          %222 = sbr.rel (%p220) target = $region24
        $region23: #{resnet_block_forward.1} parent=11 // pred_region
          _
        $region24: #{resnet_block_forward.1} parent=11 // pred_fallthru
          _
        // Predicated region
        $region25: #{resnet_block_forward.1} parent=11 // pred_check
          %p223 = pneg %p152
        $region26: #{resnet_block_forward.1} parent=11 // pred_check_branch
          %225 = sbr.rel (%p223) target = $region28
        $region27: #{resnet_block_forward.1} parent=11 // pred_region
          _
        $region28: #{resnet_block_forward.1} parent=11 // pred_fallthru
          _
        // Predicated region
        $region29: #{resnet_block_forward.1} parent=11 // pred_check
          %p226 = pneg %p173
        $region30: #{resnet_block_forward.1} parent=11 // pred_check_branch
          %228 = sbr.rel (%p226) target = $region32
        $region31: #{resnet_block_forward.1} parent=11 // pred_region
          _
        $region32: #{resnet_block_forward.1} parent=11 // pred_fallthru
          _
      $region12: #{resnet_block_forward.1} parent=5 // pred_fallthru
        _
      %p229 = scmp.lt.s32.totalorder %s16, 2
      // Predicated region
      $region33: #{resnet_block_forward.1} parent=5 // pred_check
        %p230 = pneg %p229
      $region34: #{resnet_block_forward.1} parent=5 // pred_check_branch
        %232 = sbr.rel (%p230) target = $region36
      $region35: #{resnet_block_forward.1} parent=5 // pred_region
        // Predicated region
        $region37: #{resnet_block_forward.1} parent=35 // pred_check
          %p233 = pneg %p36
        $region38: #{resnet_block_forward.1} parent=35 // pred_check_branch
          %235 = sbr.rel (%p233) target = $region40
        $region39: #{resnet_block_forward.1} parent=35 // pred_region
          %p236 = scmp.lt.s32.totalorder %s16, 1
          %s237 = scalar_select %p236, %s16, 1
          %s238 = smul.addr %s237, 72
          %s239 = smul.addr %s238, 8
          %s240 = scalar_lea.vmem %s0, %s239
        $region40: #{resnet_block_forward.1} parent=35 // pred_fallthru
          _
        // Predicated region
        $region41: #{resnet_block_forward.1} parent=35 // pred_check
          %p241 = pneg %p62
        $region42: #{resnet_block_forward.1} parent=35 // pred_check_branch
          %243 = sbr.rel (%p241) target = $region44
        $region43: #{resnet_block_forward.1} parent=35 // pred_region
          %p244 = scmp.lt.s32.totalorder %s16, 1
          %s245 = scalar_select %p244, %s16, 1
          %s246 = smul.addr %s245, 2
          %s247 = smul.addr %s246, 8
          %s248 = scalar_lea.vmem %s1, %s247
        $region44: #{resnet_block_forward.1} parent=35 // pred_fallthru
          _
      $region36: #{resnet_block_forward.1} parent=5 // pred_fallthru
        _
      %p249 = scmp.le.s32.totalorder 1, %s16
      %p250 = scmp.lt.s32.totalorder %s16, 3
      %p251 = pnand %p249, %p250
      %p252 = pneg %p251
      // Predicated region
      $region45: #{resnet_block_forward.1} parent=5 // pred_check
        _
      $region46: #{resnet_block_forward.1} parent=5 // pred_check_branch
        %254 = sbr.rel (%p251) target = $region48
      $region47: #{resnet_block_forward.1} parent=5 // pred_region
        %s255 = ssub.s32 %s16, 1
        %p256 = scmp.lt.s32.totalorder %s21, 1
        %s257 = scalar_select %p256, %s21, 1
        %s258 = smul.addr %s257, 72
        %s259 = smul.addr %s258, 8
        %s260 = scalar_lea.vmem %s0, %s259
        %p261 = pneg %p42
        %p262 = pneg %p39
        %p263 = scmp.lt.s32.totalorder %s21, 1
        %s264 = scalar_select %p263, %s21, 1
        %s265 = smul.addr %s264, 2
        %s266 = smul.addr %s265, 8
        %s267 = scalar_lea.vmem %s1, %s266
        %p268 = pneg %p68
        %p269 = pneg %p65
        %p270 = pneg %p89
        %p271 = pneg %p86
        %p272 = pneg %p110
        %p273 = pneg %p107
        %p274 = pneg %p131
        %p275 = pneg %p128
        %p276 = pneg %p152
        %p277 = pneg %p149
        %p278 = pneg %p173
        %p279 = pneg %p170
        %p280 = pneg %p199
        %p281 = pneg %p196
        %s282 = sand.u32 %s186, 1
        %s283 = scalar_lea.sflag [#allocation4], %s282
        %s284 = sand.u32 %s186, 1
        %s285 = smul.addr %s284, 16
        %s286 = scalar_lea.vmem [#allocation3], %s285
        %p287 = scmp.lt.s32.totalorder %s21, 1
        %s288 = scalar_select %p287, %s21, 1
        %s289 = smul.addr %s288, 72
        %s290 = smul.addr %s289, 8
        %s291 = scalar_lea.vmem %s0, %s290
        %p292 = scmp.lt.s32.totalorder %s21, 1
        %s293 = scalar_select %p292, %s21, 1
        %s294 = smul.addr %s293, 2
        %s295 = smul.addr %s294, 8
        %s296 = scalar_lea.vmem %s1, %s295
        %v297 = vld [vmem:[%s5] sm:$0x1]
        %v298 = vld [vmem:[%s6] sm:$0x1]
        %vm299 = vcmask 61440
        %300 = vst.msk [vmem:[#allocation2] sm:$0x1f] %vm299, 0.0
        %301 = vst.msk [vmem:[#allocation2 + $0x8] sm:$0x1f] %vm299, 0.0
        %302 = vst.msk [vmem:[#allocation2 + $0x10] sm:$0x1f] %vm299, 0.0
        %303 = vst.msk [vmem:[#allocation2 + $0x18] sm:$0x1f] %vm299, 0.0
        %304 = vst.msk [vmem:[#allocation2 + $0x20] sm:$0x1f] %vm299, 0.0
        %305 = vst.msk [vmem:[#allocation2 + $0x28] sm:$0x1f] %vm299, 0.0
        %306 = vst.msk [vmem:[#allocation2 + $0x30] sm:$0x1f] %vm299, 0.0
        %307 = vst.msk [vmem:[#allocation2 + $0x38] sm:$0x1f] %vm299, 0.0
        %308 = vst.msk [vmem:[#allocation2 + $0x40] sm:$0x1f] %vm299, 0.0
        %309 = vst.msk [vmem:[#allocation2 + $0x48] sm:$0x1f] %vm299, 0.0
        %310 = vst.msk [vmem:[#allocation2 + $0x50] sm:$0x1f] %vm299, 0.0
        %311 = vst.msk [vmem:[#allocation2 + $0x58] sm:$0x1f] %vm299, 0.0
        %312 = vst.msk [vmem:[#allocation2 + $0x60] sm:$0x1f] %vm299, 0.0
        %313 = vst.msk [vmem:[#allocation2 + $0x68] sm:$0x1f] %vm299, 0.0
        %314 = vst.msk [vmem:[#allocation2 + $0x70] sm:$0x1f] %vm299, 0.0
        %315 = vst.msk [vmem:[#allocation2 + $0x78] sm:$0x1f] %vm299, 0.0
        %316 = vst.msk [vmem:[#allocation2 + $0x80] sm:$0x1f] %vm299, 0.0
        %317 = vst.msk [vmem:[#allocation2 + $0x88] sm:$0x1f] %vm299, 0.0
        %318 = vst.msk [vmem:[#allocation2 + $0x90] sm:$0x1f] %vm299, 0.0
        %319 = vst.msk [vmem:[#allocation2 + $0x98] sm:$0x1f] %vm299, 0.0
        %v320 = vld [vmem:[%s291] sm:$0xf]
        %v321 = vld [vmem:[%s2] sm:$0xf]
        %s322 = scalar_lea.vmem %s291, 144
        %v323 = vld [vmem:[%s322] sm:$0xf]
        %s324 = scalar_lea.vmem %s2, 4
        %v325 = vld [vmem:[%s324] sm:$0xf]
        %vm326 = vcmask 31744
        %v328 = vsel %vm326, %v323, 0
        %vm330 = vcmask 1043456
        %v332 = vsel %vm330, %v325, 0
        %334 = vmatpush.msra.mxu0 0.0
        %335 = vmatpush.msra.mxu0 0.0
        %336 = vmatpush.msra.mxu0 0.0
        %337 = vmatpush.msra.mxu0 0.0
        %338 = vmatpush.msra.mxu0 0.0
        %339 = vmatpush.msra.mxu0 0.0
        %340 = vmatpush.msra.mxu0 0.0
        %341 = vmatpush.msra.mxu0 0.0
        %342 = vmatpush.msra.mxu0 0.0
        %343 = vmatpush.msra.mxu0 0.0
        %344 = vmatpush.msra.mxu0 0.0
        %345 = vmatpush.msra.mxu0 0.0
        %346 = vmatpush.msra.mxu0 0.0
        %347 = vmatpush.msra.mxu0 0.0
        %348 = vmatpush.msra.mxu0 0.0
        %349 = vmatpush.msra.mxu0 %v332
        %350 = vmatmul.f32.gmra.mxu0 %v328
        %v351 = vpop.f32.mrf.mxu0
        %v352 = vadd.f32 0.0, %v351
        %353 = vdwg.mxu0
        %v355 = vsel %vm326, %v320, 0
        %v358 = vsel %vm330, %v321, 0
        %360 = vmatpush.msra.mxu0 0.0
        %361 = vmatpush.msra.mxu0 0.0
        %362 = vmatpush.msra.mxu0 0.0
        %363 = vmatpush.msra.mxu0 0.0
        %364 = vmatpush.msra.mxu0 0.0
        %365 = vmatpush.msra.mxu0 0.0
        %366 = vmatpush.msra.mxu0 0.0
        %367 = vmatpush.msra.mxu0 0.0
        %368 = vmatpush.msra.mxu0 0.0
        %369 = vmatpush.msra.mxu0 0.0
        %370 = vmatpush.msra.mxu0 0.0
        %371 = vmatpush.msra.mxu0 0.0
        %372 = vmatpush.msra.mxu0 0.0
        %373 = vmatpush.msra.mxu0 0.0
        %374 = vmatpush.msra.mxu0 0.0
        %375 = vmatpush.msra.mxu0 %v358
        %376 = vmatmul.f32.gmra.mxu0 %v355
        %v377 = vpop.f32.mrf.mxu0
        %v378 = vadd.f32 %v352, %v377
        %379 = vdwg.mxu0
        %s380 = scalar_lea.vmem %s291, 288
        %v381 = vld [vmem:[%s380] sm:$0xf]
        %s382 = scalar_lea.vmem %s2, 8
        %v383 = vld [vmem:[%s382] sm:$0xf]
        %v385 = vsel %vm326, %v381, 0
        %v388 = vsel %vm330, %v383, 0
        %390 = vmatpush.msra.mxu0 0.0
        %391 = vmatpush.msra.mxu0 0.0
        %392 = vmatpush.msra.mxu0 0.0
        %393 = vmatpush.msra.mxu0 0.0
        %394 = vmatpush.msra.mxu0 0.0
        %395 = vmatpush.msra.mxu0 0.0
        %396 = vmatpush.msra.mxu0 0.0
        %397 = vmatpush.msra.mxu0 0.0
        %398 = vmatpush.msra.mxu0 0.0
        %399 = vmatpush.msra.mxu0 0.0
        %400 = vmatpush.msra.mxu0 0.0
        %401 = vmatpush.msra.mxu0 0.0
        %402 = vmatpush.msra.mxu0 0.0
        %403 = vmatpush.msra.mxu0 0.0
        %404 = vmatpush.msra.mxu0 0.0
        %405 = vmatpush.msra.mxu0 %v388
        %406 = vmatmul.f32.gmra.mxu0 %v385
        %v407 = vpop.f32.mrf.mxu0
        %v408 = vadd.f32 0.0, %v407
        %409 = vdwg.mxu0
        %v410 = vadd.f32 %v378, %v408
        %s411 = scalar_lea.vmem %s291, 8
        %v412 = vld [vmem:[%s411] sm:$0xf]
        %s413 = scalar_lea.vmem %s2, 12
        %v414 = vld [vmem:[%s413] sm:$0xf]
        %v416 = vsel %vm326, %v412, 0
        %v419 = vsel %vm330, %v414, 0
        %421 = vmatpush.msra.mxu0 0.0
        %422 = vmatpush.msra.mxu0 0.0
        %423 = vmatpush.msra.mxu0 0.0
        %424 = vmatpush.msra.mxu0 0.0
        %425 = vmatpush.msra.mxu0 0.0
        %426 = vmatpush.msra.mxu0 0.0
        %427 = vmatpush.msra.mxu0 0.0
        %428 = vmatpush.msra.mxu0 0.0
        %429 = vmatpush.msra.mxu0 0.0
        %430 = vmatpush.msra.mxu0 0.0
        %431 = vmatpush.msra.mxu0 0.0
        %432 = vmatpush.msra.mxu0 0.0
        %433 = vmatpush.msra.mxu0 0.0
        %434 = vmatpush.msra.mxu0 0.0
        %435 = vmatpush.msra.mxu0 0.0
        %436 = vmatpush.msra.mxu0 %v419
        %437 = vmatmul.f32.gmra.mxu0 %v416
        %v438 = vpop.f32.mrf.mxu0
        %v439 = vadd.f32 0.0, %v438
        %440 = vdwg.mxu0
        %v441 = vadd.f32 %v410, %v439
        %s442 = scalar_lea.vmem %s291, 152
        %v443 = vld [vmem:[%s442] sm:$0xf]
        %s444 = scalar_lea.vmem %s2, 16
        %v445 = vld [vmem:[%s444] sm:$0xf]
        %v447 = vsel %vm326, %v443, 0
        %v450 = vsel %vm330, %v445, 0
        %452 = vmatpush.msra.mxu0 0.0
        %453 = vmatpush.msra.mxu0 0.0
        %454 = vmatpush.msra.mxu0 0.0
        %455 = vmatpush.msra.mxu0 0.0
        %456 = vmatpush.msra.mxu0 0.0
        %457 = vmatpush.msra.mxu0 0.0
        %458 = vmatpush.msra.mxu0 0.0
        %459 = vmatpush.msra.mxu0 0.0
        %460 = vmatpush.msra.mxu0 0.0
        %461 = vmatpush.msra.mxu0 0.0
        %462 = vmatpush.msra.mxu0 0.0
        %463 = vmatpush.msra.mxu0 0.0
        %464 = vmatpush.msra.mxu0 0.0
        %465 = vmatpush.msra.mxu0 0.0
        %466 = vmatpush.msra.mxu0 0.0
        %467 = vmatpush.msra.mxu0 %v450
        %468 = vmatmul.f32.gmra.mxu0 %v447
        %v469 = vpop.f32.mrf.mxu0
        %v470 = vadd.f32 0.0, %v469
        %471 = vdwg.mxu0
        %v472 = vadd.f32 %v441, %v470
        %s473 = scalar_lea.vmem %s291, 296
        %v474 = vld [vmem:[%s473] sm:$0xf]
        %s475 = scalar_lea.vmem %s2, 20
        %v476 = vld [vmem:[%s475] sm:$0xf]
        %v478 = vsel %vm326, %v474, 0
        %v481 = vsel %vm330, %v476, 0
        %483 = vmatpush.msra.mxu0 0.0
        %484 = vmatpush.msra.mxu0 0.0
        %485 = vmatpush.msra.mxu0 0.0
        %486 = vmatpush.msra.mxu0 0.0
        %487 = vmatpush.msra.mxu0 0.0
        %488 = vmatpush.msra.mxu0 0.0
        %489 = vmatpush.msra.mxu0 0.0
        %490 = vmatpush.msra.mxu0 0.0
        %491 = vmatpush.msra.mxu0 0.0
        %492 = vmatpush.msra.mxu0 0.0
        %493 = vmatpush.msra.mxu0 0.0
        %494 = vmatpush.msra.mxu0 0.0
        %495 = vmatpush.msra.mxu0 0.0
        %496 = vmatpush.msra.mxu0 0.0
        %497 = vmatpush.msra.mxu0 0.0
        %498 = vmatpush.msra.mxu0 %v481
        %499 = vmatmul.f32.gmra.mxu0 %v478
        %v500 = vpop.f32.mrf.mxu0
        %v501 = vadd.f32 0.0, %v500
        %502 = vdwg.mxu0
        %v503 = vadd.f32 %v472, %v501
        %s504 = scalar_lea.vmem %s291, 16
        %v505 = vld [vmem:[%s504] sm:$0xf]
        %s506 = scalar_lea.vmem %s2, 24
        %v507 = vld [vmem:[%s506] sm:$0xf]
        %v509 = vsel %vm326, %v505, 0
        %v512 = vsel %vm330, %v507, 0
        %514 = vmatpush.msra.mxu0 0.0
        %515 = vmatpush.msra.mxu0 0.0
        %516 = vmatpush.msra.mxu0 0.0
        %517 = vmatpush.msra.mxu0 0.0
        %518 = vmatpush.msra.mxu0 0.0
        %519 = vmatpush.msra.mxu0 0.0
        %520 = vmatpush.msra.mxu0 0.0
        %521 = vmatpush.msra.mxu0 0.0
        %522 = vmatpush.msra.mxu0 0.0
        %523 = vmatpush.msra.mxu0 0.0
        %524 = vmatpush.msra.mxu0 0.0
        %525 = vmatpush.msra.mxu0 0.0
        %526 = vmatpush.msra.mxu0 0.0
        %527 = vmatpush.msra.mxu0 0.0
        %528 = vmatpush.msra.mxu0 0.0
        %529 = vmatpush.msra.mxu0 %v512
        %530 = vmatmul.f32.gmra.mxu0 %v509
        %v531 = vpop.f32.mrf.mxu0
        %v532 = vadd.f32 0.0, %v531
        %533 = vdwg.mxu0
        %v534 = vadd.f32 %v503, %v532
        %s535 = scalar_lea.vmem %s291, 160
        %v536 = vld [vmem:[%s535] sm:$0xf]
        %s537 = scalar_lea.vmem %s2, 28
        %v538 = vld [vmem:[%s537] sm:$0xf]
        %v540 = vsel %vm326, %v536, 0
        %v543 = vsel %vm330, %v538, 0
        %545 = vmatpush.msra.mxu0 0.0
        %546 = vmatpush.msra.mxu0 0.0
        %547 = vmatpush.msra.mxu0 0.0
        %548 = vmatpush.msra.mxu0 0.0
        %549 = vmatpush.msra.mxu0 0.0
        %550 = vmatpush.msra.mxu0 0.0
        %551 = vmatpush.msra.mxu0 0.0
        %552 = vmatpush.msra.mxu0 0.0
        %553 = vmatpush.msra.mxu0 0.0
        %554 = vmatpush.msra.mxu0 0.0
        %555 = vmatpush.msra.mxu0 0.0
        %556 = vmatpush.msra.mxu0 0.0
        %557 = vmatpush.msra.mxu0 0.0
        %558 = vmatpush.msra.mxu0 0.0
        %559 = vmatpush.msra.mxu0 0.0
        %560 = vmatpush.msra.mxu0 %v543
        %561 = vmatmul.f32.gmra.mxu0 %v540
        %v562 = vpop.f32.mrf.mxu0
        %v563 = vadd.f32 0.0, %v562
        %564 = vdwg.mxu0
        %v565 = vadd.f32 %v534, %v563
        %s566 = scalar_lea.vmem %s291, 304
        %v567 = vld [vmem:[%s566] sm:$0xf]
        %s568 = scalar_lea.vmem %s2, 32
        %v569 = vld [vmem:[%s568] sm:$0xf]
        %v571 = vsel %vm326, %v567, 0
        %v574 = vsel %vm330, %v569, 0
        %576 = vmatpush.msra.mxu0 0.0
        %577 = vmatpush.msra.mxu0 0.0
        %578 = vmatpush.msra.mxu0 0.0
        %579 = vmatpush.msra.mxu0 0.0
        %580 = vmatpush.msra.mxu0 0.0
        %581 = vmatpush.msra.mxu0 0.0
        %582 = vmatpush.msra.mxu0 0.0
        %583 = vmatpush.msra.mxu0 0.0
        %584 = vmatpush.msra.mxu0 0.0
        %585 = vmatpush.msra.mxu0 0.0
        %586 = vmatpush.msra.mxu0 0.0
        %587 = vmatpush.msra.mxu0 0.0
        %588 = vmatpush.msra.mxu0 0.0
        %589 = vmatpush.msra.mxu0 0.0
        %590 = vmatpush.msra.mxu0 0.0
        %591 = vmatpush.msra.mxu0 %v574
        %592 = vmatmul.f32.gmra.mxu0 %v571
        %v593 = vpop.f32.mrf.mxu0
        %v594 = vadd.f32 0.0, %v593
        %595 = vdwg.mxu0
        %v596 = vadd.f32 %v565, %v594
        %v598 = vperm.slane %v297, 0
        %v600 = vadd.f32 %v596, %v598
        %s601 = scalar_lea.vmem [#allocation2], 88
        %vm602 = vcmask 60416
        %603 = vst.msk [vmem:[%s601] sm:$0xf] %vm602, %v600
        %v604 = vld [vmem:[%s380] sm:$0xf]
        %v605 = vld [vmem:[%s2] sm:$0xf]
        %s606 = scalar_lea.vmem %s291, 432
        %v607 = vld [vmem:[%s606] sm:$0xf]
        %v608 = vld [vmem:[%s324] sm:$0xf]
        %v610 = vsel %vm326, %v607, 0
        %v613 = vsel %vm330, %v608, 0
        %615 = vmatpush.msra.mxu0 0.0
        %616 = vmatpush.msra.mxu0 0.0
        %617 = vmatpush.msra.mxu0 0.0
        %618 = vmatpush.msra.mxu0 0.0
        %619 = vmatpush.msra.mxu0 0.0
        %620 = vmatpush.msra.mxu0 0.0
        %621 = vmatpush.msra.mxu0 0.0
        %622 = vmatpush.msra.mxu0 0.0
        %623 = vmatpush.msra.mxu0 0.0
        %624 = vmatpush.msra.mxu0 0.0
        %625 = vmatpush.msra.mxu0 0.0
        %626 = vmatpush.msra.mxu0 0.0
        %627 = vmatpush.msra.mxu0 0.0
        %628 = vmatpush.msra.mxu0 0.0
        %629 = vmatpush.msra.mxu0 0.0
        %630 = vmatpush.msra.mxu0 %v613
        %631 = vmatmul.f32.gmra.mxu0 %v610
        %v632 = vpop.f32.mrf.mxu0
        %v633 = vadd.f32 0.0, %v632
        %634 = vdwg.mxu0
        %v636 = vsel %vm326, %v604, 0
        %v639 = vsel %vm330, %v605, 0
        %641 = vmatpush.msra.mxu0 0.0
        %642 = vmatpush.msra.mxu0 0.0
        %643 = vmatpush.msra.mxu0 0.0
        %644 = vmatpush.msra.mxu0 0.0
        %645 = vmatpush.msra.mxu0 0.0
        %646 = vmatpush.msra.mxu0 0.0
        %647 = vmatpush.msra.mxu0 0.0
        %648 = vmatpush.msra.mxu0 0.0
        %649 = vmatpush.msra.mxu0 0.0
        %650 = vmatpush.msra.mxu0 0.0
        %651 = vmatpush.msra.mxu0 0.0
        %652 = vmatpush.msra.mxu0 0.0
        %653 = vmatpush.msra.mxu0 0.0
        %654 = vmatpush.msra.mxu0 0.0
        %655 = vmatpush.msra.mxu0 0.0
        %656 = vmatpush.msra.mxu0 %v639
        %657 = vmatmul.f32.gmra.mxu0 %v636
        %v658 = vpop.f32.mrf.mxu0
        %v659 = vadd.f32 %v633, %v658
        %660 = vdwg.mxu0
        %v661 = vld [vmem:[%s291 + $0x1] sm:$0xf]
        %v662 = vld [vmem:[%s382] sm:$0xf]
        %v664 = vsel %vm326, %v661, 0
        %v667 = vsel %vm330, %v662, 0
        %669 = vmatpush.msra.mxu0 0.0
        %670 = vmatpush.msra.mxu0 0.0
        %671 = vmatpush.msra.mxu0 0.0
        %672 = vmatpush.msra.mxu0 0.0
        %673 = vmatpush.msra.mxu0 0.0
        %674 = vmatpush.msra.mxu0 0.0
        %675 = vmatpush.msra.mxu0 0.0
        %676 = vmatpush.msra.mxu0 0.0
        %677 = vmatpush.msra.mxu0 0.0
        %678 = vmatpush.msra.mxu0 0.0
        %679 = vmatpush.msra.mxu0 0.0
        %680 = vmatpush.msra.mxu0 0.0
        %681 = vmatpush.msra.mxu0 0.0
        %682 = vmatpush.msra.mxu0 0.0
        %683 = vmatpush.msra.mxu0 0.0
        %684 = vmatpush.msra.mxu0 %v667
        %685 = vmatmul.f32.gmra.mxu0 %v664
        %v686 = vpop.f32.mrf.mxu0
        %v687 = vadd.f32 0.0, %v686
        %688 = vdwg.mxu0
        %v689 = vadd.f32 %v659, %v687
        %v690 = vld [vmem:[%s473] sm:$0xf]
        %v691 = vld [vmem:[%s413] sm:$0xf]
        %v693 = vsel %vm326, %v690, 0
        %v696 = vsel %vm330, %v691, 0
        %698 = vmatpush.msra.mxu0 0.0
        %699 = vmatpush.msra.mxu0 0.0
        %700 = vmatpush.msra.mxu0 0.0
        %701 = vmatpush.msra.mxu0 0.0
        %702 = vmatpush.msra.mxu0 0.0
        %703 = vmatpush.msra.mxu0 0.0
        %704 = vmatpush.msra.mxu0 0.0
        %705 = vmatpush.msra.mxu0 0.0
        %706 = vmatpush.msra.mxu0 0.0
        %707 = vmatpush.msra.mxu0 0.0
        %708 = vmatpush.msra.mxu0 0.0
        %709 = vmatpush.msra.mxu0 0.0
        %710 = vmatpush.msra.mxu0 0.0
        %711 = vmatpush.msra.mxu0 0.0
        %712 = vmatpush.msra.mxu0 0.0
        %713 = vmatpush.msra.mxu0 %v696
        %714 = vmatmul.f32.gmra.mxu0 %v693
        %v715 = vpop.f32.mrf.mxu0
        %v716 = vadd.f32 0.0, %v715
        %717 = vdwg.mxu0
        %v718 = vadd.f32 %v689, %v716
        %s719 = scalar_lea.vmem %s291, 440
        %v720 = vld [vmem:[%s719] sm:$0xf]
        %v721 = vld [vmem:[%s444] sm:$0xf]
        %v723 = vsel %vm326, %v720, 0
        %v726 = vsel %vm330, %v721, 0
        %728 = vmatpush.msra.mxu0 0.0
        %729 = vmatpush.msra.mxu0 0.0
        %730 = vmatpush.msra.mxu0 0.0
        %731 = vmatpush.msra.mxu0 0.0
        %732 = vmatpush.msra.mxu0 0.0
        %733 = vmatpush.msra.mxu0 0.0
        %734 = vmatpush.msra.mxu0 0.0
        %735 = vmatpush.msra.mxu0 0.0
        %736 = vmatpush.msra.mxu0 0.0
        %737 = vmatpush.msra.mxu0 0.0
        %738 = vmatpush.msra.mxu0 0.0
        %739 = vmatpush.msra.mxu0 0.0
        %740 = vmatpush.msra.mxu0 0.0
        %741 = vmatpush.msra.mxu0 0.0
        %742 = vmatpush.msra.mxu0 0.0
        %743 = vmatpush.msra.mxu0 %v726
        %744 = vmatmul.f32.gmra.mxu0 %v723
        %v745 = vpop.f32.mrf.mxu0
        %v746 = vadd.f32 0.0, %v745
        %747 = vdwg.mxu0
        %v748 = vadd.f32 %v718, %v746
        %v749 = vld [vmem:[%s411 + $0x1] sm:$0xf]
        %v750 = vld [vmem:[%s475] sm:$0xf]
        %v752 = vsel %vm326, %v749, 0
        %v755 = vsel %vm330, %v750, 0
        %757 = vmatpush.msra.mxu0 0.0
        %758 = vmatpush.msra.mxu0 0.0
        %759 = vmatpush.msra.mxu0 0.0
        %760 = vmatpush.msra.mxu0 0.0
        %761 = vmatpush.msra.mxu0 0.0
        %762 = vmatpush.msra.mxu0 0.0
        %763 = vmatpush.msra.mxu0 0.0
        %764 = vmatpush.msra.mxu0 0.0
        %765 = vmatpush.msra.mxu0 0.0
        %766 = vmatpush.msra.mxu0 0.0
        %767 = vmatpush.msra.mxu0 0.0
        %768 = vmatpush.msra.mxu0 0.0
        %769 = vmatpush.msra.mxu0 0.0
        %770 = vmatpush.msra.mxu0 0.0
        %771 = vmatpush.msra.mxu0 0.0
        %772 = vmatpush.msra.mxu0 %v755
        %773 = vmatmul.f32.gmra.mxu0 %v752
        %v774 = vpop.f32.mrf.mxu0
        %v775 = vadd.f32 0.0, %v774
        %776 = vdwg.mxu0
        %v777 = vadd.f32 %v748, %v775
        %v778 = vld [vmem:[%s566] sm:$0xf]
        %v779 = vld [vmem:[%s506] sm:$0xf]
        %v781 = vsel %vm326, %v778, 0
        %v784 = vsel %vm330, %v779, 0
        %786 = vmatpush.msra.mxu0 0.0
        %787 = vmatpush.msra.mxu0 0.0
        %788 = vmatpush.msra.mxu0 0.0
        %789 = vmatpush.msra.mxu0 0.0
        %790 = vmatpush.msra.mxu0 0.0
        %791 = vmatpush.msra.mxu0 0.0
        %792 = vmatpush.msra.mxu0 0.0
        %793 = vmatpush.msra.mxu0 0.0
        %794 = vmatpush.msra.mxu0 0.0
        %795 = vmatpush.msra.mxu0 0.0
        %796 = vmatpush.msra.mxu0 0.0
        %797 = vmatpush.msra.mxu0 0.0
        %798 = vmatpush.msra.mxu0 0.0
        %799 = vmatpush.msra.mxu0 0.0
        %800 = vmatpush.msra.mxu0 0.0
        %801 = vmatpush.msra.mxu0 %v784
        %802 = vmatmul.f32.gmra.mxu0 %v781
        %v803 = vpop.f32.mrf.mxu0
        %v804 = vadd.f32 0.0, %v803
        %805 = vdwg.mxu0
        %v806 = vadd.f32 %v777, %v804
        %s807 = scalar_lea.vmem %s291, 448
        %v808 = vld [vmem:[%s807] sm:$0xf]
        %v809 = vld [vmem:[%s537] sm:$0xf]
        %v811 = vsel %vm326, %v808, 0
        %v814 = vsel %vm330, %v809, 0
        %816 = vmatpush.msra.mxu0 0.0
        %817 = vmatpush.msra.mxu0 0.0
        %818 = vmatpush.msra.mxu0 0.0
        %819 = vmatpush.msra.mxu0 0.0
        %820 = vmatpush.msra.mxu0 0.0
        %821 = vmatpush.msra.mxu0 0.0
        %822 = vmatpush.msra.mxu0 0.0
        %823 = vmatpush.msra.mxu0 0.0
        %824 = vmatpush.msra.mxu0 0.0
        %825 = vmatpush.msra.mxu0 0.0
        %826 = vmatpush.msra.mxu0 0.0
        %827 = vmatpush.msra.mxu0 0.0
        %828 = vmatpush.msra.mxu0 0.0
        %829 = vmatpush.msra.mxu0 0.0
        %830 = vmatpush.msra.mxu0 0.0
        %831 = vmatpush.msra.mxu0 %v814
        %832 = vmatmul.f32.gmra.mxu0 %v811
        %v833 = vpop.f32.mrf.mxu0
        %v834 = vadd.f32 0.0, %v833
        %835 = vdwg.mxu0
        %v836 = vadd.f32 %v806, %v834
        %v837 = vld [vmem:[%s504 + $0x1] sm:$0xf]
        %v838 = vld [vmem:[%s568] sm:$0xf]
        %v840 = vsel %vm326, %v837, 0
        %v843 = vsel %vm330, %v838, 0
        %845 = vmatpush.msra.mxu0 0.0
        %846 = vmatpush.msra.mxu0 0.0
        %847 = vmatpush.msra.mxu0 0.0
        %848 = vmatpush.msra.mxu0 0.0
        %849 = vmatpush.msra.mxu0 0.0
        %850 = vmatpush.msra.mxu0 0.0
        %851 = vmatpush.msra.mxu0 0.0
        %852 = vmatpush.msra.mxu0 0.0
        %853 = vmatpush.msra.mxu0 0.0
        %854 = vmatpush.msra.mxu0 0.0
        %855 = vmatpush.msra.mxu0 0.0
        %856 = vmatpush.msra.mxu0 0.0
        %857 = vmatpush.msra.mxu0 0.0
        %858 = vmatpush.msra.mxu0 0.0
        %859 = vmatpush.msra.mxu0 0.0
        %860 = vmatpush.msra.mxu0 %v843
        %861 = vmatmul.f32.gmra.mxu0 %v840
        %v862 = vpop.f32.mrf.mxu0
        %v863 = vadd.f32 0.0, %v862
        %864 = vdwg.mxu0
        %v865 = vadd.f32 %v836, %v863
        %v866 = vadd.f32 %v865, %v598
        %s867 = scalar_lea.vmem [#allocation2], 8
        %868 = vst.msk [vmem:[%s867 + $0x1] sm:$0xf] %vm602, %v866
        %v869 = vld [vmem:[%s504] sm:$0xf]
        %v870 = vld [vmem:[%s2] sm:$0xf]
        %v871 = vld [vmem:[%s535] sm:$0xf]
        %v872 = vld [vmem:[%s324] sm:$0xf]
        %v874 = vsel %vm326, %v871, 0
        %v877 = vsel %vm330, %v872, 0
        %879 = vmatpush.msra.mxu0 0.0
        %880 = vmatpush.msra.mxu0 0.0
        %881 = vmatpush.msra.mxu0 0.0
        %882 = vmatpush.msra.mxu0 0.0
        %883 = vmatpush.msra.mxu0 0.0
        %884 = vmatpush.msra.mxu0 0.0
        %885 = vmatpush.msra.mxu0 0.0
        %886 = vmatpush.msra.mxu0 0.0
        %887 = vmatpush.msra.mxu0 0.0
        %888 = vmatpush.msra.mxu0 0.0
        %889 = vmatpush.msra.mxu0 0.0
        %890 = vmatpush.msra.mxu0 0.0
        %891 = vmatpush.msra.mxu0 0.0
        %892 = vmatpush.msra.mxu0 0.0
        %893 = vmatpush.msra.mxu0 0.0
        %894 = vmatpush.msra.mxu0 %v877
        %895 = vmatmul.f32.gmra.mxu0 %v874
        %v896 = vpop.f32.mrf.mxu0
        %v897 = vadd.f32 0.0, %v896
        %898 = vdwg.mxu0
        %v900 = vsel %vm326, %v869, 0
        %v903 = vsel %vm330, %v870, 0
        %905 = vmatpush.msra.mxu0 0.0
        %906 = vmatpush.msra.mxu0 0.0
        %907 = vmatpush.msra.mxu0 0.0
        %908 = vmatpush.msra.mxu0 0.0
        %909 = vmatpush.msra.mxu0 0.0
        %910 = vmatpush.msra.mxu0 0.0
        %911 = vmatpush.msra.mxu0 0.0
        %912 = vmatpush.msra.mxu0 0.0
        %913 = vmatpush.msra.mxu0 0.0
        %914 = vmatpush.msra.mxu0 0.0
        %915 = vmatpush.msra.mxu0 0.0
        %916 = vmatpush.msra.mxu0 0.0
        %917 = vmatpush.msra.mxu0 0.0
        %918 = vmatpush.msra.mxu0 0.0
        %919 = vmatpush.msra.mxu0 0.0
        %920 = vmatpush.msra.mxu0 %v903
        %921 = vmatmul.f32.gmra.mxu0 %v900
        %v922 = vpop.f32.mrf.mxu0
        %v923 = vadd.f32 %v897, %v922
        %924 = vdwg.mxu0
        %v925 = vld [vmem:[%s566] sm:$0xf]
        %v926 = vld [vmem:[%s382] sm:$0xf]
        %v928 = vsel %vm326, %v925, 0
        %v931 = vsel %vm330, %v926, 0
        %933 = vmatpush.msra.mxu0 0.0
        %934 = vmatpush.msra.mxu0 0.0
        %935 = vmatpush.msra.mxu0 0.0
        %936 = vmatpush.msra.mxu0 0.0
        %937 = vmatpush.msra.mxu0 0.0
        %938 = vmatpush.msra.mxu0 0.0
        %939 = vmatpush.msra.mxu0 0.0
        %940 = vmatpush.msra.mxu0 0.0
        %941 = vmatpush.msra.mxu0 0.0
        %942 = vmatpush.msra.mxu0 0.0
        %943 = vmatpush.msra.mxu0 0.0
        %944 = vmatpush.msra.mxu0 0.0
        %945 = vmatpush.msra.mxu0 0.0
        %946 = vmatpush.msra.mxu0 0.0
        %947 = vmatpush.msra.mxu0 0.0
        %948 = vmatpush.msra.mxu0 %v931
        %949 = vmatmul.f32.gmra.mxu0 %v928
        %v950 = vpop.f32.mrf.mxu0
        %v951 = vadd.f32 0.0, %v950
        %952 = vdwg.mxu0
        %v953 = vadd.f32 %v923, %v951
        %s954 = scalar_lea.vmem %s291, 24
        %v955 = vld [vmem:[%s954] sm:$0xf]
        %v956 = vld [vmem:[%s413] sm:$0xf]
        %v958 = vsel %vm326, %v955, 0
        %v961 = vsel %vm330, %v956, 0
        %963 = vmatpush.msra.mxu0 0.0
        %964 = vmatpush.msra.mxu0 0.0
        %965 = vmatpush.msra.mxu0 0.0
        %966 = vmatpush.msra.mxu0 0.0
        %967 = vmatpush.msra.mxu0 0.0
        %968 = vmatpush.msra.mxu0 0.0
        %969 = vmatpush.msra.mxu0 0.0
        %970 = vmatpush.msra.mxu0 0.0
        %971 = vmatpush.msra.mxu0 0.0
        %972 = vmatpush.msra.mxu0 0.0
        %973 = vmatpush.msra.mxu0 0.0
        %974 = vmatpush.msra.mxu0 0.0
        %975 = vmatpush.msra.mxu0 0.0
        %976 = vmatpush.msra.mxu0 0.0
        %977 = vmatpush.msra.mxu0 0.0
        %978 = vmatpush.msra.mxu0 %v961
        %979 = vmatmul.f32.gmra.mxu0 %v958
        %v980 = vpop.f32.mrf.mxu0
        %v981 = vadd.f32 0.0, %v980
        %982 = vdwg.mxu0
        %v983 = vadd.f32 %v953, %v981
        %s984 = scalar_lea.vmem %s291, 168
        %v985 = vld [vmem:[%s984] sm:$0xf]
        %v986 = vld [vmem:[%s444] sm:$0xf]
        %v988 = vsel %vm326, %v985, 0
        %v991 = vsel %vm330, %v986, 0
        %993 = vmatpush.msra.mxu0 0.0
        %994 = vmatpush.msra.mxu0 0.0
        %995 = vmatpush.msra.mxu0 0.0
        %996 = vmatpush.msra.mxu0 0.0
        %997 = vmatpush.msra.mxu0 0.0
        %998 = vmatpush.msra.mxu0 0.0
        %999 = vmatpush.msra.mxu0 0.0
        %1000 = vmatpush.msra.mxu0 0.0
        %1001 = vmatpush.msra.mxu0 0.0
        %1002 = vmatpush.msra.mxu0 0.0
        %1003 = vmatpush.msra.mxu0 0.0
        %1004 = vmatpush.msra.mxu0 0.0
        %1005 = vmatpush.msra.mxu0 0.0
        %1006 = vmatpush.msra.mxu0 0.0
        %1007 = vmatpush.msra.mxu0 0.0
        %1008 = vmatpush.msra.mxu0 %v991
        %1009 = vmatmul.f32.gmra.mxu0 %v988
        %v1010 = vpop.f32.mrf.mxu0
        %v1011 = vadd.f32 0.0, %v1010
        %1012 = vdwg.mxu0
        %v1013 = vadd.f32 %v983, %v1011
        %s1014 = scalar_lea.vmem %s291, 312
        %v1015 = vld [vmem:[%s1014] sm:$0xf]
        %v1016 = vld [vmem:[%s475] sm:$0xf]
        %v1018 = vsel %vm326, %v1015, 0
        %v1021 = vsel %vm330, %v1016, 0
        %1023 = vmatpush.msra.mxu0 0.0
        %1024 = vmatpush.msra.mxu0 0.0
        %1025 = vmatpush.msra.mxu0 0.0
        %1026 = vmatpush.msra.mxu0 0.0
        %1027 = vmatpush.msra.mxu0 0.0
        %1028 = vmatpush.msra.mxu0 0.0
        %1029 = vmatpush.msra.mxu0 0.0
        %1030 = vmatpush.msra.mxu0 0.0
        %1031 = vmatpush.msra.mxu0 0.0
        %1032 = vmatpush.msra.mxu0 0.0
        %1033 = vmatpush.msra.mxu0 0.0
        %1034 = vmatpush.msra.mxu0 0.0
        %1035 = vmatpush.msra.mxu0 0.0
        %1036 = vmatpush.msra.mxu0 0.0
        %1037 = vmatpush.msra.mxu0 0.0
        %1038 = vmatpush.msra.mxu0 %v1021
        %1039 = vmatmul.f32.gmra.mxu0 %v1018
        %v1040 = vpop.f32.mrf.mxu0
        %v1041 = vadd.f32 0.0, %v1040
        %1042 = vdwg.mxu0
        %v1043 = vadd.f32 %v1013, %v1041
        %s1044 = scalar_lea.vmem %s291, 32
        %v1045 = vld [vmem:[%s1044] sm:$0xf]
        %v1046 = vld [vmem:[%s506] sm:$0xf]
        %v1048 = vsel %vm326, %v1045, 0
        %v1051 = vsel %vm330, %v1046, 0
        %1053 = vmatpush.msra.mxu0 0.0
        %1054 = vmatpush.msra.mxu0 0.0
        %1055 = vmatpush.msra.mxu0 0.0
        %1056 = vmatpush.msra.mxu0 0.0
        %1057 = vmatpush.msra.mxu0 0.0
        %1058 = vmatpush.msra.mxu0 0.0
        %1059 = vmatpush.msra.mxu0 0.0
        %1060 = vmatpush.msra.mxu0 0.0
        %1061 = vmatpush.msra.mxu0 0.0
        %1062 = vmatpush.msra.mxu0 0.0
        %1063 = vmatpush.msra.mxu0 0.0
        %1064 = vmatpush.msra.mxu0 0.0
        %1065 = vmatpush.msra.mxu0 0.0
        %1066 = vmatpush.msra.mxu0 0.0
        %1067 = vmatpush.msra.mxu0 0.0
        %1068 = vmatpush.msra.mxu0 %v1051
        %1069 = vmatmul.f32.gmra.mxu0 %v1048
        %v1070 = vpop.f32.mrf.mxu0
        %v1071 = vadd.f32 0.0, %v1070
        %1072 = vdwg.mxu0
        %v1073 = vadd.f32 %v1043, %v1071
        %s1074 = scalar_lea.vmem %s291, 176
        %v1075 = vld [vmem:[%s1074] sm:$0xf]
        %v1076 = vld [vmem:[%s537] sm:$0xf]
        %v1078 = vsel %vm326, %v1075, 0
        %v1081 = vsel %vm330, %v1076, 0
        %1083 = vmatpush.msra.mxu0 0.0
        %1084 = vmatpush.msra.mxu0 0.0
        %1085 = vmatpush.msra.mxu0 0.0
        %1086 = vmatpush.msra.mxu0 0.0
        %1087 = vmatpush.msra.mxu0 0.0
        %1088 = vmatpush.msra.mxu0 0.0
        %1089 = vmatpush.msra.mxu0 0.0
        %1090 = vmatpush.msra.mxu0 0.0
        %1091 = vmatpush.msra.mxu0 0.0
        %1092 = vmatpush.msra.mxu0 0.0
        %1093 = vmatpush.msra.mxu0 0.0
        %1094 = vmatpush.msra.mxu0 0.0
        %1095 = vmatpush.msra.mxu0 0.0
        %1096 = vmatpush.msra.mxu0 0.0
        %1097 = vmatpush.msra.mxu0 0.0
        %1098 = vmatpush.msra.mxu0 %v1081
        %1099 = vmatmul.f32.gmra.mxu0 %v1078
        %v1100 = vpop.f32.mrf.mxu0
        %v1101 = vadd.f32 0.0, %v1100
        %1102 = vdwg.mxu0
        %v1103 = vadd.f32 %v1073, %v1101
        %s1104 = scalar_lea.vmem %s291, 320
        %v1105 = vld [vmem:[%s1104] sm:$0xf]
        %v1106 = vld [vmem:[%s568] sm:$0xf]
        %v1108 = vsel %vm326, %v1105, 0
        %v1111 = vsel %vm330, %v1106, 0
        %1113 = vmatpush.msra.mxu0 0.0
        %1114 = vmatpush.msra.mxu0 0.0
        %1115 = vmatpush.msra.mxu0 0.0
        %1116 = vmatpush.msra.mxu0 0.0
        %1117 = vmatpush.msra.mxu0 0.0
        %1118 = vmatpush.msra.mxu0 0.0
        %1119 = vmatpush.msra.mxu0 0.0
        %1120 = vmatpush.msra.mxu0 0.0
        %1121 = vmatpush.msra.mxu0 0.0
        %1122 = vmatpush.msra.mxu0 0.0
        %1123 = vmatpush.msra.mxu0 0.0
        %1124 = vmatpush.msra.mxu0 0.0
        %1125 = vmatpush.msra.mxu0 0.0
        %1126 = vmatpush.msra.mxu0 0.0
        %1127 = vmatpush.msra.mxu0 0.0
        %1128 = vmatpush.msra.mxu0 %v1111
        %1129 = vmatmul.f32.gmra.mxu0 %v1108
        %v1130 = vpop.f32.mrf.mxu0
        %v1131 = vadd.f32 0.0, %v1130
        %1132 = vdwg.mxu0
        %v1133 = vadd.f32 %v1103, %v1131
        %v1134 = vadd.f32 %v1133, %v598
        %s1135 = scalar_lea.vmem [#allocation2], 96
        %1136 = vst.msk [vmem:[%s1135] sm:$0xf] %vm602, %v1134
        %v1137 = vld [vmem:[%s566] sm:$0xf]
        %v1138 = vld [vmem:[%s2] sm:$0xf]
        %v1139 = vld [vmem:[%s807] sm:$0xf]
        %v1140 = vld [vmem:[%s324] sm:$0xf]
        %v1142 = vsel %vm326, %v1139, 0
        %v1145 = vsel %vm330, %v1140, 0
        %1147 = vmatpush.msra.mxu0 0.0
        %1148 = vmatpush.msra.mxu0 0.0
        %1149 = vmatpush.msra.mxu0 0.0
        %1150 = vmatpush.msra.mxu0 0.0
        %1151 = vmatpush.msra.mxu0 0.0
        %1152 = vmatpush.msra.mxu0 0.0
        %1153 = vmatpush.msra.mxu0 0.0
        %1154 = vmatpush.msra.mxu0 0.0
        %1155 = vmatpush.msra.mxu0 0.0
        %1156 = vmatpush.msra.mxu0 0.0
        %1157 = vmatpush.msra.mxu0 0.0
        %1158 = vmatpush.msra.mxu0 0.0
        %1159 = vmatpush.msra.mxu0 0.0
        %1160 = vmatpush.msra.mxu0 0.0
        %1161 = vmatpush.msra.mxu0 0.0
        %1162 = vmatpush.msra.mxu0 %v1145
        %1163 = vmatmul.f32.gmra.mxu0 %v1142
        %v1164 = vpop.f32.mrf.mxu0
        %v1165 = vadd.f32 0.0, %v1164
        %1166 = vdwg.mxu0
        %v1168 = vsel %vm326, %v1137, 0
        %v1171 = vsel %vm330, %v1138, 0
        %1173 = vmatpush.msra.mxu0 0.0
        %1174 = vmatpush.msra.mxu0 0.0
        %1175 = vmatpush.msra.mxu0 0.0
        %1176 = vmatpush.msra.mxu0 0.0
        %1177 = vmatpush.msra.mxu0 0.0
        %1178 = vmatpush.msra.mxu0 0.0
        %1179 = vmatpush.msra.mxu0 0.0
        %1180 = vmatpush.msra.mxu0 0.0
        %1181 = vmatpush.msra.mxu0 0.0
        %1182 = vmatpush.msra.mxu0 0.0
        %1183 = vmatpush.msra.mxu0 0.0
        %1184 = vmatpush.msra.mxu0 0.0
        %1185 = vmatpush.msra.mxu0 0.0
        %1186 = vmatpush.msra.mxu0 0.0
        %1187 = vmatpush.msra.mxu0 0.0
        %1188 = vmatpush.msra.mxu0 %v1171
        %1189 = vmatmul.f32.gmra.mxu0 %v1168
        %v1190 = vpop.f32.mrf.mxu0
        %v1191 = vadd.f32 %v1165, %v1190
        %1192 = vdwg.mxu0
        %v1193 = vld [vmem:[%s504 + $0x1] sm:$0xf]
        %v1194 = vld [vmem:[%s382] sm:$0xf]
        %v1196 = vsel %vm326, %v1193, 0
        %v1199 = vsel %vm330, %v1194, 0
        %1201 = vmatpush.msra.mxu0 0.0
        %1202 = vmatpush.msra.mxu0 0.0
        %1203 = vmatpush.msra.mxu0 0.0
        %1204 = vmatpush.msra.mxu0 0.0
        %1205 = vmatpush.msra.mxu0 0.0
        %1206 = vmatpush.msra.mxu0 0.0
        %1207 = vmatpush.msra.mxu0 0.0
        %1208 = vmatpush.msra.mxu0 0.0
        %1209 = vmatpush.msra.mxu0 0.0
        %1210 = vmatpush.msra.mxu0 0.0
        %1211 = vmatpush.msra.mxu0 0.0
        %1212 = vmatpush.msra.mxu0 0.0
        %1213 = vmatpush.msra.mxu0 0.0
        %1214 = vmatpush.msra.mxu0 0.0
        %1215 = vmatpush.msra.mxu0 0.0
        %1216 = vmatpush.msra.mxu0 %v1199
        %1217 = vmatmul.f32.gmra.mxu0 %v1196
        %v1218 = vpop.f32.mrf.mxu0
        %v1219 = vadd.f32 0.0, %v1218
        %1220 = vdwg.mxu0
        %v1221 = vadd.f32 %v1191, %v1219
        %v1222 = vld [vmem:[%s1014] sm:$0xf]
        %v1223 = vld [vmem:[%s413] sm:$0xf]
        %v1225 = vsel %vm326, %v1222, 0
        %v1228 = vsel %vm330, %v1223, 0
        %1230 = vmatpush.msra.mxu0 0.0
        %1231 = vmatpush.msra.mxu0 0.0
        %1232 = vmatpush.msra.mxu0 0.0
        %1233 = vmatpush.msra.mxu0 0.0
        %1234 = vmatpush.msra.mxu0 0.0
        %1235 = vmatpush.msra.mxu0 0.0
        %1236 = vmatpush.msra.mxu0 0.0
        %1237 = vmatpush.msra.mxu0 0.0
        %1238 = vmatpush.msra.mxu0 0.0
        %1239 = vmatpush.msra.mxu0 0.0
        %1240 = vmatpush.msra.mxu0 0.0
        %1241 = vmatpush.msra.mxu0 0.0
        %1242 = vmatpush.msra.mxu0 0.0
        %1243 = vmatpush.msra.mxu0 0.0
        %1244 = vmatpush.msra.mxu0 0.0
        %1245 = vmatpush.msra.mxu0 %v1228
        %1246 = vmatmul.f32.gmra.mxu0 %v1225
        %v1247 = vpop.f32.mrf.mxu0
        %v1248 = vadd.f32 0.0, %v1247
        %1249 = vdwg.mxu0
        %v1250 = vadd.f32 %v1221, %v1248
        %s1251 = scalar_lea.vmem %s291, 456
        %v1252 = vld [vmem:[%s1251] sm:$0xf]
        %v1253 = vld [vmem:[%s444] sm:$0xf]
        %v1255 = vsel %vm326, %v1252, 0
        %v1258 = vsel %vm330, %v1253, 0
        %1260 = vmatpush.msra.mxu0 0.0
        %1261 = vmatpush.msra.mxu0 0.0
        %1262 = vmatpush.msra.mxu0 0.0
        %1263 = vmatpush.msra.mxu0 0.0
        %1264 = vmatpush.msra.mxu0 0.0
        %1265 = vmatpush.msra.mxu0 0.0
        %1266 = vmatpush.msra.mxu0 0.0
        %1267 = vmatpush.msra.mxu0 0.0
        %1268 = vmatpush.msra.mxu0 0.0
        %1269 = vmatpush.msra.mxu0 0.0
        %1270 = vmatpush.msra.mxu0 0.0
        %1271 = vmatpush.msra.mxu0 0.0
        %1272 = vmatpush.msra.mxu0 0.0
        %1273 = vmatpush.msra.mxu0 0.0
        %1274 = vmatpush.msra.mxu0 0.0
        %1275 = vmatpush.msra.mxu0 %v1258
        %1276 = vmatmul.f32.gmra.mxu0 %v1255
        %v1277 = vpop.f32.mrf.mxu0
        %v1278 = vadd.f32 0.0, %v1277
        %1279 = vdwg.mxu0
        %v1280 = vadd.f32 %v1250, %v1278
        %v1281 = vld [vmem:[%s954 + $0x1] sm:$0xf]
        %v1282 = vld [vmem:[%s475] sm:$0xf]
        %v1284 = vsel %vm326, %v1281, 0
        %v1287 = vsel %vm330, %v1282, 0
        %1289 = vmatpush.msra.mxu0 0.0
        %1290 = vmatpush.msra.mxu0 0.0
        %1291 = vmatpush.msra.mxu0 0.0
        %1292 = vmatpush.msra.mxu0 0.0
        %1293 = vmatpush.msra.mxu0 0.0
        %1294 = vmatpush.msra.mxu0 0.0
        %1295 = vmatpush.msra.mxu0 0.0
        %1296 = vmatpush.msra.mxu0 0.0
        %1297 = vmatpush.msra.mxu0 0.0
        %1298 = vmatpush.msra.mxu0 0.0
        %1299 = vmatpush.msra.mxu0 0.0
        %1300 = vmatpush.msra.mxu0 0.0
        %1301 = vmatpush.msra.mxu0 0.0
        %1302 = vmatpush.msra.mxu0 0.0
        %1303 = vmatpush.msra.mxu0 0.0
        %1304 = vmatpush.msra.mxu0 %v1287
        %1305 = vmatmul.f32.gmra.mxu0 %v1284
        %v1306 = vpop.f32.mrf.mxu0
        %v1307 = vadd.f32 0.0, %v1306
        %1308 = vdwg.mxu0
        %v1309 = vadd.f32 %v1280, %v1307
        %v1310 = vld [vmem:[%s1104] sm:$0xf]
        %v1311 = vld [vmem:[%s506] sm:$0xf]
        %v1313 = vsel %vm326, %v1310, 0
        %v1316 = vsel %vm330, %v1311, 0
        %1318 = vmatpush.msra.mxu0 0.0
        %1319 = vmatpush.msra.mxu0 0.0
        %1320 = vmatpush.msra.mxu0 0.0
        %1321 = vmatpush.msra.mxu0 0.0
        %1322 = vmatpush.msra.mxu0 0.0
        %1323 = vmatpush.msra.mxu0 0.0
        %1324 = vmatpush.msra.mxu0 0.0
        %1325 = vmatpush.msra.mxu0 0.0
        %1326 = vmatpush.msra.mxu0 0.0
        %1327 = vmatpush.msra.mxu0 0.0
        %1328 = vmatpush.msra.mxu0 0.0
        %1329 = vmatpush.msra.mxu0 0.0
        %1330 = vmatpush.msra.mxu0 0.0
        %1331 = vmatpush.msra.mxu0 0.0
        %1332 = vmatpush.msra.mxu0 0.0
        %1333 = vmatpush.msra.mxu0 %v1316
        %1334 = vmatmul.f32.gmra.mxu0 %v1313
        %v1335 = vpop.f32.mrf.mxu0
        %v1336 = vadd.f32 0.0, %v1335
        %1337 = vdwg.mxu0
        %v1338 = vadd.f32 %v1309, %v1336
        %s1339 = scalar_lea.vmem %s291, 464
        %v1340 = vld [vmem:[%s1339] sm:$0xf]
        %v1341 = vld [vmem:[%s537] sm:$0xf]
        %v1343 = vsel %vm326, %v1340, 0
        %v1346 = vsel %vm330, %v1341, 0
        %1348 = vmatpush.msra.mxu0 0.0
        %1349 = vmatpush.msra.mxu0 0.0
        %1350 = vmatpush.msra.mxu0 0.0
        %1351 = vmatpush.msra.mxu0 0.0
        %1352 = vmatpush.msra.mxu0 0.0
        %1353 = vmatpush.msra.mxu0 0.0
        %1354 = vmatpush.msra.mxu0 0.0
        %1355 = vmatpush.msra.mxu0 0.0
        %1356 = vmatpush.msra.mxu0 0.0
        %1357 = vmatpush.msra.mxu0 0.0
        %1358 = vmatpush.msra.mxu0 0.0
        %1359 = vmatpush.msra.mxu0 0.0
        %1360 = vmatpush.msra.mxu0 0.0
        %1361 = vmatpush.msra.mxu0 0.0
        %1362 = vmatpush.msra.mxu0 0.0
        %1363 = vmatpush.msra.mxu0 %v1346
        %1364 = vmatmul.f32.gmra.mxu0 %v1343
        %v1365 = vpop.f32.mrf.mxu0
        %v1366 = vadd.f32 0.0, %v1365
        %1367 = vdwg.mxu0
        %v1368 = vadd.f32 %v1338, %v1366
        %v1369 = vld [vmem:[%s1044 + $0x1] sm:$0xf]
        %v1370 = vld [vmem:[%s568] sm:$0xf]
        %v1372 = vsel %vm326, %v1369, 0
        %v1375 = vsel %vm330, %v1370, 0
        %1377 = vmatpush.msra.mxu0 0.0
        %1378 = vmatpush.msra.mxu0 0.0
        %1379 = vmatpush.msra.mxu0 0.0
        %1380 = vmatpush.msra.mxu0 0.0
        %1381 = vmatpush.msra.mxu0 0.0
        %1382 = vmatpush.msra.mxu0 0.0
        %1383 = vmatpush.msra.mxu0 0.0
        %1384 = vmatpush.msra.mxu0 0.0
        %1385 = vmatpush.msra.mxu0 0.0
        %1386 = vmatpush.msra.mxu0 0.0
        %1387 = vmatpush.msra.mxu0 0.0
        %1388 = vmatpush.msra.mxu0 0.0
        %1389 = vmatpush.msra.mxu0 0.0
        %1390 = vmatpush.msra.mxu0 0.0
        %1391 = vmatpush.msra.mxu0 0.0
        %1392 = vmatpush.msra.mxu0 %v1375
        %1393 = vmatmul.f32.gmra.mxu0 %v1372
        %v1394 = vpop.f32.mrf.mxu0
        %v1395 = vadd.f32 0.0, %v1394
        %1396 = vdwg.mxu0
        %v1397 = vadd.f32 %v1368, %v1395
        %v1398 = vadd.f32 %v1397, %v598
        %s1399 = scalar_lea.vmem [#allocation2], 16
        %1400 = vst.msk [vmem:[%s1399 + $0x1] sm:$0xf] %vm602, %v1398
        %v1401 = vld [vmem:[%s1044] sm:$0xf]
        %v1402 = vld [vmem:[%s2] sm:$0xf]
        %v1403 = vld [vmem:[%s1074] sm:$0xf]
        %v1404 = vld [vmem:[%s324] sm:$0xf]
        %v1406 = vsel %vm326, %v1403, 0
        %v1409 = vsel %vm330, %v1404, 0
        %1411 = vmatpush.msra.mxu0 0.0
        %1412 = vmatpush.msra.mxu0 0.0
        %1413 = vmatpush.msra.mxu0 0.0
        %1414 = vmatpush.msra.mxu0 0.0
        %1415 = vmatpush.msra.mxu0 0.0
        %1416 = vmatpush.msra.mxu0 0.0
        %1417 = vmatpush.msra.mxu0 0.0
        %1418 = vmatpush.msra.mxu0 0.0
        %1419 = vmatpush.msra.mxu0 0.0
        %1420 = vmatpush.msra.mxu0 0.0
        %1421 = vmatpush.msra.mxu0 0.0
        %1422 = vmatpush.msra.mxu0 0.0
        %1423 = vmatpush.msra.mxu0 0.0
        %1424 = vmatpush.msra.mxu0 0.0
        %1425 = vmatpush.msra.mxu0 0.0
        %1426 = vmatpush.msra.mxu0 %v1409
        %1427 = vmatmul.f32.gmra.mxu0 %v1406
        %v1428 = vpop.f32.mrf.mxu0
        %v1429 = vadd.f32 0.0, %v1428
        %1430 = vdwg.mxu0
        %v1432 = vsel %vm326, %v1401, 0
        %v1435 = vsel %vm330, %v1402, 0
        %1437 = vmatpush.msra.mxu0 0.0
        %1438 = vmatpush.msra.mxu0 0.0
        %1439 = vmatpush.msra.mxu0 0.0
        %1440 = vmatpush.msra.mxu0 0.0
        %1441 = vmatpush.msra.mxu0 0.0
        %1442 = vmatpush.msra.mxu0 0.0
        %1443 = vmatpush.msra.mxu0 0.0
        %1444 = vmatpush.msra.mxu0 0.0
        %1445 = vmatpush.msra.mxu0 0.0
        %1446 = vmatpush.msra.mxu0 0.0
        %1447 = vmatpush.msra.mxu0 0.0
        %1448 = vmatpush.msra.mxu0 0.0
        %1449 = vmatpush.msra.mxu0 0.0
        %1450 = vmatpush.msra.mxu0 0.0
        %1451 = vmatpush.msra.mxu0 0.0
        %1452 = vmatpush.msra.mxu0 %v1435
        %1453 = vmatmul.f32.gmra.mxu0 %v1432
        %v1454 = vpop.f32.mrf.mxu0
        %v1455 = vadd.f32 %v1429, %v1454
        %1456 = vdwg.mxu0
        %v1457 = vld [vmem:[%s1104] sm:$0xf]
        %v1458 = vld [vmem:[%s382] sm:$0xf]
        %v1460 = vsel %vm326, %v1457, 0
        %v1463 = vsel %vm330, %v1458, 0
        %1465 = vmatpush.msra.mxu0 0.0
        %1466 = vmatpush.msra.mxu0 0.0
        %1467 = vmatpush.msra.mxu0 0.0
        %1468 = vmatpush.msra.mxu0 0.0
        %1469 = vmatpush.msra.mxu0 0.0
        %1470 = vmatpush.msra.mxu0 0.0
        %1471 = vmatpush.msra.mxu0 0.0
        %1472 = vmatpush.msra.mxu0 0.0
        %1473 = vmatpush.msra.mxu0 0.0
        %1474 = vmatpush.msra.mxu0 0.0
        %1475 = vmatpush.msra.mxu0 0.0
        %1476 = vmatpush.msra.mxu0 0.0
        %1477 = vmatpush.msra.mxu0 0.0
        %1478 = vmatpush.msra.mxu0 0.0
        %1479 = vmatpush.msra.mxu0 0.0
        %1480 = vmatpush.msra.mxu0 %v1463
        %1481 = vmatmul.f32.gmra.mxu0 %v1460
        %v1482 = vpop.f32.mrf.mxu0
        %v1483 = vadd.f32 0.0, %v1482
        %1484 = vdwg.mxu0
        %v1485 = vadd.f32 %v1455, %v1483
        %s1486 = scalar_lea.vmem %s291, 40
        %v1487 = vld [vmem:[%s1486] sm:$0xf]
        %v1488 = vld [vmem:[%s413] sm:$0xf]
        %v1490 = vsel %vm326, %v1487, 0
        %v1493 = vsel %vm330, %v1488, 0
        %1495 = vmatpush.msra.mxu0 0.0
        %1496 = vmatpush.msra.mxu0 0.0
        %1497 = vmatpush.msra.mxu0 0.0
        %1498 = vmatpush.msra.mxu0 0.0
        %1499 = vmatpush.msra.mxu0 0.0
        %1500 = vmatpush.msra.mxu0 0.0
        %1501 = vmatpush.msra.mxu0 0.0
        %1502 = vmatpush.msra.mxu0 0.0
        %1503 = vmatpush.msra.mxu0 0.0
        %1504 = vmatpush.msra.mxu0 0.0
        %1505 = vmatpush.msra.mxu0 0.0
        %1506 = vmatpush.msra.mxu0 0.0
        %1507 = vmatpush.msra.mxu0 0.0
        %1508 = vmatpush.msra.mxu0 0.0
        %1509 = vmatpush.msra.mxu0 0.0
        %1510 = vmatpush.msra.mxu0 %v1493
        %1511 = vmatmul.f32.gmra.mxu0 %v1490
        %v1512 = vpop.f32.mrf.mxu0
        %v1513 = vadd.f32 0.0, %v1512
        %1514 = vdwg.mxu0
        %v1515 = vadd.f32 %v1485, %v1513
        %s1516 = scalar_lea.vmem %s291, 184
        %v1517 = vld [vmem:[%s1516] sm:$0xf]
        %v1518 = vld [vmem:[%s444] sm:$0xf]
        %v1520 = vsel %vm326, %v1517, 0
        %v1523 = vsel %vm330, %v1518, 0
        %1525 = vmatpush.msra.mxu0 0.0
        %1526 = vmatpush.msra.mxu0 0.0
        %1527 = vmatpush.msra.mxu0 0.0
        %1528 = vmatpush.msra.mxu0 0.0
        %1529 = vmatpush.msra.mxu0 0.0
        %1530 = vmatpush.msra.mxu0 0.0
        %1531 = vmatpush.msra.mxu0 0.0
        %1532 = vmatpush.msra.mxu0 0.0
        %1533 = vmatpush.msra.mxu0 0.0
        %1534 = vmatpush.msra.mxu0 0.0
        %1535 = vmatpush.msra.mxu0 0.0
        %1536 = vmatpush.msra.mxu0 0.0
        %1537 = vmatpush.msra.mxu0 0.0
        %1538 = vmatpush.msra.mxu0 0.0
        %1539 = vmatpush.msra.mxu0 0.0
        %1540 = vmatpush.msra.mxu0 %v1523
        %1541 = vmatmul.f32.gmra.mxu0 %v1520
        %v1542 = vpop.f32.mrf.mxu0
        %v1543 = vadd.f32 0.0, %v1542
        %1544 = vdwg.mxu0
        %v1545 = vadd.f32 %v1515, %v1543
        %s1546 = scalar_lea.vmem %s291, 328
        %v1547 = vld [vmem:[%s1546] sm:$0xf]
        %v1548 = vld [vmem:[%s475] sm:$0xf]
        %v1550 = vsel %vm326, %v1547, 0
        %v1553 = vsel %vm330, %v1548, 0
        %1555 = vmatpush.msra.mxu0 0.0
        %1556 = vmatpush.msra.mxu0 0.0
        %1557 = vmatpush.msra.mxu0 0.0
        %1558 = vmatpush.msra.mxu0 0.0
        %1559 = vmatpush.msra.mxu0 0.0
        %1560 = vmatpush.msra.mxu0 0.0
        %1561 = vmatpush.msra.mxu0 0.0
        %1562 = vmatpush.msra.mxu0 0.0
        %1563 = vmatpush.msra.mxu0 0.0
        %1564 = vmatpush.msra.mxu0 0.0
        %1565 = vmatpush.msra.mxu0 0.0
        %1566 = vmatpush.msra.mxu0 0.0
        %1567 = vmatpush.msra.mxu0 0.0
        %1568 = vmatpush.msra.mxu0 0.0
        %1569 = vmatpush.msra.mxu0 0.0
        %1570 = vmatpush.msra.mxu0 %v1553
        %1571 = vmatmul.f32.gmra.mxu0 %v1550
        %v1572 = vpop.f32.mrf.mxu0
        %v1573 = vadd.f32 0.0, %v1572
        %1574 = vdwg.mxu0
        %v1575 = vadd.f32 %v1545, %v1573
        %s1576 = scalar_lea.vmem %s291, 48
        %v1577 = vld [vmem:[%s1576] sm:$0xf]
        %v1578 = vld [vmem:[%s506] sm:$0xf]
        %v1580 = vsel %vm326, %v1577, 0
        %v1583 = vsel %vm330, %v1578, 0
        %1585 = vmatpush.msra.mxu0 0.0
        %1586 = vmatpush.msra.mxu0 0.0
        %1587 = vmatpush.msra.mxu0 0.0
        %1588 = vmatpush.msra.mxu0 0.0
        %1589 = vmatpush.msra.mxu0 0.0
        %1590 = vmatpush.msra.mxu0 0.0
        %1591 = vmatpush.msra.mxu0 0.0
        %1592 = vmatpush.msra.mxu0 0.0
        %1593 = vmatpush.msra.mxu0 0.0
        %1594 = vmatpush.msra.mxu0 0.0
        %1595 = vmatpush.msra.mxu0 0.0
        %1596 = vmatpush.msra.mxu0 0.0
        %1597 = vmatpush.msra.mxu0 0.0
        %1598 = vmatpush.msra.mxu0 0.0
        %1599 = vmatpush.msra.mxu0 0.0
        %1600 = vmatpush.msra.mxu0 %v1583
        %1601 = vmatmul.f32.gmra.mxu0 %v1580
        %v1602 = vpop.f32.mrf.mxu0
        %v1603 = vadd.f32 0.0, %v1602
        %1604 = vdwg.mxu0
        %v1605 = vadd.f32 %v1575, %v1603
        %s1606 = scalar_lea.vmem %s291, 192
        %v1607 = vld [vmem:[%s1606] sm:$0xf]
        %v1608 = vld [vmem:[%s537] sm:$0xf]
        %v1610 = vsel %vm326, %v1607, 0
        %v1613 = vsel %vm330, %v1608, 0
        %1615 = vmatpush.msra.mxu0 0.0
        %1616 = vmatpush.msra.mxu0 0.0
        %1617 = vmatpush.msra.mxu0 0.0
        %1618 = vmatpush.msra.mxu0 0.0
        %1619 = vmatpush.msra.mxu0 0.0
        %1620 = vmatpush.msra.mxu0 0.0
        %1621 = vmatpush.msra.mxu0 0.0
        %1622 = vmatpush.msra.mxu0 0.0
        %1623 = vmatpush.msra.mxu0 0.0
        %1624 = vmatpush.msra.mxu0 0.0
        %1625 = vmatpush.msra.mxu0 0.0
        %1626 = vmatpush.msra.mxu0 0.0
        %1627 = vmatpush.msra.mxu0 0.0
        %1628 = vmatpush.msra.mxu0 0.0
        %1629 = vmatpush.msra.mxu0 0.0
        %1630 = vmatpush.msra.mxu0 %v1613
        %1631 = vmatmul.f32.gmra.mxu0 %v1610
        %v1632 = vpop.f32.mrf.mxu0
        %v1633 = vadd.f32 0.0, %v1632
        %1634 = vdwg.mxu0
        %v1635 = vadd.f32 %v1605, %v1633
        %s1636 = scalar_lea.vmem %s291, 336
        %v1637 = vld [vmem:[%s1636] sm:$0xf]
        %v1638 = vld [vmem:[%s568] sm:$0xf]
        %v1640 = vsel %vm326, %v1637, 0
        %v1643 = vsel %vm330, %v1638, 0
        %1645 = vmatpush.msra.mxu0 0.0
        %1646 = vmatpush.msra.mxu0 0.0
        %1647 = vmatpush.msra.mxu0 0.0
        %1648 = vmatpush.msra.mxu0 0.0
        %1649 = vmatpush.msra.mxu0 0.0
        %1650 = vmatpush.msra.mxu0 0.0
        %1651 = vmatpush.msra.mxu0 0.0
        %1652 = vmatpush.msra.mxu0 0.0
        %1653 = vmatpush.msra.mxu0 0.0
        %1654 = vmatpush.msra.mxu0 0.0
        %1655 = vmatpush.msra.mxu0 0.0
        %1656 = vmatpush.msra.mxu0 0.0
        %1657 = vmatpush.msra.mxu0 0.0
        %1658 = vmatpush.msra.mxu0 0.0
        %1659 = vmatpush.msra.mxu0 0.0
        %1660 = vmatpush.msra.mxu0 %v1643
        %1661 = vmatmul.f32.gmra.mxu0 %v1640
        %v1662 = vpop.f32.mrf.mxu0
        %v1663 = vadd.f32 0.0, %v1662
        %1664 = vdwg.mxu0
        %v1665 = vadd.f32 %v1635, %v1663
        %v1666 = vadd.f32 %v1665, %v598
        %s1667 = scalar_lea.vmem [#allocation2], 104
        %1668 = vst.msk [vmem:[%s1667] sm:$0xf] %vm602, %v1666
        %v1669 = vld [vmem:[%s1104] sm:$0xf]
        %v1670 = vld [vmem:[%s2] sm:$0xf]
        %v1671 = vld [vmem:[%s1339] sm:$0xf]
        %v1672 = vld [vmem:[%s324] sm:$0xf]
        %v1674 = vsel %vm326, %v1671, 0
        %v1677 = vsel %vm330, %v1672, 0
        %1679 = vmatpush.msra.mxu0 0.0
        %1680 = vmatpush.msra.mxu0 0.0
        %1681 = vmatpush.msra.mxu0 0.0
        %1682 = vmatpush.msra.mxu0 0.0
        %1683 = vmatpush.msra.mxu0 0.0
        %1684 = vmatpush.msra.mxu0 0.0
        %1685 = vmatpush.msra.mxu0 0.0
        %1686 = vmatpush.msra.mxu0 0.0
        %1687 = vmatpush.msra.mxu0 0.0
        %1688 = vmatpush.msra.mxu0 0.0
        %1689 = vmatpush.msra.mxu0 0.0
        %1690 = vmatpush.msra.mxu0 0.0
        %1691 = vmatpush.msra.mxu0 0.0
        %1692 = vmatpush.msra.mxu0 0.0
        %1693 = vmatpush.msra.mxu0 0.0
        %1694 = vmatpush.msra.mxu0 %v1677
        %1695 = vmatmul.f32.gmra.mxu0 %v1674
        %v1696 = vpop.f32.mrf.mxu0
        %v1697 = vadd.f32 0.0, %v1696
        %1698 = vdwg.mxu0
        %v1700 = vsel %vm326, %v1669, 0
        %v1703 = vsel %vm330, %v1670, 0
        %1705 = vmatpush.msra.mxu0 0.0
        %1706 = vmatpush.msra.mxu0 0.0
        %1707 = vmatpush.msra.mxu0 0.0
        %1708 = vmatpush.msra.mxu0 0.0
        %1709 = vmatpush.msra.mxu0 0.0
        %1710 = vmatpush.msra.mxu0 0.0
        %1711 = vmatpush.msra.mxu0 0.0
        %1712 = vmatpush.msra.mxu0 0.0
        %1713 = vmatpush.msra.mxu0 0.0
        %1714 = vmatpush.msra.mxu0 0.0
        %1715 = vmatpush.msra.mxu0 0.0
        %1716 = vmatpush.msra.mxu0 0.0
        %1717 = vmatpush.msra.mxu0 0.0
        %1718 = vmatpush.msra.mxu0 0.0
        %1719 = vmatpush.msra.mxu0 0.0
        %1720 = vmatpush.msra.mxu0 %v1703
        %1721 = vmatmul.f32.gmra.mxu0 %v1700
        %v1722 = vpop.f32.mrf.mxu0
        %v1723 = vadd.f32 %v1697, %v1722
        %1724 = vdwg.mxu0
        %v1725 = vld [vmem:[%s1044 + $0x1] sm:$0xf]
        %v1726 = vld [vmem:[%s382] sm:$0xf]
        %v1728 = vsel %vm326, %v1725, 0
        %v1731 = vsel %vm330, %v1726, 0
        %1733 = vmatpush.msra.mxu0 0.0
        %1734 = vmatpush.msra.mxu0 0.0
        %1735 = vmatpush.msra.mxu0 0.0
        %1736 = vmatpush.msra.mxu0 0.0
        %1737 = vmatpush.msra.mxu0 0.0
        %1738 = vmatpush.msra.mxu0 0.0
        %1739 = vmatpush.msra.mxu0 0.0
        %1740 = vmatpush.msra.mxu0 0.0
        %1741 = vmatpush.msra.mxu0 0.0
        %1742 = vmatpush.msra.mxu0 0.0
        %1743 = vmatpush.msra.mxu0 0.0
        %1744 = vmatpush.msra.mxu0 0.0
        %1745 = vmatpush.msra.mxu0 0.0
        %1746 = vmatpush.msra.mxu0 0.0
        %1747 = vmatpush.msra.mxu0 0.0
        %1748 = vmatpush.msra.mxu0 %v1731
        %1749 = vmatmul.f32.gmra.mxu0 %v1728
        %v1750 = vpop.f32.mrf.mxu0
        %v1751 = vadd.f32 0.0, %v1750
        %1752 = vdwg.mxu0
        %v1753 = vadd.f32 %v1723, %v1751
        %v1754 = vld [vmem:[%s1546] sm:$0xf]
        %v1755 = vld [vmem:[%s413] sm:$0xf]
        %v1757 = vsel %vm326, %v1754, 0
        %v1760 = vsel %vm330, %v1755, 0
        %1762 = vmatpush.msra.mxu0 0.0
        %1763 = vmatpush.msra.mxu0 0.0
        %1764 = vmatpush.msra.mxu0 0.0
        %1765 = vmatpush.msra.mxu0 0.0
        %1766 = vmatpush.msra.mxu0 0.0
        %1767 = vmatpush.msra.mxu0 0.0
        %1768 = vmatpush.msra.mxu0 0.0
        %1769 = vmatpush.msra.mxu0 0.0
        %1770 = vmatpush.msra.mxu0 0.0
        %1771 = vmatpush.msra.mxu0 0.0
        %1772 = vmatpush.msra.mxu0 0.0
        %1773 = vmatpush.msra.mxu0 0.0
        %1774 = vmatpush.msra.mxu0 0.0
        %1775 = vmatpush.msra.mxu0 0.0
        %1776 = vmatpush.msra.mxu0 0.0
        %1777 = vmatpush.msra.mxu0 %v1760
        %1778 = vmatmul.f32.gmra.mxu0 %v1757
        %v1779 = vpop.f32.mrf.mxu0
        %v1780 = vadd.f32 0.0, %v1779
        %1781 = vdwg.mxu0
        %v1782 = vadd.f32 %v1753, %v1780
        %s1783 = scalar_lea.vmem %s291, 472
        %v1784 = vld [vmem:[%s1783] sm:$0xf]
        %v1785 = vld [vmem:[%s444] sm:$0xf]
        %v1787 = vsel %vm326, %v1784, 0
        %v1790 = vsel %vm330, %v1785, 0
        %1792 = vmatpush.msra.mxu0 0.0
        %1793 = vmatpush.msra.mxu0 0.0
        %1794 = vmatpush.msra.mxu0 0.0
        %1795 = vmatpush.msra.mxu0 0.0
        %1796 = vmatpush.msra.mxu0 0.0
        %1797 = vmatpush.msra.mxu0 0.0
        %1798 = vmatpush.msra.mxu0 0.0
        %1799 = vmatpush.msra.mxu0 0.0
        %1800 = vmatpush.msra.mxu0 0.0
        %1801 = vmatpush.msra.mxu0 0.0
        %1802 = vmatpush.msra.mxu0 0.0
        %1803 = vmatpush.msra.mxu0 0.0
        %1804 = vmatpush.msra.mxu0 0.0
        %1805 = vmatpush.msra.mxu0 0.0
        %1806 = vmatpush.msra.mxu0 0.0
        %1807 = vmatpush.msra.mxu0 %v1790
        %1808 = vmatmul.f32.gmra.mxu0 %v1787
        %v1809 = vpop.f32.mrf.mxu0
        %v1810 = vadd.f32 0.0, %v1809
        %1811 = vdwg.mxu0
        %v1812 = vadd.f32 %v1782, %v1810
        %v1813 = vld [vmem:[%s1486 + $0x1] sm:$0xf]
        %v1814 = vld [vmem:[%s475] sm:$0xf]
        %v1816 = vsel %vm326, %v1813, 0
        %v1819 = vsel %vm330, %v1814, 0
        %1821 = vmatpush.msra.mxu0 0.0
        %1822 = vmatpush.msra.mxu0 0.0
        %1823 = vmatpush.msra.mxu0 0.0
        %1824 = vmatpush.msra.mxu0 0.0
        %1825 = vmatpush.msra.mxu0 0.0
        %1826 = vmatpush.msra.mxu0 0.0
        %1827 = vmatpush.msra.mxu0 0.0
        %1828 = vmatpush.msra.mxu0 0.0
        %1829 = vmatpush.msra.mxu0 0.0
        %1830 = vmatpush.msra.mxu0 0.0
        %1831 = vmatpush.msra.mxu0 0.0
        %1832 = vmatpush.msra.mxu0 0.0
        %1833 = vmatpush.msra.mxu0 0.0
        %1834 = vmatpush.msra.mxu0 0.0
        %1835 = vmatpush.msra.mxu0 0.0
        %1836 = vmatpush.msra.mxu0 %v1819
        %1837 = vmatmul.f32.gmra.mxu0 %v1816
        %v1838 = vpop.f32.mrf.mxu0
        %v1839 = vadd.f32 0.0, %v1838
        %1840 = vdwg.mxu0
        %v1841 = vadd.f32 %v1812, %v1839
        %v1842 = vld [vmem:[%s1636] sm:$0xf]
        %v1843 = vld [vmem:[%s506] sm:$0xf]
        %v1845 = vsel %vm326, %v1842, 0
        %v1848 = vsel %vm330, %v1843, 0
        %1850 = vmatpush.msra.mxu0 0.0
        %1851 = vmatpush.msra.mxu0 0.0
        %1852 = vmatpush.msra.mxu0 0.0
        %1853 = vmatpush.msra.mxu0 0.0
        %1854 = vmatpush.msra.mxu0 0.0
        %1855 = vmatpush.msra.mxu0 0.0
        %1856 = vmatpush.msra.mxu0 0.0
        %1857 = vmatpush.msra.mxu0 0.0
        %1858 = vmatpush.msra.mxu0 0.0
        %1859 = vmatpush.msra.mxu0 0.0
        %1860 = vmatpush.msra.mxu0 0.0
        %1861 = vmatpush.msra.mxu0 0.0
        %1862 = vmatpush.msra.mxu0 0.0
        %1863 = vmatpush.msra.mxu0 0.0
        %1864 = vmatpush.msra.mxu0 0.0
        %1865 = vmatpush.msra.mxu0 %v1848
        %1866 = vmatmul.f32.gmra.mxu0 %v1845
        %v1867 = vpop.f32.mrf.mxu0
        %v1868 = vadd.f32 0.0, %v1867
        %1869 = vdwg.mxu0
        %v1870 = vadd.f32 %v1841, %v1868
        %s1871 = scalar_lea.vmem %s291, 480
        %v1872 = vld [vmem:[%s1871] sm:$0xf]
        %v1873 = vld [vmem:[%s537] sm:$0xf]
        %v1875 = vsel %vm326, %v1872, 0
        %v1878 = vsel %vm330, %v1873, 0
        %1880 = vmatpush.msra.mxu0 0.0
        %1881 = vmatpush.msra.mxu0 0.0
        %1882 = vmatpush.msra.mxu0 0.0
        %1883 = vmatpush.msra.mxu0 0.0
        %1884 = vmatpush.msra.mxu0 0.0
        %1885 = vmatpush.msra.mxu0 0.0
        %1886 = vmatpush.msra.mxu0 0.0
        %1887 = vmatpush.msra.mxu0 0.0
        %1888 = vmatpush.msra.mxu0 0.0
        %1889 = vmatpush.msra.mxu0 0.0
        %1890 = vmatpush.msra.mxu0 0.0
        %1891 = vmatpush.msra.mxu0 0.0
        %1892 = vmatpush.msra.mxu0 0.0
        %1893 = vmatpush.msra.mxu0 0.0
        %1894 = vmatpush.msra.mxu0 0.0
        %1895 = vmatpush.msra.mxu0 %v1878
        %1896 = vmatmul.f32.gmra.mxu0 %v1875
        %v1897 = vpop.f32.mrf.mxu0
        %v1898 = vadd.f32 0.0, %v1897
        %1899 = vdwg.mxu0
        %v1900 = vadd.f32 %v1870, %v1898
        %v1901 = vld [vmem:[%s1576 + $0x1] sm:$0xf]
        %v1902 = vld [vmem:[%s568] sm:$0xf]
        %v1904 = vsel %vm326, %v1901, 0
        %v1907 = vsel %vm330, %v1902, 0
        %1909 = vmatpush.msra.mxu0 0.0
        %1910 = vmatpush.msra.mxu0 0.0
        %1911 = vmatpush.msra.mxu0 0.0
        %1912 = vmatpush.msra.mxu0 0.0
        %1913 = vmatpush.msra.mxu0 0.0
        %1914 = vmatpush.msra.mxu0 0.0
        %1915 = vmatpush.msra.mxu0 0.0
        %1916 = vmatpush.msra.mxu0 0.0
        %1917 = vmatpush.msra.mxu0 0.0
        %1918 = vmatpush.msra.mxu0 0.0
        %1919 = vmatpush.msra.mxu0 0.0
        %1920 = vmatpush.msra.mxu0 0.0
        %1921 = vmatpush.msra.mxu0 0.0
        %1922 = vmatpush.msra.mxu0 0.0
        %1923 = vmatpush.msra.mxu0 0.0
        %1924 = vmatpush.msra.mxu0 %v1907
        %1925 = vmatmul.f32.gmra.mxu0 %v1904
        %v1926 = vpop.f32.mrf.mxu0
        %v1927 = vadd.f32 0.0, %v1926
        %1928 = vdwg.mxu0
        %v1929 = vadd.f32 %v1900, %v1927
        %v1930 = vadd.f32 %v1929, %v598
        %s1931 = scalar_lea.vmem [#allocation2], 24
        %1932 = vst.msk [vmem:[%s1931 + $0x1] sm:$0xf] %vm602, %v1930
        %v1933 = vld [vmem:[%s1576] sm:$0xf]
        %v1934 = vld [vmem:[%s2] sm:$0xf]
        %v1935 = vld [vmem:[%s1606] sm:$0xf]
        %v1936 = vld [vmem:[%s324] sm:$0xf]
        %v1938 = vsel %vm326, %v1935, 0
        %v1941 = vsel %vm330, %v1936, 0
        %1943 = vmatpush.msra.mxu0 0.0
        %1944 = vmatpush.msra.mxu0 0.0
        %1945 = vmatpush.msra.mxu0 0.0
        %1946 = vmatpush.msra.mxu0 0.0
        %1947 = vmatpush.msra.mxu0 0.0
        %1948 = vmatpush.msra.mxu0 0.0
        %1949 = vmatpush.msra.mxu0 0.0
        %1950 = vmatpush.msra.mxu0 0.0
        %1951 = vmatpush.msra.mxu0 0.0
        %1952 = vmatpush.msra.mxu0 0.0
        %1953 = vmatpush.msra.mxu0 0.0
        %1954 = vmatpush.msra.mxu0 0.0
        %1955 = vmatpush.msra.mxu0 0.0
        %1956 = vmatpush.msra.mxu0 0.0
        %1957 = vmatpush.msra.mxu0 0.0
        %1958 = vmatpush.msra.mxu0 %v1941
        %1959 = vmatmul.f32.gmra.mxu0 %v1938
        %v1960 = vpop.f32.mrf.mxu0
        %v1961 = vadd.f32 0.0, %v1960
        %1962 = vdwg.mxu0
        %v1964 = vsel %vm326, %v1933, 0
        %v1967 = vsel %vm330, %v1934, 0
        %1969 = vmatpush.msra.mxu0 0.0
        %1970 = vmatpush.msra.mxu0 0.0
        %1971 = vmatpush.msra.mxu0 0.0
        %1972 = vmatpush.msra.mxu0 0.0
        %1973 = vmatpush.msra.mxu0 0.0
        %1974 = vmatpush.msra.mxu0 0.0
        %1975 = vmatpush.msra.mxu0 0.0
        %1976 = vmatpush.msra.mxu0 0.0
        %1977 = vmatpush.msra.mxu0 0.0
        %1978 = vmatpush.msra.mxu0 0.0
        %1979 = vmatpush.msra.mxu0 0.0
        %1980 = vmatpush.msra.mxu0 0.0
        %1981 = vmatpush.msra.mxu0 0.0
        %1982 = vmatpush.msra.mxu0 0.0
        %1983 = vmatpush.msra.mxu0 0.0
        %1984 = vmatpush.msra.mxu0 %v1967
        %1985 = vmatmul.f32.gmra.mxu0 %v1964
        %v1986 = vpop.f32.mrf.mxu0
        %v1987 = vadd.f32 %v1961, %v1986
        %1988 = vdwg.mxu0
        %v1989 = vld [vmem:[%s1636] sm:$0xf]
        %v1990 = vld [vmem:[%s382] sm:$0xf]
        %v1992 = vsel %vm326, %v1989, 0
        %v1995 = vsel %vm330, %v1990, 0
        %1997 = vmatpush.msra.mxu0 0.0
        %1998 = vmatpush.msra.mxu0 0.0
        %1999 = vmatpush.msra.mxu0 0.0
        %2000 = vmatpush.msra.mxu0 0.0
        %2001 = vmatpush.msra.mxu0 0.0
        %2002 = vmatpush.msra.mxu0 0.0
        %2003 = vmatpush.msra.mxu0 0.0
        %2004 = vmatpush.msra.mxu0 0.0
        %2005 = vmatpush.msra.mxu0 0.0
        %2006 = vmatpush.msra.mxu0 0.0
        %2007 = vmatpush.msra.mxu0 0.0
        %2008 = vmatpush.msra.mxu0 0.0
        %2009 = vmatpush.msra.mxu0 0.0
        %2010 = vmatpush.msra.mxu0 0.0
        %2011 = vmatpush.msra.mxu0 0.0
        %2012 = vmatpush.msra.mxu0 %v1995
        %2013 = vmatmul.f32.gmra.mxu0 %v1992
        %v2014 = vpop.f32.mrf.mxu0
        %v2015 = vadd.f32 0.0, %v2014
        %2016 = vdwg.mxu0
        %v2017 = vadd.f32 %v1987, %v2015
        %s2018 = scalar_lea.vmem %s291, 56
        %v2019 = vld [vmem:[%s2018] sm:$0xf]
        %v2020 = vld [vmem:[%s413] sm:$0xf]
        %v2022 = vsel %vm326, %v2019, 0
        %v2025 = vsel %vm330, %v2020, 0
        %2027 = vmatpush.msra.mxu0 0.0
        %2028 = vmatpush.msra.mxu0 0.0
        %2029 = vmatpush.msra.mxu0 0.0
        %2030 = vmatpush.msra.mxu0 0.0
        %2031 = vmatpush.msra.mxu0 0.0
        %2032 = vmatpush.msra.mxu0 0.0
        %2033 = vmatpush.msra.mxu0 0.0
        %2034 = vmatpush.msra.mxu0 0.0
        %2035 = vmatpush.msra.mxu0 0.0
        %2036 = vmatpush.msra.mxu0 0.0
        %2037 = vmatpush.msra.mxu0 0.0
        %2038 = vmatpush.msra.mxu0 0.0
        %2039 = vmatpush.msra.mxu0 0.0
        %2040 = vmatpush.msra.mxu0 0.0
        %2041 = vmatpush.msra.mxu0 0.0
        %2042 = vmatpush.msra.mxu0 %v2025
        %2043 = vmatmul.f32.gmra.mxu0 %v2022
        %v2044 = vpop.f32.mrf.mxu0
        %v2045 = vadd.f32 0.0, %v2044
        %2046 = vdwg.mxu0
        %v2047 = vadd.f32 %v2017, %v2045
        %s2048 = scalar_lea.vmem %s291, 200
        %v2049 = vld [vmem:[%s2048] sm:$0xf]
        %v2050 = vld [vmem:[%s444] sm:$0xf]
        %v2052 = vsel %vm326, %v2049, 0
        %v2055 = vsel %vm330, %v2050, 0
        %2057 = vmatpush.msra.mxu0 0.0
        %2058 = vmatpush.msra.mxu0 0.0
        %2059 = vmatpush.msra.mxu0 0.0
        %2060 = vmatpush.msra.mxu0 0.0
        %2061 = vmatpush.msra.mxu0 0.0
        %2062 = vmatpush.msra.mxu0 0.0
        %2063 = vmatpush.msra.mxu0 0.0
        %2064 = vmatpush.msra.mxu0 0.0
        %2065 = vmatpush.msra.mxu0 0.0
        %2066 = vmatpush.msra.mxu0 0.0
        %2067 = vmatpush.msra.mxu0 0.0
        %2068 = vmatpush.msra.mxu0 0.0
        %2069 = vmatpush.msra.mxu0 0.0
        %2070 = vmatpush.msra.mxu0 0.0
        %2071 = vmatpush.msra.mxu0 0.0
        %2072 = vmatpush.msra.mxu0 %v2055
        %2073 = vmatmul.f32.gmra.mxu0 %v2052
        %v2074 = vpop.f32.mrf.mxu0
        %v2075 = vadd.f32 0.0, %v2074
        %2076 = vdwg.mxu0
        %v2077 = vadd.f32 %v2047, %v2075
        %s2078 = scalar_lea.vmem %s291, 344
        %v2079 = vld [vmem:[%s2078] sm:$0xf]
        %v2080 = vld [vmem:[%s475] sm:$0xf]
        %v2082 = vsel %vm326, %v2079, 0
        %v2085 = vsel %vm330, %v2080, 0
        %2087 = vmatpush.msra.mxu0 0.0
        %2088 = vmatpush.msra.mxu0 0.0
        %2089 = vmatpush.msra.mxu0 0.0
        %2090 = vmatpush.msra.mxu0 0.0
        %2091 = vmatpush.msra.mxu0 0.0
        %2092 = vmatpush.msra.mxu0 0.0
        %2093 = vmatpush.msra.mxu0 0.0
        %2094 = vmatpush.msra.mxu0 0.0
        %2095 = vmatpush.msra.mxu0 0.0
        %2096 = vmatpush.msra.mxu0 0.0
        %2097 = vmatpush.msra.mxu0 0.0
        %2098 = vmatpush.msra.mxu0 0.0
        %2099 = vmatpush.msra.mxu0 0.0
        %2100 = vmatpush.msra.mxu0 0.0
        %2101 = vmatpush.msra.mxu0 0.0
        %2102 = vmatpush.msra.mxu0 %v2085
        %2103 = vmatmul.f32.gmra.mxu0 %v2082
        %v2104 = vpop.f32.mrf.mxu0
        %v2105 = vadd.f32 0.0, %v2104
        %2106 = vdwg.mxu0
        %v2107 = vadd.f32 %v2077, %v2105
        %s2108 = scalar_lea.vmem %s291, 64
        %v2109 = vld [vmem:[%s2108] sm:$0xf]
        %v2110 = vld [vmem:[%s506] sm:$0xf]
        %v2112 = vsel %vm326, %v2109, 0
        %v2115 = vsel %vm330, %v2110, 0
        %2117 = vmatpush.msra.mxu0 0.0
        %2118 = vmatpush.msra.mxu0 0.0
        %2119 = vmatpush.msra.mxu0 0.0
        %2120 = vmatpush.msra.mxu0 0.0
        %2121 = vmatpush.msra.mxu0 0.0
        %2122 = vmatpush.msra.mxu0 0.0
        %2123 = vmatpush.msra.mxu0 0.0
        %2124 = vmatpush.msra.mxu0 0.0
        %2125 = vmatpush.msra.mxu0 0.0
        %2126 = vmatpush.msra.mxu0 0.0
        %2127 = vmatpush.msra.mxu0 0.0
        %2128 = vmatpush.msra.mxu0 0.0
        %2129 = vmatpush.msra.mxu0 0.0
        %2130 = vmatpush.msra.mxu0 0.0
        %2131 = vmatpush.msra.mxu0 0.0
        %2132 = vmatpush.msra.mxu0 %v2115
        %2133 = vmatmul.f32.gmra.mxu0 %v2112
        %v2134 = vpop.f32.mrf.mxu0
        %v2135 = vadd.f32 0.0, %v2134
        %2136 = vdwg.mxu0
        %v2137 = vadd.f32 %v2107, %v2135
        %s2138 = scalar_lea.vmem %s291, 208
        %v2139 = vld [vmem:[%s2138] sm:$0xf]
        %v2140 = vld [vmem:[%s537] sm:$0xf]
        %v2142 = vsel %vm326, %v2139, 0
        %v2145 = vsel %vm330, %v2140, 0
        %2147 = vmatpush.msra.mxu0 0.0
        %2148 = vmatpush.msra.mxu0 0.0
        %2149 = vmatpush.msra.mxu0 0.0
        %2150 = vmatpush.msra.mxu0 0.0
        %2151 = vmatpush.msra.mxu0 0.0
        %2152 = vmatpush.msra.mxu0 0.0
        %2153 = vmatpush.msra.mxu0 0.0
        %2154 = vmatpush.msra.mxu0 0.0
        %2155 = vmatpush.msra.mxu0 0.0
        %2156 = vmatpush.msra.mxu0 0.0
        %2157 = vmatpush.msra.mxu0 0.0
        %2158 = vmatpush.msra.mxu0 0.0
        %2159 = vmatpush.msra.mxu0 0.0
        %2160 = vmatpush.msra.mxu0 0.0
        %2161 = vmatpush.msra.mxu0 0.0
        %2162 = vmatpush.msra.mxu0 %v2145
        %2163 = vmatmul.f32.gmra.mxu0 %v2142
        %v2164 = vpop.f32.mrf.mxu0
        %v2165 = vadd.f32 0.0, %v2164
        %2166 = vdwg.mxu0
        %v2167 = vadd.f32 %v2137, %v2165
        %s2168 = scalar_lea.vmem %s291, 352
        %v2169 = vld [vmem:[%s2168] sm:$0xf]
        %v2170 = vld [vmem:[%s568] sm:$0xf]
        %v2172 = vsel %vm326, %v2169, 0
        %v2175 = vsel %vm330, %v2170, 0
        %2177 = vmatpush.msra.mxu0 0.0
        %2178 = vmatpush.msra.mxu0 0.0
        %2179 = vmatpush.msra.mxu0 0.0
        %2180 = vmatpush.msra.mxu0 0.0
        %2181 = vmatpush.msra.mxu0 0.0
        %2182 = vmatpush.msra.mxu0 0.0
        %2183 = vmatpush.msra.mxu0 0.0
        %2184 = vmatpush.msra.mxu0 0.0
        %2185 = vmatpush.msra.mxu0 0.0
        %2186 = vmatpush.msra.mxu0 0.0
        %2187 = vmatpush.msra.mxu0 0.0
        %2188 = vmatpush.msra.mxu0 0.0
        %2189 = vmatpush.msra.mxu0 0.0
        %2190 = vmatpush.msra.mxu0 0.0
        %2191 = vmatpush.msra.mxu0 0.0
        %2192 = vmatpush.msra.mxu0 %v2175
        %2193 = vmatmul.f32.gmra.mxu0 %v2172
        %v2194 = vpop.f32.mrf.mxu0
        %v2195 = vadd.f32 0.0, %v2194
        %2196 = vdwg.mxu0
        %v2197 = vadd.f32 %v2167, %v2195
        %v2198 = vadd.f32 %v2197, %v598
        %s2199 = scalar_lea.vmem [#allocation2], 112
        %2200 = vst.msk [vmem:[%s2199] sm:$0xf] %vm602, %v2198
        %v2201 = vld [vmem:[%s1636] sm:$0xf]
        %v2202 = vld [vmem:[%s2] sm:$0xf]
        %v2203 = vld [vmem:[%s1871] sm:$0xf]
        %v2204 = vld [vmem:[%s324] sm:$0xf]
        %v2206 = vsel %vm326, %v2203, 0
        %v2209 = vsel %vm330, %v2204, 0
        %2211 = vmatpush.msra.mxu0 0.0
        %2212 = vmatpush.msra.mxu0 0.0
        %2213 = vmatpush.msra.mxu0 0.0
        %2214 = vmatpush.msra.mxu0 0.0
        %2215 = vmatpush.msra.mxu0 0.0
        %2216 = vmatpush.msra.mxu0 0.0
        %2217 = vmatpush.msra.mxu0 0.0
        %2218 = vmatpush.msra.mxu0 0.0
        %2219 = vmatpush.msra.mxu0 0.0
        %2220 = vmatpush.msra.mxu0 0.0
        %2221 = vmatpush.msra.mxu0 0.0
        %2222 = vmatpush.msra.mxu0 0.0
        %2223 = vmatpush.msra.mxu0 0.0
        %2224 = vmatpush.msra.mxu0 0.0
        %2225 = vmatpush.msra.mxu0 0.0
        %2226 = vmatpush.msra.mxu0 %v2209
        %2227 = vmatmul.f32.gmra.mxu0 %v2206
        %v2228 = vpop.f32.mrf.mxu0
        %v2229 = vadd.f32 0.0, %v2228
        %2230 = vdwg.mxu0
        %v2232 = vsel %vm326, %v2201, 0
        %v2235 = vsel %vm330, %v2202, 0
        %2237 = vmatpush.msra.mxu0 0.0
        %2238 = vmatpush.msra.mxu0 0.0
        %2239 = vmatpush.msra.mxu0 0.0
        %2240 = vmatpush.msra.mxu0 0.0
        %2241 = vmatpush.msra.mxu0 0.0
        %2242 = vmatpush.msra.mxu0 0.0
        %2243 = vmatpush.msra.mxu0 0.0
        %2244 = vmatpush.msra.mxu0 0.0
        %2245 = vmatpush.msra.mxu0 0.0
        %2246 = vmatpush.msra.mxu0 0.0
        %2247 = vmatpush.msra.mxu0 0.0
        %2248 = vmatpush.msra.mxu0 0.0
        %2249 = vmatpush.msra.mxu0 0.0
        %2250 = vmatpush.msra.mxu0 0.0
        %2251 = vmatpush.msra.mxu0 0.0
        %2252 = vmatpush.msra.mxu0 %v2235
        %2253 = vmatmul.f32.gmra.mxu0 %v2232
        %v2254 = vpop.f32.mrf.mxu0
        %v2255 = vadd.f32 %v2229, %v2254
        %2256 = vdwg.mxu0
        %v2257 = vld [vmem:[%s1576 + $0x1] sm:$0xf]
        %v2258 = vld [vmem:[%s382] sm:$0xf]
        %v2260 = vsel %vm326, %v2257, 0
        %v2263 = vsel %vm330, %v2258, 0
        %2265 = vmatpush.msra.mxu0 0.0
        %2266 = vmatpush.msra.mxu0 0.0
        %2267 = vmatpush.msra.mxu0 0.0
        %2268 = vmatpush.msra.mxu0 0.0
        %2269 = vmatpush.msra.mxu0 0.0
        %2270 = vmatpush.msra.mxu0 0.0
        %2271 = vmatpush.msra.mxu0 0.0
        %2272 = vmatpush.msra.mxu0 0.0
        %2273 = vmatpush.msra.mxu0 0.0
        %2274 = vmatpush.msra.mxu0 0.0
        %2275 = vmatpush.msra.mxu0 0.0
        %2276 = vmatpush.msra.mxu0 0.0
        %2277 = vmatpush.msra.mxu0 0.0
        %2278 = vmatpush.msra.mxu0 0.0
        %2279 = vmatpush.msra.mxu0 0.0
        %2280 = vmatpush.msra.mxu0 %v2263
        %2281 = vmatmul.f32.gmra.mxu0 %v2260
        %v2282 = vpop.f32.mrf.mxu0
        %v2283 = vadd.f32 0.0, %v2282
        %2284 = vdwg.mxu0
        %v2285 = vadd.f32 %v2255, %v2283
        %v2286 = vld [vmem:[%s2078] sm:$0xf]
        %v2287 = vld [vmem:[%s413] sm:$0xf]
        %v2289 = vsel %vm326, %v2286, 0
        %v2292 = vsel %vm330, %v2287, 0
        %2294 = vmatpush.msra.mxu0 0.0
        %2295 = vmatpush.msra.mxu0 0.0
        %2296 = vmatpush.msra.mxu0 0.0
        %2297 = vmatpush.msra.mxu0 0.0
        %2298 = vmatpush.msra.mxu0 0.0
        %2299 = vmatpush.msra.mxu0 0.0
        %2300 = vmatpush.msra.mxu0 0.0
        %2301 = vmatpush.msra.mxu0 0.0
        %2302 = vmatpush.msra.mxu0 0.0
        %2303 = vmatpush.msra.mxu0 0.0
        %2304 = vmatpush.msra.mxu0 0.0
        %2305 = vmatpush.msra.mxu0 0.0
        %2306 = vmatpush.msra.mxu0 0.0
        %2307 = vmatpush.msra.mxu0 0.0
        %2308 = vmatpush.msra.mxu0 0.0
        %2309 = vmatpush.msra.mxu0 %v2292
        %2310 = vmatmul.f32.gmra.mxu0 %v2289
        %v2311 = vpop.f32.mrf.mxu0
        %v2312 = vadd.f32 0.0, %v2311
        %2313 = vdwg.mxu0
        %v2314 = vadd.f32 %v2285, %v2312
        %s2315 = scalar_lea.vmem %s291, 488
        %v2316 = vld [vmem:[%s2315] sm:$0xf]
        %v2317 = vld [vmem:[%s444] sm:$0xf]
        %v2319 = vsel %vm326, %v2316, 0
        %v2322 = vsel %vm330, %v2317, 0
        %2324 = vmatpush.msra.mxu0 0.0
        %2325 = vmatpush.msra.mxu0 0.0
        %2326 = vmatpush.msra.mxu0 0.0
        %2327 = vmatpush.msra.mxu0 0.0
        %2328 = vmatpush.msra.mxu0 0.0
        %2329 = vmatpush.msra.mxu0 0.0
        %2330 = vmatpush.msra.mxu0 0.0
        %2331 = vmatpush.msra.mxu0 0.0
        %2332 = vmatpush.msra.mxu0 0.0
        %2333 = vmatpush.msra.mxu0 0.0
        %2334 = vmatpush.msra.mxu0 0.0
        %2335 = vmatpush.msra.mxu0 0.0
        %2336 = vmatpush.msra.mxu0 0.0
        %2337 = vmatpush.msra.mxu0 0.0
        %2338 = vmatpush.msra.mxu0 0.0
        %2339 = vmatpush.msra.mxu0 %v2322
        %2340 = vmatmul.f32.gmra.mxu0 %v2319
        %v2341 = vpop.f32.mrf.mxu0
        %v2342 = vadd.f32 0.0, %v2341
        %2343 = vdwg.mxu0
        %v2344 = vadd.f32 %v2314, %v2342
        %v2345 = vld [vmem:[%s2018 + $0x1] sm:$0xf]
        %v2346 = vld [vmem:[%s475] sm:$0xf]
        %v2348 = vsel %vm326, %v2345, 0
        %v2351 = vsel %vm330, %v2346, 0
        %2353 = vmatpush.msra.mxu0 0.0
        %2354 = vmatpush.msra.mxu0 0.0
        %2355 = vmatpush.msra.mxu0 0.0
        %2356 = vmatpush.msra.mxu0 0.0
        %2357 = vmatpush.msra.mxu0 0.0
        %2358 = vmatpush.msra.mxu0 0.0
        %2359 = vmatpush.msra.mxu0 0.0
        %2360 = vmatpush.msra.mxu0 0.0
        %2361 = vmatpush.msra.mxu0 0.0
        %2362 = vmatpush.msra.mxu0 0.0
        %2363 = vmatpush.msra.mxu0 0.0
        %2364 = vmatpush.msra.mxu0 0.0
        %2365 = vmatpush.msra.mxu0 0.0
        %2366 = vmatpush.msra.mxu0 0.0
        %2367 = vmatpush.msra.mxu0 0.0
        %2368 = vmatpush.msra.mxu0 %v2351
        %2369 = vmatmul.f32.gmra.mxu0 %v2348
        %v2370 = vpop.f32.mrf.mxu0
        %v2371 = vadd.f32 0.0, %v2370
        %2372 = vdwg.mxu0
        %v2373 = vadd.f32 %v2344, %v2371
        %v2374 = vld [vmem:[%s2168] sm:$0xf]
        %v2375 = vld [vmem:[%s506] sm:$0xf]
        %v2377 = vsel %vm326, %v2374, 0
        %v2380 = vsel %vm330, %v2375, 0
        %2382 = vmatpush.msra.mxu0 0.0
        %2383 = vmatpush.msra.mxu0 0.0
        %2384 = vmatpush.msra.mxu0 0.0
        %2385 = vmatpush.msra.mxu0 0.0
        %2386 = vmatpush.msra.mxu0 0.0
        %2387 = vmatpush.msra.mxu0 0.0
        %2388 = vmatpush.msra.mxu0 0.0
        %2389 = vmatpush.msra.mxu0 0.0
        %2390 = vmatpush.msra.mxu0 0.0
        %2391 = vmatpush.msra.mxu0 0.0
        %2392 = vmatpush.msra.mxu0 0.0
        %2393 = vmatpush.msra.mxu0 0.0
        %2394 = vmatpush.msra.mxu0 0.0
        %2395 = vmatpush.msra.mxu0 0.0
        %2396 = vmatpush.msra.mxu0 0.0
        %2397 = vmatpush.msra.mxu0 %v2380
        %2398 = vmatmul.f32.gmra.mxu0 %v2377
        %v2399 = vpop.f32.mrf.mxu0
        %v2400 = vadd.f32 0.0, %v2399
        %2401 = vdwg.mxu0
        %v2402 = vadd.f32 %v2373, %v2400
        %s2403 = scalar_lea.vmem %s291, 496
        %v2404 = vld [vmem:[%s2403] sm:$0xf]
        %v2405 = vld [vmem:[%s537] sm:$0xf]
        %v2407 = vsel %vm326, %v2404, 0
        %v2410 = vsel %vm330, %v2405, 0
        %2412 = vmatpush.msra.mxu0 0.0
        %2413 = vmatpush.msra.mxu0 0.0
        %2414 = vmatpush.msra.mxu0 0.0
        %2415 = vmatpush.msra.mxu0 0.0
        %2416 = vmatpush.msra.mxu0 0.0
        %2417 = vmatpush.msra.mxu0 0.0
        %2418 = vmatpush.msra.mxu0 0.0
        %2419 = vmatpush.msra.mxu0 0.0
        %2420 = vmatpush.msra.mxu0 0.0
        %2421 = vmatpush.msra.mxu0 0.0
        %2422 = vmatpush.msra.mxu0 0.0
        %2423 = vmatpush.msra.mxu0 0.0
        %2424 = vmatpush.msra.mxu0 0.0
        %2425 = vmatpush.msra.mxu0 0.0
        %2426 = vmatpush.msra.mxu0 0.0
        %2427 = vmatpush.msra.mxu0 %v2410
        %2428 = vmatmul.f32.gmra.mxu0 %v2407
        %v2429 = vpop.f32.mrf.mxu0
        %v2430 = vadd.f32 0.0, %v2429
        %2431 = vdwg.mxu0
        %v2432 = vadd.f32 %v2402, %v2430
        %v2433 = vld [vmem:[%s2108 + $0x1] sm:$0xf]
        %v2434 = vld [vmem:[%s568] sm:$0xf]
        %v2436 = vsel %vm326, %v2433, 0
        %v2439 = vsel %vm330, %v2434, 0
        %2441 = vmatpush.msra.mxu0 0.0
        %2442 = vmatpush.msra.mxu0 0.0
        %2443 = vmatpush.msra.mxu0 0.0
        %2444 = vmatpush.msra.mxu0 0.0
        %2445 = vmatpush.msra.mxu0 0.0
        %2446 = vmatpush.msra.mxu0 0.0
        %2447 = vmatpush.msra.mxu0 0.0
        %2448 = vmatpush.msra.mxu0 0.0
        %2449 = vmatpush.msra.mxu0 0.0
        %2450 = vmatpush.msra.mxu0 0.0
        %2451 = vmatpush.msra.mxu0 0.0
        %2452 = vmatpush.msra.mxu0 0.0
        %2453 = vmatpush.msra.mxu0 0.0
        %2454 = vmatpush.msra.mxu0 0.0
        %2455 = vmatpush.msra.mxu0 0.0
        %2456 = vmatpush.msra.mxu0 %v2439
        %2457 = vmatmul.f32.gmra.mxu0 %v2436
        %v2458 = vpop.f32.mrf.mxu0
        %v2459 = vadd.f32 0.0, %v2458
        %2460 = vdwg.mxu0
        %v2461 = vadd.f32 %v2432, %v2459
        %v2462 = vadd.f32 %v2461, %v598
        %s2463 = scalar_lea.vmem [#allocation2], 32
        %2464 = vst.msk [vmem:[%s2463 + $0x1] sm:$0xf] %vm602, %v2462
        %v2465 = vld [vmem:[%s2108] sm:$0xf]
        %v2466 = vld [vmem:[%s2] sm:$0xf]
        %v2467 = vld [vmem:[%s2138] sm:$0xf]
        %v2468 = vld [vmem:[%s324] sm:$0xf]
        %v2470 = vsel %vm326, %v2467, 0
        %v2473 = vsel %vm330, %v2468, 0
        %2475 = vmatpush.msra.mxu0 0.0
        %2476 = vmatpush.msra.mxu0 0.0
        %2477 = vmatpush.msra.mxu0 0.0
        %2478 = vmatpush.msra.mxu0 0.0
        %2479 = vmatpush.msra.mxu0 0.0
        %2480 = vmatpush.msra.mxu0 0.0
        %2481 = vmatpush.msra.mxu0 0.0
        %2482 = vmatpush.msra.mxu0 0.0
        %2483 = vmatpush.msra.mxu0 0.0
        %2484 = vmatpush.msra.mxu0 0.0
        %2485 = vmatpush.msra.mxu0 0.0
        %2486 = vmatpush.msra.mxu0 0.0
        %2487 = vmatpush.msra.mxu0 0.0
        %2488 = vmatpush.msra.mxu0 0.0
        %2489 = vmatpush.msra.mxu0 0.0
        %2490 = vmatpush.msra.mxu0 %v2473
        %2491 = vmatmul.f32.gmra.mxu0 %v2470
        %v2492 = vpop.f32.mrf.mxu0
        %v2493 = vadd.f32 0.0, %v2492
        %2494 = vdwg.mxu0
        %v2496 = vsel %vm326, %v2465, 0
        %v2499 = vsel %vm330, %v2466, 0
        %2501 = vmatpush.msra.mxu0 0.0
        %2502 = vmatpush.msra.mxu0 0.0
        %2503 = vmatpush.msra.mxu0 0.0
        %2504 = vmatpush.msra.mxu0 0.0
        %2505 = vmatpush.msra.mxu0 0.0
        %2506 = vmatpush.msra.mxu0 0.0
        %2507 = vmatpush.msra.mxu0 0.0
        %2508 = vmatpush.msra.mxu0 0.0
        %2509 = vmatpush.msra.mxu0 0.0
        %2510 = vmatpush.msra.mxu0 0.0
        %2511 = vmatpush.msra.mxu0 0.0
        %2512 = vmatpush.msra.mxu0 0.0
        %2513 = vmatpush.msra.mxu0 0.0
        %2514 = vmatpush.msra.mxu0 0.0
        %2515 = vmatpush.msra.mxu0 0.0
        %2516 = vmatpush.msra.mxu0 %v2499
        %2517 = vmatmul.f32.gmra.mxu0 %v2496
        %v2518 = vpop.f32.mrf.mxu0
        %v2519 = vadd.f32 %v2493, %v2518
        %2520 = vdwg.mxu0
        %v2521 = vld [vmem:[%s2168] sm:$0xf]
        %v2522 = vld [vmem:[%s382] sm:$0xf]
        %v2524 = vsel %vm326, %v2521, 0
        %v2527 = vsel %vm330, %v2522, 0
        %2529 = vmatpush.msra.mxu0 0.0
        %2530 = vmatpush.msra.mxu0 0.0
        %2531 = vmatpush.msra.mxu0 0.0
        %2532 = vmatpush.msra.mxu0 0.0
        %2533 = vmatpush.msra.mxu0 0.0
        %2534 = vmatpush.msra.mxu0 0.0
        %2535 = vmatpush.msra.mxu0 0.0
        %2536 = vmatpush.msra.mxu0 0.0
        %2537 = vmatpush.msra.mxu0 0.0
        %2538 = vmatpush.msra.mxu0 0.0
        %2539 = vmatpush.msra.mxu0 0.0
        %2540 = vmatpush.msra.mxu0 0.0
        %2541 = vmatpush.msra.mxu0 0.0
        %2542 = vmatpush.msra.mxu0 0.0
        %2543 = vmatpush.msra.mxu0 0.0
        %2544 = vmatpush.msra.mxu0 %v2527
        %2545 = vmatmul.f32.gmra.mxu0 %v2524
        %v2546 = vpop.f32.mrf.mxu0
        %v2547 = vadd.f32 0.0, %v2546
        %2548 = vdwg.mxu0
        %v2549 = vadd.f32 %v2519, %v2547
        %s2550 = scalar_lea.vmem %s291, 72
        %v2551 = vld [vmem:[%s2550] sm:$0xf]
        %v2552 = vld [vmem:[%s413] sm:$0xf]
        %v2554 = vsel %vm326, %v2551, 0
        %v2557 = vsel %vm330, %v2552, 0
        %2559 = vmatpush.msra.mxu0 0.0
        %2560 = vmatpush.msra.mxu0 0.0
        %2561 = vmatpush.msra.mxu0 0.0
        %2562 = vmatpush.msra.mxu0 0.0
        %2563 = vmatpush.msra.mxu0 0.0
        %2564 = vmatpush.msra.mxu0 0.0
        %2565 = vmatpush.msra.mxu0 0.0
        %2566 = vmatpush.msra.mxu0 0.0
        %2567 = vmatpush.msra.mxu0 0.0
        %2568 = vmatpush.msra.mxu0 0.0
        %2569 = vmatpush.msra.mxu0 0.0
        %2570 = vmatpush.msra.mxu0 0.0
        %2571 = vmatpush.msra.mxu0 0.0
        %2572 = vmatpush.msra.mxu0 0.0
        %2573 = vmatpush.msra.mxu0 0.0
        %2574 = vmatpush.msra.mxu0 %v2557
        %2575 = vmatmul.f32.gmra.mxu0 %v2554
        %v2576 = vpop.f32.mrf.mxu0
        %v2577 = vadd.f32 0.0, %v2576
        %2578 = vdwg.mxu0
        %v2579 = vadd.f32 %v2549, %v2577
        %s2580 = scalar_lea.vmem %s291, 216
        %v2581 = vld [vmem:[%s2580] sm:$0xf]
        %v2582 = vld [vmem:[%s444] sm:$0xf]
        %v2584 = vsel %vm326, %v2581, 0
        %v2587 = vsel %vm330, %v2582, 0
        %2589 = vmatpush.msra.mxu0 0.0
        %2590 = vmatpush.msra.mxu0 0.0
        %2591 = vmatpush.msra.mxu0 0.0
        %2592 = vmatpush.msra.mxu0 0.0
        %2593 = vmatpush.msra.mxu0 0.0
        %2594 = vmatpush.msra.mxu0 0.0
        %2595 = vmatpush.msra.mxu0 0.0
        %2596 = vmatpush.msra.mxu0 0.0
        %2597 = vmatpush.msra.mxu0 0.0
        %2598 = vmatpush.msra.mxu0 0.0
        %2599 = vmatpush.msra.mxu0 0.0
        %2600 = vmatpush.msra.mxu0 0.0
        %2601 = vmatpush.msra.mxu0 0.0
        %2602 = vmatpush.msra.mxu0 0.0
        %2603 = vmatpush.msra.mxu0 0.0
        %2604 = vmatpush.msra.mxu0 %v2587
        %2605 = vmatmul.f32.gmra.mxu0 %v2584
        %v2606 = vpop.f32.mrf.mxu0
        %v2607 = vadd.f32 0.0, %v2606
        %2608 = vdwg.mxu0
        %v2609 = vadd.f32 %v2579, %v2607
        %s2610 = scalar_lea.vmem %s291, 360
        %v2611 = vld [vmem:[%s2610] sm:$0xf]
        %v2612 = vld [vmem:[%s475] sm:$0xf]
        %v2614 = vsel %vm326, %v2611, 0
        %v2617 = vsel %vm330, %v2612, 0
        %2619 = vmatpush.msra.mxu0 0.0
        %2620 = vmatpush.msra.mxu0 0.0
        %2621 = vmatpush.msra.mxu0 0.0
        %2622 = vmatpush.msra.mxu0 0.0
        %2623 = vmatpush.msra.mxu0 0.0
        %2624 = vmatpush.msra.mxu0 0.0
        %2625 = vmatpush.msra.mxu0 0.0
        %2626 = vmatpush.msra.mxu0 0.0
        %2627 = vmatpush.msra.mxu0 0.0
        %2628 = vmatpush.msra.mxu0 0.0
        %2629 = vmatpush.msra.mxu0 0.0
        %2630 = vmatpush.msra.mxu0 0.0
        %2631 = vmatpush.msra.mxu0 0.0
        %2632 = vmatpush.msra.mxu0 0.0
        %2633 = vmatpush.msra.mxu0 0.0
        %2634 = vmatpush.msra.mxu0 %v2617
        %2635 = vmatmul.f32.gmra.mxu0 %v2614
        %v2636 = vpop.f32.mrf.mxu0
        %v2637 = vadd.f32 0.0, %v2636
        %2638 = vdwg.mxu0
        %v2639 = vadd.f32 %v2609, %v2637
        %s2640 = scalar_lea.vmem %s291, 80
        %v2641 = vld [vmem:[%s2640] sm:$0xf]
        %v2642 = vld [vmem:[%s506] sm:$0xf]
        %v2644 = vsel %vm326, %v2641, 0
        %v2647 = vsel %vm330, %v2642, 0
        %2649 = vmatpush.msra.mxu0 0.0
        %2650 = vmatpush.msra.mxu0 0.0
        %2651 = vmatpush.msra.mxu0 0.0
        %2652 = vmatpush.msra.mxu0 0.0
        %2653 = vmatpush.msra.mxu0 0.0
        %2654 = vmatpush.msra.mxu0 0.0
        %2655 = vmatpush.msra.mxu0 0.0
        %2656 = vmatpush.msra.mxu0 0.0
        %2657 = vmatpush.msra.mxu0 0.0
        %2658 = vmatpush.msra.mxu0 0.0
        %2659 = vmatpush.msra.mxu0 0.0
        %2660 = vmatpush.msra.mxu0 0.0
        %2661 = vmatpush.msra.mxu0 0.0
        %2662 = vmatpush.msra.mxu0 0.0
        %2663 = vmatpush.msra.mxu0 0.0
        %2664 = vmatpush.msra.mxu0 %v2647
        %2665 = vmatmul.f32.gmra.mxu0 %v2644
        %v2666 = vpop.f32.mrf.mxu0
        %v2667 = vadd.f32 0.0, %v2666
        %2668 = vdwg.mxu0
        %v2669 = vadd.f32 %v2639, %v2667
        %s2670 = scalar_lea.vmem %s291, 224
        %v2671 = vld [vmem:[%s2670] sm:$0xf]
        %v2672 = vld [vmem:[%s537] sm:$0xf]
        %v2674 = vsel %vm326, %v2671, 0
        %v2677 = vsel %vm330, %v2672, 0
        %2679 = vmatpush.msra.mxu0 0.0
        %2680 = vmatpush.msra.mxu0 0.0
        %2681 = vmatpush.msra.mxu0 0.0
        %2682 = vmatpush.msra.mxu0 0.0
        %2683 = vmatpush.msra.mxu0 0.0
        %2684 = vmatpush.msra.mxu0 0.0
        %2685 = vmatpush.msra.mxu0 0.0
        %2686 = vmatpush.msra.mxu0 0.0
        %2687 = vmatpush.msra.mxu0 0.0
        %2688 = vmatpush.msra.mxu0 0.0
        %2689 = vmatpush.msra.mxu0 0.0
        %2690 = vmatpush.msra.mxu0 0.0
        %2691 = vmatpush.msra.mxu0 0.0
        %2692 = vmatpush.msra.mxu0 0.0
        %2693 = vmatpush.msra.mxu0 0.0
        %2694 = vmatpush.msra.mxu0 %v2677
        %2695 = vmatmul.f32.gmra.mxu0 %v2674
        %v2696 = vpop.f32.mrf.mxu0
        %v2697 = vadd.f32 0.0, %v2696
        %2698 = vdwg.mxu0
        %v2699 = vadd.f32 %v2669, %v2697
        %s2700 = scalar_lea.vmem %s291, 368
        %v2701 = vld [vmem:[%s2700] sm:$0xf]
        %v2702 = vld [vmem:[%s568] sm:$0xf]
        %v2704 = vsel %vm326, %v2701, 0
        %v2707 = vsel %vm330, %v2702, 0
        %2709 = vmatpush.msra.mxu0 0.0
        %2710 = vmatpush.msra.mxu0 0.0
        %2711 = vmatpush.msra.mxu0 0.0
        %2712 = vmatpush.msra.mxu0 0.0
        %2713 = vmatpush.msra.mxu0 0.0
        %2714 = vmatpush.msra.mxu0 0.0
        %2715 = vmatpush.msra.mxu0 0.0
        %2716 = vmatpush.msra.mxu0 0.0
        %2717 = vmatpush.msra.mxu0 0.0
        %2718 = vmatpush.msra.mxu0 0.0
        %2719 = vmatpush.msra.mxu0 0.0
        %2720 = vmatpush.msra.mxu0 0.0
        %2721 = vmatpush.msra.mxu0 0.0
        %2722 = vmatpush.msra.mxu0 0.0
        %2723 = vmatpush.msra.mxu0 0.0
        %2724 = vmatpush.msra.mxu0 %v2707
        %2725 = vmatmul.f32.gmra.mxu0 %v2704
        %v2726 = vpop.f32.mrf.mxu0
        %v2727 = vadd.f32 0.0, %v2726
        %2728 = vdwg.mxu0
        %v2729 = vadd.f32 %v2699, %v2727
        %v2730 = vadd.f32 %v2729, %v598
        %s2731 = scalar_lea.vmem [#allocation2], 120
        %2732 = vst.msk [vmem:[%s2731] sm:$0xf] %vm602, %v2730
        %v2733 = vld [vmem:[%s2168] sm:$0xf]
        %v2734 = vld [vmem:[%s2] sm:$0xf]
        %v2735 = vld [vmem:[%s2403] sm:$0xf]
        %v2736 = vld [vmem:[%s324] sm:$0xf]
        %v2738 = vsel %vm326, %v2735, 0
        %v2741 = vsel %vm330, %v2736, 0
        %2743 = vmatpush.msra.mxu0 0.0
        %2744 = vmatpush.msra.mxu0 0.0
        %2745 = vmatpush.msra.mxu0 0.0
        %2746 = vmatpush.msra.mxu0 0.0
        %2747 = vmatpush.msra.mxu0 0.0
        %2748 = vmatpush.msra.mxu0 0.0
        %2749 = vmatpush.msra.mxu0 0.0
        %2750 = vmatpush.msra.mxu0 0.0
        %2751 = vmatpush.msra.mxu0 0.0
        %2752 = vmatpush.msra.mxu0 0.0
        %2753 = vmatpush.msra.mxu0 0.0
        %2754 = vmatpush.msra.mxu0 0.0
        %2755 = vmatpush.msra.mxu0 0.0
        %2756 = vmatpush.msra.mxu0 0.0
        %2757 = vmatpush.msra.mxu0 0.0
        %2758 = vmatpush.msra.mxu0 %v2741
        %2759 = vmatmul.f32.gmra.mxu0 %v2738
        %v2760 = vpop.f32.mrf.mxu0
        %v2761 = vadd.f32 0.0, %v2760
        %2762 = vdwg.mxu0
        %v2764 = vsel %vm326, %v2733, 0
        %v2767 = vsel %vm330, %v2734, 0
        %2769 = vmatpush.msra.mxu0 0.0
        %2770 = vmatpush.msra.mxu0 0.0
        %2771 = vmatpush.msra.mxu0 0.0
        %2772 = vmatpush.msra.mxu0 0.0
        %2773 = vmatpush.msra.mxu0 0.0
        %2774 = vmatpush.msra.mxu0 0.0
        %2775 = vmatpush.msra.mxu0 0.0
        %2776 = vmatpush.msra.mxu0 0.0
        %2777 = vmatpush.msra.mxu0 0.0
        %2778 = vmatpush.msra.mxu0 0.0
        %2779 = vmatpush.msra.mxu0 0.0
        %2780 = vmatpush.msra.mxu0 0.0
        %2781 = vmatpush.msra.mxu0 0.0
        %2782 = vmatpush.msra.mxu0 0.0
        %2783 = vmatpush.msra.mxu0 0.0
        %2784 = vmatpush.msra.mxu0 %v2767
        %2785 = vmatmul.f32.gmra.mxu0 %v2764
        %v2786 = vpop.f32.mrf.mxu0
        %v2787 = vadd.f32 %v2761, %v2786
        %2788 = vdwg.mxu0
        %v2789 = vld [vmem:[%s2108 + $0x1] sm:$0xf]
        %v2790 = vld [vmem:[%s382] sm:$0xf]
        %v2792 = vsel %vm326, %v2789, 0
        %v2795 = vsel %vm330, %v2790, 0
        %2797 = vmatpush.msra.mxu0 0.0
        %2798 = vmatpush.msra.mxu0 0.0
        %2799 = vmatpush.msra.mxu0 0.0
        %2800 = vmatpush.msra.mxu0 0.0
        %2801 = vmatpush.msra.mxu0 0.0
        %2802 = vmatpush.msra.mxu0 0.0
        %2803 = vmatpush.msra.mxu0 0.0
        %2804 = vmatpush.msra.mxu0 0.0
        %2805 = vmatpush.msra.mxu0 0.0
        %2806 = vmatpush.msra.mxu0 0.0
        %2807 = vmatpush.msra.mxu0 0.0
        %2808 = vmatpush.msra.mxu0 0.0
        %2809 = vmatpush.msra.mxu0 0.0
        %2810 = vmatpush.msra.mxu0 0.0
        %2811 = vmatpush.msra.mxu0 0.0
        %2812 = vmatpush.msra.mxu0 %v2795
        %2813 = vmatmul.f32.gmra.mxu0 %v2792
        %v2814 = vpop.f32.mrf.mxu0
        %v2815 = vadd.f32 0.0, %v2814
        %2816 = vdwg.mxu0
        %v2817 = vadd.f32 %v2787, %v2815
        %v2818 = vld [vmem:[%s2610] sm:$0xf]
        %v2819 = vld [vmem:[%s413] sm:$0xf]
        %v2821 = vsel %vm326, %v2818, 0
        %v2824 = vsel %vm330, %v2819, 0
        %2826 = vmatpush.msra.mxu0 0.0
        %2827 = vmatpush.msra.mxu0 0.0
        %2828 = vmatpush.msra.mxu0 0.0
        %2829 = vmatpush.msra.mxu0 0.0
        %2830 = vmatpush.msra.mxu0 0.0
        %2831 = vmatpush.msra.mxu0 0.0
        %2832 = vmatpush.msra.mxu0 0.0
        %2833 = vmatpush.msra.mxu0 0.0
        %2834 = vmatpush.msra.mxu0 0.0
        %2835 = vmatpush.msra.mxu0 0.0
        %2836 = vmatpush.msra.mxu0 0.0
        %2837 = vmatpush.msra.mxu0 0.0
        %2838 = vmatpush.msra.mxu0 0.0
        %2839 = vmatpush.msra.mxu0 0.0
        %2840 = vmatpush.msra.mxu0 0.0
        %2841 = vmatpush.msra.mxu0 %v2824
        %2842 = vmatmul.f32.gmra.mxu0 %v2821
        %v2843 = vpop.f32.mrf.mxu0
        %v2844 = vadd.f32 0.0, %v2843
        %2845 = vdwg.mxu0
        %v2846 = vadd.f32 %v2817, %v2844
        %s2847 = scalar_lea.vmem %s291, 504
        %v2848 = vld [vmem:[%s2847] sm:$0xf]
        %v2849 = vld [vmem:[%s444] sm:$0xf]
        %v2851 = vsel %vm326, %v2848, 0
        %v2854 = vsel %vm330, %v2849, 0
        %2856 = vmatpush.msra.mxu0 0.0
        %2857 = vmatpush.msra.mxu0 0.0
        %2858 = vmatpush.msra.mxu0 0.0
        %2859 = vmatpush.msra.mxu0 0.0
        %2860 = vmatpush.msra.mxu0 0.0
        %2861 = vmatpush.msra.mxu0 0.0
        %2862 = vmatpush.msra.mxu0 0.0
        %2863 = vmatpush.msra.mxu0 0.0
        %2864 = vmatpush.msra.mxu0 0.0
        %2865 = vmatpush.msra.mxu0 0.0
        %2866 = vmatpush.msra.mxu0 0.0
        %2867 = vmatpush.msra.mxu0 0.0
        %2868 = vmatpush.msra.mxu0 0.0
        %2869 = vmatpush.msra.mxu0 0.0
        %2870 = vmatpush.msra.mxu0 0.0
        %2871 = vmatpush.msra.mxu0 %v2854
        %2872 = vmatmul.f32.gmra.mxu0 %v2851
        %v2873 = vpop.f32.mrf.mxu0
        %v2874 = vadd.f32 0.0, %v2873
        %2875 = vdwg.mxu0
        %v2876 = vadd.f32 %v2846, %v2874
        %v2877 = vld [vmem:[%s2550 + $0x1] sm:$0xf]
        %v2878 = vld [vmem:[%s475] sm:$0xf]
        %v2880 = vsel %vm326, %v2877, 0
        %v2883 = vsel %vm330, %v2878, 0
        %2885 = vmatpush.msra.mxu0 0.0
        %2886 = vmatpush.msra.mxu0 0.0
        %2887 = vmatpush.msra.mxu0 0.0
        %2888 = vmatpush.msra.mxu0 0.0
        %2889 = vmatpush.msra.mxu0 0.0
        %2890 = vmatpush.msra.mxu0 0.0
        %2891 = vmatpush.msra.mxu0 0.0
        %2892 = vmatpush.msra.mxu0 0.0
        %2893 = vmatpush.msra.mxu0 0.0
        %2894 = vmatpush.msra.mxu0 0.0
        %2895 = vmatpush.msra.mxu0 0.0
        %2896 = vmatpush.msra.mxu0 0.0
        %2897 = vmatpush.msra.mxu0 0.0
        %2898 = vmatpush.msra.mxu0 0.0
        %2899 = vmatpush.msra.mxu0 0.0
        %2900 = vmatpush.msra.mxu0 %v2883
        %2901 = vmatmul.f32.gmra.mxu0 %v2880
        %v2902 = vpop.f32.mrf.mxu0
        %v2903 = vadd.f32 0.0, %v2902
        %2904 = vdwg.mxu0
        %v2905 = vadd.f32 %v2876, %v2903
        %v2906 = vld [vmem:[%s2700] sm:$0xf]
        %v2907 = vld [vmem:[%s506] sm:$0xf]
        %v2909 = vsel %vm326, %v2906, 0
        %v2912 = vsel %vm330, %v2907, 0
        %2914 = vmatpush.msra.mxu0 0.0
        %2915 = vmatpush.msra.mxu0 0.0
        %2916 = vmatpush.msra.mxu0 0.0
        %2917 = vmatpush.msra.mxu0 0.0
        %2918 = vmatpush.msra.mxu0 0.0
        %2919 = vmatpush.msra.mxu0 0.0
        %2920 = vmatpush.msra.mxu0 0.0
        %2921 = vmatpush.msra.mxu0 0.0
        %2922 = vmatpush.msra.mxu0 0.0
        %2923 = vmatpush.msra.mxu0 0.0
        %2924 = vmatpush.msra.mxu0 0.0
        %2925 = vmatpush.msra.mxu0 0.0
        %2926 = vmatpush.msra.mxu0 0.0
        %2927 = vmatpush.msra.mxu0 0.0
        %2928 = vmatpush.msra.mxu0 0.0
        %2929 = vmatpush.msra.mxu0 %v2912
        %2930 = vmatmul.f32.gmra.mxu0 %v2909
        %v2931 = vpop.f32.mrf.mxu0
        %v2932 = vadd.f32 0.0, %v2931
        %2933 = vdwg.mxu0
        %v2934 = vadd.f32 %v2905, %v2932
        %s2935 = scalar_lea.vmem %s291, 512
        %v2936 = vld [vmem:[%s2935] sm:$0xf]
        %v2937 = vld [vmem:[%s537] sm:$0xf]
        %v2939 = vsel %vm326, %v2936, 0
        %v2942 = vsel %vm330, %v2937, 0
        %2944 = vmatpush.msra.mxu0 0.0
        %2945 = vmatpush.msra.mxu0 0.0
        %2946 = vmatpush.msra.mxu0 0.0
        %2947 = vmatpush.msra.mxu0 0.0
        %2948 = vmatpush.msra.mxu0 0.0
        %2949 = vmatpush.msra.mxu0 0.0
        %2950 = vmatpush.msra.mxu0 0.0
        %2951 = vmatpush.msra.mxu0 0.0
        %2952 = vmatpush.msra.mxu0 0.0
        %2953 = vmatpush.msra.mxu0 0.0
        %2954 = vmatpush.msra.mxu0 0.0
        %2955 = vmatpush.msra.mxu0 0.0
        %2956 = vmatpush.msra.mxu0 0.0
        %2957 = vmatpush.msra.mxu0 0.0
        %2958 = vmatpush.msra.mxu0 0.0
        %2959 = vmatpush.msra.mxu0 %v2942
        %2960 = vmatmul.f32.gmra.mxu0 %v2939
        %v2961 = vpop.f32.mrf.mxu0
        %v2962 = vadd.f32 0.0, %v2961
        %2963 = vdwg.mxu0
        %v2964 = vadd.f32 %v2934, %v2962
        %v2965 = vld [vmem:[%s2640 + $0x1] sm:$0xf]
        %v2966 = vld [vmem:[%s568] sm:$0xf]
        %v2968 = vsel %vm326, %v2965, 0
        %v2971 = vsel %vm330, %v2966, 0
        %2973 = vmatpush.msra.mxu0 0.0
        %2974 = vmatpush.msra.mxu0 0.0
        %2975 = vmatpush.msra.mxu0 0.0
        %2976 = vmatpush.msra.mxu0 0.0
        %2977 = vmatpush.msra.mxu0 0.0
        %2978 = vmatpush.msra.mxu0 0.0
        %2979 = vmatpush.msra.mxu0 0.0
        %2980 = vmatpush.msra.mxu0 0.0
        %2981 = vmatpush.msra.mxu0 0.0
        %2982 = vmatpush.msra.mxu0 0.0
        %2983 = vmatpush.msra.mxu0 0.0
        %2984 = vmatpush.msra.mxu0 0.0
        %2985 = vmatpush.msra.mxu0 0.0
        %2986 = vmatpush.msra.mxu0 0.0
        %2987 = vmatpush.msra.mxu0 0.0
        %2988 = vmatpush.msra.mxu0 %v2971
        %2989 = vmatmul.f32.gmra.mxu0 %v2968
        %v2990 = vpop.f32.mrf.mxu0
        %v2991 = vadd.f32 0.0, %v2990
        %2992 = vdwg.mxu0
        %v2993 = vadd.f32 %v2964, %v2991
        %v2994 = vadd.f32 %v2993, %v598
        %s2995 = scalar_lea.vmem [#allocation2], 40
        %2996 = vst.msk [vmem:[%s2995 + $0x1] sm:$0xf] %vm602, %v2994
        %v2997 = vld [vmem:[%s2640] sm:$0xf]
        %v2998 = vld [vmem:[%s2] sm:$0xf]
        %v2999 = vld [vmem:[%s2670] sm:$0xf]
        %v3000 = vld [vmem:[%s324] sm:$0xf]
        %v3002 = vsel %vm326, %v2999, 0
        %v3005 = vsel %vm330, %v3000, 0
        %3007 = vmatpush.msra.mxu0 0.0
        %3008 = vmatpush.msra.mxu0 0.0
        %3009 = vmatpush.msra.mxu0 0.0
        %3010 = vmatpush.msra.mxu0 0.0
        %3011 = vmatpush.msra.mxu0 0.0
        %3012 = vmatpush.msra.mxu0 0.0
        %3013 = vmatpush.msra.mxu0 0.0
        %3014 = vmatpush.msra.mxu0 0.0
        %3015 = vmatpush.msra.mxu0 0.0
        %3016 = vmatpush.msra.mxu0 0.0
        %3017 = vmatpush.msra.mxu0 0.0
        %3018 = vmatpush.msra.mxu0 0.0
        %3019 = vmatpush.msra.mxu0 0.0
        %3020 = vmatpush.msra.mxu0 0.0
        %3021 = vmatpush.msra.mxu0 0.0
        %3022 = vmatpush.msra.mxu0 %v3005
        %3023 = vmatmul.f32.gmra.mxu0 %v3002
        %v3024 = vpop.f32.mrf.mxu0
        %v3025 = vadd.f32 0.0, %v3024
        %3026 = vdwg.mxu0
        %v3028 = vsel %vm326, %v2997, 0
        %v3031 = vsel %vm330, %v2998, 0
        %3033 = vmatpush.msra.mxu0 0.0
        %3034 = vmatpush.msra.mxu0 0.0
        %3035 = vmatpush.msra.mxu0 0.0
        %3036 = vmatpush.msra.mxu0 0.0
        %3037 = vmatpush.msra.mxu0 0.0
        %3038 = vmatpush.msra.mxu0 0.0
        %3039 = vmatpush.msra.mxu0 0.0
        %3040 = vmatpush.msra.mxu0 0.0
        %3041 = vmatpush.msra.mxu0 0.0
        %3042 = vmatpush.msra.mxu0 0.0
        %3043 = vmatpush.msra.mxu0 0.0
        %3044 = vmatpush.msra.mxu0 0.0
        %3045 = vmatpush.msra.mxu0 0.0
        %3046 = vmatpush.msra.mxu0 0.0
        %3047 = vmatpush.msra.mxu0 0.0
        %3048 = vmatpush.msra.mxu0 %v3031
        %3049 = vmatmul.f32.gmra.mxu0 %v3028
        %v3050 = vpop.f32.mrf.mxu0
        %v3051 = vadd.f32 %v3025, %v3050
        %3052 = vdwg.mxu0
        %v3053 = vld [vmem:[%s2700] sm:$0xf]
        %v3054 = vld [vmem:[%s382] sm:$0xf]
        %v3056 = vsel %vm326, %v3053, 0
        %v3059 = vsel %vm330, %v3054, 0
        %3061 = vmatpush.msra.mxu0 0.0
        %3062 = vmatpush.msra.mxu0 0.0
        %3063 = vmatpush.msra.mxu0 0.0
        %3064 = vmatpush.msra.mxu0 0.0
        %3065 = vmatpush.msra.mxu0 0.0
        %3066 = vmatpush.msra.mxu0 0.0
        %3067 = vmatpush.msra.mxu0 0.0
        %3068 = vmatpush.msra.mxu0 0.0
        %3069 = vmatpush.msra.mxu0 0.0
        %3070 = vmatpush.msra.mxu0 0.0
        %3071 = vmatpush.msra.mxu0 0.0
        %3072 = vmatpush.msra.mxu0 0.0
        %3073 = vmatpush.msra.mxu0 0.0
        %3074 = vmatpush.msra.mxu0 0.0
        %3075 = vmatpush.msra.mxu0 0.0
        %3076 = vmatpush.msra.mxu0 %v3059
        %3077 = vmatmul.f32.gmra.mxu0 %v3056
        %v3078 = vpop.f32.mrf.mxu0
        %v3079 = vadd.f32 0.0, %v3078
        %3080 = vdwg.mxu0
        %v3081 = vadd.f32 %v3051, %v3079
        %s3082 = scalar_lea.vmem %s291, 88
        %v3083 = vld [vmem:[%s3082] sm:$0xf]
        %v3084 = vld [vmem:[%s413] sm:$0xf]
        %v3086 = vsel %vm326, %v3083, 0
        %v3089 = vsel %vm330, %v3084, 0
        %3091 = vmatpush.msra.mxu0 0.0
        %3092 = vmatpush.msra.mxu0 0.0
        %3093 = vmatpush.msra.mxu0 0.0
        %3094 = vmatpush.msra.mxu0 0.0
        %3095 = vmatpush.msra.mxu0 0.0
        %3096 = vmatpush.msra.mxu0 0.0
        %3097 = vmatpush.msra.mxu0 0.0
        %3098 = vmatpush.msra.mxu0 0.0
        %3099 = vmatpush.msra.mxu0 0.0
        %3100 = vmatpush.msra.mxu0 0.0
        %3101 = vmatpush.msra.mxu0 0.0
        %3102 = vmatpush.msra.mxu0 0.0
        %3103 = vmatpush.msra.mxu0 0.0
        %3104 = vmatpush.msra.mxu0 0.0
        %3105 = vmatpush.msra.mxu0 0.0
        %3106 = vmatpush.msra.mxu0 %v3089
        %3107 = vmatmul.f32.gmra.mxu0 %v3086
        %v3108 = vpop.f32.mrf.mxu0
        %v3109 = vadd.f32 0.0, %v3108
        %3110 = vdwg.mxu0
        %v3111 = vadd.f32 %v3081, %v3109
        %s3112 = scalar_lea.vmem %s291, 232
        %v3113 = vld [vmem:[%s3112] sm:$0xf]
        %v3114 = vld [vmem:[%s444] sm:$0xf]
        %v3116 = vsel %vm326, %v3113, 0
        %v3119 = vsel %vm330, %v3114, 0
        %3121 = vmatpush.msra.mxu0 0.0
        %3122 = vmatpush.msra.mxu0 0.0
        %3123 = vmatpush.msra.mxu0 0.0
        %3124 = vmatpush.msra.mxu0 0.0
        %3125 = vmatpush.msra.mxu0 0.0
        %3126 = vmatpush.msra.mxu0 0.0
        %3127 = vmatpush.msra.mxu0 0.0
        %3128 = vmatpush.msra.mxu0 0.0
        %3129 = vmatpush.msra.mxu0 0.0
        %3130 = vmatpush.msra.mxu0 0.0
        %3131 = vmatpush.msra.mxu0 0.0
        %3132 = vmatpush.msra.mxu0 0.0
        %3133 = vmatpush.msra.mxu0 0.0
        %3134 = vmatpush.msra.mxu0 0.0
        %3135 = vmatpush.msra.mxu0 0.0
        %3136 = vmatpush.msra.mxu0 %v3119
        %3137 = vmatmul.f32.gmra.mxu0 %v3116
        %v3138 = vpop.f32.mrf.mxu0
        %v3139 = vadd.f32 0.0, %v3138
        %3140 = vdwg.mxu0
        %v3141 = vadd.f32 %v3111, %v3139
        %s3142 = scalar_lea.vmem %s291, 376
        %v3143 = vld [vmem:[%s3142] sm:$0xf]
        %v3144 = vld [vmem:[%s475] sm:$0xf]
        %v3146 = vsel %vm326, %v3143, 0
        %v3149 = vsel %vm330, %v3144, 0
        %3151 = vmatpush.msra.mxu0 0.0
        %3152 = vmatpush.msra.mxu0 0.0
        %3153 = vmatpush.msra.mxu0 0.0
        %3154 = vmatpush.msra.mxu0 0.0
        %3155 = vmatpush.msra.mxu0 0.0
        %3156 = vmatpush.msra.mxu0 0.0
        %3157 = vmatpush.msra.mxu0 0.0
        %3158 = vmatpush.msra.mxu0 0.0
        %3159 = vmatpush.msra.mxu0 0.0
        %3160 = vmatpush.msra.mxu0 0.0
        %3161 = vmatpush.msra.mxu0 0.0
        %3162 = vmatpush.msra.mxu0 0.0
        %3163 = vmatpush.msra.mxu0 0.0
        %3164 = vmatpush.msra.mxu0 0.0
        %3165 = vmatpush.msra.mxu0 0.0
        %3166 = vmatpush.msra.mxu0 %v3149
        %3167 = vmatmul.f32.gmra.mxu0 %v3146
        %v3168 = vpop.f32.mrf.mxu0
        %v3169 = vadd.f32 0.0, %v3168
        %3170 = vdwg.mxu0
        %v3171 = vadd.f32 %v3141, %v3169
        %s3172 = scalar_lea.vmem %s291, 96
        %v3173 = vld [vmem:[%s3172] sm:$0xf]
        %v3174 = vld [vmem:[%s506] sm:$0xf]
        %v3176 = vsel %vm326, %v3173, 0
        %v3179 = vsel %vm330, %v3174, 0
        %3181 = vmatpush.msra.mxu0 0.0
        %3182 = vmatpush.msra.mxu0 0.0
        %3183 = vmatpush.msra.mxu0 0.0
        %3184 = vmatpush.msra.mxu0 0.0
        %3185 = vmatpush.msra.mxu0 0.0
        %3186 = vmatpush.msra.mxu0 0.0
        %3187 = vmatpush.msra.mxu0 0.0
        %3188 = vmatpush.msra.mxu0 0.0
        %3189 = vmatpush.msra.mxu0 0.0
        %3190 = vmatpush.msra.mxu0 0.0
        %3191 = vmatpush.msra.mxu0 0.0
        %3192 = vmatpush.msra.mxu0 0.0
        %3193 = vmatpush.msra.mxu0 0.0
        %3194 = vmatpush.msra.mxu0 0.0
        %3195 = vmatpush.msra.mxu0 0.0
        %3196 = vmatpush.msra.mxu0 %v3179
        %3197 = vmatmul.f32.gmra.mxu0 %v3176
        %v3198 = vpop.f32.mrf.mxu0
        %v3199 = vadd.f32 0.0, %v3198
        %3200 = vdwg.mxu0
        %v3201 = vadd.f32 %v3171, %v3199
        %s3202 = scalar_lea.vmem %s291, 240
        %v3203 = vld [vmem:[%s3202] sm:$0xf]
        %v3204 = vld [vmem:[%s537] sm:$0xf]
        %v3206 = vsel %vm326, %v3203, 0
        %v3209 = vsel %vm330, %v3204, 0
        %3211 = vmatpush.msra.mxu0 0.0
        %3212 = vmatpush.msra.mxu0 0.0
        %3213 = vmatpush.msra.mxu0 0.0
        %3214 = vmatpush.msra.mxu0 0.0
        %3215 = vmatpush.msra.mxu0 0.0
        %3216 = vmatpush.msra.mxu0 0.0
        %3217 = vmatpush.msra.mxu0 0.0
        %3218 = vmatpush.msra.mxu0 0.0
        %3219 = vmatpush.msra.mxu0 0.0
        %3220 = vmatpush.msra.mxu0 0.0
        %3221 = vmatpush.msra.mxu0 0.0
        %3222 = vmatpush.msra.mxu0 0.0
        %3223 = vmatpush.msra.mxu0 0.0
        %3224 = vmatpush.msra.mxu0 0.0
        %3225 = vmatpush.msra.mxu0 0.0
        %3226 = vmatpush.msra.mxu0 %v3209
        %3227 = vmatmul.f32.gmra.mxu0 %v3206
        %v3228 = vpop.f32.mrf.mxu0
        %v3229 = vadd.f32 0.0, %v3228
        %3230 = vdwg.mxu0
        %v3231 = vadd.f32 %v3201, %v3229
        %s3232 = scalar_lea.vmem %s291, 384
        %v3233 = vld [vmem:[%s3232] sm:$0xf]
        %v3234 = vld [vmem:[%s568] sm:$0xf]
        %v3236 = vsel %vm326, %v3233, 0
        %v3239 = vsel %vm330, %v3234, 0
        %3241 = vmatpush.msra.mxu0 0.0
        %3242 = vmatpush.msra.mxu0 0.0
        %3243 = vmatpush.msra.mxu0 0.0
        %3244 = vmatpush.msra.mxu0 0.0
        %3245 = vmatpush.msra.mxu0 0.0
        %3246 = vmatpush.msra.mxu0 0.0
        %3247 = vmatpush.msra.mxu0 0.0
        %3248 = vmatpush.msra.mxu0 0.0
        %3249 = vmatpush.msra.mxu0 0.0
        %3250 = vmatpush.msra.mxu0 0.0
        %3251 = vmatpush.msra.mxu0 0.0
        %3252 = vmatpush.msra.mxu0 0.0
        %3253 = vmatpush.msra.mxu0 0.0
        %3254 = vmatpush.msra.mxu0 0.0
        %3255 = vmatpush.msra.mxu0 0.0
        %3256 = vmatpush.msra.mxu0 %v3239
        %3257 = vmatmul.f32.gmra.mxu0 %v3236
        %v3258 = vpop.f32.mrf.mxu0
        %v3259 = vadd.f32 0.0, %v3258
        %3260 = vdwg.mxu0
        %v3261 = vadd.f32 %v3231, %v3259
        %v3262 = vadd.f32 %v3261, %v598
        %s3263 = scalar_lea.vmem [#allocation2], 128
        %3264 = vst.msk [vmem:[%s3263] sm:$0xf] %vm602, %v3262
        %v3265 = vld [vmem:[%s2700] sm:$0xf]
        %v3266 = vld [vmem:[%s2] sm:$0xf]
        %v3267 = vld [vmem:[%s2935] sm:$0xf]
        %v3268 = vld [vmem:[%s324] sm:$0xf]
        %v3270 = vsel %vm326, %v3267, 0
        %v3273 = vsel %vm330, %v3268, 0
        %3275 = vmatpush.msra.mxu0 0.0
        %3276 = vmatpush.msra.mxu0 0.0
        %3277 = vmatpush.msra.mxu0 0.0
        %3278 = vmatpush.msra.mxu0 0.0
        %3279 = vmatpush.msra.mxu0 0.0
        %3280 = vmatpush.msra.mxu0 0.0
        %3281 = vmatpush.msra.mxu0 0.0
        %3282 = vmatpush.msra.mxu0 0.0
        %3283 = vmatpush.msra.mxu0 0.0
        %3284 = vmatpush.msra.mxu0 0.0
        %3285 = vmatpush.msra.mxu0 0.0
        %3286 = vmatpush.msra.mxu0 0.0
        %3287 = vmatpush.msra.mxu0 0.0
        %3288 = vmatpush.msra.mxu0 0.0
        %3289 = vmatpush.msra.mxu0 0.0
        %3290 = vmatpush.msra.mxu0 %v3273
        %3291 = vmatmul.f32.gmra.mxu0 %v3270
        %v3292 = vpop.f32.mrf.mxu0
        %v3293 = vadd.f32 0.0, %v3292
        %3294 = vdwg.mxu0
        %v3296 = vsel %vm326, %v3265, 0
        %v3299 = vsel %vm330, %v3266, 0
        %3301 = vmatpush.msra.mxu0 0.0
        %3302 = vmatpush.msra.mxu0 0.0
        %3303 = vmatpush.msra.mxu0 0.0
        %3304 = vmatpush.msra.mxu0 0.0
        %3305 = vmatpush.msra.mxu0 0.0
        %3306 = vmatpush.msra.mxu0 0.0
        %3307 = vmatpush.msra.mxu0 0.0
        %3308 = vmatpush.msra.mxu0 0.0
        %3309 = vmatpush.msra.mxu0 0.0
        %3310 = vmatpush.msra.mxu0 0.0
        %3311 = vmatpush.msra.mxu0 0.0
        %3312 = vmatpush.msra.mxu0 0.0
        %3313 = vmatpush.msra.mxu0 0.0
        %3314 = vmatpush.msra.mxu0 0.0
        %3315 = vmatpush.msra.mxu0 0.0
        %3316 = vmatpush.msra.mxu0 %v3299
        %3317 = vmatmul.f32.gmra.mxu0 %v3296
        %v3318 = vpop.f32.mrf.mxu0
        %v3319 = vadd.f32 %v3293, %v3318
        %3320 = vdwg.mxu0
        %v3321 = vld [vmem:[%s2640 + $0x1] sm:$0xf]
        %v3322 = vld [vmem:[%s382] sm:$0xf]
        %v3324 = vsel %vm326, %v3321, 0
        %v3327 = vsel %vm330, %v3322, 0
        %3329 = vmatpush.msra.mxu0 0.0
        %3330 = vmatpush.msra.mxu0 0.0
        %3331 = vmatpush.msra.mxu0 0.0
        %3332 = vmatpush.msra.mxu0 0.0
        %3333 = vmatpush.msra.mxu0 0.0
        %3334 = vmatpush.msra.mxu0 0.0
        %3335 = vmatpush.msra.mxu0 0.0
        %3336 = vmatpush.msra.mxu0 0.0
        %3337 = vmatpush.msra.mxu0 0.0
        %3338 = vmatpush.msra.mxu0 0.0
        %3339 = vmatpush.msra.mxu0 0.0
        %3340 = vmatpush.msra.mxu0 0.0
        %3341 = vmatpush.msra.mxu0 0.0
        %3342 = vmatpush.msra.mxu0 0.0
        %3343 = vmatpush.msra.mxu0 0.0
        %3344 = vmatpush.msra.mxu0 %v3327
        %3345 = vmatmul.f32.gmra.mxu0 %v3324
        %v3346 = vpop.f32.mrf.mxu0
        %v3347 = vadd.f32 0.0, %v3346
        %3348 = vdwg.mxu0
        %v3349 = vadd.f32 %v3319, %v3347
        %v3350 = vld [vmem:[%s3142] sm:$0xf]
        %v3351 = vld [vmem:[%s413] sm:$0xf]
        %v3353 = vsel %vm326, %v3350, 0
        %v3356 = vsel %vm330, %v3351, 0
        %3358 = vmatpush.msra.mxu0 0.0
        %3359 = vmatpush.msra.mxu0 0.0
        %3360 = vmatpush.msra.mxu0 0.0
        %3361 = vmatpush.msra.mxu0 0.0
        %3362 = vmatpush.msra.mxu0 0.0
        %3363 = vmatpush.msra.mxu0 0.0
        %3364 = vmatpush.msra.mxu0 0.0
        %3365 = vmatpush.msra.mxu0 0.0
        %3366 = vmatpush.msra.mxu0 0.0
        %3367 = vmatpush.msra.mxu0 0.0
        %3368 = vmatpush.msra.mxu0 0.0
        %3369 = vmatpush.msra.mxu0 0.0
        %3370 = vmatpush.msra.mxu0 0.0
        %3371 = vmatpush.msra.mxu0 0.0
        %3372 = vmatpush.msra.mxu0 0.0
        %3373 = vmatpush.msra.mxu0 %v3356
        %3374 = vmatmul.f32.gmra.mxu0 %v3353
        %v3375 = vpop.f32.mrf.mxu0
        %v3376 = vadd.f32 0.0, %v3375
        %3377 = vdwg.mxu0
        %v3378 = vadd.f32 %v3349, %v3376
        %s3379 = scalar_lea.vmem %s291, 520
        %v3380 = vld [vmem:[%s3379] sm:$0xf]
        %v3381 = vld [vmem:[%s444] sm:$0xf]
        %v3383 = vsel %vm326, %v3380, 0
        %v3386 = vsel %vm330, %v3381, 0
        %3388 = vmatpush.msra.mxu0 0.0
        %3389 = vmatpush.msra.mxu0 0.0
        %3390 = vmatpush.msra.mxu0 0.0
        %3391 = vmatpush.msra.mxu0 0.0
        %3392 = vmatpush.msra.mxu0 0.0
        %3393 = vmatpush.msra.mxu0 0.0
        %3394 = vmatpush.msra.mxu0 0.0
        %3395 = vmatpush.msra.mxu0 0.0
        %3396 = vmatpush.msra.mxu0 0.0
        %3397 = vmatpush.msra.mxu0 0.0
        %3398 = vmatpush.msra.mxu0 0.0
        %3399 = vmatpush.msra.mxu0 0.0
        %3400 = vmatpush.msra.mxu0 0.0
        %3401 = vmatpush.msra.mxu0 0.0
        %3402 = vmatpush.msra.mxu0 0.0
        %3403 = vmatpush.msra.mxu0 %v3386
        %3404 = vmatmul.f32.gmra.mxu0 %v3383
        %v3405 = vpop.f32.mrf.mxu0
        %v3406 = vadd.f32 0.0, %v3405
        %3407 = vdwg.mxu0
        %v3408 = vadd.f32 %v3378, %v3406
        %v3409 = vld [vmem:[%s3082 + $0x1] sm:$0xf]
        %v3410 = vld [vmem:[%s475] sm:$0xf]
        %v3412 = vsel %vm326, %v3409, 0
        %v3415 = vsel %vm330, %v3410, 0
        %3417 = vmatpush.msra.mxu0 0.0
        %3418 = vmatpush.msra.mxu0 0.0
        %3419 = vmatpush.msra.mxu0 0.0
        %3420 = vmatpush.msra.mxu0 0.0
        %3421 = vmatpush.msra.mxu0 0.0
        %3422 = vmatpush.msra.mxu0 0.0
        %3423 = vmatpush.msra.mxu0 0.0
        %3424 = vmatpush.msra.mxu0 0.0
        %3425 = vmatpush.msra.mxu0 0.0
        %3426 = vmatpush.msra.mxu0 0.0
        %3427 = vmatpush.msra.mxu0 0.0
        %3428 = vmatpush.msra.mxu0 0.0
        %3429 = vmatpush.msra.mxu0 0.0
        %3430 = vmatpush.msra.mxu0 0.0
        %3431 = vmatpush.msra.mxu0 0.0
        %3432 = vmatpush.msra.mxu0 %v3415
        %3433 = vmatmul.f32.gmra.mxu0 %v3412
        %v3434 = vpop.f32.mrf.mxu0
        %v3435 = vadd.f32 0.0, %v3434
        %3436 = vdwg.mxu0
        %v3437 = vadd.f32 %v3408, %v3435
        %v3438 = vld [vmem:[%s3232] sm:$0xf]
        %v3439 = vld [vmem:[%s506] sm:$0xf]
        %v3441 = vsel %vm326, %v3438, 0
        %v3444 = vsel %vm330, %v3439, 0
        %3446 = vmatpush.msra.mxu0 0.0
        %3447 = vmatpush.msra.mxu0 0.0
        %3448 = vmatpush.msra.mxu0 0.0
        %3449 = vmatpush.msra.mxu0 0.0
        %3450 = vmatpush.msra.mxu0 0.0
        %3451 = vmatpush.msra.mxu0 0.0
        %3452 = vmatpush.msra.mxu0 0.0
        %3453 = vmatpush.msra.mxu0 0.0
        %3454 = vmatpush.msra.mxu0 0.0
        %3455 = vmatpush.msra.mxu0 0.0
        %3456 = vmatpush.msra.mxu0 0.0
        %3457 = vmatpush.msra.mxu0 0.0
        %3458 = vmatpush.msra.mxu0 0.0
        %3459 = vmatpush.msra.mxu0 0.0
        %3460 = vmatpush.msra.mxu0 0.0
        %3461 = vmatpush.msra.mxu0 %v3444
        %3462 = vmatmul.f32.gmra.mxu0 %v3441
        %v3463 = vpop.f32.mrf.mxu0
        %v3464 = vadd.f32 0.0, %v3463
        %3465 = vdwg.mxu0
        %v3466 = vadd.f32 %v3437, %v3464
        %s3467 = scalar_lea.vmem %s291, 528
        %v3468 = vld [vmem:[%s3467] sm:$0xf]
        %v3469 = vld [vmem:[%s537] sm:$0xf]
        %v3471 = vsel %vm326, %v3468, 0
        %v3474 = vsel %vm330, %v3469, 0
        %3476 = vmatpush.msra.mxu0 0.0
        %3477 = vmatpush.msra.mxu0 0.0
        %3478 = vmatpush.msra.mxu0 0.0
        %3479 = vmatpush.msra.mxu0 0.0
        %3480 = vmatpush.msra.mxu0 0.0
        %3481 = vmatpush.msra.mxu0 0.0
        %3482 = vmatpush.msra.mxu0 0.0
        %3483 = vmatpush.msra.mxu0 0.0
        %3484 = vmatpush.msra.mxu0 0.0
        %3485 = vmatpush.msra.mxu0 0.0
        %3486 = vmatpush.msra.mxu0 0.0
        %3487 = vmatpush.msra.mxu0 0.0
        %3488 = vmatpush.msra.mxu0 0.0
        %3489 = vmatpush.msra.mxu0 0.0
        %3490 = vmatpush.msra.mxu0 0.0
        %3491 = vmatpush.msra.mxu0 %v3474
        %3492 = vmatmul.f32.gmra.mxu0 %v3471
        %v3493 = vpop.f32.mrf.mxu0
        %v3494 = vadd.f32 0.0, %v3493
        %3495 = vdwg.mxu0
        %v3496 = vadd.f32 %v3466, %v3494
        %v3497 = vld [vmem:[%s3172 + $0x1] sm:$0xf]
        %v3498 = vld [vmem:[%s568] sm:$0xf]
        %v3500 = vsel %vm326, %v3497, 0
        %v3503 = vsel %vm330, %v3498, 0
        %3505 = vmatpush.msra.mxu0 0.0
        %3506 = vmatpush.msra.mxu0 0.0
        %3507 = vmatpush.msra.mxu0 0.0
        %3508 = vmatpush.msra.mxu0 0.0
        %3509 = vmatpush.msra.mxu0 0.0
        %3510 = vmatpush.msra.mxu0 0.0
        %3511 = vmatpush.msra.mxu0 0.0
        %3512 = vmatpush.msra.mxu0 0.0
        %3513 = vmatpush.msra.mxu0 0.0
        %3514 = vmatpush.msra.mxu0 0.0
        %3515 = vmatpush.msra.mxu0 0.0
        %3516 = vmatpush.msra.mxu0 0.0
        %3517 = vmatpush.msra.mxu0 0.0
        %3518 = vmatpush.msra.mxu0 0.0
        %3519 = vmatpush.msra.mxu0 0.0
        %3520 = vmatpush.msra.mxu0 %v3503
        %3521 = vmatmul.f32.gmra.mxu0 %v3500
        %v3522 = vpop.f32.mrf.mxu0
        %v3523 = vadd.f32 0.0, %v3522
        %3524 = vdwg.mxu0
        %v3525 = vadd.f32 %v3496, %v3523
        %v3526 = vadd.f32 %v3525, %v598
        %s3527 = scalar_lea.vmem [#allocation2], 48
        %3528 = vst.msk [vmem:[%s3527 + $0x1] sm:$0xf] %vm602, %v3526
        %v3529 = vld [vmem:[%s3172] sm:$0xf]
        %v3530 = vld [vmem:[%s2] sm:$0xf]
        %v3531 = vld [vmem:[%s3202] sm:$0xf]
        %v3532 = vld [vmem:[%s324] sm:$0xf]
        %v3534 = vsel %vm326, %v3531, 0
        %v3537 = vsel %vm330, %v3532, 0
        %3539 = vmatpush.msra.mxu0 0.0
        %3540 = vmatpush.msra.mxu0 0.0
        %3541 = vmatpush.msra.mxu0 0.0
        %3542 = vmatpush.msra.mxu0 0.0
        %3543 = vmatpush.msra.mxu0 0.0
        %3544 = vmatpush.msra.mxu0 0.0
        %3545 = vmatpush.msra.mxu0 0.0
        %3546 = vmatpush.msra.mxu0 0.0
        %3547 = vmatpush.msra.mxu0 0.0
        %3548 = vmatpush.msra.mxu0 0.0
        %3549 = vmatpush.msra.mxu0 0.0
        %3550 = vmatpush.msra.mxu0 0.0
        %3551 = vmatpush.msra.mxu0 0.0
        %3552 = vmatpush.msra.mxu0 0.0
        %3553 = vmatpush.msra.mxu0 0.0
        %3554 = vmatpush.msra.mxu0 %v3537
        %3555 = vmatmul.f32.gmra.mxu0 %v3534
        %v3556 = vpop.f32.mrf.mxu0
        %v3557 = vadd.f32 0.0, %v3556
        %3558 = vdwg.mxu0
        %v3560 = vsel %vm326, %v3529, 0
        %v3563 = vsel %vm330, %v3530, 0
        %3565 = vmatpush.msra.mxu0 0.0
        %3566 = vmatpush.msra.mxu0 0.0
        %3567 = vmatpush.msra.mxu0 0.0
        %3568 = vmatpush.msra.mxu0 0.0
        %3569 = vmatpush.msra.mxu0 0.0
        %3570 = vmatpush.msra.mxu0 0.0
        %3571 = vmatpush.msra.mxu0 0.0
        %3572 = vmatpush.msra.mxu0 0.0
        %3573 = vmatpush.msra.mxu0 0.0
        %3574 = vmatpush.msra.mxu0 0.0
        %3575 = vmatpush.msra.mxu0 0.0
        %3576 = vmatpush.msra.mxu0 0.0
        %3577 = vmatpush.msra.mxu0 0.0
        %3578 = vmatpush.msra.mxu0 0.0
        %3579 = vmatpush.msra.mxu0 0.0
        %3580 = vmatpush.msra.mxu0 %v3563
        %3581 = vmatmul.f32.gmra.mxu0 %v3560
        %v3582 = vpop.f32.mrf.mxu0
        %v3583 = vadd.f32 %v3557, %v3582
        %3584 = vdwg.mxu0
        %v3585 = vld [vmem:[%s3232] sm:$0xf]
        %v3586 = vld [vmem:[%s382] sm:$0xf]
        %v3588 = vsel %vm326, %v3585, 0
        %v3591 = vsel %vm330, %v3586, 0
        %3593 = vmatpush.msra.mxu0 0.0
        %3594 = vmatpush.msra.mxu0 0.0
        %3595 = vmatpush.msra.mxu0 0.0
        %3596 = vmatpush.msra.mxu0 0.0
        %3597 = vmatpush.msra.mxu0 0.0
        %3598 = vmatpush.msra.mxu0 0.0
        %3599 = vmatpush.msra.mxu0 0.0
        %3600 = vmatpush.msra.mxu0 0.0
        %3601 = vmatpush.msra.mxu0 0.0
        %3602 = vmatpush.msra.mxu0 0.0
        %3603 = vmatpush.msra.mxu0 0.0
        %3604 = vmatpush.msra.mxu0 0.0
        %3605 = vmatpush.msra.mxu0 0.0
        %3606 = vmatpush.msra.mxu0 0.0
        %3607 = vmatpush.msra.mxu0 0.0
        %3608 = vmatpush.msra.mxu0 %v3591
        %3609 = vmatmul.f32.gmra.mxu0 %v3588
        %v3610 = vpop.f32.mrf.mxu0
        %v3611 = vadd.f32 0.0, %v3610
        %3612 = vdwg.mxu0
        %v3613 = vadd.f32 %v3583, %v3611
        %s3614 = scalar_lea.vmem %s291, 104
        %v3615 = vld [vmem:[%s3614] sm:$0xf]
        %v3616 = vld [vmem:[%s413] sm:$0xf]
        %v3618 = vsel %vm326, %v3615, 0
        %v3621 = vsel %vm330, %v3616, 0
        %3623 = vmatpush.msra.mxu0 0.0
        %3624 = vmatpush.msra.mxu0 0.0
        %3625 = vmatpush.msra.mxu0 0.0
        %3626 = vmatpush.msra.mxu0 0.0
        %3627 = vmatpush.msra.mxu0 0.0
        %3628 = vmatpush.msra.mxu0 0.0
        %3629 = vmatpush.msra.mxu0 0.0
        %3630 = vmatpush.msra.mxu0 0.0
        %3631 = vmatpush.msra.mxu0 0.0
        %3632 = vmatpush.msra.mxu0 0.0
        %3633 = vmatpush.msra.mxu0 0.0
        %3634 = vmatpush.msra.mxu0 0.0
        %3635 = vmatpush.msra.mxu0 0.0
        %3636 = vmatpush.msra.mxu0 0.0
        %3637 = vmatpush.msra.mxu0 0.0
        %3638 = vmatpush.msra.mxu0 %v3621
        %3639 = vmatmul.f32.gmra.mxu0 %v3618
        %v3640 = vpop.f32.mrf.mxu0
        %v3641 = vadd.f32 0.0, %v3640
        %3642 = vdwg.mxu0
        %v3643 = vadd.f32 %v3613, %v3641
        %s3644 = scalar_lea.vmem %s291, 248
        %v3645 = vld [vmem:[%s3644] sm:$0xf]
        %v3646 = vld [vmem:[%s444] sm:$0xf]
        %v3648 = vsel %vm326, %v3645, 0
        %v3651 = vsel %vm330, %v3646, 0
        %3653 = vmatpush.msra.mxu0 0.0
        %3654 = vmatpush.msra.mxu0 0.0
        %3655 = vmatpush.msra.mxu0 0.0
        %3656 = vmatpush.msra.mxu0 0.0
        %3657 = vmatpush.msra.mxu0 0.0
        %3658 = vmatpush.msra.mxu0 0.0
        %3659 = vmatpush.msra.mxu0 0.0
        %3660 = vmatpush.msra.mxu0 0.0
        %3661 = vmatpush.msra.mxu0 0.0
        %3662 = vmatpush.msra.mxu0 0.0
        %3663 = vmatpush.msra.mxu0 0.0
        %3664 = vmatpush.msra.mxu0 0.0
        %3665 = vmatpush.msra.mxu0 0.0
        %3666 = vmatpush.msra.mxu0 0.0
        %3667 = vmatpush.msra.mxu0 0.0
        %3668 = vmatpush.msra.mxu0 %v3651
        %3669 = vmatmul.f32.gmra.mxu0 %v3648
        %v3670 = vpop.f32.mrf.mxu0
        %v3671 = vadd.f32 0.0, %v3670
        %3672 = vdwg.mxu0
        %v3673 = vadd.f32 %v3643, %v3671
        %s3674 = scalar_lea.vmem %s291, 392
        %v3675 = vld [vmem:[%s3674] sm:$0xf]
        %v3676 = vld [vmem:[%s475] sm:$0xf]
        %v3678 = vsel %vm326, %v3675, 0
        %v3681 = vsel %vm330, %v3676, 0
        %3683 = vmatpush.msra.mxu0 0.0
        %3684 = vmatpush.msra.mxu0 0.0
        %3685 = vmatpush.msra.mxu0 0.0
        %3686 = vmatpush.msra.mxu0 0.0
        %3687 = vmatpush.msra.mxu0 0.0
        %3688 = vmatpush.msra.mxu0 0.0
        %3689 = vmatpush.msra.mxu0 0.0
        %3690 = vmatpush.msra.mxu0 0.0
        %3691 = vmatpush.msra.mxu0 0.0
        %3692 = vmatpush.msra.mxu0 0.0
        %3693 = vmatpush.msra.mxu0 0.0
        %3694 = vmatpush.msra.mxu0 0.0
        %3695 = vmatpush.msra.mxu0 0.0
        %3696 = vmatpush.msra.mxu0 0.0
        %3697 = vmatpush.msra.mxu0 0.0
        %3698 = vmatpush.msra.mxu0 %v3681
        %3699 = vmatmul.f32.gmra.mxu0 %v3678
        %v3700 = vpop.f32.mrf.mxu0
        %v3701 = vadd.f32 0.0, %v3700
        %3702 = vdwg.mxu0
        %v3703 = vadd.f32 %v3673, %v3701
        %s3704 = scalar_lea.vmem %s291, 112
        %v3705 = vld [vmem:[%s3704] sm:$0xf]
        %v3706 = vld [vmem:[%s506] sm:$0xf]
        %v3708 = vsel %vm326, %v3705, 0
        %v3711 = vsel %vm330, %v3706, 0
        %3713 = vmatpush.msra.mxu0 0.0
        %3714 = vmatpush.msra.mxu0 0.0
        %3715 = vmatpush.msra.mxu0 0.0
        %3716 = vmatpush.msra.mxu0 0.0
        %3717 = vmatpush.msra.mxu0 0.0
        %3718 = vmatpush.msra.mxu0 0.0
        %3719 = vmatpush.msra.mxu0 0.0
        %3720 = vmatpush.msra.mxu0 0.0
        %3721 = vmatpush.msra.mxu0 0.0
        %3722 = vmatpush.msra.mxu0 0.0
        %3723 = vmatpush.msra.mxu0 0.0
        %3724 = vmatpush.msra.mxu0 0.0
        %3725 = vmatpush.msra.mxu0 0.0
        %3726 = vmatpush.msra.mxu0 0.0
        %3727 = vmatpush.msra.mxu0 0.0
        %3728 = vmatpush.msra.mxu0 %v3711
        %3729 = vmatmul.f32.gmra.mxu0 %v3708
        %v3730 = vpop.f32.mrf.mxu0
        %v3731 = vadd.f32 0.0, %v3730
        %3732 = vdwg.mxu0
        %v3733 = vadd.f32 %v3703, %v3731
        %s3734 = scalar_lea.vmem %s291, 256
        %v3735 = vld [vmem:[%s3734] sm:$0xf]
        %v3736 = vld [vmem:[%s537] sm:$0xf]
        %v3738 = vsel %vm326, %v3735, 0
        %v3741 = vsel %vm330, %v3736, 0
        %3743 = vmatpush.msra.mxu0 0.0
        %3744 = vmatpush.msra.mxu0 0.0
        %3745 = vmatpush.msra.mxu0 0.0
        %3746 = vmatpush.msra.mxu0 0.0
        %3747 = vmatpush.msra.mxu0 0.0
        %3748 = vmatpush.msra.mxu0 0.0
        %3749 = vmatpush.msra.mxu0 0.0
        %3750 = vmatpush.msra.mxu0 0.0
        %3751 = vmatpush.msra.mxu0 0.0
        %3752 = vmatpush.msra.mxu0 0.0
        %3753 = vmatpush.msra.mxu0 0.0
        %3754 = vmatpush.msra.mxu0 0.0
        %3755 = vmatpush.msra.mxu0 0.0
        %3756 = vmatpush.msra.mxu0 0.0
        %3757 = vmatpush.msra.mxu0 0.0
        %3758 = vmatpush.msra.mxu0 %v3741
        %3759 = vmatmul.f32.gmra.mxu0 %v3738
        %v3760 = vpop.f32.mrf.mxu0
        %v3761 = vadd.f32 0.0, %v3760
        %3762 = vdwg.mxu0
        %v3763 = vadd.f32 %v3733, %v3761
        %s3764 = scalar_lea.vmem %s291, 400
        %v3765 = vld [vmem:[%s3764] sm:$0xf]
        %v3766 = vld [vmem:[%s568] sm:$0xf]
        %v3768 = vsel %vm326, %v3765, 0
        %v3771 = vsel %vm330, %v3766, 0
        %3773 = vmatpush.msra.mxu0 0.0
        %3774 = vmatpush.msra.mxu0 0.0
        %3775 = vmatpush.msra.mxu0 0.0
        %3776 = vmatpush.msra.mxu0 0.0
        %3777 = vmatpush.msra.mxu0 0.0
        %3778 = vmatpush.msra.mxu0 0.0
        %3779 = vmatpush.msra.mxu0 0.0
        %3780 = vmatpush.msra.mxu0 0.0
        %3781 = vmatpush.msra.mxu0 0.0
        %3782 = vmatpush.msra.mxu0 0.0
        %3783 = vmatpush.msra.mxu0 0.0
        %3784 = vmatpush.msra.mxu0 0.0
        %3785 = vmatpush.msra.mxu0 0.0
        %3786 = vmatpush.msra.mxu0 0.0
        %3787 = vmatpush.msra.mxu0 0.0
        %3788 = vmatpush.msra.mxu0 %v3771
        %3789 = vmatmul.f32.gmra.mxu0 %v3768
        %v3790 = vpop.f32.mrf.mxu0
        %v3791 = vadd.f32 0.0, %v3790
        %3792 = vdwg.mxu0
        %v3793 = vadd.f32 %v3763, %v3791
        %v3794 = vadd.f32 %v3793, %v598
        %s3795 = scalar_lea.vmem [#allocation2], 136
        %3796 = vst.msk [vmem:[%s3795] sm:$0xf] %vm602, %v3794
        %v3797 = vld [vmem:[%s3232] sm:$0xf]
        %v3798 = vld [vmem:[%s2] sm:$0xf]
        %v3799 = vld [vmem:[%s3467] sm:$0xf]
        %v3800 = vld [vmem:[%s324] sm:$0xf]
        %v3802 = vsel %vm326, %v3799, 0
        %v3805 = vsel %vm330, %v3800, 0
        %3807 = vmatpush.msra.mxu0 0.0
        %3808 = vmatpush.msra.mxu0 0.0
        %3809 = vmatpush.msra.mxu0 0.0
        %3810 = vmatpush.msra.mxu0 0.0
        %3811 = vmatpush.msra.mxu0 0.0
        %3812 = vmatpush.msra.mxu0 0.0
        %3813 = vmatpush.msra.mxu0 0.0
        %3814 = vmatpush.msra.mxu0 0.0
        %3815 = vmatpush.msra.mxu0 0.0
        %3816 = vmatpush.msra.mxu0 0.0
        %3817 = vmatpush.msra.mxu0 0.0
        %3818 = vmatpush.msra.mxu0 0.0
        %3819 = vmatpush.msra.mxu0 0.0
        %3820 = vmatpush.msra.mxu0 0.0
        %3821 = vmatpush.msra.mxu0 0.0
        %3822 = vmatpush.msra.mxu0 %v3805
        %3823 = vmatmul.f32.gmra.mxu0 %v3802
        %v3824 = vpop.f32.mrf.mxu0
        %v3825 = vadd.f32 0.0, %v3824
        %3826 = vdwg.mxu0
        %v3828 = vsel %vm326, %v3797, 0
        %v3831 = vsel %vm330, %v3798, 0
        %3833 = vmatpush.msra.mxu0 0.0
        %3834 = vmatpush.msra.mxu0 0.0
        %3835 = vmatpush.msra.mxu0 0.0
        %3836 = vmatpush.msra.mxu0 0.0
        %3837 = vmatpush.msra.mxu0 0.0
        %3838 = vmatpush.msra.mxu0 0.0
        %3839 = vmatpush.msra.mxu0 0.0
        %3840 = vmatpush.msra.mxu0 0.0
        %3841 = vmatpush.msra.mxu0 0.0
        %3842 = vmatpush.msra.mxu0 0.0
        %3843 = vmatpush.msra.mxu0 0.0
        %3844 = vmatpush.msra.mxu0 0.0
        %3845 = vmatpush.msra.mxu0 0.0
        %3846 = vmatpush.msra.mxu0 0.0
        %3847 = vmatpush.msra.mxu0 0.0
        %3848 = vmatpush.msra.mxu0 %v3831
        %3849 = vmatmul.f32.gmra.mxu0 %v3828
        %v3850 = vpop.f32.mrf.mxu0
        %v3851 = vadd.f32 %v3825, %v3850
        %3852 = vdwg.mxu0
        %v3853 = vld [vmem:[%s3172 + $0x1] sm:$0xf]
        %v3854 = vld [vmem:[%s382] sm:$0xf]
        %v3856 = vsel %vm326, %v3853, 0
        %v3859 = vsel %vm330, %v3854, 0
        %3861 = vmatpush.msra.mxu0 0.0
        %3862 = vmatpush.msra.mxu0 0.0
        %3863 = vmatpush.msra.mxu0 0.0
        %3864 = vmatpush.msra.mxu0 0.0
        %3865 = vmatpush.msra.mxu0 0.0
        %3866 = vmatpush.msra.mxu0 0.0
        %3867 = vmatpush.msra.mxu0 0.0
        %3868 = vmatpush.msra.mxu0 0.0
        %3869 = vmatpush.msra.mxu0 0.0
        %3870 = vmatpush.msra.mxu0 0.0
        %3871 = vmatpush.msra.mxu0 0.0
        %3872 = vmatpush.msra.mxu0 0.0
        %3873 = vmatpush.msra.mxu0 0.0
        %3874 = vmatpush.msra.mxu0 0.0
        %3875 = vmatpush.msra.mxu0 0.0
        %3876 = vmatpush.msra.mxu0 %v3859
        %3877 = vmatmul.f32.gmra.mxu0 %v3856
        %v3878 = vpop.f32.mrf.mxu0
        %v3879 = vadd.f32 0.0, %v3878
        %3880 = vdwg.mxu0
        %v3881 = vadd.f32 %v3851, %v3879
        %v3882 = vld [vmem:[%s3674] sm:$0xf]
        %v3883 = vld [vmem:[%s413] sm:$0xf]
        %v3885 = vsel %vm326, %v3882, 0
        %v3888 = vsel %vm330, %v3883, 0
        %3890 = vmatpush.msra.mxu0 0.0
        %3891 = vmatpush.msra.mxu0 0.0
        %3892 = vmatpush.msra.mxu0 0.0
        %3893 = vmatpush.msra.mxu0 0.0
        %3894 = vmatpush.msra.mxu0 0.0
        %3895 = vmatpush.msra.mxu0 0.0
        %3896 = vmatpush.msra.mxu0 0.0
        %3897 = vmatpush.msra.mxu0 0.0
        %3898 = vmatpush.msra.mxu0 0.0
        %3899 = vmatpush.msra.mxu0 0.0
        %3900 = vmatpush.msra.mxu0 0.0
        %3901 = vmatpush.msra.mxu0 0.0
        %3902 = vmatpush.msra.mxu0 0.0
        %3903 = vmatpush.msra.mxu0 0.0
        %3904 = vmatpush.msra.mxu0 0.0
        %3905 = vmatpush.msra.mxu0 %v3888
        %3906 = vmatmul.f32.gmra.mxu0 %v3885
        %v3907 = vpop.f32.mrf.mxu0
        %v3908 = vadd.f32 0.0, %v3907
        %3909 = vdwg.mxu0
        %v3910 = vadd.f32 %v3881, %v3908
        %s3911 = scalar_lea.vmem %s291, 536
        %v3912 = vld [vmem:[%s3911] sm:$0xf]
        %v3913 = vld [vmem:[%s444] sm:$0xf]
        %v3915 = vsel %vm326, %v3912, 0
        %v3918 = vsel %vm330, %v3913, 0
        %3920 = vmatpush.msra.mxu0 0.0
        %3921 = vmatpush.msra.mxu0 0.0
        %3922 = vmatpush.msra.mxu0 0.0
        %3923 = vmatpush.msra.mxu0 0.0
        %3924 = vmatpush.msra.mxu0 0.0
        %3925 = vmatpush.msra.mxu0 0.0
        %3926 = vmatpush.msra.mxu0 0.0
        %3927 = vmatpush.msra.mxu0 0.0
        %3928 = vmatpush.msra.mxu0 0.0
        %3929 = vmatpush.msra.mxu0 0.0
        %3930 = vmatpush.msra.mxu0 0.0
        %3931 = vmatpush.msra.mxu0 0.0
        %3932 = vmatpush.msra.mxu0 0.0
        %3933 = vmatpush.msra.mxu0 0.0
        %3934 = vmatpush.msra.mxu0 0.0
        %3935 = vmatpush.msra.mxu0 %v3918
        %3936 = vmatmul.f32.gmra.mxu0 %v3915
        %v3937 = vpop.f32.mrf.mxu0
        %v3938 = vadd.f32 0.0, %v3937
        %3939 = vdwg.mxu0
        %v3940 = vadd.f32 %v3910, %v3938
        %v3941 = vld [vmem:[%s3614 + $0x1] sm:$0xf]
        %v3942 = vld [vmem:[%s475] sm:$0xf]
        %v3944 = vsel %vm326, %v3941, 0
        %v3947 = vsel %vm330, %v3942, 0
        %3949 = vmatpush.msra.mxu0 0.0
        %3950 = vmatpush.msra.mxu0 0.0
        %3951 = vmatpush.msra.mxu0 0.0
        %3952 = vmatpush.msra.mxu0 0.0
        %3953 = vmatpush.msra.mxu0 0.0
        %3954 = vmatpush.msra.mxu0 0.0
        %3955 = vmatpush.msra.mxu0 0.0
        %3956 = vmatpush.msra.mxu0 0.0
        %3957 = vmatpush.msra.mxu0 0.0
        %3958 = vmatpush.msra.mxu0 0.0
        %3959 = vmatpush.msra.mxu0 0.0
        %3960 = vmatpush.msra.mxu0 0.0
        %3961 = vmatpush.msra.mxu0 0.0
        %3962 = vmatpush.msra.mxu0 0.0
        %3963 = vmatpush.msra.mxu0 0.0
        %3964 = vmatpush.msra.mxu0 %v3947
        %3965 = vmatmul.f32.gmra.mxu0 %v3944
        %v3966 = vpop.f32.mrf.mxu0
        %v3967 = vadd.f32 0.0, %v3966
        %3968 = vdwg.mxu0
        %v3969 = vadd.f32 %v3940, %v3967
        %v3970 = vld [vmem:[%s3764] sm:$0xf]
        %v3971 = vld [vmem:[%s506] sm:$0xf]
        %v3973 = vsel %vm326, %v3970, 0
        %v3976 = vsel %vm330, %v3971, 0
        %3978 = vmatpush.msra.mxu0 0.0
        %3979 = vmatpush.msra.mxu0 0.0
        %3980 = vmatpush.msra.mxu0 0.0
        %3981 = vmatpush.msra.mxu0 0.0
        %3982 = vmatpush.msra.mxu0 0.0
        %3983 = vmatpush.msra.mxu0 0.0
        %3984 = vmatpush.msra.mxu0 0.0
        %3985 = vmatpush.msra.mxu0 0.0
        %3986 = vmatpush.msra.mxu0 0.0
        %3987 = vmatpush.msra.mxu0 0.0
        %3988 = vmatpush.msra.mxu0 0.0
        %3989 = vmatpush.msra.mxu0 0.0
        %3990 = vmatpush.msra.mxu0 0.0
        %3991 = vmatpush.msra.mxu0 0.0
        %3992 = vmatpush.msra.mxu0 0.0
        %3993 = vmatpush.msra.mxu0 %v3976
        %3994 = vmatmul.f32.gmra.mxu0 %v3973
        %v3995 = vpop.f32.mrf.mxu0
        %v3996 = vadd.f32 0.0, %v3995
        %3997 = vdwg.mxu0
        %v3998 = vadd.f32 %v3969, %v3996
        %s3999 = scalar_lea.vmem %s291, 544
        %v4000 = vld [vmem:[%s3999] sm:$0xf]
        %v4001 = vld [vmem:[%s537] sm:$0xf]
        %v4003 = vsel %vm326, %v4000, 0
        %v4006 = vsel %vm330, %v4001, 0
        %4008 = vmatpush.msra.mxu0 0.0
        %4009 = vmatpush.msra.mxu0 0.0
        %4010 = vmatpush.msra.mxu0 0.0
        %4011 = vmatpush.msra.mxu0 0.0
        %4012 = vmatpush.msra.mxu0 0.0
        %4013 = vmatpush.msra.mxu0 0.0
        %4014 = vmatpush.msra.mxu0 0.0
        %4015 = vmatpush.msra.mxu0 0.0
        %4016 = vmatpush.msra.mxu0 0.0
        %4017 = vmatpush.msra.mxu0 0.0
        %4018 = vmatpush.msra.mxu0 0.0
        %4019 = vmatpush.msra.mxu0 0.0
        %4020 = vmatpush.msra.mxu0 0.0
        %4021 = vmatpush.msra.mxu0 0.0
        %4022 = vmatpush.msra.mxu0 0.0
        %4023 = vmatpush.msra.mxu0 %v4006
        %4024 = vmatmul.f32.gmra.mxu0 %v4003
        %v4025 = vpop.f32.mrf.mxu0
        %v4026 = vadd.f32 0.0, %v4025
        %4027 = vdwg.mxu0
        %v4028 = vadd.f32 %v3998, %v4026
        %v4029 = vld [vmem:[%s3704 + $0x1] sm:$0xf]
        %v4030 = vld [vmem:[%s568] sm:$0xf]
        %v4032 = vsel %vm326, %v4029, 0
        %v4035 = vsel %vm330, %v4030, 0
        %4037 = vmatpush.msra.mxu0 0.0
        %4038 = vmatpush.msra.mxu0 0.0
        %4039 = vmatpush.msra.mxu0 0.0
        %4040 = vmatpush.msra.mxu0 0.0
        %4041 = vmatpush.msra.mxu0 0.0
        %4042 = vmatpush.msra.mxu0 0.0
        %4043 = vmatpush.msra.mxu0 0.0
        %4044 = vmatpush.msra.mxu0 0.0
        %4045 = vmatpush.msra.mxu0 0.0
        %4046 = vmatpush.msra.mxu0 0.0
        %4047 = vmatpush.msra.mxu0 0.0
        %4048 = vmatpush.msra.mxu0 0.0
        %4049 = vmatpush.msra.mxu0 0.0
        %4050 = vmatpush.msra.mxu0 0.0
        %4051 = vmatpush.msra.mxu0 0.0
        %4052 = vmatpush.msra.mxu0 %v4035
        %4053 = vmatmul.f32.gmra.mxu0 %v4032
        %v4054 = vpop.f32.mrf.mxu0
        %v4055 = vadd.f32 0.0, %v4054
        %4056 = vdwg.mxu0
        %v4057 = vadd.f32 %v4028, %v4055
        %v4058 = vadd.f32 %v4057, %v598
        %s4059 = scalar_lea.vmem [#allocation2], 56
        %4060 = vst.msk [vmem:[%s4059 + $0x1] sm:$0xf] %vm602, %v4058
        %v4061 = vld [vmem:[%s3704] sm:$0xf]
        %v4062 = vld [vmem:[%s2] sm:$0xf]
        %v4063 = vld [vmem:[%s3734] sm:$0xf]
        %v4064 = vld [vmem:[%s324] sm:$0xf]
        %v4066 = vsel %vm326, %v4063, 0
        %v4069 = vsel %vm330, %v4064, 0
        %4071 = vmatpush.msra.mxu0 0.0
        %4072 = vmatpush.msra.mxu0 0.0
        %4073 = vmatpush.msra.mxu0 0.0
        %4074 = vmatpush.msra.mxu0 0.0
        %4075 = vmatpush.msra.mxu0 0.0
        %4076 = vmatpush.msra.mxu0 0.0
        %4077 = vmatpush.msra.mxu0 0.0
        %4078 = vmatpush.msra.mxu0 0.0
        %4079 = vmatpush.msra.mxu0 0.0
        %4080 = vmatpush.msra.mxu0 0.0
        %4081 = vmatpush.msra.mxu0 0.0
        %4082 = vmatpush.msra.mxu0 0.0
        %4083 = vmatpush.msra.mxu0 0.0
        %4084 = vmatpush.msra.mxu0 0.0
        %4085 = vmatpush.msra.mxu0 0.0
        %4086 = vmatpush.msra.mxu0 %v4069
        %4087 = vmatmul.f32.gmra.mxu0 %v4066
        %v4088 = vpop.f32.mrf.mxu0
        %v4089 = vadd.f32 0.0, %v4088
        %4090 = vdwg.mxu0
        %v4092 = vsel %vm326, %v4061, 0
        %v4095 = vsel %vm330, %v4062, 0
        %4097 = vmatpush.msra.mxu0 0.0
        %4098 = vmatpush.msra.mxu0 0.0
        %4099 = vmatpush.msra.mxu0 0.0
        %4100 = vmatpush.msra.mxu0 0.0
        %4101 = vmatpush.msra.mxu0 0.0
        %4102 = vmatpush.msra.mxu0 0.0
        %4103 = vmatpush.msra.mxu0 0.0
        %4104 = vmatpush.msra.mxu0 0.0
        %4105 = vmatpush.msra.mxu0 0.0
        %4106 = vmatpush.msra.mxu0 0.0
        %4107 = vmatpush.msra.mxu0 0.0
        %4108 = vmatpush.msra.mxu0 0.0
        %4109 = vmatpush.msra.mxu0 0.0
        %4110 = vmatpush.msra.mxu0 0.0
        %4111 = vmatpush.msra.mxu0 0.0
        %4112 = vmatpush.msra.mxu0 %v4095
        %4113 = vmatmul.f32.gmra.mxu0 %v4092
        %v4114 = vpop.f32.mrf.mxu0
        %v4115 = vadd.f32 %v4089, %v4114
        %4116 = vdwg.mxu0
        %v4117 = vld [vmem:[%s3764] sm:$0xf]
        %v4118 = vld [vmem:[%s382] sm:$0xf]
        %v4120 = vsel %vm326, %v4117, 0
        %v4123 = vsel %vm330, %v4118, 0
        %4125 = vmatpush.msra.mxu0 0.0
        %4126 = vmatpush.msra.mxu0 0.0
        %4127 = vmatpush.msra.mxu0 0.0
        %4128 = vmatpush.msra.mxu0 0.0
        %4129 = vmatpush.msra.mxu0 0.0
        %4130 = vmatpush.msra.mxu0 0.0
        %4131 = vmatpush.msra.mxu0 0.0
        %4132 = vmatpush.msra.mxu0 0.0
        %4133 = vmatpush.msra.mxu0 0.0
        %4134 = vmatpush.msra.mxu0 0.0
        %4135 = vmatpush.msra.mxu0 0.0
        %4136 = vmatpush.msra.mxu0 0.0
        %4137 = vmatpush.msra.mxu0 0.0
        %4138 = vmatpush.msra.mxu0 0.0
        %4139 = vmatpush.msra.mxu0 0.0
        %4140 = vmatpush.msra.mxu0 %v4123
        %4141 = vmatmul.f32.gmra.mxu0 %v4120
        %v4142 = vpop.f32.mrf.mxu0
        %v4143 = vadd.f32 0.0, %v4142
        %4144 = vdwg.mxu0
        %v4145 = vadd.f32 %v4115, %v4143
        %s4146 = scalar_lea.vmem %s291, 120
        %v4147 = vld [vmem:[%s4146] sm:$0xf]
        %v4148 = vld [vmem:[%s413] sm:$0xf]
        %v4150 = vsel %vm326, %v4147, 0
        %v4153 = vsel %vm330, %v4148, 0
        %4155 = vmatpush.msra.mxu0 0.0
        %4156 = vmatpush.msra.mxu0 0.0
        %4157 = vmatpush.msra.mxu0 0.0
        %4158 = vmatpush.msra.mxu0 0.0
        %4159 = vmatpush.msra.mxu0 0.0
        %4160 = vmatpush.msra.mxu0 0.0
        %4161 = vmatpush.msra.mxu0 0.0
        %4162 = vmatpush.msra.mxu0 0.0
        %4163 = vmatpush.msra.mxu0 0.0
        %4164 = vmatpush.msra.mxu0 0.0
        %4165 = vmatpush.msra.mxu0 0.0
        %4166 = vmatpush.msra.mxu0 0.0
        %4167 = vmatpush.msra.mxu0 0.0
        %4168 = vmatpush.msra.mxu0 0.0
        %4169 = vmatpush.msra.mxu0 0.0
        %4170 = vmatpush.msra.mxu0 %v4153
        %4171 = vmatmul.f32.gmra.mxu0 %v4150
        %v4172 = vpop.f32.mrf.mxu0
        %v4173 = vadd.f32 0.0, %v4172
        %4174 = vdwg.mxu0
        %v4175 = vadd.f32 %v4145, %v4173
        %s4176 = scalar_lea.vmem %s291, 264
        %v4177 = vld [vmem:[%s4176] sm:$0xf]
        %v4178 = vld [vmem:[%s444] sm:$0xf]
        %v4180 = vsel %vm326, %v4177, 0
        %v4183 = vsel %vm330, %v4178, 0
        %4185 = vmatpush.msra.mxu0 0.0
        %4186 = vmatpush.msra.mxu0 0.0
        %4187 = vmatpush.msra.mxu0 0.0
        %4188 = vmatpush.msra.mxu0 0.0
        %4189 = vmatpush.msra.mxu0 0.0
        %4190 = vmatpush.msra.mxu0 0.0
        %4191 = vmatpush.msra.mxu0 0.0
        %4192 = vmatpush.msra.mxu0 0.0
        %4193 = vmatpush.msra.mxu0 0.0
        %4194 = vmatpush.msra.mxu0 0.0
        %4195 = vmatpush.msra.mxu0 0.0
        %4196 = vmatpush.msra.mxu0 0.0
        %4197 = vmatpush.msra.mxu0 0.0
        %4198 = vmatpush.msra.mxu0 0.0
        %4199 = vmatpush.msra.mxu0 0.0
        %4200 = vmatpush.msra.mxu0 %v4183
        %4201 = vmatmul.f32.gmra.mxu0 %v4180
        %v4202 = vpop.f32.mrf.mxu0
        %v4203 = vadd.f32 0.0, %v4202
        %4204 = vdwg.mxu0
        %v4205 = vadd.f32 %v4175, %v4203
        %s4206 = scalar_lea.vmem %s291, 408
        %v4207 = vld [vmem:[%s4206] sm:$0xf]
        %v4208 = vld [vmem:[%s475] sm:$0xf]
        %v4210 = vsel %vm326, %v4207, 0
        %v4213 = vsel %vm330, %v4208, 0
        %4215 = vmatpush.msra.mxu0 0.0
        %4216 = vmatpush.msra.mxu0 0.0
        %4217 = vmatpush.msra.mxu0 0.0
        %4218 = vmatpush.msra.mxu0 0.0
        %4219 = vmatpush.msra.mxu0 0.0
        %4220 = vmatpush.msra.mxu0 0.0
        %4221 = vmatpush.msra.mxu0 0.0
        %4222 = vmatpush.msra.mxu0 0.0
        %4223 = vmatpush.msra.mxu0 0.0
        %4224 = vmatpush.msra.mxu0 0.0
        %4225 = vmatpush.msra.mxu0 0.0
        %4226 = vmatpush.msra.mxu0 0.0
        %4227 = vmatpush.msra.mxu0 0.0
        %4228 = vmatpush.msra.mxu0 0.0
        %4229 = vmatpush.msra.mxu0 0.0
        %4230 = vmatpush.msra.mxu0 %v4213
        %4231 = vmatmul.f32.gmra.mxu0 %v4210
        %v4232 = vpop.f32.mrf.mxu0
        %v4233 = vadd.f32 0.0, %v4232
        %4234 = vdwg.mxu0
        %v4235 = vadd.f32 %v4205, %v4233
        %s4236 = scalar_lea.vmem %s291, 128
        %v4237 = vld [vmem:[%s4236] sm:$0xf]
        %v4238 = vld [vmem:[%s506] sm:$0xf]
        %v4240 = vsel %vm326, %v4237, 0
        %v4243 = vsel %vm330, %v4238, 0
        %4245 = vmatpush.msra.mxu0 0.0
        %4246 = vmatpush.msra.mxu0 0.0
        %4247 = vmatpush.msra.mxu0 0.0
        %4248 = vmatpush.msra.mxu0 0.0
        %4249 = vmatpush.msra.mxu0 0.0
        %4250 = vmatpush.msra.mxu0 0.0
        %4251 = vmatpush.msra.mxu0 0.0
        %4252 = vmatpush.msra.mxu0 0.0
        %4253 = vmatpush.msra.mxu0 0.0
        %4254 = vmatpush.msra.mxu0 0.0
        %4255 = vmatpush.msra.mxu0 0.0
        %4256 = vmatpush.msra.mxu0 0.0
        %4257 = vmatpush.msra.mxu0 0.0
        %4258 = vmatpush.msra.mxu0 0.0
        %4259 = vmatpush.msra.mxu0 0.0
        %4260 = vmatpush.msra.mxu0 %v4243
        %4261 = vmatmul.f32.gmra.mxu0 %v4240
        %v4262 = vpop.f32.mrf.mxu0
        %v4263 = vadd.f32 0.0, %v4262
        %4264 = vdwg.mxu0
        %v4265 = vadd.f32 %v4235, %v4263
        %s4266 = scalar_lea.vmem %s291, 272
        %v4267 = vld [vmem:[%s4266] sm:$0xf]
        %v4268 = vld [vmem:[%s537] sm:$0xf]
        %v4270 = vsel %vm326, %v4267, 0
        %v4273 = vsel %vm330, %v4268, 0
        %4275 = vmatpush.msra.mxu0 0.0
        %4276 = vmatpush.msra.mxu0 0.0
        %4277 = vmatpush.msra.mxu0 0.0
        %4278 = vmatpush.msra.mxu0 0.0
        %4279 = vmatpush.msra.mxu0 0.0
        %4280 = vmatpush.msra.mxu0 0.0
        %4281 = vmatpush.msra.mxu0 0.0
        %4282 = vmatpush.msra.mxu0 0.0
        %4283 = vmatpush.msra.mxu0 0.0
        %4284 = vmatpush.msra.mxu0 0.0
        %4285 = vmatpush.msra.mxu0 0.0
        %4286 = vmatpush.msra.mxu0 0.0
        %4287 = vmatpush.msra.mxu0 0.0
        %4288 = vmatpush.msra.mxu0 0.0
        %4289 = vmatpush.msra.mxu0 0.0
        %4290 = vmatpush.msra.mxu0 %v4273
        %4291 = vmatmul.f32.gmra.mxu0 %v4270
        %v4292 = vpop.f32.mrf.mxu0
        %v4293 = vadd.f32 0.0, %v4292
        %4294 = vdwg.mxu0
        %v4295 = vadd.f32 %v4265, %v4293
        %s4296 = scalar_lea.vmem %s291, 416
        %v4297 = vld [vmem:[%s4296] sm:$0xf]
        %v4298 = vld [vmem:[%s568] sm:$0xf]
        %v4300 = vsel %vm326, %v4297, 0
        %v4303 = vsel %vm330, %v4298, 0
        %4305 = vmatpush.msra.mxu0 0.0
        %4306 = vmatpush.msra.mxu0 0.0
        %4307 = vmatpush.msra.mxu0 0.0
        %4308 = vmatpush.msra.mxu0 0.0
        %4309 = vmatpush.msra.mxu0 0.0
        %4310 = vmatpush.msra.mxu0 0.0
        %4311 = vmatpush.msra.mxu0 0.0
        %4312 = vmatpush.msra.mxu0 0.0
        %4313 = vmatpush.msra.mxu0 0.0
        %4314 = vmatpush.msra.mxu0 0.0
        %4315 = vmatpush.msra.mxu0 0.0
        %4316 = vmatpush.msra.mxu0 0.0
        %4317 = vmatpush.msra.mxu0 0.0
        %4318 = vmatpush.msra.mxu0 0.0
        %4319 = vmatpush.msra.mxu0 0.0
        %4320 = vmatpush.msra.mxu0 %v4303
        %4321 = vmatmul.f32.gmra.mxu0 %v4300
        %v4322 = vpop.f32.mrf.mxu0
        %v4323 = vadd.f32 0.0, %v4322
        %4324 = vdwg.mxu0
        %v4325 = vadd.f32 %v4295, %v4323
        %v4326 = vadd.f32 %v4325, %v598
        %s4327 = scalar_lea.vmem [#allocation2], 144
        %4328 = vst.msk [vmem:[%s4327] sm:$0xf] %vm602, %v4326
        %v4329 = vld [vmem:[%s3764] sm:$0xf]
        %v4330 = vld [vmem:[%s2] sm:$0xf]
        %v4331 = vld [vmem:[%s3999] sm:$0xf]
        %v4332 = vld [vmem:[%s324] sm:$0xf]
        %v4334 = vsel %vm326, %v4331, 0
        %v4337 = vsel %vm330, %v4332, 0
        %4339 = vmatpush.msra.mxu0 0.0
        %4340 = vmatpush.msra.mxu0 0.0
        %4341 = vmatpush.msra.mxu0 0.0
        %4342 = vmatpush.msra.mxu0 0.0
        %4343 = vmatpush.msra.mxu0 0.0
        %4344 = vmatpush.msra.mxu0 0.0
        %4345 = vmatpush.msra.mxu0 0.0
        %4346 = vmatpush.msra.mxu0 0.0
        %4347 = vmatpush.msra.mxu0 0.0
        %4348 = vmatpush.msra.mxu0 0.0
        %4349 = vmatpush.msra.mxu0 0.0
        %4350 = vmatpush.msra.mxu0 0.0
        %4351 = vmatpush.msra.mxu0 0.0
        %4352 = vmatpush.msra.mxu0 0.0
        %4353 = vmatpush.msra.mxu0 0.0
        %4354 = vmatpush.msra.mxu0 %v4337
        %4355 = vmatmul.f32.gmra.mxu0 %v4334
        %v4356 = vpop.f32.mrf.mxu0
        %v4357 = vadd.f32 0.0, %v4356
        %4358 = vdwg.mxu0
        %v4360 = vsel %vm326, %v4329, 0
        %v4363 = vsel %vm330, %v4330, 0
        %4365 = vmatpush.msra.mxu0 0.0
        %4366 = vmatpush.msra.mxu0 0.0
        %4367 = vmatpush.msra.mxu0 0.0
        %4368 = vmatpush.msra.mxu0 0.0
        %4369 = vmatpush.msra.mxu0 0.0
        %4370 = vmatpush.msra.mxu0 0.0
        %4371 = vmatpush.msra.mxu0 0.0
        %4372 = vmatpush.msra.mxu0 0.0
        %4373 = vmatpush.msra.mxu0 0.0
        %4374 = vmatpush.msra.mxu0 0.0
        %4375 = vmatpush.msra.mxu0 0.0
        %4376 = vmatpush.msra.mxu0 0.0
        %4377 = vmatpush.msra.mxu0 0.0
        %4378 = vmatpush.msra.mxu0 0.0
        %4379 = vmatpush.msra.mxu0 0.0
        %4380 = vmatpush.msra.mxu0 %v4363
        %4381 = vmatmul.f32.gmra.mxu0 %v4360
        %v4382 = vpop.f32.mrf.mxu0
        %v4383 = vadd.f32 %v4357, %v4382
        %4384 = vdwg.mxu0
        %v4385 = vld [vmem:[%s3704 + $0x1] sm:$0xf]
        %v4386 = vld [vmem:[%s382] sm:$0xf]
        %v4388 = vsel %vm326, %v4385, 0
        %v4391 = vsel %vm330, %v4386, 0
        %4393 = vmatpush.msra.mxu0 0.0
        %4394 = vmatpush.msra.mxu0 0.0
        %4395 = vmatpush.msra.mxu0 0.0
        %4396 = vmatpush.msra.mxu0 0.0
        %4397 = vmatpush.msra.mxu0 0.0
        %4398 = vmatpush.msra.mxu0 0.0
        %4399 = vmatpush.msra.mxu0 0.0
        %4400 = vmatpush.msra.mxu0 0.0
        %4401 = vmatpush.msra.mxu0 0.0
        %4402 = vmatpush.msra.mxu0 0.0
        %4403 = vmatpush.msra.mxu0 0.0
        %4404 = vmatpush.msra.mxu0 0.0
        %4405 = vmatpush.msra.mxu0 0.0
        %4406 = vmatpush.msra.mxu0 0.0
        %4407 = vmatpush.msra.mxu0 0.0
        %4408 = vmatpush.msra.mxu0 %v4391
        %4409 = vmatmul.f32.gmra.mxu0 %v4388
        %v4410 = vpop.f32.mrf.mxu0
        %v4411 = vadd.f32 0.0, %v4410
        %4412 = vdwg.mxu0
        %v4413 = vadd.f32 %v4383, %v4411
        %v4414 = vld [vmem:[%s4206] sm:$0xf]
        %v4415 = vld [vmem:[%s413] sm:$0xf]
        %v4417 = vsel %vm326, %v4414, 0
        %v4420 = vsel %vm330, %v4415, 0
        %4422 = vmatpush.msra.mxu0 0.0
        %4423 = vmatpush.msra.mxu0 0.0
        %4424 = vmatpush.msra.mxu0 0.0
        %4425 = vmatpush.msra.mxu0 0.0
        %4426 = vmatpush.msra.mxu0 0.0
        %4427 = vmatpush.msra.mxu0 0.0
        %4428 = vmatpush.msra.mxu0 0.0
        %4429 = vmatpush.msra.mxu0 0.0
        %4430 = vmatpush.msra.mxu0 0.0
        %4431 = vmatpush.msra.mxu0 0.0
        %4432 = vmatpush.msra.mxu0 0.0
        %4433 = vmatpush.msra.mxu0 0.0
        %4434 = vmatpush.msra.mxu0 0.0
        %4435 = vmatpush.msra.mxu0 0.0
        %4436 = vmatpush.msra.mxu0 0.0
        %4437 = vmatpush.msra.mxu0 %v4420
        %4438 = vmatmul.f32.gmra.mxu0 %v4417
        %v4439 = vpop.f32.mrf.mxu0
        %v4440 = vadd.f32 0.0, %v4439
        %4441 = vdwg.mxu0
        %v4442 = vadd.f32 %v4413, %v4440
        %s4443 = scalar_lea.vmem %s291, 552
        %v4444 = vld [vmem:[%s4443] sm:$0xf]
        %v4445 = vld [vmem:[%s444] sm:$0xf]
        %v4447 = vsel %vm326, %v4444, 0
        %v4450 = vsel %vm330, %v4445, 0
        %4452 = vmatpush.msra.mxu0 0.0
        %4453 = vmatpush.msra.mxu0 0.0
        %4454 = vmatpush.msra.mxu0 0.0
        %4455 = vmatpush.msra.mxu0 0.0
        %4456 = vmatpush.msra.mxu0 0.0
        %4457 = vmatpush.msra.mxu0 0.0
        %4458 = vmatpush.msra.mxu0 0.0
        %4459 = vmatpush.msra.mxu0 0.0
        %4460 = vmatpush.msra.mxu0 0.0
        %4461 = vmatpush.msra.mxu0 0.0
        %4462 = vmatpush.msra.mxu0 0.0
        %4463 = vmatpush.msra.mxu0 0.0
        %4464 = vmatpush.msra.mxu0 0.0
        %4465 = vmatpush.msra.mxu0 0.0
        %4466 = vmatpush.msra.mxu0 0.0
        %4467 = vmatpush.msra.mxu0 %v4450
        %4468 = vmatmul.f32.gmra.mxu0 %v4447
        %v4469 = vpop.f32.mrf.mxu0
        %v4470 = vadd.f32 0.0, %v4469
        %4471 = vdwg.mxu0
        %v4472 = vadd.f32 %v4442, %v4470
        %v4473 = vld [vmem:[%s4146 + $0x1] sm:$0xf]
        %v4474 = vld [vmem:[%s475] sm:$0xf]
        %v4476 = vsel %vm326, %v4473, 0
        %v4479 = vsel %vm330, %v4474, 0
        %4481 = vmatpush.msra.mxu0 0.0
        %4482 = vmatpush.msra.mxu0 0.0
        %4483 = vmatpush.msra.mxu0 0.0
        %4484 = vmatpush.msra.mxu0 0.0
        %4485 = vmatpush.msra.mxu0 0.0
        %4486 = vmatpush.msra.mxu0 0.0
        %4487 = vmatpush.msra.mxu0 0.0
        %4488 = vmatpush.msra.mxu0 0.0
        %4489 = vmatpush.msra.mxu0 0.0
        %4490 = vmatpush.msra.mxu0 0.0
        %4491 = vmatpush.msra.mxu0 0.0
        %4492 = vmatpush.msra.mxu0 0.0
        %4493 = vmatpush.msra.mxu0 0.0
        %4494 = vmatpush.msra.mxu0 0.0
        %4495 = vmatpush.msra.mxu0 0.0
        %4496 = vmatpush.msra.mxu0 %v4479
        %4497 = vmatmul.f32.gmra.mxu0 %v4476
        %v4498 = vpop.f32.mrf.mxu0
        %v4499 = vadd.f32 0.0, %v4498
        %4500 = vdwg.mxu0
        %v4501 = vadd.f32 %v4472, %v4499
        %v4502 = vld [vmem:[%s4296] sm:$0xf]
        %v4503 = vld [vmem:[%s506] sm:$0xf]
        %v4505 = vsel %vm326, %v4502, 0
        %v4508 = vsel %vm330, %v4503, 0
        %4510 = vmatpush.msra.mxu0 0.0
        %4511 = vmatpush.msra.mxu0 0.0
        %4512 = vmatpush.msra.mxu0 0.0
        %4513 = vmatpush.msra.mxu0 0.0
        %4514 = vmatpush.msra.mxu0 0.0
        %4515 = vmatpush.msra.mxu0 0.0
        %4516 = vmatpush.msra.mxu0 0.0
        %4517 = vmatpush.msra.mxu0 0.0
        %4518 = vmatpush.msra.mxu0 0.0
        %4519 = vmatpush.msra.mxu0 0.0
        %4520 = vmatpush.msra.mxu0 0.0
        %4521 = vmatpush.msra.mxu0 0.0
        %4522 = vmatpush.msra.mxu0 0.0
        %4523 = vmatpush.msra.mxu0 0.0
        %4524 = vmatpush.msra.mxu0 0.0
        %4525 = vmatpush.msra.mxu0 %v4508
        %4526 = vmatmul.f32.gmra.mxu0 %v4505
        %v4527 = vpop.f32.mrf.mxu0
        %v4528 = vadd.f32 0.0, %v4527
        %4529 = vdwg.mxu0
        %v4530 = vadd.f32 %v4501, %v4528
        %s4531 = scalar_lea.vmem %s291, 560
        %v4532 = vld [vmem:[%s4531] sm:$0xf]
        %v4533 = vld [vmem:[%s537] sm:$0xf]
        %v4535 = vsel %vm326, %v4532, 0
        %v4538 = vsel %vm330, %v4533, 0
        %4540 = vmatpush.msra.mxu0 0.0
        %4541 = vmatpush.msra.mxu0 0.0
        %4542 = vmatpush.msra.mxu0 0.0
        %4543 = vmatpush.msra.mxu0 0.0
        %4544 = vmatpush.msra.mxu0 0.0
        %4545 = vmatpush.msra.mxu0 0.0
        %4546 = vmatpush.msra.mxu0 0.0
        %4547 = vmatpush.msra.mxu0 0.0
        %4548 = vmatpush.msra.mxu0 0.0
        %4549 = vmatpush.msra.mxu0 0.0
        %4550 = vmatpush.msra.mxu0 0.0
        %4551 = vmatpush.msra.mxu0 0.0
        %4552 = vmatpush.msra.mxu0 0.0
        %4553 = vmatpush.msra.mxu0 0.0
        %4554 = vmatpush.msra.mxu0 0.0
        %4555 = vmatpush.msra.mxu0 %v4538
        %4556 = vmatmul.f32.gmra.mxu0 %v4535
        %v4557 = vpop.f32.mrf.mxu0
        %v4558 = vadd.f32 0.0, %v4557
        %4559 = vdwg.mxu0
        %v4560 = vadd.f32 %v4530, %v4558
        %v4561 = vld [vmem:[%s4236 + $0x1] sm:$0xf]
        %v4562 = vld [vmem:[%s568] sm:$0xf]
        %v4564 = vsel %vm326, %v4561, 0
        %v4567 = vsel %vm330, %v4562, 0
        %4569 = vmatpush.msra.mxu0 0.0
        %4570 = vmatpush.msra.mxu0 0.0
        %4571 = vmatpush.msra.mxu0 0.0
        %4572 = vmatpush.msra.mxu0 0.0
        %4573 = vmatpush.msra.mxu0 0.0
        %4574 = vmatpush.msra.mxu0 0.0
        %4575 = vmatpush.msra.mxu0 0.0
        %4576 = vmatpush.msra.mxu0 0.0
        %4577 = vmatpush.msra.mxu0 0.0
        %4578 = vmatpush.msra.mxu0 0.0
        %4579 = vmatpush.msra.mxu0 0.0
        %4580 = vmatpush.msra.mxu0 0.0
        %4581 = vmatpush.msra.mxu0 0.0
        %4582 = vmatpush.msra.mxu0 0.0
        %4583 = vmatpush.msra.mxu0 0.0
        %4584 = vmatpush.msra.mxu0 %v4567
        %4585 = vmatmul.f32.gmra.mxu0 %v4564
        %v4586 = vpop.f32.mrf.mxu0
        %v4587 = vadd.f32 0.0, %v4586
        %4588 = vdwg.mxu0
        %v4589 = vadd.f32 %v4560, %v4587
        %v4590 = vadd.f32 %v4589, %v598
        %s4591 = scalar_lea.vmem [#allocation2], 64
        %4592 = vst.msk [vmem:[%s4591 + $0x1] sm:$0xf] %vm602, %v4590
        %v4593 = vld [vmem:[%s296] sm:$0xff]
        %v4594 = vld [vmem:[%s296 + $0x8] sm:$0xff]
        %v4595 = vld [vmem:[%s4] sm:$0xff]
        %v4596 = vld [vmem:[%s4 + $0x8] sm:$0xff]
        %v4597 = vld [vmem:[%s4 + $0x10] sm:$0xff]
        %v4598 = vld [vmem:[%s4 + $0x18] sm:$0xff]
        %v4599 = vld [vmem:[%s4 + $0x20] sm:$0xff]
        %v4600 = vld [vmem:[%s4 + $0x28] sm:$0xff]
        %v4601 = vld [vmem:[%s4 + $0x30] sm:$0xff]
        %v4602 = vld [vmem:[%s4 + $0x38] sm:$0xff]
        %vm4603 = vcmask 523264
        %v4605 = vsel %vm4603, %v4593, 0
        %v4608 = vsel %vm4603, %v4594, 0
        %4610 = vmatpush.msra.mxu0 0.0
        %4611 = vmatpush.msra.mxu0 0.0
        %4612 = vmatpush.msra.mxu0 0.0
        %4613 = vmatpush.msra.mxu0 0.0
        %4614 = vmatpush.msra.mxu0 0.0
        %4615 = vmatpush.msra.mxu0 0.0
        %4616 = vmatpush.msra.mxu0 0.0
        %4617 = vmatpush.msra.mxu0 0.0
        %4618 = vmatpush.msra.mxu0 %v4602
        %4619 = vmatpush.msra.mxu0 %v4601
        %4620 = vmatpush.msra.mxu0 %v4600
        %4621 = vmatpush.msra.mxu0 %v4599
        %4622 = vmatpush.msra.mxu0 %v4598
        %4623 = vmatpush.msra.mxu0 %v4597
        %4624 = vmatpush.msra.mxu0 %v4596
        %4625 = vmatpush.msra.mxu0 %v4595
        %4626 = vmatmul.f32.gmra.mxu0 %v4605
        %v4627 = vpop.f32.mrf.mxu0
        %v4628 = vadd.f32 0.0, %v4627
        %4629 = vmatmul.f32.gmra.mxu0 %v4608
        %v4630 = vpop.f32.mrf.mxu0
        %v4631 = vadd.f32 0.0, %v4630
        %4632 = vdwg.mxu0
        %v4633 = vld [vmem:[#allocation2] sm:$0xf]
        %v4634 = vld [vmem:[%s3] sm:$0xff]
        %vm4635 = vcmask 64512
        %v4637 = vsel %vm4635, %v4633, 0
        %4639 = vmatpush.msra.mxu0 0.0
        %4640 = vmatpush.msra.mxu0 0.0
        %4641 = vmatpush.msra.mxu0 0.0
        %4642 = vmatpush.msra.mxu0 0.0
        %4643 = vmatpush.msra.mxu0 0.0
        %4644 = vmatpush.msra.mxu0 0.0
        %4645 = vmatpush.msra.mxu0 0.0
        %4646 = vmatpush.msra.mxu0 0.0
        %4647 = vmatpush.msra.mxu0 0.0
        %4648 = vmatpush.msra.mxu0 0.0
        %4649 = vmatpush.msra.mxu0 0.0
        %4650 = vmatpush.msra.mxu0 0.0
        %4651 = vmatpush.msra.mxu0 0.0
        %4652 = vmatpush.msra.mxu0 0.0
        %4653 = vmatpush.msra.mxu0 0.0
        %4654 = vmatpush.msra.mxu0 %v4634
        %4655 = vmatmul.f32.gmra.mxu0 %v4637
        %v4656 = vpop.f32.mrf.mxu0
        %v4657 = vadd.f32 0.0, %v4656
        %4658 = vdwg.mxu0
        %v4659 = vadd.f32 %v4628, %v4657
        %s4660 = scalar_lea.vmem [#allocation2], 80
        %v4661 = vld [vmem:[%s4660] sm:$0xf]
        %s4662 = scalar_lea.vmem %s3, 8
        %v4663 = vld [vmem:[%s4662] sm:$0xff]
        %v4665 = vsel %vm4635, %v4661, 0
        %4667 = vmatpush.msra.mxu0 0.0
        %4668 = vmatpush.msra.mxu0 0.0
        %4669 = vmatpush.msra.mxu0 0.0
        %4670 = vmatpush.msra.mxu0 0.0
        %4671 = vmatpush.msra.mxu0 0.0
        %4672 = vmatpush.msra.mxu0 0.0
        %4673 = vmatpush.msra.mxu0 0.0
        %4674 = vmatpush.msra.mxu0 0.0
        %4675 = vmatpush.msra.mxu0 0.0
        %4676 = vmatpush.msra.mxu0 0.0
        %4677 = vmatpush.msra.mxu0 0.0
        %4678 = vmatpush.msra.mxu0 0.0
        %4679 = vmatpush.msra.mxu0 0.0
        %4680 = vmatpush.msra.mxu0 0.0
        %4681 = vmatpush.msra.mxu0 0.0
        %4682 = vmatpush.msra.mxu0 %v4663
        %4683 = vmatmul.f32.gmra.mxu0 %v4665
        %v4684 = vpop.f32.mrf.mxu0
        %v4685 = vadd.f32 0.0, %v4684
        %4686 = vdwg.mxu0
        %v4687 = vadd.f32 %v4659, %v4685
        %v4688 = vld [vmem:[#allocation2 + $0x1] sm:$0xf]
        %s4689 = scalar_lea.vmem %s3, 16
        %v4690 = vld [vmem:[%s4689] sm:$0xff]
        %v4692 = vsel %vm4635, %v4688, 0
        %4694 = vmatpush.msra.mxu0 0.0
        %4695 = vmatpush.msra.mxu0 0.0
        %4696 = vmatpush.msra.mxu0 0.0
        %4697 = vmatpush.msra.mxu0 0.0
        %4698 = vmatpush.msra.mxu0 0.0
        %4699 = vmatpush.msra.mxu0 0.0
        %4700 = vmatpush.msra.mxu0 0.0
        %4701 = vmatpush.msra.mxu0 0.0
        %4702 = vmatpush.msra.mxu0 0.0
        %4703 = vmatpush.msra.mxu0 0.0
        %4704 = vmatpush.msra.mxu0 0.0
        %4705 = vmatpush.msra.mxu0 0.0
        %4706 = vmatpush.msra.mxu0 0.0
        %4707 = vmatpush.msra.mxu0 0.0
        %4708 = vmatpush.msra.mxu0 0.0
        %4709 = vmatpush.msra.mxu0 %v4690
        %4710 = vmatmul.f32.gmra.mxu0 %v4692
        %v4711 = vpop.f32.mrf.mxu0
        %v4712 = vadd.f32 0.0, %v4711
        %4713 = vdwg.mxu0
        %v4714 = vadd.f32 %v4687, %v4712
        %v4715 = vld [vmem:[%s867] sm:$0xf]
        %s4716 = scalar_lea.vmem %s3, 24
        %v4717 = vld [vmem:[%s4716] sm:$0xff]
        %v4719 = vsel %vm4635, %v4715, 0
        %4721 = vmatpush.msra.mxu0 0.0
        %4722 = vmatpush.msra.mxu0 0.0
        %4723 = vmatpush.msra.mxu0 0.0
        %4724 = vmatpush.msra.mxu0 0.0
        %4725 = vmatpush.msra.mxu0 0.0
        %4726 = vmatpush.msra.mxu0 0.0
        %4727 = vmatpush.msra.mxu0 0.0
        %4728 = vmatpush.msra.mxu0 0.0
        %4729 = vmatpush.msra.mxu0 0.0
        %4730 = vmatpush.msra.mxu0 0.0
        %4731 = vmatpush.msra.mxu0 0.0
        %4732 = vmatpush.msra.mxu0 0.0
        %4733 = vmatpush.msra.mxu0 0.0
        %4734 = vmatpush.msra.mxu0 0.0
        %4735 = vmatpush.msra.mxu0 0.0
        %4736 = vmatpush.msra.mxu0 %v4717
        %4737 = vmatmul.f32.gmra.mxu0 %v4719
        %v4738 = vpop.f32.mrf.mxu0
        %v4739 = vadd.f32 0.0, %v4738
        %4740 = vdwg.mxu0
        %v4741 = vadd.f32 %v4714, %v4739
        %v4742 = vld [vmem:[%s601] sm:$0xf]
        %s4743 = scalar_lea.vmem %s3, 32
        %v4744 = vld [vmem:[%s4743] sm:$0xff]
        %v4746 = vsel %vm4635, %v4742, 0
        %4748 = vmatpush.msra.mxu0 0.0
        %4749 = vmatpush.msra.mxu0 0.0
        %4750 = vmatpush.msra.mxu0 0.0
        %4751 = vmatpush.msra.mxu0 0.0
        %4752 = vmatpush.msra.mxu0 0.0
        %4753 = vmatpush.msra.mxu0 0.0
        %4754 = vmatpush.msra.mxu0 0.0
        %4755 = vmatpush.msra.mxu0 0.0
        %4756 = vmatpush.msra.mxu0 0.0
        %4757 = vmatpush.msra.mxu0 0.0
        %4758 = vmatpush.msra.mxu0 0.0
        %4759 = vmatpush.msra.mxu0 0.0
        %4760 = vmatpush.msra.mxu0 0.0
        %4761 = vmatpush.msra.mxu0 0.0
        %4762 = vmatpush.msra.mxu0 0.0
        %4763 = vmatpush.msra.mxu0 %v4744
        %4764 = vmatmul.f32.gmra.mxu0 %v4746
        %v4765 = vpop.f32.mrf.mxu0
        %v4766 = vadd.f32 0.0, %v4765
        %4767 = vdwg.mxu0
        %v4768 = vadd.f32 %v4741, %v4766
        %v4769 = vld [vmem:[%s867 + $0x1] sm:$0xf]
        %s4770 = scalar_lea.vmem %s3, 40
        %v4771 = vld [vmem:[%s4770] sm:$0xff]
        %v4773 = vsel %vm4635, %v4769, 0
        %4775 = vmatpush.msra.mxu0 0.0
        %4776 = vmatpush.msra.mxu0 0.0
        %4777 = vmatpush.msra.mxu0 0.0
        %4778 = vmatpush.msra.mxu0 0.0
        %4779 = vmatpush.msra.mxu0 0.0
        %4780 = vmatpush.msra.mxu0 0.0
        %4781 = vmatpush.msra.mxu0 0.0
        %4782 = vmatpush.msra.mxu0 0.0
        %4783 = vmatpush.msra.mxu0 0.0
        %4784 = vmatpush.msra.mxu0 0.0
        %4785 = vmatpush.msra.mxu0 0.0
        %4786 = vmatpush.msra.mxu0 0.0
        %4787 = vmatpush.msra.mxu0 0.0
        %4788 = vmatpush.msra.mxu0 0.0
        %4789 = vmatpush.msra.mxu0 0.0
        %4790 = vmatpush.msra.mxu0 %v4771
        %4791 = vmatmul.f32.gmra.mxu0 %v4773
        %v4792 = vpop.f32.mrf.mxu0
        %v4793 = vadd.f32 0.0, %v4792
        %4794 = vdwg.mxu0
        %v4795 = vadd.f32 %v4768, %v4793
        %v4796 = vld [vmem:[%s1399] sm:$0xf]
        %s4797 = scalar_lea.vmem %s3, 48
        %v4798 = vld [vmem:[%s4797] sm:$0xff]
        %v4800 = vsel %vm4635, %v4796, 0
        %4802 = vmatpush.msra.mxu0 0.0
        %4803 = vmatpush.msra.mxu0 0.0
        %4804 = vmatpush.msra.mxu0 0.0
        %4805 = vmatpush.msra.mxu0 0.0
        %4806 = vmatpush.msra.mxu0 0.0
        %4807 = vmatpush.msra.mxu0 0.0
        %4808 = vmatpush.msra.mxu0 0.0
        %4809 = vmatpush.msra.mxu0 0.0
        %4810 = vmatpush.msra.mxu0 0.0
        %4811 = vmatpush.msra.mxu0 0.0
        %4812 = vmatpush.msra.mxu0 0.0
        %4813 = vmatpush.msra.mxu0 0.0
        %4814 = vmatpush.msra.mxu0 0.0
        %4815 = vmatpush.msra.mxu0 0.0
        %4816 = vmatpush.msra.mxu0 0.0
        %4817 = vmatpush.msra.mxu0 %v4798
        %4818 = vmatmul.f32.gmra.mxu0 %v4800
        %v4819 = vpop.f32.mrf.mxu0
        %v4820 = vadd.f32 0.0, %v4819
        %4821 = vdwg.mxu0
        %v4822 = vadd.f32 %v4795, %v4820
        %v4823 = vld [vmem:[%s1135] sm:$0xf]
        %s4824 = scalar_lea.vmem %s3, 56
        %v4825 = vld [vmem:[%s4824] sm:$0xff]
        %v4827 = vsel %vm4635, %v4823, 0
        %4829 = vmatpush.msra.mxu0 0.0
        %4830 = vmatpush.msra.mxu0 0.0
        %4831 = vmatpush.msra.mxu0 0.0
        %4832 = vmatpush.msra.mxu0 0.0
        %4833 = vmatpush.msra.mxu0 0.0
        %4834 = vmatpush.msra.mxu0 0.0
        %4835 = vmatpush.msra.mxu0 0.0
        %4836 = vmatpush.msra.mxu0 0.0
        %4837 = vmatpush.msra.mxu0 0.0
        %4838 = vmatpush.msra.mxu0 0.0
        %4839 = vmatpush.msra.mxu0 0.0
        %4840 = vmatpush.msra.mxu0 0.0
        %4841 = vmatpush.msra.mxu0 0.0
        %4842 = vmatpush.msra.mxu0 0.0
        %4843 = vmatpush.msra.mxu0 0.0
        %4844 = vmatpush.msra.mxu0 %v4825
        %4845 = vmatmul.f32.gmra.mxu0 %v4827
        %v4846 = vpop.f32.mrf.mxu0
        %v4847 = vadd.f32 0.0, %v4846
        %4848 = vdwg.mxu0
        %v4849 = vadd.f32 %v4822, %v4847
        %v4850 = vld [vmem:[%s1399 + $0x1] sm:$0xf]
        %s4851 = scalar_lea.vmem %s3, 64
        %v4852 = vld [vmem:[%s4851] sm:$0xff]
        %v4854 = vsel %vm4635, %v4850, 0
        %4856 = vmatpush.msra.mxu0 0.0
        %4857 = vmatpush.msra.mxu0 0.0
        %4858 = vmatpush.msra.mxu0 0.0
        %4859 = vmatpush.msra.mxu0 0.0
        %4860 = vmatpush.msra.mxu0 0.0
        %4861 = vmatpush.msra.mxu0 0.0
        %4862 = vmatpush.msra.mxu0 0.0
        %4863 = vmatpush.msra.mxu0 0.0
        %4864 = vmatpush.msra.mxu0 0.0
        %4865 = vmatpush.msra.mxu0 0.0
        %4866 = vmatpush.msra.mxu0 0.0
        %4867 = vmatpush.msra.mxu0 0.0
        %4868 = vmatpush.msra.mxu0 0.0
        %4869 = vmatpush.msra.mxu0 0.0
        %4870 = vmatpush.msra.mxu0 0.0
        %4871 = vmatpush.msra.mxu0 %v4852
        %4872 = vmatmul.f32.gmra.mxu0 %v4854
        %v4873 = vpop.f32.mrf.mxu0
        %v4874 = vadd.f32 0.0, %v4873
        %4875 = vdwg.mxu0
        %v4876 = vadd.f32 %v4849, %v4874
        %v4878 = vperm.slane %v298, 0
        %v4880 = vadd.f32 %v4876, %v4878
        %4881 = vst [vmem:[%s286] sm:$0xf] %v4880
        %v4882 = vld [vmem:[%s1399] sm:$0xf]
        %v4883 = vld [vmem:[%s3] sm:$0xff]
        %v4885 = vsel %vm4635, %v4882, 0
        %4887 = vmatpush.msra.mxu0 0.0
        %4888 = vmatpush.msra.mxu0 0.0
        %4889 = vmatpush.msra.mxu0 0.0
        %4890 = vmatpush.msra.mxu0 0.0
        %4891 = vmatpush.msra.mxu0 0.0
        %4892 = vmatpush.msra.mxu0 0.0
        %4893 = vmatpush.msra.mxu0 0.0
        %4894 = vmatpush.msra.mxu0 0.0
        %4895 = vmatpush.msra.mxu0 0.0
        %4896 = vmatpush.msra.mxu0 0.0
        %4897 = vmatpush.msra.mxu0 0.0
        %4898 = vmatpush.msra.mxu0 0.0
        %4899 = vmatpush.msra.mxu0 0.0
        %4900 = vmatpush.msra.mxu0 0.0
        %4901 = vmatpush.msra.mxu0 0.0
        %4902 = vmatpush.msra.mxu0 %v4883
        %4903 = vmatmul.f32.gmra.mxu0 %v4885
        %v4904 = vpop.f32.mrf.mxu0
        %v4905 = vadd.f32 0.0, %v4904
        %4906 = vdwg.mxu0
        %v4908 = vrot.slane %v4905, 4
        %v4910 = vadd.f32 %v4628, %v4908
        %v4911 = vld [vmem:[%s1135] sm:$0xf]
        %v4912 = vld [vmem:[%s4662] sm:$0xff]
        %v4914 = vsel %vm4635, %v4911, 0
        %4916 = vmatpush.msra.mxu0 0.0
        %4917 = vmatpush.msra.mxu0 0.0
        %4918 = vmatpush.msra.mxu0 0.0
        %4919 = vmatpush.msra.mxu0 0.0
        %4920 = vmatpush.msra.mxu0 0.0
        %4921 = vmatpush.msra.mxu0 0.0
        %4922 = vmatpush.msra.mxu0 0.0
        %4923 = vmatpush.msra.mxu0 0.0
        %4924 = vmatpush.msra.mxu0 0.0
        %4925 = vmatpush.msra.mxu0 0.0
        %4926 = vmatpush.msra.mxu0 0.0
        %4927 = vmatpush.msra.mxu0 0.0
        %4928 = vmatpush.msra.mxu0 0.0
        %4929 = vmatpush.msra.mxu0 0.0
        %4930 = vmatpush.msra.mxu0 0.0
        %4931 = vmatpush.msra.mxu0 %v4912
        %4932 = vmatmul.f32.gmra.mxu0 %v4914
        %v4933 = vpop.f32.mrf.mxu0
        %v4934 = vadd.f32 0.0, %v4933
        %4935 = vdwg.mxu0
        %v4937 = vrot.slane %v4934, 4
        %v4939 = vadd.f32 %v4910, %v4937
        %v4940 = vld [vmem:[%s1399 + $0x1] sm:$0xf]
        %v4941 = vld [vmem:[%s4689] sm:$0xff]
        %v4943 = vsel %vm4635, %v4940, 0
        %4945 = vmatpush.msra.mxu0 0.0
        %4946 = vmatpush.msra.mxu0 0.0
        %4947 = vmatpush.msra.mxu0 0.0
        %4948 = vmatpush.msra.mxu0 0.0
        %4949 = vmatpush.msra.mxu0 0.0
        %4950 = vmatpush.msra.mxu0 0.0
        %4951 = vmatpush.msra.mxu0 0.0
        %4952 = vmatpush.msra.mxu0 0.0
        %4953 = vmatpush.msra.mxu0 0.0
        %4954 = vmatpush.msra.mxu0 0.0
        %4955 = vmatpush.msra.mxu0 0.0
        %4956 = vmatpush.msra.mxu0 0.0
        %4957 = vmatpush.msra.mxu0 0.0
        %4958 = vmatpush.msra.mxu0 0.0
        %4959 = vmatpush.msra.mxu0 0.0
        %4960 = vmatpush.msra.mxu0 %v4941
        %4961 = vmatmul.f32.gmra.mxu0 %v4943
        %v4962 = vpop.f32.mrf.mxu0
        %v4963 = vadd.f32 0.0, %v4962
        %4964 = vdwg.mxu0
        %v4966 = vrot.slane %v4963, 4
        %v4968 = vadd.f32 %v4939, %v4966
        %v4969 = vld [vmem:[%s1931] sm:$0xf]
        %v4970 = vld [vmem:[%s4716] sm:$0xff]
        %v4972 = vsel %vm4635, %v4969, 0
        %4974 = vmatpush.msra.mxu0 0.0
        %4975 = vmatpush.msra.mxu0 0.0
        %4976 = vmatpush.msra.mxu0 0.0
        %4977 = vmatpush.msra.mxu0 0.0
        %4978 = vmatpush.msra.mxu0 0.0
        %4979 = vmatpush.msra.mxu0 0.0
        %4980 = vmatpush.msra.mxu0 0.0
        %4981 = vmatpush.msra.mxu0 0.0
        %4982 = vmatpush.msra.mxu0 0.0
        %4983 = vmatpush.msra.mxu0 0.0
        %4984 = vmatpush.msra.mxu0 0.0
        %4985 = vmatpush.msra.mxu0 0.0
        %4986 = vmatpush.msra.mxu0 0.0
        %4987 = vmatpush.msra.mxu0 0.0
        %4988 = vmatpush.msra.mxu0 0.0
        %4989 = vmatpush.msra.mxu0 %v4970
        %4990 = vmatmul.f32.gmra.mxu0 %v4972
        %v4991 = vpop.f32.mrf.mxu0
        %v4992 = vadd.f32 0.0, %v4991
        %4993 = vdwg.mxu0
        %v4995 = vrot.slane %v4992, 4
        %v4997 = vadd.f32 %v4968, %v4995
        %v4998 = vld [vmem:[%s1667] sm:$0xf]
        %v4999 = vld [vmem:[%s4743] sm:$0xff]
        %v5001 = vsel %vm4635, %v4998, 0
        %5003 = vmatpush.msra.mxu0 0.0
        %5004 = vmatpush.msra.mxu0 0.0
        %5005 = vmatpush.msra.mxu0 0.0
        %5006 = vmatpush.msra.mxu0 0.0
        %5007 = vmatpush.msra.mxu0 0.0
        %5008 = vmatpush.msra.mxu0 0.0
        %5009 = vmatpush.msra.mxu0 0.0
        %5010 = vmatpush.msra.mxu0 0.0
        %5011 = vmatpush.msra.mxu0 0.0
        %5012 = vmatpush.msra.mxu0 0.0
        %5013 = vmatpush.msra.mxu0 0.0
        %5014 = vmatpush.msra.mxu0 0.0
        %5015 = vmatpush.msra.mxu0 0.0
        %5016 = vmatpush.msra.mxu0 0.0
        %5017 = vmatpush.msra.mxu0 0.0
        %5018 = vmatpush.msra.mxu0 %v4999
        %5019 = vmatmul.f32.gmra.mxu0 %v5001
        %v5020 = vpop.f32.mrf.mxu0
        %v5021 = vadd.f32 0.0, %v5020
        %5022 = vdwg.mxu0
        %v5024 = vrot.slane %v5021, 4
        %v5026 = vadd.f32 %v4997, %v5024
        %v5027 = vld [vmem:[%s1931 + $0x1] sm:$0xf]
        %v5028 = vld [vmem:[%s4770] sm:$0xff]
        %v5030 = vsel %vm4635, %v5027, 0
        %5032 = vmatpush.msra.mxu0 0.0
        %5033 = vmatpush.msra.mxu0 0.0
        %5034 = vmatpush.msra.mxu0 0.0
        %5035 = vmatpush.msra.mxu0 0.0
        %5036 = vmatpush.msra.mxu0 0.0
        %5037 = vmatpush.msra.mxu0 0.0
        %5038 = vmatpush.msra.mxu0 0.0
        %5039 = vmatpush.msra.mxu0 0.0
        %5040 = vmatpush.msra.mxu0 0.0
        %5041 = vmatpush.msra.mxu0 0.0
        %5042 = vmatpush.msra.mxu0 0.0
        %5043 = vmatpush.msra.mxu0 0.0
        %5044 = vmatpush.msra.mxu0 0.0
        %5045 = vmatpush.msra.mxu0 0.0
        %5046 = vmatpush.msra.mxu0 0.0
        %5047 = vmatpush.msra.mxu0 %v5028
        %5048 = vmatmul.f32.gmra.mxu0 %v5030
        %v5049 = vpop.f32.mrf.mxu0
        %v5050 = vadd.f32 0.0, %v5049
        %5051 = vdwg.mxu0
        %v5053 = vrot.slane %v5050, 4
        %v5055 = vadd.f32 %v5026, %v5053
        %v5056 = vld [vmem:[%s2463] sm:$0xf]
        %v5057 = vld [vmem:[%s4797] sm:$0xff]
        %v5059 = vsel %vm4635, %v5056, 0
        %5061 = vmatpush.msra.mxu0 0.0
        %5062 = vmatpush.msra.mxu0 0.0
        %5063 = vmatpush.msra.mxu0 0.0
        %5064 = vmatpush.msra.mxu0 0.0
        %5065 = vmatpush.msra.mxu0 0.0
        %5066 = vmatpush.msra.mxu0 0.0
        %5067 = vmatpush.msra.mxu0 0.0
        %5068 = vmatpush.msra.mxu0 0.0
        %5069 = vmatpush.msra.mxu0 0.0
        %5070 = vmatpush.msra.mxu0 0.0
        %5071 = vmatpush.msra.mxu0 0.0
        %5072 = vmatpush.msra.mxu0 0.0
        %5073 = vmatpush.msra.mxu0 0.0
        %5074 = vmatpush.msra.mxu0 0.0
        %5075 = vmatpush.msra.mxu0 0.0
        %5076 = vmatpush.msra.mxu0 %v5057
        %5077 = vmatmul.f32.gmra.mxu0 %v5059
        %v5078 = vpop.f32.mrf.mxu0
        %v5079 = vadd.f32 0.0, %v5078
        %5080 = vdwg.mxu0
        %v5082 = vrot.slane %v5079, 4
        %v5084 = vadd.f32 %v5055, %v5082
        %v5085 = vld [vmem:[%s2199] sm:$0xf]
        %v5086 = vld [vmem:[%s4824] sm:$0xff]
        %v5088 = vsel %vm4635, %v5085, 0
        %5090 = vmatpush.msra.mxu0 0.0
        %5091 = vmatpush.msra.mxu0 0.0
        %5092 = vmatpush.msra.mxu0 0.0
        %5093 = vmatpush.msra.mxu0 0.0
        %5094 = vmatpush.msra.mxu0 0.0
        %5095 = vmatpush.msra.mxu0 0.0
        %5096 = vmatpush.msra.mxu0 0.0
        %5097 = vmatpush.msra.mxu0 0.0
        %5098 = vmatpush.msra.mxu0 0.0
        %5099 = vmatpush.msra.mxu0 0.0
        %5100 = vmatpush.msra.mxu0 0.0
        %5101 = vmatpush.msra.mxu0 0.0
        %5102 = vmatpush.msra.mxu0 0.0
        %5103 = vmatpush.msra.mxu0 0.0
        %5104 = vmatpush.msra.mxu0 0.0
        %5105 = vmatpush.msra.mxu0 %v5086
        %5106 = vmatmul.f32.gmra.mxu0 %v5088
        %v5107 = vpop.f32.mrf.mxu0
        %v5108 = vadd.f32 0.0, %v5107
        %5109 = vdwg.mxu0
        %v5111 = vrot.slane %v5108, 4
        %v5113 = vadd.f32 %v5084, %v5111
        %v5114 = vld [vmem:[%s2463 + $0x1] sm:$0xf]
        %v5115 = vld [vmem:[%s4851] sm:$0xff]
        %v5117 = vsel %vm4635, %v5114, 0
        %5119 = vmatpush.msra.mxu0 0.0
        %5120 = vmatpush.msra.mxu0 0.0
        %5121 = vmatpush.msra.mxu0 0.0
        %5122 = vmatpush.msra.mxu0 0.0
        %5123 = vmatpush.msra.mxu0 0.0
        %5124 = vmatpush.msra.mxu0 0.0
        %5125 = vmatpush.msra.mxu0 0.0
        %5126 = vmatpush.msra.mxu0 0.0
        %5127 = vmatpush.msra.mxu0 0.0
        %5128 = vmatpush.msra.mxu0 0.0
        %5129 = vmatpush.msra.mxu0 0.0
        %5130 = vmatpush.msra.mxu0 0.0
        %5131 = vmatpush.msra.mxu0 0.0
        %5132 = vmatpush.msra.mxu0 0.0
        %5133 = vmatpush.msra.mxu0 0.0
        %5134 = vmatpush.msra.mxu0 %v5115
        %5135 = vmatmul.f32.gmra.mxu0 %v5117
        %v5136 = vpop.f32.mrf.mxu0
        %v5137 = vadd.f32 0.0, %v5136
        %5138 = vdwg.mxu0
        %v5140 = vrot.slane %v5137, 4
        %v5142 = vadd.f32 %v5113, %v5140
        %v5143 = vadd.f32 %v5142, %v4878
        %5144 = vst [vmem:[%s286] sm:$0xf0] %v5143
        %v5145 = vld [vmem:[%s2463] sm:$0xf]
        %v5146 = vld [vmem:[%s3] sm:$0xff]
        %v5148 = vsel %vm4635, %v5145, 0
        %5150 = vmatpush.msra.mxu0 0.0
        %5151 = vmatpush.msra.mxu0 0.0
        %5152 = vmatpush.msra.mxu0 0.0
        %5153 = vmatpush.msra.mxu0 0.0
        %5154 = vmatpush.msra.mxu0 0.0
        %5155 = vmatpush.msra.mxu0 0.0
        %5156 = vmatpush.msra.mxu0 0.0
        %5157 = vmatpush.msra.mxu0 0.0
        %5158 = vmatpush.msra.mxu0 0.0
        %5159 = vmatpush.msra.mxu0 0.0
        %5160 = vmatpush.msra.mxu0 0.0
        %5161 = vmatpush.msra.mxu0 0.0
        %5162 = vmatpush.msra.mxu0 0.0
        %5163 = vmatpush.msra.mxu0 0.0
        %5164 = vmatpush.msra.mxu0 0.0
        %5165 = vmatpush.msra.mxu0 %v5146
        %5166 = vmatmul.f32.gmra.mxu0 %v5148
        %v5167 = vpop.f32.mrf.mxu0
        %v5168 = vadd.f32 0.0, %v5167
        %5169 = vdwg.mxu0
        %v5170 = vadd.f32 %v4631, %v5168
        %v5171 = vld [vmem:[%s2199] sm:$0xf]
        %v5172 = vld [vmem:[%s4662] sm:$0xff]
        %v5174 = vsel %vm4635, %v5171, 0
        %5176 = vmatpush.msra.mxu0 0.0
        %5177 = vmatpush.msra.mxu0 0.0
        %5178 = vmatpush.msra.mxu0 0.0
        %5179 = vmatpush.msra.mxu0 0.0
        %5180 = vmatpush.msra.mxu0 0.0
        %5181 = vmatpush.msra.mxu0 0.0
        %5182 = vmatpush.msra.mxu0 0.0
        %5183 = vmatpush.msra.mxu0 0.0
        %5184 = vmatpush.msra.mxu0 0.0
        %5185 = vmatpush.msra.mxu0 0.0
        %5186 = vmatpush.msra.mxu0 0.0
        %5187 = vmatpush.msra.mxu0 0.0
        %5188 = vmatpush.msra.mxu0 0.0
        %5189 = vmatpush.msra.mxu0 0.0
        %5190 = vmatpush.msra.mxu0 0.0
        %5191 = vmatpush.msra.mxu0 %v5172
        %5192 = vmatmul.f32.gmra.mxu0 %v5174
        %v5193 = vpop.f32.mrf.mxu0
        %v5194 = vadd.f32 0.0, %v5193
        %5195 = vdwg.mxu0
        %v5196 = vadd.f32 %v5170, %v5194
        %v5197 = vld [vmem:[%s2463 + $0x1] sm:$0xf]
        %v5198 = vld [vmem:[%s4689] sm:$0xff]
        %v5200 = vsel %vm4635, %v5197, 0
        %5202 = vmatpush.msra.mxu0 0.0
        %5203 = vmatpush.msra.mxu0 0.0
        %5204 = vmatpush.msra.mxu0 0.0
        %5205 = vmatpush.msra.mxu0 0.0
        %5206 = vmatpush.msra.mxu0 0.0
        %5207 = vmatpush.msra.mxu0 0.0
        %5208 = vmatpush.msra.mxu0 0.0
        %5209 = vmatpush.msra.mxu0 0.0
        %5210 = vmatpush.msra.mxu0 0.0
        %5211 = vmatpush.msra.mxu0 0.0
        %5212 = vmatpush.msra.mxu0 0.0
        %5213 = vmatpush.msra.mxu0 0.0
        %5214 = vmatpush.msra.mxu0 0.0
        %5215 = vmatpush.msra.mxu0 0.0
        %5216 = vmatpush.msra.mxu0 0.0
        %5217 = vmatpush.msra.mxu0 %v5198
        %5218 = vmatmul.f32.gmra.mxu0 %v5200
        %v5219 = vpop.f32.mrf.mxu0
        %v5220 = vadd.f32 0.0, %v5219
        %5221 = vdwg.mxu0
        %v5222 = vadd.f32 %v5196, %v5220
        %v5223 = vld [vmem:[%s2995] sm:$0xf]
        %v5224 = vld [vmem:[%s4716] sm:$0xff]
        %v5226 = vsel %vm4635, %v5223, 0
        %5228 = vmatpush.msra.mxu0 0.0
        %5229 = vmatpush.msra.mxu0 0.0
        %5230 = vmatpush.msra.mxu0 0.0
        %5231 = vmatpush.msra.mxu0 0.0
        %5232 = vmatpush.msra.mxu0 0.0
        %5233 = vmatpush.msra.mxu0 0.0
        %5234 = vmatpush.msra.mxu0 0.0
        %5235 = vmatpush.msra.mxu0 0.0
        %5236 = vmatpush.msra.mxu0 0.0
        %5237 = vmatpush.msra.mxu0 0.0
        %5238 = vmatpush.msra.mxu0 0.0
        %5239 = vmatpush.msra.mxu0 0.0
        %5240 = vmatpush.msra.mxu0 0.0
        %5241 = vmatpush.msra.mxu0 0.0
        %5242 = vmatpush.msra.mxu0 0.0
        %5243 = vmatpush.msra.mxu0 %v5224
        %5244 = vmatmul.f32.gmra.mxu0 %v5226
        %v5245 = vpop.f32.mrf.mxu0
        %v5246 = vadd.f32 0.0, %v5245
        %5247 = vdwg.mxu0
        %v5248 = vadd.f32 %v5222, %v5246
        %v5249 = vld [vmem:[%s2731] sm:$0xf]
        %v5250 = vld [vmem:[%s4743] sm:$0xff]
        %v5252 = vsel %vm4635, %v5249, 0
        %5254 = vmatpush.msra.mxu0 0.0
        %5255 = vmatpush.msra.mxu0 0.0
        %5256 = vmatpush.msra.mxu0 0.0
        %5257 = vmatpush.msra.mxu0 0.0
        %5258 = vmatpush.msra.mxu0 0.0
        %5259 = vmatpush.msra.mxu0 0.0
        %5260 = vmatpush.msra.mxu0 0.0
        %5261 = vmatpush.msra.mxu0 0.0
        %5262 = vmatpush.msra.mxu0 0.0
        %5263 = vmatpush.msra.mxu0 0.0
        %5264 = vmatpush.msra.mxu0 0.0
        %5265 = vmatpush.msra.mxu0 0.0
        %5266 = vmatpush.msra.mxu0 0.0
        %5267 = vmatpush.msra.mxu0 0.0
        %5268 = vmatpush.msra.mxu0 0.0
        %5269 = vmatpush.msra.mxu0 %v5250
        %5270 = vmatmul.f32.gmra.mxu0 %v5252
        %v5271 = vpop.f32.mrf.mxu0
        %v5272 = vadd.f32 0.0, %v5271
        %5273 = vdwg.mxu0
        %v5274 = vadd.f32 %v5248, %v5272
        %v5275 = vld [vmem:[%s2995 + $0x1] sm:$0xf]
        %v5276 = vld [vmem:[%s4770] sm:$0xff]
        %v5278 = vsel %vm4635, %v5275, 0
        %5280 = vmatpush.msra.mxu0 0.0
        %5281 = vmatpush.msra.mxu0 0.0
        %5282 = vmatpush.msra.mxu0 0.0
        %5283 = vmatpush.msra.mxu0 0.0
        %5284 = vmatpush.msra.mxu0 0.0
        %5285 = vmatpush.msra.mxu0 0.0
        %5286 = vmatpush.msra.mxu0 0.0
        %5287 = vmatpush.msra.mxu0 0.0
        %5288 = vmatpush.msra.mxu0 0.0
        %5289 = vmatpush.msra.mxu0 0.0
        %5290 = vmatpush.msra.mxu0 0.0
        %5291 = vmatpush.msra.mxu0 0.0
        %5292 = vmatpush.msra.mxu0 0.0
        %5293 = vmatpush.msra.mxu0 0.0
        %5294 = vmatpush.msra.mxu0 0.0
        %5295 = vmatpush.msra.mxu0 %v5276
        %5296 = vmatmul.f32.gmra.mxu0 %v5278
        %v5297 = vpop.f32.mrf.mxu0
        %v5298 = vadd.f32 0.0, %v5297
        %5299 = vdwg.mxu0
        %v5300 = vadd.f32 %v5274, %v5298
        %v5301 = vld [vmem:[%s3527] sm:$0xf]
        %v5302 = vld [vmem:[%s4797] sm:$0xff]
        %v5304 = vsel %vm4635, %v5301, 0
        %5306 = vmatpush.msra.mxu0 0.0
        %5307 = vmatpush.msra.mxu0 0.0
        %5308 = vmatpush.msra.mxu0 0.0
        %5309 = vmatpush.msra.mxu0 0.0
        %5310 = vmatpush.msra.mxu0 0.0
        %5311 = vmatpush.msra.mxu0 0.0
        %5312 = vmatpush.msra.mxu0 0.0
        %5313 = vmatpush.msra.mxu0 0.0
        %5314 = vmatpush.msra.mxu0 0.0
        %5315 = vmatpush.msra.mxu0 0.0
        %5316 = vmatpush.msra.mxu0 0.0
        %5317 = vmatpush.msra.mxu0 0.0
        %5318 = vmatpush.msra.mxu0 0.0
        %5319 = vmatpush.msra.mxu0 0.0
        %5320 = vmatpush.msra.mxu0 0.0
        %5321 = vmatpush.msra.mxu0 %v5302
        %5322 = vmatmul.f32.gmra.mxu0 %v5304
        %v5323 = vpop.f32.mrf.mxu0
        %v5324 = vadd.f32 0.0, %v5323
        %5325 = vdwg.mxu0
        %v5326 = vadd.f32 %v5300, %v5324
        %v5327 = vld [vmem:[%s3263] sm:$0xf]
        %v5328 = vld [vmem:[%s4824] sm:$0xff]
        %v5330 = vsel %vm4635, %v5327, 0
        %5332 = vmatpush.msra.mxu0 0.0
        %5333 = vmatpush.msra.mxu0 0.0
        %5334 = vmatpush.msra.mxu0 0.0
        %5335 = vmatpush.msra.mxu0 0.0
        %5336 = vmatpush.msra.mxu0 0.0
        %5337 = vmatpush.msra.mxu0 0.0
        %5338 = vmatpush.msra.mxu0 0.0
        %5339 = vmatpush.msra.mxu0 0.0
        %5340 = vmatpush.msra.mxu0 0.0
        %5341 = vmatpush.msra.mxu0 0.0
        %5342 = vmatpush.msra.mxu0 0.0
        %5343 = vmatpush.msra.mxu0 0.0
        %5344 = vmatpush.msra.mxu0 0.0
        %5345 = vmatpush.msra.mxu0 0.0
        %5346 = vmatpush.msra.mxu0 0.0
        %5347 = vmatpush.msra.mxu0 %v5328
        %5348 = vmatmul.f32.gmra.mxu0 %v5330
        %v5349 = vpop.f32.mrf.mxu0
        %v5350 = vadd.f32 0.0, %v5349
        %5351 = vdwg.mxu0
        %v5352 = vadd.f32 %v5326, %v5350
        %v5353 = vld [vmem:[%s3527 + $0x1] sm:$0xf]
        %v5354 = vld [vmem:[%s4851] sm:$0xff]
        %v5356 = vsel %vm4635, %v5353, 0
        %5358 = vmatpush.msra.mxu0 0.0
        %5359 = vmatpush.msra.mxu0 0.0
        %5360 = vmatpush.msra.mxu0 0.0
        %5361 = vmatpush.msra.mxu0 0.0
        %5362 = vmatpush.msra.mxu0 0.0
        %5363 = vmatpush.msra.mxu0 0.0
        %5364 = vmatpush.msra.mxu0 0.0
        %5365 = vmatpush.msra.mxu0 0.0
        %5366 = vmatpush.msra.mxu0 0.0
        %5367 = vmatpush.msra.mxu0 0.0
        %5368 = vmatpush.msra.mxu0 0.0
        %5369 = vmatpush.msra.mxu0 0.0
        %5370 = vmatpush.msra.mxu0 0.0
        %5371 = vmatpush.msra.mxu0 0.0
        %5372 = vmatpush.msra.mxu0 0.0
        %5373 = vmatpush.msra.mxu0 %v5354
        %5374 = vmatmul.f32.gmra.mxu0 %v5356
        %v5375 = vpop.f32.mrf.mxu0
        %v5376 = vadd.f32 0.0, %v5375
        %5377 = vdwg.mxu0
        %v5378 = vadd.f32 %v5352, %v5376
        %v5379 = vadd.f32 %v5378, %v4878
        %5380 = vst [vmem:[%s286 + $0x8] sm:$0xf] %v5379
        %v5381 = vld [vmem:[%s3527] sm:$0xf]
        %v5382 = vld [vmem:[%s3] sm:$0xff]
        %v5384 = vsel %vm4635, %v5381, 0
        %5386 = vmatpush.msra.mxu0 0.0
        %5387 = vmatpush.msra.mxu0 0.0
        %5388 = vmatpush.msra.mxu0 0.0
        %5389 = vmatpush.msra.mxu0 0.0
        %5390 = vmatpush.msra.mxu0 0.0
        %5391 = vmatpush.msra.mxu0 0.0
        %5392 = vmatpush.msra.mxu0 0.0
        %5393 = vmatpush.msra.mxu0 0.0
        %5394 = vmatpush.msra.mxu0 0.0
        %5395 = vmatpush.msra.mxu0 0.0
        %5396 = vmatpush.msra.mxu0 0.0
        %5397 = vmatpush.msra.mxu0 0.0
        %5398 = vmatpush.msra.mxu0 0.0
        %5399 = vmatpush.msra.mxu0 0.0
        %5400 = vmatpush.msra.mxu0 0.0
        %5401 = vmatpush.msra.mxu0 %v5382
        %5402 = vmatmul.f32.gmra.mxu0 %v5384
        %v5403 = vpop.f32.mrf.mxu0
        %v5404 = vadd.f32 0.0, %v5403
        %5405 = vdwg.mxu0
        %v5407 = vrot.slane %v5404, 4
        %v5409 = vadd.f32 %v4631, %v5407
        %v5410 = vld [vmem:[%s3263] sm:$0xf]
        %v5411 = vld [vmem:[%s4662] sm:$0xff]
        %v5413 = vsel %vm4635, %v5410, 0
        %5415 = vmatpush.msra.mxu0 0.0
        %5416 = vmatpush.msra.mxu0 0.0
        %5417 = vmatpush.msra.mxu0 0.0
        %5418 = vmatpush.msra.mxu0 0.0
        %5419 = vmatpush.msra.mxu0 0.0
        %5420 = vmatpush.msra.mxu0 0.0
        %5421 = vmatpush.msra.mxu0 0.0
        %5422 = vmatpush.msra.mxu0 0.0
        %5423 = vmatpush.msra.mxu0 0.0
        %5424 = vmatpush.msra.mxu0 0.0
        %5425 = vmatpush.msra.mxu0 0.0
        %5426 = vmatpush.msra.mxu0 0.0
        %5427 = vmatpush.msra.mxu0 0.0
        %5428 = vmatpush.msra.mxu0 0.0
        %5429 = vmatpush.msra.mxu0 0.0
        %5430 = vmatpush.msra.mxu0 %v5411
        %5431 = vmatmul.f32.gmra.mxu0 %v5413
        %v5432 = vpop.f32.mrf.mxu0
        %v5433 = vadd.f32 0.0, %v5432
        %5434 = vdwg.mxu0
        %v5436 = vrot.slane %v5433, 4
        %v5438 = vadd.f32 %v5409, %v5436
        %v5439 = vld [vmem:[%s3527 + $0x1] sm:$0xf]
        %v5440 = vld [vmem:[%s4689] sm:$0xff]
        %v5442 = vsel %vm4635, %v5439, 0
        %5444 = vmatpush.msra.mxu0 0.0
        %5445 = vmatpush.msra.mxu0 0.0
        %5446 = vmatpush.msra.mxu0 0.0
        %5447 = vmatpush.msra.mxu0 0.0
        %5448 = vmatpush.msra.mxu0 0.0
        %5449 = vmatpush.msra.mxu0 0.0
        %5450 = vmatpush.msra.mxu0 0.0
        %5451 = vmatpush.msra.mxu0 0.0
        %5452 = vmatpush.msra.mxu0 0.0
        %5453 = vmatpush.msra.mxu0 0.0
        %5454 = vmatpush.msra.mxu0 0.0
        %5455 = vmatpush.msra.mxu0 0.0
        %5456 = vmatpush.msra.mxu0 0.0
        %5457 = vmatpush.msra.mxu0 0.0
        %5458 = vmatpush.msra.mxu0 0.0
        %5459 = vmatpush.msra.mxu0 %v5440
        %5460 = vmatmul.f32.gmra.mxu0 %v5442
        %v5461 = vpop.f32.mrf.mxu0
        %v5462 = vadd.f32 0.0, %v5461
        %5463 = vdwg.mxu0
        %v5465 = vrot.slane %v5462, 4
        %v5467 = vadd.f32 %v5438, %v5465
        %v5468 = vld [vmem:[%s4059] sm:$0xf]
        %v5469 = vld [vmem:[%s4716] sm:$0xff]
        %v5471 = vsel %vm4635, %v5468, 0
        %5473 = vmatpush.msra.mxu0 0.0
        %5474 = vmatpush.msra.mxu0 0.0
        %5475 = vmatpush.msra.mxu0 0.0
        %5476 = vmatpush.msra.mxu0 0.0
        %5477 = vmatpush.msra.mxu0 0.0
        %5478 = vmatpush.msra.mxu0 0.0
        %5479 = vmatpush.msra.mxu0 0.0
        %5480 = vmatpush.msra.mxu0 0.0
        %5481 = vmatpush.msra.mxu0 0.0
        %5482 = vmatpush.msra.mxu0 0.0
        %5483 = vmatpush.msra.mxu0 0.0
        %5484 = vmatpush.msra.mxu0 0.0
        %5485 = vmatpush.msra.mxu0 0.0
        %5486 = vmatpush.msra.mxu0 0.0
        %5487 = vmatpush.msra.mxu0 0.0
        %5488 = vmatpush.msra.mxu0 %v5469
        %5489 = vmatmul.f32.gmra.mxu0 %v5471
        %v5490 = vpop.f32.mrf.mxu0
        %v5491 = vadd.f32 0.0, %v5490
        %5492 = vdwg.mxu0
        %v5494 = vrot.slane %v5491, 4
        %v5496 = vadd.f32 %v5467, %v5494
        %v5497 = vld [vmem:[%s3795] sm:$0xf]
        %v5498 = vld [vmem:[%s4743] sm:$0xff]
        %v5500 = vsel %vm4635, %v5497, 0
        %5502 = vmatpush.msra.mxu0 0.0
        %5503 = vmatpush.msra.mxu0 0.0
        %5504 = vmatpush.msra.mxu0 0.0
        %5505 = vmatpush.msra.mxu0 0.0
        %5506 = vmatpush.msra.mxu0 0.0
        %5507 = vmatpush.msra.mxu0 0.0
        %5508 = vmatpush.msra.mxu0 0.0
        %5509 = vmatpush.msra.mxu0 0.0
        %5510 = vmatpush.msra.mxu0 0.0
        %5511 = vmatpush.msra.mxu0 0.0
        %5512 = vmatpush.msra.mxu0 0.0
        %5513 = vmatpush.msra.mxu0 0.0
        %5514 = vmatpush.msra.mxu0 0.0
        %5515 = vmatpush.msra.mxu0 0.0
        %5516 = vmatpush.msra.mxu0 0.0
        %5517 = vmatpush.msra.mxu0 %v5498
        %5518 = vmatmul.f32.gmra.mxu0 %v5500
        %v5519 = vpop.f32.mrf.mxu0
        %v5520 = vadd.f32 0.0, %v5519
        %5521 = vdwg.mxu0
        %v5523 = vrot.slane %v5520, 4
        %v5525 = vadd.f32 %v5496, %v5523
        %v5526 = vld [vmem:[%s4059 + $0x1] sm:$0xf]
        %v5527 = vld [vmem:[%s4770] sm:$0xff]
        %v5529 = vsel %vm4635, %v5526, 0
        %5531 = vmatpush.msra.mxu0 0.0
        %5532 = vmatpush.msra.mxu0 0.0
        %5533 = vmatpush.msra.mxu0 0.0
        %5534 = vmatpush.msra.mxu0 0.0
        %5535 = vmatpush.msra.mxu0 0.0
        %5536 = vmatpush.msra.mxu0 0.0
        %5537 = vmatpush.msra.mxu0 0.0
        %5538 = vmatpush.msra.mxu0 0.0
        %5539 = vmatpush.msra.mxu0 0.0
        %5540 = vmatpush.msra.mxu0 0.0
        %5541 = vmatpush.msra.mxu0 0.0
        %5542 = vmatpush.msra.mxu0 0.0
        %5543 = vmatpush.msra.mxu0 0.0
        %5544 = vmatpush.msra.mxu0 0.0
        %5545 = vmatpush.msra.mxu0 0.0
        %5546 = vmatpush.msra.mxu0 %v5527
        %5547 = vmatmul.f32.gmra.mxu0 %v5529
        %v5548 = vpop.f32.mrf.mxu0
        %v5549 = vadd.f32 0.0, %v5548
        %5550 = vdwg.mxu0
        %v5552 = vrot.slane %v5549, 4
        %v5554 = vadd.f32 %v5525, %v5552
        %v5555 = vld [vmem:[%s4591] sm:$0xf]
        %v5556 = vld [vmem:[%s4797] sm:$0xff]
        %v5558 = vsel %vm4635, %v5555, 0
        %5560 = vmatpush.msra.mxu0 0.0
        %5561 = vmatpush.msra.mxu0 0.0
        %5562 = vmatpush.msra.mxu0 0.0
        %5563 = vmatpush.msra.mxu0 0.0
        %5564 = vmatpush.msra.mxu0 0.0
        %5565 = vmatpush.msra.mxu0 0.0
        %5566 = vmatpush.msra.mxu0 0.0
        %5567 = vmatpush.msra.mxu0 0.0
        %5568 = vmatpush.msra.mxu0 0.0
        %5569 = vmatpush.msra.mxu0 0.0
        %5570 = vmatpush.msra.mxu0 0.0
        %5571 = vmatpush.msra.mxu0 0.0
        %5572 = vmatpush.msra.mxu0 0.0
        %5573 = vmatpush.msra.mxu0 0.0
        %5574 = vmatpush.msra.mxu0 0.0
        %5575 = vmatpush.msra.mxu0 %v5556
        %5576 = vmatmul.f32.gmra.mxu0 %v5558
        %v5577 = vpop.f32.mrf.mxu0
        %v5578 = vadd.f32 0.0, %v5577
        %5579 = vdwg.mxu0
        %v5581 = vrot.slane %v5578, 4
        %v5583 = vadd.f32 %v5554, %v5581
        %v5584 = vld [vmem:[%s4327] sm:$0xf]
        %v5585 = vld [vmem:[%s4824] sm:$0xff]
        %v5587 = vsel %vm4635, %v5584, 0
        %5589 = vmatpush.msra.mxu0 0.0
        %5590 = vmatpush.msra.mxu0 0.0
        %5591 = vmatpush.msra.mxu0 0.0
        %5592 = vmatpush.msra.mxu0 0.0
        %5593 = vmatpush.msra.mxu0 0.0
        %5594 = vmatpush.msra.mxu0 0.0
        %5595 = vmatpush.msra.mxu0 0.0
        %5596 = vmatpush.msra.mxu0 0.0
        %5597 = vmatpush.msra.mxu0 0.0
        %5598 = vmatpush.msra.mxu0 0.0
        %5599 = vmatpush.msra.mxu0 0.0
        %5600 = vmatpush.msra.mxu0 0.0
        %5601 = vmatpush.msra.mxu0 0.0
        %5602 = vmatpush.msra.mxu0 0.0
        %5603 = vmatpush.msra.mxu0 0.0
        %5604 = vmatpush.msra.mxu0 %v5585
        %5605 = vmatmul.f32.gmra.mxu0 %v5587
        %v5606 = vpop.f32.mrf.mxu0
        %v5607 = vadd.f32 0.0, %v5606
        %5608 = vdwg.mxu0
        %v5610 = vrot.slane %v5607, 4
        %v5612 = vadd.f32 %v5583, %v5610
        %v5613 = vld [vmem:[%s4591 + $0x1] sm:$0xf]
        %v5614 = vld [vmem:[%s4851] sm:$0xff]
        %v5616 = vsel %vm4635, %v5613, 0
        %5618 = vmatpush.msra.mxu0 0.0
        %5619 = vmatpush.msra.mxu0 0.0
        %5620 = vmatpush.msra.mxu0 0.0
        %5621 = vmatpush.msra.mxu0 0.0
        %5622 = vmatpush.msra.mxu0 0.0
        %5623 = vmatpush.msra.mxu0 0.0
        %5624 = vmatpush.msra.mxu0 0.0
        %5625 = vmatpush.msra.mxu0 0.0
        %5626 = vmatpush.msra.mxu0 0.0
        %5627 = vmatpush.msra.mxu0 0.0
        %5628 = vmatpush.msra.mxu0 0.0
        %5629 = vmatpush.msra.mxu0 0.0
        %5630 = vmatpush.msra.mxu0 0.0
        %5631 = vmatpush.msra.mxu0 0.0
        %5632 = vmatpush.msra.mxu0 0.0
        %5633 = vmatpush.msra.mxu0 %v5614
        %5634 = vmatmul.f32.gmra.mxu0 %v5616
        %v5635 = vpop.f32.mrf.mxu0
        %v5636 = vadd.f32 0.0, %v5635
        %5637 = vdwg.mxu0
        %v5639 = vrot.slane %v5636, 4
        %v5641 = vadd.f32 %v5612, %v5639
        %v5642 = vadd.f32 %v5641, %v4878
        %5643 = vst [vmem:[%s286 + $0x8] sm:$0xf0] %v5642
        %s5644 = sand.u32 %s186, 1
        %s5645 = scalar_lea.sflag [#allocation4], %s5644
        %s5646 = sand.u32 %s186, 1
        %s5647 = smul.addr %s5646, 16
        %s5648 = scalar_lea.vmem [#allocation3], %s5647
        // Predicated region
        $region49: #{resnet_block_forward.1} parent=47 // pred_check
          %p5649 = pneg %p196
        $region50: #{resnet_block_forward.1} parent=47 // pred_check_branch
          %5651 = sbr.rel (%p5649) target = $region52
        $region51: #{resnet_block_forward.1} parent=47 // pred_region
          %5653 = vsyncadd %s5645, 0
          %s5654 = smul.addr %s21, 2
          %s5655 = smul.addr %s5654, 8
          %s5656 = scalar_lea.hbm %s7, %s5655
          %s5657 = sshll.u32 %s5648, 4
          %s5658 = int_to_ptr.vmem [resolvable:$true] %s5657
          %s5659 = sshll.u32 %s5656, 4
          %s5660 = int_to_ptr.hbm [resolvable:$true] %s5659
          %5665 = dma.vmem_to_hbm [thread:$0]  %s5658, 256, %s5660, %s5645, 128, 128, 8
        $region52: #{resnet_block_forward.1} parent=47 // pred_fallthru
          _
      $region48: #{resnet_block_forward.1} parent=5 // pred_fallthru
        _
      %p5666 = scmp.le.s32.totalorder 2, %s16
      // Predicated region
      $region53: #{resnet_block_forward.1} parent=5 // pred_check
        %p5667 = pneg %p5666
      $region54: #{resnet_block_forward.1} parent=5 // pred_check_branch
        %5669 = sbr.rel (%p5667) target = $region56
      $region55: #{resnet_block_forward.1} parent=5 // pred_region
        %s5670 = ssub.s32 %s16, 2
        // Predicated region
        $region57: #{resnet_block_forward.1} parent=55 // pred_check
          %p5671 = pneg %p202
        $region58: #{resnet_block_forward.1} parent=55 // pred_check_branch
          %5673 = sbr.rel (%p5671) target = $region60
        $region59: #{resnet_block_forward.1} parent=55 // pred_region
          %s5674 = sand.u32 %s187, 1
          %s5675 = scalar_lea.sflag [#allocation4], %s5674
          %s5676 = sand.u32 %s187, 1
          %s5677 = smul.addr %s5676, 16
          %s5678 = scalar_lea.vmem [#allocation3], %s5677
          %5680 = dma.done %s5675, 256
        $region60: #{resnet_block_forward.1} parent=55 // pred_fallthru
          _
      $region56: #{resnet_block_forward.1} parent=5 // pred_fallthru
        _
    $region6: #{resnet_block_forward.1} parent=1 // loop_footer
      %s20 = sadd.s32 1, %s16
    $region7: #{resnet_block_forward.1} parent=1 // loop_footer_branch
      %15 = sbr.rel target = $region3
    $region8: #{resnet_block_forward.1} parent=1 // loop_exit
      _
    %5681 = vsyncpa [#allocation4], 1
    %s5682 = scalar_lea.sflag [#allocation4], 1
    %5683 = vsyncpa %s5682, 1

</llo_original>
